<compile_context>
chip_gen: v5e
topology: v5e:2x2
jax: 0.10.0
libtpu: 0.0.40
codegen_flags: <defaults>
</compile_context>

<pallas_src>
import math

import jax
import jax.numpy as jnp
from jax.experimental import pallas as pl
from jax.experimental.pallas import tpu as pltpu

# ---- static problem sizes (synthetic path: 3 nodes, 8 neighbors each) ---------------
H_GRU    = 404                 # relation_dim == GRU hidden size == query dim
D_NODE   = 128                 # node_encode_dim
D_NEIGH  = D_NODE + H_GRU      # 532 = node emb ++ relation emb
IN_GRU   = 3 * D_NODE          # 384
L_NODES  = 3                   # nodes on the path
N_NEIGH  = 8                   # neighbors per node (fixed in this synthetic instance)
GATE_PAD = 512                 # lane-aligned slot per fused GRU gate (404 -> 4*128)
FUSED    = 3 * GATE_PAD        # width of the fused gate matmuls (r|z|n slots)
OUT_PAD  = 128                 # lane-dense output row; probs live in lanes 0..N_NEIGH


# ---- fused-gate GRU math (f32, lane-aligned slices) ----------------------------------
def _gru_gates(gi, gh, h):
    """gi/gh: (1, FUSED) fused gate pre-activations; h: (1, H_GRU). PyTorch gate order."""
    gir = gi[:, 0:H_GRU]
    giz = gi[:, GATE_PAD:GATE_PAD + H_GRU]
    gin = gi[:, 2 * GATE_PAD:2 * GATE_PAD + H_GRU]
    ghr = gh[:, 0:H_GRU]
    ghz = gh[:, GATE_PAD:GATE_PAD + H_GRU]
    ghn = gh[:, 2 * GATE_PAD:2 * GATE_PAD + H_GRU]
    r = jax.nn.sigmoid(gir + ghr)
    z = jax.nn.sigmoid(giz + ghz)
    n = jnp.tanh(gin + r * ghn)
    return (1.0 - z) * n + z * h


# ---- the Pallas kernel: whole per-sample forward pass on-chip ------------------------
def policy_kernel(action_ids_ref,                       # SMEM scalar-prefetch (B, L-1)
                  h0_ref, node_ref, neigh_ref,          # per-sample activation blocks
                  wi_ref, wh_ref, bi_ref, bh_ref,       # fused GRU weights (bf16 / f32)
                  wfa_ref, bfa_ref, wfs_ref, bfs_ref,   # FA / FS
                  wfp_ref, bfp_ref,                     # FP as (2,128) row weights
                  out_ref):                             # (1, OUT_PAD) output block
    b = pl.program_id(0)

    # weights stay VMEM-resident across the whole batch grid (loaded once).
    wi, wh = wi_ref[...], wh_ref[...]          # (IN_GRU, FUSED) / (H_GRU, FUSED) bf16
    bi, bh = bi_ref[...], bh_ref[...]          # (1, FUSED) f32
    wfa, bfa = wfa_ref[...], bfa_ref[...]      # (D_NEIGH, D_NODE) bf16 / (1, D_NODE) f32

    def fused_gru(x_f32, h_f32):
        gi = jnp.dot(x_f32.astype(jnp.bfloat16), wi,
                     preferred_element_type=jnp.float32) + bi
        gh = jnp.dot(h_f32.astype(jnp.bfloat16), wh,
                     preferred_element_type=jnp.float32) + bh
        return _gru_gates(gi, gh, h_f32)

    def fa(neigh_f32):
        return jnp.dot(neigh_f32.astype(jnp.bfloat16), wfa,
                       preferred_element_type=jnp.float32) + bfa

    # first GRU step: input = [zeros(128) | zeros(128) | node_emb_0]; only the node rows
    # of the fused input weight contribute, so skip the zero blocks entirely.
    h0 = h0_ref[...]                                                   # (1, H_GRU)
    gi0 = jnp.dot(node_ref[0:1, :].astype(jnp.bfloat16),
                  wi[2 * D_NODE:IN_GRU, :],
                  preferred_element_type=jnp.float32) + bi
    gh0 = jnp.dot(h0.astype(jnp.bfloat16), wh,
                  preferred_element_type=jnp.float32) + bh
    qt = _gru_gates(gi0, gh0, h0)                                      # (1, H_GRU)

    row_ids = jax.lax.broadcasted_iota(jnp.int32, (N_NEIGH, 1), 0)

    # intermediate hops (static python loop, L_NODES is a compile-time constant)
    for i in range(L_NODES - 1):
        hnts = fa(neigh_ref[i])                                        # (N, 128)
        hAt_ = jnp.max(hnts, axis=0, keepdims=True)                    # _Max -> (1, 128)
        aid = action_ids_ref[b, i]
        hat_ = jnp.sum(jnp.where(row_ids == aid, hnts, 0.0),
                       axis=0, keepdims=True)                          # taken-action row
        x = jnp.concatenate([hAt_, hat_, node_ref[i + 1:i + 2, :]], axis=1)
        qt = fused_gru(x, qt)

    # scoring head on last node's neighbors
    hSt = jnp.dot(qt.astype(jnp.bfloat16), wfs_ref[...],
                  preferred_element_type=jnp.float32) + bfs_ref[...]   # (1, 128)
    hnts = fa(neigh_ref[L_NODES - 1])                                  # (N, 128)
    hAt = jnp.max(hnts, axis=0, keepdims=True)
    # FP(cat(hSt, hAt)) as a VPU lane-reduce instead of a 1-column MXU matmul
    u0 = jnp.sum(hSt * wfp_ref[0:1, :] + hAt * wfp_ref[1:2, :],
                 axis=1, keepdims=True) + bfp_ref[...]                 # (1, 1)
    uks = jax.lax.dot_general(hSt, hnts, (((1,), (1,)), ((), ())),
                              preferred_element_type=jnp.float32)      # (1, N)
    logits = jnp.concatenate([u0, uks], axis=1)                        # (1, N+1)

    m = jnp.max(logits, axis=1, keepdims=True)
    e = jnp.exp(logits - m)
    probs = e / jnp.sum(e, axis=1, keepdims=True)

    out_ref[...] = jnp.zeros((1, OUT_PAD), jnp.float32)                # lane-dense row
    out_ref[:, :N_NEIGH + 1] = probs


def policy_forward(h0, node_embs, neighbor_mats, action_ids, packed):
    """Batched forward.

    h0 (B, 404) f32, node_embs (B, L, 128) f32, neighbor_mats (B, L, N, 532) f32,
    action_ids (B, L-1) int32, packed = bf16 fused weights from pack_params().
    Returns (B, N_NEIGH + 1) f32 probabilities.
    """
    B = h0.shape[0]
    h0_3d = h0.reshape(B, 1, H_GRU)
    w_spec = pl.BlockSpec(memory_space=pltpu.MemorySpace.VMEM)  # whole array, resident

    grid_spec = pltpu.PrefetchScalarGridSpec(
        num_scalar_prefetch=1,
        grid=(B,),
        in_specs=[
            pl.BlockSpec((None, 1, H_GRU), lambda b, aid: (b, 0, 0)),
            pl.BlockSpec((None, L_NODES, D_NODE), lambda b, aid: (b, 0, 0)),
            pl.BlockSpec((None, L_NODES, N_NEIGH, D_NEIGH),
                         lambda b, aid: (b, 0, 0, 0)),
        ] + [w_spec] * len(packed),
        out_specs=pl.BlockSpec((None, 1, OUT_PAD), lambda b, aid: (b, 0, 0)),
    )

    out = pl.pallas_call(
        policy_kernel,
        out_shape=jax.ShapeDtypeStruct((B, 1, OUT_PAD), jnp.float32),
        grid_spec=grid_spec,
        compiler_params=pltpu.CompilerParams(
            dimension_semantics=("parallel",)),   # shard batch over v7x's 2 TCs
    )(action_ids, h0_3d, node_embs, neighbor_mats, *packed)
    return out[:, 0, :N_NEIGH + 1]


# ---- pure-JAX reference (same packed inputs, unfused f32 weights) --------------------
def _gru_cell_ref(x, h, wir, wiz, win, whr, whz, whn, bir, biz, bin_, bhr, bhz, bhn):
    r = jax.nn.sigmoid(x @ wir + bir + h @ whr + bhr)
    z = jax.nn.sigmoid(x @ wiz + biz + h @ whz + bhz)
    n = jnp.tanh(x @ win + bin_ + r * (h @ whn + bhn))
    return (1.0 - z) * n + z * h


def policy_forward_ref(h0, node_embs, neighbor_mats, action_ids, params):
    (wir, wiz, win, whr, whz, whn,
     bir, biz, bin_, bhr, bhz, bhn,
     wfa, bfa, wfs, bfs, wfp, bfp) = params
    gru_w = (wir, wiz, win, whr, whz, whn, bir, biz, bin_, bhr, bhz, bhn)
    zeros128 = jnp.zeros((1, D_NODE), jnp.float32)
    qt = _gru_cell_ref(jnp.concatenate([zeros128, zeros128, node_embs[0:1]], axis=1),
                       h0, *gru_w)
    for i in range(L_NODES - 1):
        hnts = neighbor_mats[i] @ wfa + bfa
        hAt_ = jnp.max(hnts, axis=0, keepdims=True)
        hat_ = hnts[action_ids[i]][None, :]
        qt = _gru_cell_ref(jnp.concatenate([hAt_, hat_, node_embs[i + 1:i + 2]], axis=1),
                           qt, *gru_w)
    hSt = qt @ wfs + bfs
    hnts = neighbor_mats[-1] @ wfa + bfa
    hAt = jnp.max(hnts, axis=0, keepdims=True)
    u0 = jnp.concatenate([hSt, hAt], axis=1) @ wfp + bfp
    uks = hSt @ hnts.T
    return jax.nn.softmax(jnp.concatenate([u0, uks], axis=1), axis=1)


# ---- deterministic parameter construction + kernel-side packing ----------------------
def _uniform(key, shape, fan_in):
    b = 1.0 / math.sqrt(fan_in)
    return jax.random.uniform(key, shape, jnp.float32, -b, b)


def make_params(key):
    ks = jax.random.split(key, 18)
    # GRUCell(384 -> 404): per-gate matrices stored pre-transposed as (in, out)
    wir = _uniform(ks[0], (IN_GRU, H_GRU), H_GRU)
    wiz = _uniform(ks[1], (IN_GRU, H_GRU), H_GRU)
    win = _uniform(ks[2], (IN_GRU, H_GRU), H_GRU)
    whr = _uniform(ks[3], (H_GRU, H_GRU), H_GRU)
    whz = _uniform(ks[4], (H_GRU, H_GRU), H_GRU)
    whn = _uniform(ks[5], (H_GRU, H_GRU), H_GRU)
    bir = _uniform(ks[6], (1, H_GRU), H_GRU)
    biz = _uniform(ks[7], (1, H_GRU), H_GRU)
    bin_ = _uniform(ks[8], (1, H_GRU), H_GRU)
    bhr = _uniform(ks[9], (1, H_GRU), H_GRU)
    bhz = _uniform(ks[10], (1, H_GRU), H_GRU)
    bhn = _uniform(ks[11], (1, H_GRU), H_GRU)
    # FA: Linear(532 -> 128), FS: Linear(404 -> 128), FP: Linear(256 -> 1)
    wfa = _uniform(ks[12], (D_NEIGH, D_NODE), D_NEIGH)
    bfa = _uniform(ks[13], (1, D_NODE), D_NEIGH)
    wfs = _uniform(ks[14], (H_GRU, D_NODE), H_GRU)
    bfs = _uniform(ks[15], (1, D_NODE), H_GRU)
    wfp = _uniform(ks[16], (2 * D_NODE, 1), 2 * D_NODE)
    bfp = _uniform(ks[17], (1, 1), 2 * D_NODE)
    return (wir, wiz, win, whr, whz, whn,
            bir, biz, bin_, bhr, bhz, bhn,
            wfa, bfa, wfs, bfs, wfp, bfp)


def pack_params(params):
    """Fuse GRU gates into 512-lane slots and cast matmul weights to bf16."""
    (wir, wiz, win, whr, whz, whn,
     bir, biz, bin_, bhr, bhz, bhn,
     wfa, bfa, wfs, bfs, wfp, bfp) = params

    def fuse(r, z, n, rows):
        out = jnp.zeros((rows, FUSED), jnp.float32)
        out = out.at[:, 0:H_GRU].set(r)
        out = out.at[:, GATE_PAD:GATE_PAD + H_GRU].set(z)
        out = out.at[:, 2 * GATE_PAD:2 * GATE_PAD + H_GRU].set(n)
        return out

    wi_f = fuse(wir, wiz, win, IN_GRU).astype(jnp.bfloat16)
    wh_f = fuse(whr, whz, whn, H_GRU).astype(jnp.bfloat16)
    bi_f = fuse(bir, biz, bin_, 1)                       # biases stay f32
    bh_f = fuse(bhr, bhz, bhn, 1)
    wfp_rows = jnp.concatenate([wfp[:D_NODE, 0][None, :],
                                wfp[D_NODE:, 0][None, :]], axis=0)   # (2, 128) f32
    return (wi_f, wh_f, bi_f, bh_f,
            wfa.astype(jnp.bfloat16), bfa,
            wfs.astype(jnp.bfloat16), bfs,
            wfp_rows, bfp)


# TODO(synk): analysis_state() (graph traversal building ragged dataX and the
# action_candidate python list) is host-side data-dependent python; here we pack an
# equivalent dense synthetic dataX batch instead of walking a knowledge graph.

if __name__ == "__main__":
    B = 4
    key = jax.random.PRNGKey(0)
    k_par, k_h0, k_node, k_nei, k_act = jax.random.split(key, 5)

    params = make_params(k_par)
    packed = pack_params(params)

    h0 = 0.1 * jax.random.normal(k_h0, (B, H_GRU), jnp.float32)              # query embs
    node_embs = 0.1 * jax.random.normal(k_node, (B, L_NODES, D_NODE), jnp.float32)
    neighbor_mats = 0.1 * jax.random.normal(k_nei, (B, L_NODES, N_NEIGH, D_NEIGH),
                                            jnp.float32)
    action_ids = jax.random.randint(k_act, (B, L_NODES - 1), 0,
                                    N_NEIGH).astype(jnp.int32)

    probs = policy_forward(h0, node_embs, neighbor_mats, action_ids, packed)
    probs = jax.block_until_ready(probs)

    ref = jnp.concatenate(
        [policy_forward_ref(h0[j:j + 1], node_embs[j], neighbor_mats[j],
                            action_ids[j], params) for j in range(B)], axis=0)

    assert probs.shape == (B, N_NEIGH + 1)
    assert bool(jnp.allclose(probs, ref, atol=1e-2, rtol=1e-2)), (probs, ref)
    assert bool(jnp.all(jnp.abs(jnp.sum(probs, axis=1) - 1.0) < 1e-3))

    print("KERNEL_OK")
</pallas_src>

<mosaic_0001>
module attributes {stable_mosaic.version = 11 : i64} {
  func.func @policy_kernel(%arg0: i32, %arg1: memref<4x2xi32, #tpu.memory_space<smem>>, %arg2: memref<1x1x404xf32, #tpu.memory_space<vmem>>, %arg3: memref<1x3x128xf32, #tpu.memory_space<vmem>>, %arg4: memref<1x3x8x532xf32, #tpu.memory_space<vmem>>, %arg5: memref<384x1536xbf16, #tpu.memory_space<vmem>>, %arg6: memref<404x1536xbf16, #tpu.memory_space<vmem>>, %arg7: memref<1x1536xf32, #tpu.memory_space<vmem>>, %arg8: memref<1x1536xf32, #tpu.memory_space<vmem>>, %arg9: memref<532x128xbf16, #tpu.memory_space<vmem>>, %arg10: memref<1x128xf32, #tpu.memory_space<vmem>>, %arg11: memref<404x128xbf16, #tpu.memory_space<vmem>>, %arg12: memref<1x128xf32, #tpu.memory_space<vmem>>, %arg13: memref<2x128xf32, #tpu.memory_space<vmem>>, %arg14: memref<1x1xf32, #tpu.memory_space<vmem>>, %arg15: memref<1x1x128xf32, #tpu.memory_space<vmem>>) attributes {dimension_semantics = [#tpu.dimension_semantics<parallel>], iteration_bounds = array<i64: 4>, scalar_prefetch = 1 : i64, scratch_operands = 0 : i64, tpu.core_type = #tpu.core_type<tc>, window_params = [{transform_indices = @transform_0, window_bounds = array<i64: 1, 1, 404>}, {transform_indices = @transform_1, window_bounds = array<i64: 1, 3, 128>}, {transform_indices = @transform_2, window_bounds = array<i64: 1, 3, 8, 532>}, {pipeline_mode = #tpu.pipeline_mode<synchronous>, transform_indices = @transform_3, window_bounds = array<i64: 384, 1536>}, {pipeline_mode = #tpu.pipeline_mode<synchronous>, transform_indices = @transform_4, window_bounds = array<i64: 404, 1536>}, {pipeline_mode = #tpu.pipeline_mode<synchronous>, transform_indices = @transform_5, window_bounds = array<i64: 1, 1536>}, {pipeline_mode = #tpu.pipeline_mode<synchronous>, transform_indices = @transform_6, window_bounds = array<i64: 1, 1536>}, {pipeline_mode = #tpu.pipeline_mode<synchronous>, transform_indices = @transform_7, window_bounds = array<i64: 532, 128>}, {pipeline_mode = #tpu.pipeline_mode<synchronous>, transform_indices = @transform_8, window_bounds = array<i64: 1, 128>}, {pipeline_mode = #tpu.pipeline_mode<synchronous>, transform_indices = @transform_9, window_bounds = array<i64: 404, 128>}, {pipeline_mode = #tpu.pipeline_mode<synchronous>, transform_indices = @transform_10, window_bounds = array<i64: 1, 128>}, {pipeline_mode = #tpu.pipeline_mode<synchronous>, transform_indices = @transform_11, window_bounds = array<i64: 2, 128>}, {pipeline_mode = #tpu.pipeline_mode<synchronous>, transform_indices = @transform_12, window_bounds = array<i64: 1, 1>}, {transform_indices = @transform_13, window_bounds = array<i64: 1, 1, 128>}]} {
    %c0 = arith.constant 0 : index
    %c0_0 = arith.constant 0 : index
    %0 = vector.load %arg5[%c0, %c0_0] : memref<384x1536xbf16, #tpu.memory_space<vmem>>, vector<384x1536xbf16>
    %c0_1 = arith.constant 0 : index
    %c0_2 = arith.constant 0 : index
    %1 = vector.load %arg6[%c0_1, %c0_2] : memref<404x1536xbf16, #tpu.memory_space<vmem>>, vector<404x1536xbf16>
    %c0_3 = arith.constant 0 : index
    %c0_4 = arith.constant 0 : index
    %2 = vector.load %arg7[%c0_3, %c0_4] : memref<1x1536xf32, #tpu.memory_space<vmem>>, vector<1x1536xf32>
    %c0_5 = arith.constant 0 : index
    %c0_6 = arith.constant 0 : index
    %3 = vector.load %arg8[%c0_5, %c0_6] : memref<1x1536xf32, #tpu.memory_space<vmem>>, vector<1x1536xf32>
    %c0_7 = arith.constant 0 : index
    %c0_8 = arith.constant 0 : index
    %4 = vector.load %arg9[%c0_7, %c0_8] : memref<532x128xbf16, #tpu.memory_space<vmem>>, vector<532x128xbf16>
    %c0_9 = arith.constant 0 : index
    %c0_10 = arith.constant 0 : index
    %5 = vector.load %arg10[%c0_9, %c0_10] : memref<1x128xf32, #tpu.memory_space<vmem>>, vector<1x128xf32>
    %c0_11 = arith.constant 0 : index
    %c0_12 = arith.constant 0 : index
    %c0_13 = arith.constant 0 : index
    %6 = vector.load %arg2[%c0_11, %c0_12, %c0_13] : memref<1x1x404xf32, #tpu.memory_space<vmem>>, vector<1x1x404xf32>
    %7 = vector.shape_cast %6 : vector<1x1x404xf32> to vector<1x404xf32>
    %c0_14 = arith.constant 0 : index
    %c0_15 = arith.constant 0 : index
    %c0_16 = arith.constant 0 : index
    %8 = vector.load %arg3[%c0_14, %c0_15, %c0_16] : memref<1x3x128xf32, #tpu.memory_space<vmem>>, vector<1x1x128xf32>
    %9 = vector.shape_cast %8 : vector<1x1x128xf32> to vector<1x128xf32>
    %10 = arith.truncf %9 : vector<1x128xf32> to vector<1x128xbf16>
    %11 = vector.extract_strided_slice %0 {offsets = [256, 0], sizes = [128, 1536], strides = [1, 1]} : vector<384x1536xbf16> to vector<128x1536xbf16>
    %cst = arith.constant dense<0.000000e+00> : vector<1x1536xf32>
    %12 = tpu.matmul %10, %11, %cst {dimension_numbers = #tpu.dot_dimension_numbers<[1], [0], [0], [1], [0, 0, 1, 1], [], []>} : vector<1x128xbf16>, vector<128x1536xbf16>, vector<1x1536xf32> -> vector<1x1536xf32>
    %13 = arith.addf %12, %2 : vector<1x1536xf32>
    %14 = arith.truncf %7 : vector<1x404xf32> to vector<1x404xbf16>
    %cst_17 = arith.constant dense<0.000000e+00> : vector<1x1536xf32>
    %15 = tpu.matmul %14, %1, %cst_17 {dimension_numbers = #tpu.dot_dimension_numbers<[1], [0], [0], [1], [0, 0, 1, 1], [], []>} : vector<1x404xbf16>, vector<404x1536xbf16>, vector<1x1536xf32> -> vector<1x1536xf32>
    %16 = arith.addf %15, %3 : vector<1x1536xf32>
    %17 = vector.extract_strided_slice %13 {offsets = [0, 0], sizes = [1, 404], strides = [1, 1]} : vector<1x1536xf32> to vector<1x404xf32>
    %18 = vector.extract_strided_slice %13 {offsets = [0, 512], sizes = [1, 404], strides = [1, 1]} : vector<1x1536xf32> to vector<1x404xf32>
    %19 = vector.extract_strided_slice %13 {offsets = [0, 1024], sizes = [1, 404], strides = [1, 1]} : vector<1x1536xf32> to vector<1x404xf32>
    %20 = vector.extract_strided_slice %16 {offsets = [0, 0], sizes = [1, 404], strides = [1, 1]} : vector<1x1536xf32> to vector<1x404xf32>
    %21 = vector.extract_strided_slice %16 {offsets = [0, 512], sizes = [1, 404], strides = [1, 1]} : vector<1x1536xf32> to vector<1x404xf32>
    %22 = vector.extract_strided_slice %16 {offsets = [0, 1024], sizes = [1, 404], strides = [1, 1]} : vector<1x1536xf32> to vector<1x404xf32>
    %23 = arith.addf %17, %20 : vector<1x404xf32>
    %24 = arith.negf %23 : vector<1x404xf32>
    %25 = math.exp %24 : vector<1x404xf32>
    %cst_18 = arith.constant 1.000000e+00 : f32
    %26 = vector.broadcast %cst_18 : f32 to vector<1x404xf32>
    %27 = arith.addf %26, %25 : vector<1x404xf32>
    %28 = arith.divf %26, %27 : vector<1x404xf32>
    %29 = arith.addf %18, %21 : vector<1x404xf32>
    %30 = arith.negf %29 : vector<1x404xf32>
    %31 = math.exp %30 : vector<1x404xf32>
    %cst_19 = arith.constant 1.000000e+00 : f32
    %32 = vector.broadcast %cst_19 : f32 to vector<1x404xf32>
    %33 = arith.addf %32, %31 : vector<1x404xf32>
    %34 = arith.divf %32, %33 : vector<1x404xf32>
    %35 = arith.mulf %28, %22 : vector<1x404xf32>
    %36 = arith.addf %19, %35 : vector<1x404xf32>
    %37 = math.tanh %36 : vector<1x404xf32>
    %cst_20 = arith.constant 1.000000e+00 : f32
    %38 = vector.broadcast %cst_20 : f32 to vector<1x404xf32>
    %39 = arith.subf %38, %34 : vector<1x404xf32>
    %40 = arith.mulf %39, %37 : vector<1x404xf32>
    %41 = arith.mulf %34, %7 : vector<1x404xf32>
    %42 = arith.addf %40, %41 : vector<1x404xf32>
    %43 = tpu.iota {dimensions = array<i32: 0>} : vector<8x1xi32>
    %c0_21 = arith.constant 0 : index
    %c0_22 = arith.constant 0 : index
    %c0_23 = arith.constant 0 : index
    %c0_24 = arith.constant 0 : index
    %44 = vector.load %arg4[%c0_21, %c0_22, %c0_23, %c0_24] : memref<1x3x8x532xf32, #tpu.memory_space<vmem>>, vector<1x1x8x532xf32>
    %45 = vector.shape_cast %44 : vector<1x1x8x532xf32> to vector<8x532xf32>
    %46 = arith.truncf %45 : vector<8x532xf32> to vector<8x532xbf16>
    %cst_25 = arith.constant dense<0.000000e+00> : vector<8x128xf32>
    %47 = tpu.matmul %46, %4, %cst_25 {dimension_numbers = #tpu.dot_dimension_numbers<[1], [0], [0], [1], [0, 0, 1, 1], [], []>} : vector<8x532xbf16>, vector<532x128xbf16>, vector<8x128xf32> -> vector<8x128xf32>
    %48 = vector.broadcast %5 : vector<1x128xf32> to vector<8x128xf32>
    %49 = arith.addf %47, %48 : vector<8x128xf32>
    %cst_26 = arith.constant dense<0xFF800000> : vector<128xf32>
    %50 = vector.multi_reduction <maximumf>, %49, %cst_26 [0] : vector<8x128xf32> to vector<128xf32>
    %51 = vector.shape_cast %50 : vector<128xf32> to vector<1x128xf32>
    %52 = arith.index_cast %arg0 : i32 to index
    %c0_27 = arith.constant 0 : index
    %53 = memref.load %arg1[%52, %c0_27] : memref<4x2xi32, #tpu.memory_space<smem>>
    %54 = vector.broadcast %53 : i32 to vector<8x1xi32>
    %55 = arith.cmpi eq, %43, %54 : vector<8x1xi32>
    %cst_28 = arith.constant 0.000000e+00 : f32
    %56 = vector.shape_cast %55 : vector<8x1xi1> to vector<8x1xi1>
    %57 = vector.broadcast %56 : vector<8x1xi1> to vector<8x128xi1>
    %58 = vector.broadcast %cst_28 : f32 to vector<8x128xf32>
    %59 = arith.select %57, %49, %58 : vector<8x128xi1>, vector<8x128xf32>
    %cst_29 = arith.constant dense<0.000000e+00> : vector<128xf32>
    %60 = vector.multi_reduction <add>, %59, %cst_29 [0] : vector<8x128xf32> to vector<128xf32>
    %61 = vector.shape_cast %60 : vector<128xf32> to vector<1x128xf32>
    %c0_30 = arith.constant 0 : index
    %c1 = arith.constant 1 : index
    %c0_31 = arith.constant 0 : index
    %62 = vector.load %arg3[%c0_30, %c1, %c0_31] : memref<1x3x128xf32, #tpu.memory_space<vmem>>, vector<1x1x128xf32>
    %63 = vector.shape_cast %62 : vector<1x1x128xf32> to vector<1x128xf32>
    %64 = tpu.concatenate %51, %61, %63 in 1 : vector<1x128xf32>, vector<1x128xf32>, vector<1x128xf32> -> vector<1x384xf32>
    %65 = arith.truncf %64 : vector<1x384xf32> to vector<1x384xbf16>
    %cst_32 = arith.constant dense<0.000000e+00> : vector<1x1536xf32>
    %66 = tpu.matmul %65, %0, %cst_32 {dimension_numbers = #tpu.dot_dimension_numbers<[1], [0], [0], [1], [0, 0, 1, 1], [], []>} : vector<1x384xbf16>, vector<384x1536xbf16>, vector<1x1536xf32> -> vector<1x1536xf32>
    %67 = arith.addf %66, %2 : vector<1x1536xf32>
    %68 = arith.truncf %42 : vector<1x404xf32> to vector<1x404xbf16>
    %cst_33 = arith.constant dense<0.000000e+00> : vector<1x1536xf32>
    %69 = tpu.matmul %68, %1, %cst_33 {dimension_numbers = #tpu.dot_dimension_numbers<[1], [0], [0], [1], [0, 0, 1, 1], [], []>} : vector<1x404xbf16>, vector<404x1536xbf16>, vector<1x1536xf32> -> vector<1x1536xf32>
    %70 = arith.addf %69, %3 : vector<1x1536xf32>
    %71 = vector.extract_strided_slice %67 {offsets = [0, 0], sizes = [1, 404], strides = [1, 1]} : vector<1x1536xf32> to vector<1x404xf32>
    %72 = vector.extract_strided_slice %67 {offsets = [0, 512], sizes = [1, 404], strides = [1, 1]} : vector<1x1536xf32> to vector<1x404xf32>
    %73 = vector.extract_strided_slice %67 {offsets = [0, 1024], sizes = [1, 404], strides = [1, 1]} : vector<1x1536xf32> to vector<1x404xf32>
    %74 = vector.extract_strided_slice %70 {offsets = [0, 0], sizes = [1, 404], strides = [1, 1]} : vector<1x1536xf32> to vector<1x404xf32>
    %75 = vector.extract_strided_slice %70 {offsets = [0, 512], sizes = [1, 404], strides = [1, 1]} : vector<1x1536xf32> to vector<1x404xf32>
    %76 = vector.extract_strided_slice %70 {offsets = [0, 1024], sizes = [1, 404], strides = [1, 1]} : vector<1x1536xf32> to vector<1x404xf32>
    %77 = arith.addf %71, %74 : vector<1x404xf32>
    %78 = arith.negf %77 : vector<1x404xf32>
    %79 = math.exp %78 : vector<1x404xf32>
    %cst_34 = arith.constant 1.000000e+00 : f32
    %80 = vector.broadcast %cst_34 : f32 to vector<1x404xf32>
    %81 = arith.addf %80, %79 : vector<1x404xf32>
    %82 = arith.divf %80, %81 : vector<1x404xf32>
    %83 = arith.addf %72, %75 : vector<1x404xf32>
    %84 = arith.negf %83 : vector<1x404xf32>
    %85 = math.exp %84 : vector<1x404xf32>
    %cst_35 = arith.constant 1.000000e+00 : f32
    %86 = vector.broadcast %cst_35 : f32 to vector<1x404xf32>
    %87 = arith.addf %86, %85 : vector<1x404xf32>
    %88 = arith.divf %86, %87 : vector<1x404xf32>
    %89 = arith.mulf %82, %76 : vector<1x404xf32>
    %90 = arith.addf %73, %89 : vector<1x404xf32>
    %91 = math.tanh %90 : vector<1x404xf32>
    %cst_36 = arith.constant 1.000000e+00 : f32
    %92 = vector.broadcast %cst_36 : f32 to vector<1x404xf32>
    %93 = arith.subf %92, %88 : vector<1x404xf32>
    %94 = arith.mulf %93, %91 : vector<1x404xf32>
    %95 = arith.mulf %88, %42 : vector<1x404xf32>
    %96 = arith.addf %94, %95 : vector<1x404xf32>
    %c0_37 = arith.constant 0 : index
    %c1_38 = arith.constant 1 : index
    %c0_39 = arith.constant 0 : index
    %c0_40 = arith.constant 0 : index
    %97 = vector.load %arg4[%c0_37, %c1_38, %c0_39, %c0_40] : memref<1x3x8x532xf32, #tpu.memory_space<vmem>>, vector<1x1x8x532xf32>
    %98 = vector.shape_cast %97 : vector<1x1x8x532xf32> to vector<8x532xf32>
    %99 = arith.truncf %98 : vector<8x532xf32> to vector<8x532xbf16>
    %cst_41 = arith.constant dense<0.000000e+00> : vector<8x128xf32>
    %100 = tpu.matmul %99, %4, %cst_41 {dimension_numbers = #tpu.dot_dimension_numbers<[1], [0], [0], [1], [0, 0, 1, 1], [], []>} : vector<8x532xbf16>, vector<532x128xbf16>, vector<8x128xf32> -> vector<8x128xf32>
    %101 = vector.broadcast %5 : vector<1x128xf32> to vector<8x128xf32>
    %102 = arith.addf %100, %101 : vector<8x128xf32>
    %cst_42 = arith.constant dense<0xFF800000> : vector<128xf32>
    %103 = vector.multi_reduction <maximumf>, %102, %cst_42 [0] : vector<8x128xf32> to vector<128xf32>
    %104 = vector.shape_cast %103 : vector<128xf32> to vector<1x128xf32>
    %105 = arith.index_cast %arg0 : i32 to index
    %c1_43 = arith.constant 1 : index
    %106 = memref.load %arg1[%105, %c1_43] : memref<4x2xi32, #tpu.memory_space<smem>>
    %107 = vector.broadcast %106 : i32 to vector<8x1xi32>
    %108 = arith.cmpi eq, %43, %107 : vector<8x1xi32>
    %cst_44 = arith.constant 0.000000e+00 : f32
    %109 = vector.shape_cast %108 : vector<8x1xi1> to vector<8x1xi1>
    %110 = vector.broadcast %109 : vector<8x1xi1> to vector<8x128xi1>
    %111 = vector.broadcast %cst_44 : f32 to vector<8x128xf32>
    %112 = arith.select %110, %102, %111 : vector<8x128xi1>, vector<8x128xf32>
    %cst_45 = arith.constant dense<0.000000e+00> : vector<128xf32>
    %113 = vector.multi_reduction <add>, %112, %cst_45 [0] : vector<8x128xf32> to vector<128xf32>
    %114 = vector.shape_cast %113 : vector<128xf32> to vector<1x128xf32>
    %c0_46 = arith.constant 0 : index
    %c2 = arith.constant 2 : index
    %c0_47 = arith.constant 0 : index
    %115 = vector.load %arg3[%c0_46, %c2, %c0_47] : memref<1x3x128xf32, #tpu.memory_space<vmem>>, vector<1x1x128xf32>
    %116 = vector.shape_cast %115 : vector<1x1x128xf32> to vector<1x128xf32>
    %117 = tpu.concatenate %104, %114, %116 in 1 : vector<1x128xf32>, vector<1x128xf32>, vector<1x128xf32> -> vector<1x384xf32>
    %118 = arith.truncf %117 : vector<1x384xf32> to vector<1x384xbf16>
    %cst_48 = arith.constant dense<0.000000e+00> : vector<1x1536xf32>
    %119 = tpu.matmul %118, %0, %cst_48 {dimension_numbers = #tpu.dot_dimension_numbers<[1], [0], [0], [1], [0, 0, 1, 1], [], []>} : vector<1x384xbf16>, vector<384x1536xbf16>, vector<1x1536xf32> -> vector<1x1536xf32>
    %120 = arith.addf %119, %2 : vector<1x1536xf32>
    %121 = arith.truncf %96 : vector<1x404xf32> to vector<1x404xbf16>
    %cst_49 = arith.constant dense<0.000000e+00> : vector<1x1536xf32>
    %122 = tpu.matmul %121, %1, %cst_49 {dimension_numbers = #tpu.dot_dimension_numbers<[1], [0], [0], [1], [0, 0, 1, 1], [], []>} : vector<1x404xbf16>, vector<404x1536xbf16>, vector<1x1536xf32> -> vector<1x1536xf32>
    %123 = arith.addf %122, %3 : vector<1x1536xf32>
    %124 = vector.extract_strided_slice %120 {offsets = [0, 0], sizes = [1, 404], strides = [1, 1]} : vector<1x1536xf32> to vector<1x404xf32>
    %125 = vector.extract_strided_slice %120 {offsets = [0, 512], sizes = [1, 404], strides = [1, 1]} : vector<1x1536xf32> to vector<1x404xf32>
    %126 = vector.extract_strided_slice %120 {offsets = [0, 1024], sizes = [1, 404], strides = [1, 1]} : vector<1x1536xf32> to vector<1x404xf32>
    %127 = vector.extract_strided_slice %123 {offsets = [0, 0], sizes = [1, 404], strides = [1, 1]} : vector<1x1536xf32> to vector<1x404xf32>
    %128 = vector.extract_strided_slice %123 {offsets = [0, 512], sizes = [1, 404], strides = [1, 1]} : vector<1x1536xf32> to vector<1x404xf32>
    %129 = vector.extract_strided_slice %123 {offsets = [0, 1024], sizes = [1, 404], strides = [1, 1]} : vector<1x1536xf32> to vector<1x404xf32>
    %130 = arith.addf %124, %127 : vector<1x404xf32>
    %131 = arith.negf %130 : vector<1x404xf32>
    %132 = math.exp %131 : vector<1x404xf32>
    %cst_50 = arith.constant 1.000000e+00 : f32
    %133 = vector.broadcast %cst_50 : f32 to vector<1x404xf32>
    %134 = arith.addf %133, %132 : vector<1x404xf32>
    %135 = arith.divf %133, %134 : vector<1x404xf32>
    %136 = arith.addf %125, %128 : vector<1x404xf32>
    %137 = arith.negf %136 : vector<1x404xf32>
    %138 = math.exp %137 : vector<1x404xf32>
    %cst_51 = arith.constant 1.000000e+00 : f32
    %139 = vector.broadcast %cst_51 : f32 to vector<1x404xf32>
    %140 = arith.addf %139, %138 : vector<1x404xf32>
    %141 = arith.divf %139, %140 : vector<1x404xf32>
    %142 = arith.mulf %135, %129 : vector<1x404xf32>
    %143 = arith.addf %126, %142 : vector<1x404xf32>
    %144 = math.tanh %143 : vector<1x404xf32>
    %cst_52 = arith.constant 1.000000e+00 : f32
    %145 = vector.broadcast %cst_52 : f32 to vector<1x404xf32>
    %146 = arith.subf %145, %141 : vector<1x404xf32>
    %147 = arith.mulf %146, %144 : vector<1x404xf32>
    %148 = arith.mulf %141, %96 : vector<1x404xf32>
    %149 = arith.addf %147, %148 : vector<1x404xf32>
    %150 = arith.truncf %149 : vector<1x404xf32> to vector<1x404xbf16>
    %c0_53 = arith.constant 0 : index
    %c0_54 = arith.constant 0 : index
    %151 = vector.load %arg11[%c0_53, %c0_54] : memref<404x128xbf16, #tpu.memory_space<vmem>>, vector<404x128xbf16>
    %cst_55 = arith.constant dense<0.000000e+00> : vector<1x128xf32>
    %152 = tpu.matmul %150, %151, %cst_55 {dimension_numbers = #tpu.dot_dimension_numbers<[1], [0], [0], [1], [0, 0, 1, 1], [], []>} : vector<1x404xbf16>, vector<404x128xbf16>, vector<1x128xf32> -> vector<1x128xf32>
    %c0_56 = arith.constant 0 : index
    %c0_57 = arith.constant 0 : index
    %153 = vector.load %arg12[%c0_56, %c0_57] : memref<1x128xf32, #tpu.memory_space<vmem>>, vector<1x128xf32>
    %154 = arith.addf %152, %153 : vector<1x128xf32>
    %c0_58 = arith.constant 0 : index
    %c2_59 = arith.constant 2 : index
    %c0_60 = arith.constant 0 : index
    %c0_61 = arith.constant 0 : index
    %155 = vector.load %arg4[%c0_58, %c2_59, %c0_60, %c0_61] : memref<1x3x8x532xf32, #tpu.memory_space<vmem>>, vector<1x1x8x532xf32>
    %156 = vector.shape_cast %155 : vector<1x1x8x532xf32> to vector<8x532xf32>
    %157 = arith.truncf %156 : vector<8x532xf32> to vector<8x532xbf16>
    %cst_62 = arith.constant dense<0.000000e+00> : vector<8x128xf32>
    %158 = tpu.matmul %157, %4, %cst_62 {dimension_numbers = #tpu.dot_dimension_numbers<[1], [0], [0], [1], [0, 0, 1, 1], [], []>} : vector<8x532xbf16>, vector<532x128xbf16>, vector<8x128xf32> -> vector<8x128xf32>
    %159 = vector.broadcast %5 : vector<1x128xf32> to vector<8x128xf32>
    %160 = arith.addf %158, %159 : vector<8x128xf32>
    %cst_63 = arith.constant dense<0xFF800000> : vector<128xf32>
    %161 = vector.multi_reduction <maximumf>, %160, %cst_63 [0] : vector<8x128xf32> to vector<128xf32>
    %162 = vector.shape_cast %161 : vector<128xf32> to vector<1x128xf32>
    %c0_64 = arith.constant 0 : index
    %c0_65 = arith.constant 0 : index
    %163 = vector.load %arg13[%c0_64, %c0_65] : memref<2x128xf32, #tpu.memory_space<vmem>>, vector<1x128xf32>
    %164 = arith.mulf %154, %163 : vector<1x128xf32>
    %c1_66 = arith.constant 1 : index
    %c0_67 = arith.constant 0 : index
    %165 = vector.load %arg13[%c1_66, %c0_67] : memref<2x128xf32, #tpu.memory_space<vmem>>, vector<1x128xf32>
    %166 = arith.mulf %162, %165 : vector<1x128xf32>
    %167 = arith.addf %164, %166 : vector<1x128xf32>
    %cst_68 = arith.constant dense<0.000000e+00> : vector<1xf32>
    %168 = vector.multi_reduction <add>, %167, %cst_68 [1] : vector<1x128xf32> to vector<1xf32>
    %169 = vector.shape_cast %168 : vector<1xf32> to vector<1x1xf32>
    %c0_69 = arith.constant 0 : index
    %c0_70 = arith.constant 0 : index
    %170 = vector.load %arg14[%c0_69, %c0_70] : memref<1x1xf32, #tpu.memory_space<vmem>>, vector<1x1xf32>
    %171 = arith.addf %169, %170 : vector<1x1xf32>
    %cst_71 = arith.constant dense<0.000000e+00> : vector<1x8xf32>
    %172 = tpu.matmul %154, %160, %cst_71 {dimension_numbers = #tpu.dot_dimension_numbers<[1], [1], [0], [0], [0, 0, 1, 0], [], []>} : vector<1x128xf32>, vector<8x128xf32>, vector<1x8xf32> -> vector<1x8xf32>
    %173 = tpu.concatenate %171, %172 in 1 : vector<1x1xf32>, vector<1x8xf32> -> vector<1x9xf32>
    %cst_72 = arith.constant dense<0xFF800000> : vector<1xf32>
    %174 = vector.multi_reduction <maximumf>, %173, %cst_72 [1] : vector<1x9xf32> to vector<1xf32>
    %175 = vector.shape_cast %174 : vector<1xf32> to vector<1x1xf32>
    %176 = vector.broadcast %175 : vector<1x1xf32> to vector<1x9xf32>
    %177 = arith.subf %173, %176 : vector<1x9xf32>
    %178 = math.exp %177 : vector<1x9xf32>
    %cst_73 = arith.constant dense<0.000000e+00> : vector<1xf32>
    %179 = vector.multi_reduction <add>, %178, %cst_73 [1] : vector<1x9xf32> to vector<1xf32>
    %180 = vector.shape_cast %179 : vector<1xf32> to vector<1x1xf32>
    %181 = vector.broadcast %180 : vector<1x1xf32> to vector<1x9xf32>
    %182 = arith.divf %178, %181 : vector<1x9xf32>
    %cst_74 = arith.constant 0.000000e+00 : f32
    %183 = vector.broadcast %cst_74 : f32 to vector<1x128xf32>
    %c0_75 = arith.constant 0 : index
    %c0_76 = arith.constant 0 : index
    %c0_77 = arith.constant 0 : index
    %184 = vector.load %arg15[%c0_75, %c0_76, %c0_77] : memref<1x1x128xf32, #tpu.memory_space<vmem>>, vector<1x1x128xf32>
    %185 = vector.shape_cast %184 : vector<1x1x128xf32> to vector<1x128xf32>
    %186 = vector.shape_cast %183 : vector<1x128xf32> to vector<1x1x128xf32>
    tpu.vector_store %arg15[%c0_75, %c0_76, %c0_77], %186 {strides = array<i32>} : memref<1x1x128xf32, #tpu.memory_space<vmem>>, vector<1x1x128xf32>,
    %c0_78 = arith.constant 0 : index
    %c0_79 = arith.constant 0 : index
    %c0_80 = arith.constant 0 : index
    %187 = vector.load %arg15[%c0_78, %c0_79, %c0_80] : memref<1x1x128xf32, #tpu.memory_space<vmem>>, vector<1x1x9xf32>
    %188 = vector.shape_cast %187 : vector<1x1x9xf32> to vector<1x9xf32>
    %189 = vector.shape_cast %182 : vector<1x9xf32> to vector<1x1x9xf32>
    tpu.vector_store %arg15[%c0_78, %c0_79, %c0_80], %189 {strides = array<i32>} : memref<1x1x128xf32, #tpu.memory_space<vmem>>, vector<1x1x9xf32>,
    return
  }
  func.func @transform_0(%arg0: i32, %arg1: memref<4x2xi32, #tpu.memory_space<smem>>) -> (i32, i32, i32) {
    %c0_i32 = arith.constant 0 : i32
    %c0_i32_0 = arith.constant 0 : i32
    %c0_i32_1 = arith.constant 0 : i32
    return %arg0, %c0_i32, %c0_i32_0 : i32, i32, i32
  }
  func.func @transform_1(%arg0: i32, %arg1: memref<4x2xi32, #tpu.memory_space<smem>>) -> (i32, i32, i32) {
    %c0_i32 = arith.constant 0 : i32
    %c0_i32_0 = arith.constant 0 : i32
    %c0_i32_1 = arith.constant 0 : i32
    return %arg0, %c0_i32, %c0_i32_0 : i32, i32, i32
  }
  func.func @transform_2(%arg0: i32, %arg1: memref<4x2xi32, #tpu.memory_space<smem>>) -> (i32, i32, i32, i32) {
    %c0_i32 = arith.constant 0 : i32
    %c0_i32_0 = arith.constant 0 : i32
    %c0_i32_1 = arith.constant 0 : i32
    %c0_i32_2 = arith.constant 0 : i32
    return %arg0, %c0_i32, %c0_i32_0, %c0_i32_1 : i32, i32, i32, i32
  }
  func.func @transform_3(%arg0: i32, %arg1: memref<4x2xi32, #tpu.memory_space<smem>>) -> (i32, i32) {
    %c0_i32 = arith.constant 0 : i32
    %c0_i32_0 = arith.constant 0 : i32
    %c0_i32_1 = arith.constant 0 : i32
    return %c0_i32, %c0_i32_0 : i32, i32
  }
  func.func @transform_4(%arg0: i32, %arg1: memref<4x2xi32, #tpu.memory_space<smem>>) -> (i32, i32) {
    %c0_i32 = arith.constant 0 : i32
    %c0_i32_0 = arith.constant 0 : i32
    %c0_i32_1 = arith.constant 0 : i32
    return %c0_i32, %c0_i32_0 : i32, i32
  }
  func.func @transform_5(%arg0: i32, %arg1: memref<4x2xi32, #tpu.memory_space<smem>>) -> (i32, i32) {
    %c0_i32 = arith.constant 0 : i32
    %c0_i32_0 = arith.constant 0 : i32
    %c0_i32_1 = arith.constant 0 : i32
    return %c0_i32, %c0_i32_0 : i32, i32
  }
  func.func @transform_6(%arg0: i32, %arg1: memref<4x2xi32, #tpu.memory_space<smem>>) -> (i32, i32) {
    %c0_i32 = arith.constant 0 : i32
    %c0_i32_0 = arith.constant 0 : i32
    %c0_i32_1 = arith.constant 0 : i32
    return %c0_i32, %c0_i32_0 : i32, i32
  }
  func.func @transform_7(%arg0: i32, %arg1: memref<4x2xi32, #tpu.memory_space<smem>>) -> (i32, i32) {
    %c0_i32 = arith.constant 0 : i32
    %c0_i32_0 = arith.constant 0 : i32
    %c0_i32_1 = arith.constant 0 : i32
    return %c0_i32, %c0_i32_0 : i32, i32
  }
  func.func @transform_8(%arg0: i32, %arg1: memref<4x2xi32, #tpu.memory_space<smem>>) -> (i32, i32) {
    %c0_i32 = arith.constant 0 : i32
    %c0_i32_0 = arith.constant 0 : i32
    %c0_i32_1 = arith.constant 0 : i32
    return %c0_i32, %c0_i32_0 : i32, i32
  }
  func.func @transform_9(%arg0: i32, %arg1: memref<4x2xi32, #tpu.memory_space<smem>>) -> (i32, i32) {
    %c0_i32 = arith.constant 0 : i32
    %c0_i32_0 = arith.constant 0 : i32
    %c0_i32_1 = arith.constant 0 : i32
    return %c0_i32, %c0_i32_0 : i32, i32
  }
  func.func @transform_10(%arg0: i32, %arg1: memref<4x2xi32, #tpu.memory_space<smem>>) -> (i32, i32) {
    %c0_i32 = arith.constant 0 : i32
    %c0_i32_0 = arith.constant 0 : i32
    %c0_i32_1 = arith.constant 0 : i32
    return %c0_i32, %c0_i32_0 : i32, i32
  }
  func.func @transform_11(%arg0: i32, %arg1: memref<4x2xi32, #tpu.memory_space<smem>>) -> (i32, i32) {
    %c0_i32 = arith.constant 0 : i32
    %c0_i32_0 = arith.constant 0 : i32
    %c0_i32_1 = arith.constant 0 : i32
    return %c0_i32, %c0_i32_0 : i32, i32
  }
  func.func @transform_12(%arg0: i32, %arg1: memref<4x2xi32, #tpu.memory_space<smem>>) -> (i32, i32) {
    %c0_i32 = arith.constant 0 : i32
    %c0_i32_0 = arith.constant 0 : i32
    %c0_i32_1 = arith.constant 0 : i32
    return %c0_i32, %c0_i32_0 : i32, i32
  }
  func.func @transform_13(%arg0: i32, %arg1: memref<4x2xi32, #tpu.memory_space<smem>>) -> (i32, i32, i32) {
    %c0_i32 = arith.constant 0 : i32
    %c0_i32_0 = arith.constant 0 : i32
    %c0_i32_1 = arith.constant 0 : i32
    return %arg0, %c0_i32, %c0_i32_0 : i32, i32, i32
  }
}

</mosaic_0001>

<llo_original>
// kernel: tpu_custom_call.1
$region0: #{tpu_custom_call.1}
  #allocation0 [shape = 'u32[]', space=smem, size = 0x4, offset = 0x4, fixed_abs, tag = 'smem constant byte address 0x4 - core index']
  #allocation1 [shape = 'u32[72,128]{1,0:T(1,128)}', space=vmem, size = 0x9000, scoped, tag = 'internal scratch']
  #allocation2 [shape = 's32[1]{0}', space=sflag, size = 0x4, scoped, tag = 'scoped memory for tpu_custom_call.1']
  #allocation3 [shape = 'u8[2048]{0}', space=smem, size = 0x800, scoped, tag = 'prefetched SMEM operand 0']
  #allocation4 [shape = 'f32[1,1]{1,0:T(1,128)S(1)}', space=vmem, size = 0x200, scoped, tag = 'scoped memory for tpu_custom_call.1']
  %s0 = inlined_call_operand.vmem [shape: s32[4,2], index: 0, kind: input, shape index: {}]
  %s1 = inlined_call_operand.hbm [shape: f32[4,1,404], index: 1, kind: input, shape index: {}]
  %s2 = inlined_call_operand.vmem [shape: f32[4,3,128], index: 2, kind: input, shape index: {}]
  %s3 = inlined_call_operand.hbm [shape: f32[4,3,8,532], index: 3, kind: input, shape index: {}]
  %s4 = inlined_call_operand.hbm [shape: bf16[384,1536], index: 4, kind: input, shape index: {}]
  %s5 = inlined_call_operand.hbm [shape: bf16[404,1536], index: 5, kind: input, shape index: {}]
  %s6 = inlined_call_operand.hbm [shape: f32[1,1536], index: 6, kind: input, shape index: {}]
  %s7 = inlined_call_operand.hbm [shape: f32[1,1536], index: 7, kind: input, shape index: {}]
  %s8 = inlined_call_operand.hbm [shape: bf16[532,128], index: 8, kind: input, shape index: {}]
  %s9 = inlined_call_operand.hbm [shape: f32[1,128], index: 9, kind: input, shape index: {}]
  %s10 = inlined_call_operand.hbm [shape: bf16[404,128], index: 10, kind: input, shape index: {}]
  %s11 = inlined_call_operand.hbm [shape: f32[1,128], index: 11, kind: input, shape index: {}]
  %s12 = inlined_call_operand.hbm [shape: f32[2,128], index: 12, kind: input, shape index: {}]
  %s13 = inlined_call_operand.<no memory space> [shape: f32[1,1], index: 13, kind: input, shape index: {}]
  %s14 = inlined_call_operand.hbm [shape: f32[4,1,128], index: 14, kind: output, shape index: {}]
  %s15 = sld [smem:[#allocation0]]
  $region129: #{tpu_custom_call.1} parent=0
    _
  %s17 = ssub.s32 1, %s15
  %s18 = scalar_select 0, %s17, %s15
  %s20 = sshll.u32 %s0, 4
  %s21 = int_to_ptr.vmem [resolvable:$true] %s20
  %23 = dma.vmem_to_smem %s21, 64, [#allocation3], [#allocation2]
  %v24 = vstv %s13
  %25 = vst [vmem:[#allocation4] sm:$0x1] %v24
  %27 = dma.done [#allocation2], 64
  %28 = sfence
  $region1: #{tpu_custom_call.1} parent=0
    #allocation5 [shape = 'u8[4096]{0}', space=vmem, size = 0x1000, scoped, tag = 'input window, operand 1']
    #allocation6 [shape = 's32[2]{0}', space=sflag, size = 0x8, scoped, tag = 'scoped memory for tpu_custom_call.1']
    #allocation7 [shape = 's32[2]{0}', space=sflag, size = 0x8, scoped, tag = 'scoped memory for tpu_custom_call.1']
    #allocation8 [shape = 'u8[122880]{0}', space=vmem, size = 0x1e000, scoped, tag = 'input window, operand 3']
    #allocation9 [shape = 's32[2]{0}', space=sflag, size = 0x8, scoped, tag = 'scoped memory for tpu_custom_call.1']
    #allocation10 [shape = 'u8[1179648]{0}', space=vmem, size = 0x120000, scoped, tag = 'input window, operand 4, single buffered']
    #allocation11 [shape = 'u8[1253376]{0}', space=vmem, size = 0x132000, scoped, tag = 'input window, operand 5, single buffered']
    #allocation12 [shape = 's32[1]{0}', space=sflag, size = 0x4, scoped, tag = 'scoped memory for tpu_custom_call.1']
    #allocation13 [shape = 'u8[6144]{0}', space=vmem, size = 0x1800, scoped, tag = 'input window, operand 6, single buffered']
    #allocation14 [shape = 'u8[6144]{0}', space=vmem, size = 0x1800, scoped, tag = 'input window, operand 7, single buffered']
    #allocation15 [shape = 's32[1]{0}', space=sflag, size = 0x4, scoped, tag = 'scoped memory for tpu_custom_call.1']
    #allocation16 [shape = 'u8[137216]{0}', space=vmem, size = 0x21800, scoped, tag = 'input window, operand 8, single buffered']
    #allocation17 [shape = 'u8[512]{0}', space=vmem, size = 0x400, scoped, tag = 'input window, operand 9, single buffered']
    #allocation18 [shape = 's32[1]{0}', space=sflag, size = 0x4, scoped, tag = 'scoped memory for tpu_custom_call.1']
    #allocation19 [shape = 'u8[104448]{0}', space=vmem, size = 0x19800, scoped, tag = 'input window, operand 10, single buffered']
    #allocation20 [shape = 'u8[512]{0}', space=vmem, size = 0x400, scoped, tag = 'input window, operand 11, single buffered']
    #allocation21 [shape = 's32[1]{0}', space=sflag, size = 0x4, scoped, tag = 'scoped memory for tpu_custom_call.1']
    #allocation22 [shape = 'u8[1024]{0}', space=vmem, size = 0x400, scoped, tag = 'input window, operand 12, single buffered']
    #allocation23 [shape = 'u8[1024]{0}', space=vmem, size = 0x400, scoped, tag = 'output window, operand 0']
    %29 = vsyncpa [#allocation6], 0
    %s30 = scalar_lea.sflag [#allocation6], 1
    %31 = vsyncpa %s30, 0
    %32 = vsyncpa [#allocation9], 0
    %s33 = scalar_lea.sflag [#allocation9], 1
    %34 = vsyncpa %s33, 0
    %35 = vsyncpa [#allocation12], 0
    %36 = vsyncpa [#allocation15], 0
    %37 = vsyncpa [#allocation18], 0
    %38 = vsyncpa [#allocation21], 0
    %39 = vsyncpa [#allocation7], 0
    %s40 = scalar_lea.sflag [#allocation7], 1
    %41 = vsyncpa %s40, 0
    loop: start=0, step=1, limit=6
    $region2: #{tpu_custom_call.1} parent=1 // loop_pre_header
      _
    $region3: #{tpu_custom_call.1} parent=1 // loop_header
      %s43 = sphi 0, %s47
      %p44 = scmp.ge.s32.totalorder %s43, 6
      %s53 = sphi 0, %s55
      %s56 = sphi 0, %s53
      %s57 = sphi 0, %s56
      %s73 = sphi 0, %s57
      %s79 = sphi 0, %s81
      %s82 = sphi 0, %s79
      %s83 = sphi 0, %s82
      %s99 = sphi 0, %s83
      %s105 = sphi 0, %s107
      %s108 = sphi 0, %s105
      %s109 = sphi 0, %s108
      %s125 = sphi 0, %s109
      %s129 = sphi 0, %s129
      %s131 = sphi 0, %s129
      %s132 = sphi 0, %s131
      %s146 = sphi 0, %s132
      %s150 = sphi 0, %s150
      %s152 = sphi 0, %s150
      %s153 = sphi 0, %s152
      %s167 = sphi 0, %s153
      %s171 = sphi 0, %s171
      %s173 = sphi 0, %s171
      %s174 = sphi 0, %s173
      %s188 = sphi 0, %s174
      %s192 = sphi 0, %s192
      %s194 = sphi 0, %s192
      %s195 = sphi 0, %s194
      %s209 = sphi 0, %s195
      %s213 = sphi 0, %s213
      %s215 = sphi 0, %s213
      %s216 = sphi 0, %s215
      %s230 = sphi 0, %s216
      %s234 = sphi 0, %s234
      %s236 = sphi 0, %s234
      %s237 = sphi 0, %s236
      %s251 = sphi 0, %s237
      %s255 = sphi 0, %s255
      %s257 = sphi 0, %s255
      %s258 = sphi 0, %s257
      %s272 = sphi 0, %s258
      %s276 = sphi 0, %s276
      %s278 = sphi 0, %s276
      %s279 = sphi 0, %s278
      %s293 = sphi 0, %s279
      %s297 = sphi 0, %s297
      %s299 = sphi 0, %s297
      %s300 = sphi 0, %s299
      %s314 = sphi 0, %s300
      %s318 = sphi 0, %s318
      %s320 = sphi 0, %s318
      %s321 = sphi 0, %s320
      %s335 = sphi 0, %s321
      %s341 = sphi 0, %s343
      %s344 = sphi 0, %s341
      %s345 = sphi 0, %s344
      %s361 = sphi 0, %s345
    $region4: #{tpu_custom_call.1} parent=1 // loop_header_branch
      %46 = sbr.rel (%p44) target = $region8
    $region5: #{tpu_custom_call.1} parent=1 // loop_body
      %s48 = ssub.s32 %s43, 1
      %s49 = ssub.s32 %s43, 2
      %s50 = sadd.s32 %s43, 1
      %s51 = ssub.s32 %s43, %s50
      %p52 = scmp.eq.s32.totalorder %s51, 0
      %s54 = sadd.s32 %s53, 1
      %s55 = scalar_select %p52, %s53, %s54
      %p58 = pneg %p52
      %p59 = scmp.eq.s32.totalorder %s43, 3
      %p60 = por %p58, %p59
      %p61 = scmp.ne.s32.totalorder %s53, %s56
      %p62 = scmp.eq.s32.totalorder %s43, 0
      %p63 = por %p61, %p62
      %p64 = scmp.ne.s32.totalorder %s53, %s56
      %p65 = scmp.eq.s32.totalorder %s48, 3
      %p66 = por %p64, %p65
      %p67 = scmp.ne.s32.totalorder %s56, %s57
      %p68 = scmp.eq.s32.totalorder %s48, 0
      %p69 = por %p67, %p68
      %p70 = scmp.ne.s32.totalorder %s56, %s57
      %p71 = scmp.eq.s32.totalorder %s49, 3
      %p72 = por %p70, %p71
      %p74 = scmp.ne.s32.totalorder %s57, %s73
      %p75 = scmp.eq.s32.totalorder %s49, 0
      %p76 = por %p74, %p75
      %s77 = ssub.s32 %s43, %s50
      %p78 = scmp.eq.s32.totalorder %s77, 0
      %s80 = sadd.s32 %s79, 1
      %s81 = scalar_select %p78, %s79, %s80
      %p84 = pneg %p78
      %p85 = scmp.eq.s32.totalorder %s43, 3
      %p86 = por %p84, %p85
      %p87 = scmp.ne.s32.totalorder %s79, %s82
      %p88 = scmp.eq.s32.totalorder %s43, 0
      %p89 = por %p87, %p88
      %p90 = scmp.ne.s32.totalorder %s79, %s82
      %p91 = scmp.eq.s32.totalorder %s48, 3
      %p92 = por %p90, %p91
      %p93 = scmp.ne.s32.totalorder %s82, %s83
      %p94 = scmp.eq.s32.totalorder %s48, 0
      %p95 = por %p93, %p94
      %p96 = scmp.ne.s32.totalorder %s82, %s83
      %p97 = scmp.eq.s32.totalorder %s49, 3
      %p98 = por %p96, %p97
      %p100 = scmp.ne.s32.totalorder %s83, %s99
      %p101 = scmp.eq.s32.totalorder %s49, 0
      %p102 = por %p100, %p101
      %s103 = ssub.s32 %s43, %s50
      %p104 = scmp.eq.s32.totalorder %s103, 0
      %s106 = sadd.s32 %s105, 1
      %s107 = scalar_select %p104, %s105, %s106
      %p110 = pneg %p104
      %p111 = scmp.eq.s32.totalorder %s43, 3
      %p112 = por %p110, %p111
      %p113 = scmp.ne.s32.totalorder %s105, %s108
      %p114 = scmp.eq.s32.totalorder %s43, 0
      %p115 = por %p113, %p114
      %p116 = scmp.ne.s32.totalorder %s105, %s108
      %p117 = scmp.eq.s32.totalorder %s48, 3
      %p118 = por %p116, %p117
      %p119 = scmp.ne.s32.totalorder %s108, %s109
      %p120 = scmp.eq.s32.totalorder %s48, 0
      %p121 = por %p119, %p120
      %p122 = scmp.ne.s32.totalorder %s108, %s109
      %p123 = scmp.eq.s32.totalorder %s49, 3
      %p124 = por %p122, %p123
      %p126 = scmp.ne.s32.totalorder %s109, %s125
      %p127 = scmp.eq.s32.totalorder %s49, 0
      %p128 = por %p126, %p127
      %s130 = sadd.s32 %s129, 1
      %p133 = scmp.eq.s32.totalorder %s43, 3
      %p134 = scmp.ne.s32.totalorder %s129, %s131
      %p135 = scmp.eq.s32.totalorder %s43, 0
      %p136 = por %p134, %p135
      %p137 = scmp.ne.s32.totalorder %s129, %s131
      %p138 = scmp.eq.s32.totalorder %s48, 3
      %p139 = por %p137, %p138
      %p140 = scmp.ne.s32.totalorder %s131, %s132
      %p141 = scmp.eq.s32.totalorder %s48, 0
      %p142 = por %p140, %p141
      %p143 = scmp.ne.s32.totalorder %s131, %s132
      %p144 = scmp.eq.s32.totalorder %s49, 3
      %p145 = por %p143, %p144
      %p147 = scmp.ne.s32.totalorder %s132, %s146
      %p148 = scmp.eq.s32.totalorder %s49, 0
      %p149 = por %p147, %p148
      %s151 = sadd.s32 %s150, 1
      %p154 = scmp.eq.s32.totalorder %s43, 3
      %p155 = scmp.ne.s32.totalorder %s150, %s152
      %p156 = scmp.eq.s32.totalorder %s43, 0
      %p157 = por %p155, %p156
      %p158 = scmp.ne.s32.totalorder %s150, %s152
      %p159 = scmp.eq.s32.totalorder %s48, 3
      %p160 = por %p158, %p159
      %p161 = scmp.ne.s32.totalorder %s152, %s153
      %p162 = scmp.eq.s32.totalorder %s48, 0
      %p163 = por %p161, %p162
      %p164 = scmp.ne.s32.totalorder %s152, %s153
      %p165 = scmp.eq.s32.totalorder %s49, 3
      %p166 = por %p164, %p165
      %p168 = scmp.ne.s32.totalorder %s153, %s167
      %p169 = scmp.eq.s32.totalorder %s49, 0
      %p170 = por %p168, %p169
      %s172 = sadd.s32 %s171, 1
      %p175 = scmp.eq.s32.totalorder %s43, 3
      %p176 = scmp.ne.s32.totalorder %s171, %s173
      %p177 = scmp.eq.s32.totalorder %s43, 0
      %p178 = por %p176, %p177
      %p179 = scmp.ne.s32.totalorder %s171, %s173
      %p180 = scmp.eq.s32.totalorder %s48, 3
      %p181 = por %p179, %p180
      %p182 = scmp.ne.s32.totalorder %s173, %s174
      %p183 = scmp.eq.s32.totalorder %s48, 0
      %p184 = por %p182, %p183
      %p185 = scmp.ne.s32.totalorder %s173, %s174
      %p186 = scmp.eq.s32.totalorder %s49, 3
      %p187 = por %p185, %p186
      %p189 = scmp.ne.s32.totalorder %s174, %s188
      %p190 = scmp.eq.s32.totalorder %s49, 0
      %p191 = por %p189, %p190
      %s193 = sadd.s32 %s192, 1
      %p196 = scmp.eq.s32.totalorder %s43, 3
      %p197 = scmp.ne.s32.totalorder %s192, %s194
      %p198 = scmp.eq.s32.totalorder %s43, 0
      %p199 = por %p197, %p198
      %p200 = scmp.ne.s32.totalorder %s192, %s194
      %p201 = scmp.eq.s32.totalorder %s48, 3
      %p202 = por %p200, %p201
      %p203 = scmp.ne.s32.totalorder %s194, %s195
      %p204 = scmp.eq.s32.totalorder %s48, 0
      %p205 = por %p203, %p204
      %p206 = scmp.ne.s32.totalorder %s194, %s195
      %p207 = scmp.eq.s32.totalorder %s49, 3
      %p208 = por %p206, %p207
      %p210 = scmp.ne.s32.totalorder %s195, %s209
      %p211 = scmp.eq.s32.totalorder %s49, 0
      %p212 = por %p210, %p211
      %s214 = sadd.s32 %s213, 1
      %p217 = scmp.eq.s32.totalorder %s43, 3
      %p218 = scmp.ne.s32.totalorder %s213, %s215
      %p219 = scmp.eq.s32.totalorder %s43, 0
      %p220 = por %p218, %p219
      %p221 = scmp.ne.s32.totalorder %s213, %s215
      %p222 = scmp.eq.s32.totalorder %s48, 3
      %p223 = por %p221, %p222
      %p224 = scmp.ne.s32.totalorder %s215, %s216
      %p225 = scmp.eq.s32.totalorder %s48, 0
      %p226 = por %p224, %p225
      %p227 = scmp.ne.s32.totalorder %s215, %s216
      %p228 = scmp.eq.s32.totalorder %s49, 3
      %p229 = por %p227, %p228
      %p231 = scmp.ne.s32.totalorder %s216, %s230
      %p232 = scmp.eq.s32.totalorder %s49, 0
      %p233 = por %p231, %p232
      %s235 = sadd.s32 %s234, 1
      %p238 = scmp.eq.s32.totalorder %s43, 3
      %p239 = scmp.ne.s32.totalorder %s234, %s236
      %p240 = scmp.eq.s32.totalorder %s43, 0
      %p241 = por %p239, %p240
      %p242 = scmp.ne.s32.totalorder %s234, %s236
      %p243 = scmp.eq.s32.totalorder %s48, 3
      %p244 = por %p242, %p243
      %p245 = scmp.ne.s32.totalorder %s236, %s237
      %p246 = scmp.eq.s32.totalorder %s48, 0
      %p247 = por %p245, %p246
      %p248 = scmp.ne.s32.totalorder %s236, %s237
      %p249 = scmp.eq.s32.totalorder %s49, 3
      %p250 = por %p248, %p249
      %p252 = scmp.ne.s32.totalorder %s237, %s251
      %p253 = scmp.eq.s32.totalorder %s49, 0
      %p254 = por %p252, %p253
      %s256 = sadd.s32 %s255, 1
      %p259 = scmp.eq.s32.totalorder %s43, 3
      %p260 = scmp.ne.s32.totalorder %s255, %s257
      %p261 = scmp.eq.s32.totalorder %s43, 0
      %p262 = por %p260, %p261
      %p263 = scmp.ne.s32.totalorder %s255, %s257
      %p264 = scmp.eq.s32.totalorder %s48, 3
      %p265 = por %p263, %p264
      %p266 = scmp.ne.s32.totalorder %s257, %s258
      %p267 = scmp.eq.s32.totalorder %s48, 0
      %p268 = por %p266, %p267
      %p269 = scmp.ne.s32.totalorder %s257, %s258
      %p270 = scmp.eq.s32.totalorder %s49, 3
      %p271 = por %p269, %p270
      %p273 = scmp.ne.s32.totalorder %s258, %s272
      %p274 = scmp.eq.s32.totalorder %s49, 0
      %p275 = por %p273, %p274
      %s277 = sadd.s32 %s276, 1
      %p280 = scmp.eq.s32.totalorder %s43, 3
      %p281 = scmp.ne.s32.totalorder %s276, %s278
      %p282 = scmp.eq.s32.totalorder %s43, 0
      %p283 = por %p281, %p282
      %p284 = scmp.ne.s32.totalorder %s276, %s278
      %p285 = scmp.eq.s32.totalorder %s48, 3
      %p286 = por %p284, %p285
      %p287 = scmp.ne.s32.totalorder %s278, %s279
      %p288 = scmp.eq.s32.totalorder %s48, 0
      %p289 = por %p287, %p288
      %p290 = scmp.ne.s32.totalorder %s278, %s279
      %p291 = scmp.eq.s32.totalorder %s49, 3
      %p292 = por %p290, %p291
      %p294 = scmp.ne.s32.totalorder %s279, %s293
      %p295 = scmp.eq.s32.totalorder %s49, 0
      %p296 = por %p294, %p295
      %s298 = sadd.s32 %s297, 1
      %p301 = scmp.eq.s32.totalorder %s43, 3
      %p302 = scmp.ne.s32.totalorder %s297, %s299
      %p303 = scmp.eq.s32.totalorder %s43, 0
      %p304 = por %p302, %p303
      %p305 = scmp.ne.s32.totalorder %s297, %s299
      %p306 = scmp.eq.s32.totalorder %s48, 3
      %p307 = por %p305, %p306
      %p308 = scmp.ne.s32.totalorder %s299, %s300
      %p309 = scmp.eq.s32.totalorder %s48, 0
      %p310 = por %p308, %p309
      %p311 = scmp.ne.s32.totalorder %s299, %s300
      %p312 = scmp.eq.s32.totalorder %s49, 3
      %p313 = por %p311, %p312
      %p315 = scmp.ne.s32.totalorder %s300, %s314
      %p316 = scmp.eq.s32.totalorder %s49, 0
      %p317 = por %p315, %p316
      %s319 = sadd.s32 %s318, 1
      %p322 = scmp.eq.s32.totalorder %s43, 3
      %p323 = scmp.ne.s32.totalorder %s318, %s320
      %p324 = scmp.eq.s32.totalorder %s43, 0
      %p325 = por %p323, %p324
      %p326 = scmp.ne.s32.totalorder %s318, %s320
      %p327 = scmp.eq.s32.totalorder %s48, 3
      %p328 = por %p326, %p327
      %p329 = scmp.ne.s32.totalorder %s320, %s321
      %p330 = scmp.eq.s32.totalorder %s48, 0
      %p331 = por %p329, %p330
      %p332 = scmp.ne.s32.totalorder %s320, %s321
      %p333 = scmp.eq.s32.totalorder %s49, 3
      %p334 = por %p332, %p333
      %p336 = scmp.ne.s32.totalorder %s321, %s335
      %p337 = scmp.eq.s32.totalorder %s49, 0
      %p338 = por %p336, %p337
      %s339 = ssub.s32 %s43, %s50
      %p340 = scmp.eq.s32.totalorder %s339, 0
      %s342 = sadd.s32 %s341, 1
      %s343 = scalar_select %p340, %s341, %s342
      %p346 = pneg %p340
      %p347 = scmp.eq.s32.totalorder %s43, 3
      %p348 = por %p346, %p347
      %p349 = scmp.ne.s32.totalorder %s341, %s344
      %p350 = scmp.eq.s32.totalorder %s43, 0
      %p351 = por %p349, %p350
      %p352 = scmp.ne.s32.totalorder %s341, %s344
      %p353 = scmp.eq.s32.totalorder %s48, 3
      %p354 = por %p352, %p353
      %p355 = scmp.ne.s32.totalorder %s344, %s345
      %p356 = scmp.eq.s32.totalorder %s48, 0
      %p357 = por %p355, %p356
      %p358 = scmp.ne.s32.totalorder %s344, %s345
      %p359 = scmp.eq.s32.totalorder %s49, 3
      %p360 = por %p358, %p359
      %p362 = scmp.ne.s32.totalorder %s345, %s361
      %p363 = scmp.eq.s32.totalorder %s49, 0
      %p364 = por %p362, %p363
      %p365 = scmp.le.s32.totalorder 1, %s43
      %p366 = scmp.lt.s32.totalorder %s43, 5
      %p367 = pnand %p365, %p366
      %p368 = pneg %p367
      // Predicated region
      $region9: #{tpu_custom_call.1} parent=5 // pred_check
        _
      $region10: #{tpu_custom_call.1} parent=5 // pred_check_branch
        %370 = sbr.rel (%p367) target = $region12
      $region11: #{tpu_custom_call.1} parent=5 // pred_region
        %s371 = ssub.s32 %s43, 1
        // Predicated region
        $region13: #{tpu_custom_call.1} parent=11 // pred_check
          %p372 = pneg %p142
        $region14: #{tpu_custom_call.1} parent=11 // pred_check_branch
          %374 = sbr.rel (%p372) target = $region16
        $region15: #{tpu_custom_call.1} parent=11 // pred_region
          %376 = vsyncadd [#allocation9], 0
          %s377 = sshll.u32 %s4, 4
          %s378 = int_to_ptr.hbm [resolvable:$true] %s377
          %s379 = sshll.u32 [#allocation10], 4
          %s380 = int_to_ptr.vmem [resolvable:$true] %s379
          %385 = dma.hbm_to_vmem [thread:$0]  %s378, 36864, %s380, [#allocation9], 768, 768, 48
        $region16: #{tpu_custom_call.1} parent=11 // pred_fallthru
          _
        // Predicated region
        $region17: #{tpu_custom_call.1} parent=11 // pred_check
          %p386 = pneg %p163
        $region18: #{tpu_custom_call.1} parent=11 // pred_check_branch
          %388 = sbr.rel (%p386) target = $region20
        $region19: #{tpu_custom_call.1} parent=11 // pred_region
          %390 = vsyncadd [#allocation12], 0
          %s391 = sshll.u32 %s5, 4
          %s392 = int_to_ptr.hbm [resolvable:$true] %s391
          %s393 = sshll.u32 [#allocation11], 4
          %s394 = int_to_ptr.vmem [resolvable:$true] %s393
          %399 = dma.hbm_to_vmem [thread:$0]  %s392, 39168, %s394, [#allocation12], 768, 768, 48
        $region20: #{tpu_custom_call.1} parent=11 // pred_fallthru
          _
        // Predicated region
        $region21: #{tpu_custom_call.1} parent=11 // pred_check
          %p400 = pneg %p184
        $region22: #{tpu_custom_call.1} parent=11 // pred_check_branch
          %402 = sbr.rel (%p400) target = $region24
        $region23: #{tpu_custom_call.1} parent=11 // pred_region
          %404 = vsyncadd [#allocation12], 0
          %s406 = sshll.u32 %s6, 4
          %s407 = int_to_ptr.hbm [resolvable:$true] %s406
          %s408 = sshll.u32 [#allocation13], 4
          %s409 = int_to_ptr.vmem [resolvable:$true] %s408
          %411 = dma.hbm_to_vmem [thread:$0]  %s407, 192, %s409, [#allocation12]
        $region24: #{tpu_custom_call.1} parent=11 // pred_fallthru
          _
        // Predicated region
        $region25: #{tpu_custom_call.1} parent=11 // pred_check
          %p412 = pneg %p205
        $region26: #{tpu_custom_call.1} parent=11 // pred_check_branch
          %414 = sbr.rel (%p412) target = $region28
        $region27: #{tpu_custom_call.1} parent=11 // pred_region
          %416 = vsyncadd [#allocation15], 0
          %s418 = sshll.u32 %s7, 4
          %s419 = int_to_ptr.hbm [resolvable:$true] %s418
          %s420 = sshll.u32 [#allocation14], 4
          %s421 = int_to_ptr.vmem [resolvable:$true] %s420
          %423 = dma.hbm_to_vmem [thread:$0]  %s419, 192, %s421, [#allocation15]
        $region28: #{tpu_custom_call.1} parent=11 // pred_fallthru
          _
        // Predicated region
        $region29: #{tpu_custom_call.1} parent=11 // pred_check
          %p424 = pneg %p226
        $region30: #{tpu_custom_call.1} parent=11 // pred_check_branch
          %426 = sbr.rel (%p424) target = $region32
        $region31: #{tpu_custom_call.1} parent=11 // pred_region
          %428 = vsyncadd [#allocation15], 0
          %s429 = sshll.u32 %s8, 4
          %s430 = int_to_ptr.hbm [resolvable:$true] %s429
          %s431 = sshll.u32 [#allocation16], 4
          %s432 = int_to_ptr.vmem [resolvable:$true] %s431
          %437 = dma.hbm_to_vmem [thread:$0]  %s430, 4288, %s432, [#allocation15], 64, 64, 4
        $region32: #{tpu_custom_call.1} parent=11 // pred_fallthru
          _
        // Predicated region
        $region33: #{tpu_custom_call.1} parent=11 // pred_check
          %p438 = pneg %p247
        $region34: #{tpu_custom_call.1} parent=11 // pred_check_branch
          %440 = sbr.rel (%p438) target = $region36
        $region35: #{tpu_custom_call.1} parent=11 // pred_region
          %442 = vsyncadd [#allocation18], 0
          %s444 = sshll.u32 %s9, 4
          %s445 = int_to_ptr.hbm [resolvable:$true] %s444
          %s446 = sshll.u32 [#allocation17], 4
          %s447 = int_to_ptr.vmem [resolvable:$true] %s446
          %449 = dma.hbm_to_vmem [thread:$0]  %s445, 16, %s447, [#allocation18]
        $region36: #{tpu_custom_call.1} parent=11 // pred_fallthru
          _
        // Predicated region
        $region37: #{tpu_custom_call.1} parent=11 // pred_check
          %p450 = pneg %p268
        $region38: #{tpu_custom_call.1} parent=11 // pred_check_branch
          %452 = sbr.rel (%p450) target = $region40
        $region39: #{tpu_custom_call.1} parent=11 // pred_region
          %454 = vsyncadd [#allocation18], 0
          %s455 = sshll.u32 %s10, 4
          %s456 = int_to_ptr.hbm [resolvable:$true] %s455
          %s457 = sshll.u32 [#allocation19], 4
          %s458 = int_to_ptr.vmem [resolvable:$true] %s457
          %463 = dma.hbm_to_vmem [thread:$0]  %s456, 3264, %s458, [#allocation18], 64, 64, 4
        $region40: #{tpu_custom_call.1} parent=11 // pred_fallthru
          _
        // Predicated region
        $region41: #{tpu_custom_call.1} parent=11 // pred_check
          %p464 = pneg %p289
        $region42: #{tpu_custom_call.1} parent=11 // pred_check_branch
          %466 = sbr.rel (%p464) target = $region44
        $region43: #{tpu_custom_call.1} parent=11 // pred_region
          %468 = vsyncadd [#allocation21], 0
          %s470 = sshll.u32 %s11, 4
          %s471 = int_to_ptr.hbm [resolvable:$true] %s470
          %s472 = sshll.u32 [#allocation20], 4
          %s473 = int_to_ptr.vmem [resolvable:$true] %s472
          %475 = dma.hbm_to_vmem [thread:$0]  %s471, 16, %s473, [#allocation21]
        $region44: #{tpu_custom_call.1} parent=11 // pred_fallthru
          _
        // Predicated region
        $region45: #{tpu_custom_call.1} parent=11 // pred_check
          %p476 = pneg %p310
        $region46: #{tpu_custom_call.1} parent=11 // pred_check_branch
          %478 = sbr.rel (%p476) target = $region48
        $region47: #{tpu_custom_call.1} parent=11 // pred_region
          %480 = vsyncadd [#allocation21], 0
          %s482 = sshll.u32 %s12, 4
          %s483 = int_to_ptr.hbm [resolvable:$true] %s482
          %s484 = sshll.u32 [#allocation22], 4
          %s485 = int_to_ptr.vmem [resolvable:$true] %s484
          %487 = dma.hbm_to_vmem [thread:$0]  %s483, 32, %s485, [#allocation21]
        $region48: #{tpu_custom_call.1} parent=11 // pred_fallthru
          _
        // Predicated region
        $region49: #{tpu_custom_call.1} parent=11 // pred_check
          %p488 = pneg %p331
        $region50: #{tpu_custom_call.1} parent=11 // pred_check_branch
          %490 = sbr.rel (%p488) target = $region52
        $region51: #{tpu_custom_call.1} parent=11 // pred_region
          _
        $region52: #{tpu_custom_call.1} parent=11 // pred_fallthru
          _
      $region12: #{tpu_custom_call.1} parent=5 // pred_fallthru
        _
      %p491 = scmp.lt.s32.totalorder %s43, 4
      // Predicated region
      $region53: #{tpu_custom_call.1} parent=5 // pred_check
        %p492 = pneg %p491
      $region54: #{tpu_custom_call.1} parent=5 // pred_check_branch
        %494 = sbr.rel (%p492) target = $region56
      $region55: #{tpu_custom_call.1} parent=5 // pred_region
        // Predicated region
        $region57: #{tpu_custom_call.1} parent=55 // pred_check
          %p495 = pneg %p63
        $region58: #{tpu_custom_call.1} parent=55 // pred_check_branch
          %497 = sbr.rel (%p495) target = $region60
        $region59: #{tpu_custom_call.1} parent=55 // pred_region
          %s498 = sand.u32 %s53, 1
          %s499 = scalar_lea.sflag [#allocation6], %s498
          %s500 = sand.u32 %s53, 1
          %s501 = smul.addr %s500, 4
          %s502 = scalar_lea.vmem [#allocation5], %s501
          %504 = vsyncadd %s499, 0
          %s505 = smul.addr %s43, 4
          %s506 = scalar_lea.hbm %s1, %s505
          %s508 = sshll.u32 %s506, 4
          %s509 = int_to_ptr.hbm [resolvable:$true] %s508
          %s510 = sshll.u32 %s502, 4
          %s511 = int_to_ptr.vmem [resolvable:$true] %s510
          %513 = dma.hbm_to_vmem [thread:$0]  %s509, 64, %s511, %s499
        $region60: #{tpu_custom_call.1} parent=55 // pred_fallthru
          _
        // Predicated region
        $region61: #{tpu_custom_call.1} parent=55 // pred_check
          %p514 = pneg %p89
        $region62: #{tpu_custom_call.1} parent=55 // pred_check_branch
          %516 = sbr.rel (%p514) target = $region64
        $region63: #{tpu_custom_call.1} parent=55 // pred_region
          %p517 = scmp.lt.s32.totalorder %s43, 3
          %s518 = scalar_select %p517, %s43, 3
          %s519 = smul.addr %s518, 4
          %s520 = scalar_lea.vmem %s2, %s519
        $region64: #{tpu_custom_call.1} parent=55 // pred_fallthru
          _
        // Predicated region
        $region65: #{tpu_custom_call.1} parent=55 // pred_check
          %p521 = pneg %p115
        $region66: #{tpu_custom_call.1} parent=55 // pred_check_branch
          %523 = sbr.rel (%p521) target = $region68
        $region67: #{tpu_custom_call.1} parent=55 // pred_region
          %s524 = sand.u32 %s43, 1
          %s525 = scalar_lea.sflag [#allocation9], %s524
          %s526 = sand.u32 %s105, 1
          %s527 = smul.addr %s526, 120
          %s528 = scalar_lea.vmem [#allocation8], %s527
          %530 = vsyncadd %s525, 0
          %s531 = smul.addr %s43, 15
          %s532 = smul.addr %s531, 8
          %s533 = scalar_lea.hbm %s3, %s532
          %s534 = sshll.u32 %s533, 4
          %s535 = int_to_ptr.hbm [resolvable:$true] %s534
          %s536 = sshll.u32 %s528, 4
          %s537 = int_to_ptr.vmem [resolvable:$true] %s536
          %542 = dma.hbm_to_vmem [thread:$0]  %s535, 1920, %s537, %s525, 640, 640, 40
        $region68: #{tpu_custom_call.1} parent=55 // pred_fallthru
          _
      $region56: #{tpu_custom_call.1} parent=5 // pred_fallthru
        _
      %p543 = scmp.le.s32.totalorder 1, %s43
      %p544 = scmp.lt.s32.totalorder %s43, 5
      %p545 = pnand %p543, %p544
      %p546 = pneg %p545
      // Predicated region
      $region69: #{tpu_custom_call.1} parent=5 // pred_check
        _
      $region70: #{tpu_custom_call.1} parent=5 // pred_check_branch
        %548 = sbr.rel (%p545) target = $region72
      $region71: #{tpu_custom_call.1} parent=5 // pred_region
        %s549 = ssub.s32 %s43, 1
        %s550 = sand.u32 %s56, 1
        %s551 = scalar_lea.sflag [#allocation6], %s550
        %s552 = sand.u32 %s56, 1
        %s553 = smul.addr %s552, 4
        %s554 = scalar_lea.vmem [#allocation5], %s553
        // Predicated region
        $region73: #{tpu_custom_call.1} parent=71 // pred_check
          %p555 = pneg %p69
        $region74: #{tpu_custom_call.1} parent=71 // pred_check_branch
          %557 = sbr.rel (%p555) target = $region76
        $region75: #{tpu_custom_call.1} parent=71 // pred_region
          %559 = dma.done %s551, 64
        $region76: #{tpu_custom_call.1} parent=71 // pred_fallthru
          _
        %s560 = sand.u32 %s48, 1
        %s561 = scalar_lea.sflag [#allocation9], %s560
        %s562 = sand.u32 %s108, 1
        %s563 = smul.addr %s562, 120
        %s564 = scalar_lea.vmem [#allocation8], %s563
        // Predicated region
        $region77: #{tpu_custom_call.1} parent=71 // pred_check
          %p565 = pneg %p121
        $region78: #{tpu_custom_call.1} parent=71 // pred_check_branch
          %567 = sbr.rel (%p565) target = $region80
        $region79: #{tpu_custom_call.1} parent=71 // pred_region
          %569 = dma.done %s561, 1920
        $region80: #{tpu_custom_call.1} parent=71 // pred_fallthru
          _
        // Predicated region
        $region81: #{tpu_custom_call.1} parent=71 // pred_check
          %p570 = pneg %p142
        $region82: #{tpu_custom_call.1} parent=71 // pred_check_branch
          %572 = sbr.rel (%p570) target = $region84
        $region83: #{tpu_custom_call.1} parent=71 // pred_region
          %574 = dma.done [#allocation9], 36864
        $region84: #{tpu_custom_call.1} parent=71 // pred_fallthru
          _
        // Predicated region
        $region85: #{tpu_custom_call.1} parent=71 // pred_check
          %p575 = pneg %p163
        $region86: #{tpu_custom_call.1} parent=71 // pred_check_branch
          %577 = sbr.rel (%p575) target = $region88
        $region87: #{tpu_custom_call.1} parent=71 // pred_region
          %579 = dma.done [#allocation12], 39168
        $region88: #{tpu_custom_call.1} parent=71 // pred_fallthru
          _
        // Predicated region
        $region89: #{tpu_custom_call.1} parent=71 // pred_check
          %p580 = pneg %p184
        $region90: #{tpu_custom_call.1} parent=71 // pred_check_branch
          %582 = sbr.rel (%p580) target = $region92
        $region91: #{tpu_custom_call.1} parent=71 // pred_region
          %584 = dma.done [#allocation12], 192
        $region92: #{tpu_custom_call.1} parent=71 // pred_fallthru
          _
        // Predicated region
        $region93: #{tpu_custom_call.1} parent=71 // pred_check
          %p585 = pneg %p205
        $region94: #{tpu_custom_call.1} parent=71 // pred_check_branch
          %587 = sbr.rel (%p585) target = $region96
        $region95: #{tpu_custom_call.1} parent=71 // pred_region
          %589 = dma.done [#allocation15], 192
        $region96: #{tpu_custom_call.1} parent=71 // pred_fallthru
          _
        // Predicated region
        $region97: #{tpu_custom_call.1} parent=71 // pred_check
          %p590 = pneg %p226
        $region98: #{tpu_custom_call.1} parent=71 // pred_check_branch
          %592 = sbr.rel (%p590) target = $region100
        $region99: #{tpu_custom_call.1} parent=71 // pred_region
          %594 = dma.done [#allocation15], 4288
        $region100: #{tpu_custom_call.1} parent=71 // pred_fallthru
          _
        // Predicated region
        $region101: #{tpu_custom_call.1} parent=71 // pred_check
          %p595 = pneg %p247
        $region102: #{tpu_custom_call.1} parent=71 // pred_check_branch
          %597 = sbr.rel (%p595) target = $region104
        $region103: #{tpu_custom_call.1} parent=71 // pred_region
          %599 = dma.done [#allocation18], 16
        $region104: #{tpu_custom_call.1} parent=71 // pred_fallthru
          _
        // Predicated region
        $region105: #{tpu_custom_call.1} parent=71 // pred_check
          %p600 = pneg %p268
        $region106: #{tpu_custom_call.1} parent=71 // pred_check_branch
          %602 = sbr.rel (%p600) target = $region108
        $region107: #{tpu_custom_call.1} parent=71 // pred_region
          %604 = dma.done [#allocation18], 3264
        $region108: #{tpu_custom_call.1} parent=71 // pred_fallthru
          _
        // Predicated region
        $region109: #{tpu_custom_call.1} parent=71 // pred_check
          %p605 = pneg %p289
        $region110: #{tpu_custom_call.1} parent=71 // pred_check_branch
          %607 = sbr.rel (%p605) target = $region112
        $region111: #{tpu_custom_call.1} parent=71 // pred_region
          %609 = dma.done [#allocation21], 16
        $region112: #{tpu_custom_call.1} parent=71 // pred_fallthru
          _
        // Predicated region
        $region113: #{tpu_custom_call.1} parent=71 // pred_check
          %p610 = pneg %p310
        $region114: #{tpu_custom_call.1} parent=71 // pred_check_branch
          %612 = sbr.rel (%p610) target = $region116
        $region115: #{tpu_custom_call.1} parent=71 // pred_region
          %614 = dma.done [#allocation21], 32
        $region116: #{tpu_custom_call.1} parent=71 // pred_fallthru
          _
        %s615 = sand.u32 %s56, 1
        %s616 = scalar_lea.sflag [#allocation6], %s615
        %s617 = sand.u32 %s56, 1
        %s618 = smul.addr %s617, 4
        %s619 = scalar_lea.vmem [#allocation5], %s618
        %p620 = pneg %p69
        %p621 = pneg %p66
        %p622 = scmp.lt.s32.totalorder %s48, 3
        %s623 = scalar_select %p622, %s48, 3
        %s624 = smul.addr %s623, 4
        %s625 = scalar_lea.vmem %s2, %s624
        %p626 = pneg %p95
        %p627 = pneg %p92
        %s628 = sand.u32 %s48, 1
        %s629 = scalar_lea.sflag [#allocation9], %s628
        %s630 = sand.u32 %s108, 1
        %s631 = smul.addr %s630, 120
        %s632 = scalar_lea.vmem [#allocation8], %s631
        %p633 = pneg %p121
        %p634 = pneg %p118
        %p635 = pneg %p142
        %p636 = pneg %p139
        %p637 = pneg %p163
        %p638 = pneg %p160
        %p639 = pneg %p184
        %p640 = pneg %p181
        %p641 = pneg %p205
        %p642 = pneg %p202
        %p643 = pneg %p226
        %p644 = pneg %p223
        %p645 = pneg %p247
        %p646 = pneg %p244
        %p647 = pneg %p268
        %p648 = pneg %p265
        %p649 = pneg %p289
        %p650 = pneg %p286
        %p651 = pneg %p310
        %p652 = pneg %p307
        %p653 = pneg %p331
        %p654 = pneg %p328
        %p655 = pneg %p357
        %p656 = pneg %p354
        %s657 = sand.u32 %s344, 1
        %s658 = scalar_lea.sflag [#allocation7], %s657
        %s659 = sand.u32 %s344, 1
        %s660 = scalar_lea.vmem [#allocation23], %s659
        %p661 = scmp.lt.s32.totalorder %s48, 3
        %s662 = scalar_select %p661, %s48, 3
        %s663 = smul.addr %s662, 4
        %s664 = scalar_lea.vmem %s2, %s663
        %v666 = vld [vmem:[#allocation10] sm:$0xff]
        %v667 = vld [vmem:[#allocation10 + $0x8] sm:$0xff]
        %v668 = vld [vmem:[#allocation10 + $0x10] sm:$0xff]
        %v669 = vld [vmem:[#allocation10 + $0x18] sm:$0xff]
        %v670 = vld [vmem:[#allocation10 + $0x20] sm:$0xff]
        %v671 = vld [vmem:[#allocation10 + $0x28] sm:$0xff]
        %v672 = vld [vmem:[#allocation10 + $0x30] sm:$0xff]
        %v673 = vld [vmem:[#allocation10 + $0x38] sm:$0xff]
        %v674 = vld [vmem:[#allocation10 + $0x40] sm:$0xff]
        %v675 = vld [vmem:[#allocation10 + $0x48] sm:$0xff]
        %v676 = vld [vmem:[#allocation10 + $0x50] sm:$0xff]
        %v677 = vld [vmem:[#allocation10 + $0x58] sm:$0xff]
        %v678 = vld [vmem:[#allocation10 + $0x60] sm:$0xff]
        %v679 = vld [vmem:[#allocation10 + $0x68] sm:$0xff]
        %v680 = vld [vmem:[#allocation10 + $0x70] sm:$0xff]
        %v681 = vld [vmem:[#allocation10 + $0x78] sm:$0xff]
        %v682 = vld [vmem:[#allocation10 + $0x80] sm:$0xff]
        %v683 = vld [vmem:[#allocation10 + $0x88] sm:$0xff]
        %v684 = vld [vmem:[#allocation10 + $0x90] sm:$0xff]
        %v685 = vld [vmem:[#allocation10 + $0x98] sm:$0xff]
        %v686 = vld [vmem:[#allocation10 + $0xa0] sm:$0xff]
        %v687 = vld [vmem:[#allocation10 + $0xa8] sm:$0xff]
        %v688 = vld [vmem:[#allocation10 + $0xb0] sm:$0xff]
        %v689 = vld [vmem:[#allocation10 + $0xb8] sm:$0xff]
        %v690 = vld [vmem:[#allocation10 + $0xc0] sm:$0xff]
        %v691 = vld [vmem:[#allocation10 + $0xc8] sm:$0xff]
        %v692 = vld [vmem:[#allocation10 + $0xd0] sm:$0xff]
        %v693 = vld [vmem:[#allocation10 + $0xd8] sm:$0xff]
        %v694 = vld [vmem:[#allocation10 + $0xe0] sm:$0xff]
        %v695 = vld [vmem:[#allocation10 + $0xe8] sm:$0xff]
        %v696 = vld [vmem:[#allocation10 + $0xf0] sm:$0xff]
        %v697 = vld [vmem:[#allocation10 + $0xf8] sm:$0xff]
        %v698 = vld [vmem:[#allocation10 + $0x100] sm:$0xff]
        %v699 = vld [vmem:[#allocation10 + $0x108] sm:$0xff]
        %v700 = vld [vmem:[#allocation10 + $0x110] sm:$0xff]
        %v701 = vld [vmem:[#allocation10 + $0x118] sm:$0xff]
        %v702 = vld [vmem:[#allocation10 + $0x120] sm:$0xff]
        %v703 = vld [vmem:[#allocation10 + $0x128] sm:$0xff]
        %v704 = vld [vmem:[#allocation10 + $0x130] sm:$0xff]
        %v705 = vld [vmem:[#allocation10 + $0x138] sm:$0xff]
        %v706 = vld [vmem:[#allocation10 + $0x140] sm:$0xff]
        %v707 = vld [vmem:[#allocation10 + $0x148] sm:$0xff]
        %v708 = vld [vmem:[#allocation10 + $0x150] sm:$0xff]
        %v709 = vld [vmem:[#allocation10 + $0x158] sm:$0xff]
        %v710 = vld [vmem:[#allocation10 + $0x160] sm:$0xff]
        %v711 = vld [vmem:[#allocation10 + $0x168] sm:$0xff]
        %v712 = vld [vmem:[#allocation10 + $0x170] sm:$0xff]
        %v713 = vld [vmem:[#allocation10 + $0x178] sm:$0xff]
        %v714 = vld [vmem:[#allocation10 + $0x180] sm:$0xff]
        %v715 = vld [vmem:[#allocation10 + $0x188] sm:$0xff]
        %v716 = vld [vmem:[#allocation10 + $0x190] sm:$0xff]
        %v717 = vld [vmem:[#allocation10 + $0x198] sm:$0xff]
        %v718 = vld [vmem:[#allocation10 + $0x1a0] sm:$0xff]
        %v719 = vld [vmem:[#allocation10 + $0x1a8] sm:$0xff]
        %v720 = vld [vmem:[#allocation10 + $0x1b0] sm:$0xff]
        %v721 = vld [vmem:[#allocation10 + $0x1b8] sm:$0xff]
        %v722 = vld [vmem:[#allocation10 + $0x1c0] sm:$0xff]
        %v723 = vld [vmem:[#allocation10 + $0x1c8] sm:$0xff]
        %v724 = vld [vmem:[#allocation10 + $0x1d0] sm:$0xff]
        %v725 = vld [vmem:[#allocation10 + $0x1d8] sm:$0xff]
        %v726 = vld [vmem:[#allocation10 + $0x1e0] sm:$0xff]
        %v727 = vld [vmem:[#allocation10 + $0x1e8] sm:$0xff]
        %v728 = vld [vmem:[#allocation10 + $0x1f0] sm:$0xff]
        %v729 = vld [vmem:[#allocation10 + $0x1f8] sm:$0xff]
        %v730 = vld [vmem:[#allocation10 + $0x200] sm:$0xff]
        %v731 = vld [vmem:[#allocation10 + $0x208] sm:$0xff]
        %v732 = vld [vmem:[#allocation10 + $0x210] sm:$0xff]
        %v733 = vld [vmem:[#allocation10 + $0x218] sm:$0xff]
        %v734 = vld [vmem:[#allocation10 + $0x220] sm:$0xff]
        %v735 = vld [vmem:[#allocation10 + $0x228] sm:$0xff]
        %v736 = vld [vmem:[#allocation10 + $0x230] sm:$0xff]
        %v737 = vld [vmem:[#allocation10 + $0x238] sm:$0xff]
        %v738 = vld [vmem:[#allocation10 + $0x240] sm:$0xff]
        %v739 = vld [vmem:[#allocation10 + $0x248] sm:$0xff]
        %v740 = vld [vmem:[#allocation10 + $0x250] sm:$0xff]
        %v741 = vld [vmem:[#allocation10 + $0x258] sm:$0xff]
        %v742 = vld [vmem:[#allocation10 + $0x260] sm:$0xff]
        %v743 = vld [vmem:[#allocation10 + $0x268] sm:$0xff]
        %v744 = vld [vmem:[#allocation10 + $0x270] sm:$0xff]
        %v745 = vld [vmem:[#allocation10 + $0x278] sm:$0xff]
        %v746 = vld [vmem:[#allocation10 + $0x280] sm:$0xff]
        %v747 = vld [vmem:[#allocation10 + $0x288] sm:$0xff]
        %v748 = vld [vmem:[#allocation10 + $0x290] sm:$0xff]
        %v749 = vld [vmem:[#allocation10 + $0x298] sm:$0xff]
        %v750 = vld [vmem:[#allocation10 + $0x2a0] sm:$0xff]
        %v751 = vld [vmem:[#allocation10 + $0x2a8] sm:$0xff]
        %v752 = vld [vmem:[#allocation10 + $0x2b0] sm:$0xff]
        %v753 = vld [vmem:[#allocation10 + $0x2b8] sm:$0xff]
        %v754 = vld [vmem:[#allocation10 + $0x2c0] sm:$0xff]
        %v755 = vld [vmem:[#allocation10 + $0x2c8] sm:$0xff]
        %v756 = vld [vmem:[#allocation10 + $0x2d0] sm:$0xff]
        %v757 = vld [vmem:[#allocation10 + $0x2d8] sm:$0xff]
        %v758 = vld [vmem:[#allocation10 + $0x2e0] sm:$0xff]
        %v759 = vld [vmem:[#allocation10 + $0x2e8] sm:$0xff]
        %v760 = vld [vmem:[#allocation10 + $0x2f0] sm:$0xff]
        %v761 = vld [vmem:[#allocation10 + $0x2f8] sm:$0xff]
        %v762 = vld [vmem:[#allocation10 + $0x300] sm:$0xff]
        %v763 = vld [vmem:[#allocation10 + $0x308] sm:$0xff]
        %v764 = vld [vmem:[#allocation10 + $0x310] sm:$0xff]
        %v765 = vld [vmem:[#allocation10 + $0x318] sm:$0xff]
        %v766 = vld [vmem:[#allocation10 + $0x320] sm:$0xff]
        %v767 = vld [vmem:[#allocation10 + $0x328] sm:$0xff]
        %v768 = vld [vmem:[#allocation10 + $0x330] sm:$0xff]
        %v769 = vld [vmem:[#allocation10 + $0x338] sm:$0xff]
        %v770 = vld [vmem:[#allocation10 + $0x340] sm:$0xff]
        %v771 = vld [vmem:[#allocation10 + $0x348] sm:$0xff]
        %v772 = vld [vmem:[#allocation10 + $0x350] sm:$0xff]
        %v773 = vld [vmem:[#allocation10 + $0x358] sm:$0xff]
        %v774 = vld [vmem:[#allocation10 + $0x360] sm:$0xff]
        %v775 = vld [vmem:[#allocation10 + $0x368] sm:$0xff]
        %v776 = vld [vmem:[#allocation10 + $0x370] sm:$0xff]
        %v777 = vld [vmem:[#allocation10 + $0x378] sm:$0xff]
        %v778 = vld [vmem:[#allocation10 + $0x380] sm:$0xff]
        %v779 = vld [vmem:[#allocation10 + $0x388] sm:$0xff]
        %v780 = vld [vmem:[#allocation10 + $0x390] sm:$0xff]
        %v781 = vld [vmem:[#allocation10 + $0x398] sm:$0xff]
        %v782 = vld [vmem:[#allocation10 + $0x3a0] sm:$0xff]
        %v783 = vld [vmem:[#allocation10 + $0x3a8] sm:$0xff]
        %v784 = vld [vmem:[#allocation10 + $0x3b0] sm:$0xff]
        %v785 = vld [vmem:[#allocation10 + $0x3b8] sm:$0xff]
        %v786 = vld [vmem:[#allocation10 + $0x3c0] sm:$0xff]
        %v787 = vld [vmem:[#allocation10 + $0x3c8] sm:$0xff]
        %v788 = vld [vmem:[#allocation10 + $0x3d0] sm:$0xff]
        %v789 = vld [vmem:[#allocation10 + $0x3d8] sm:$0xff]
        %v790 = vld [vmem:[#allocation10 + $0x3e0] sm:$0xff]
        %v791 = vld [vmem:[#allocation10 + $0x3e8] sm:$0xff]
        %v792 = vld [vmem:[#allocation10 + $0x3f0] sm:$0xff]
        %v793 = vld [vmem:[#allocation10 + $0x3f8] sm:$0xff]
        %v794 = vld [vmem:[#allocation10 + $0x400] sm:$0xff]
        %v795 = vld [vmem:[#allocation10 + $0x408] sm:$0xff]
        %v796 = vld [vmem:[#allocation10 + $0x410] sm:$0xff]
        %v797 = vld [vmem:[#allocation10 + $0x418] sm:$0xff]
        %v798 = vld [vmem:[#allocation10 + $0x420] sm:$0xff]
        %v799 = vld [vmem:[#allocation10 + $0x428] sm:$0xff]
        %v800 = vld [vmem:[#allocation10 + $0x430] sm:$0xff]
        %v801 = vld [vmem:[#allocation10 + $0x438] sm:$0xff]
        %v802 = vld [vmem:[#allocation10 + $0x440] sm:$0xff]
        %v803 = vld [vmem:[#allocation10 + $0x448] sm:$0xff]
        %v804 = vld [vmem:[#allocation10 + $0x450] sm:$0xff]
        %v805 = vld [vmem:[#allocation10 + $0x458] sm:$0xff]
        %v806 = vld [vmem:[#allocation10 + $0x460] sm:$0xff]
        %v807 = vld [vmem:[#allocation10 + $0x468] sm:$0xff]
        %v808 = vld [vmem:[#allocation10 + $0x470] sm:$0xff]
        %v809 = vld [vmem:[#allocation10 + $0x478] sm:$0xff]
        %v810 = vld [vmem:[#allocation10 + $0x480] sm:$0xff]
        %v811 = vld [vmem:[#allocation10 + $0x488] sm:$0xff]
        %v812 = vld [vmem:[#allocation10 + $0x490] sm:$0xff]
        %v813 = vld [vmem:[#allocation10 + $0x498] sm:$0xff]
        %v814 = vld [vmem:[#allocation10 + $0x4a0] sm:$0xff]
        %v815 = vld [vmem:[#allocation10 + $0x4a8] sm:$0xff]
        %v816 = vld [vmem:[#allocation10 + $0x4b0] sm:$0xff]
        %v817 = vld [vmem:[#allocation10 + $0x4b8] sm:$0xff]
        %v818 = vld [vmem:[#allocation10 + $0x4c0] sm:$0xff]
        %v819 = vld [vmem:[#allocation10 + $0x4c8] sm:$0xff]
        %v820 = vld [vmem:[#allocation10 + $0x4d0] sm:$0xff]
        %v821 = vld [vmem:[#allocation10 + $0x4d8] sm:$0xff]
        %v822 = vld [vmem:[#allocation10 + $0x4e0] sm:$0xff]
        %v823 = vld [vmem:[#allocation10 + $0x4e8] sm:$0xff]
        %v824 = vld [vmem:[#allocation10 + $0x4f0] sm:$0xff]
        %v825 = vld [vmem:[#allocation10 + $0x4f8] sm:$0xff]
        %v826 = vld [vmem:[#allocation10 + $0x500] sm:$0xff]
        %v827 = vld [vmem:[#allocation10 + $0x508] sm:$0xff]
        %v828 = vld [vmem:[#allocation10 + $0x510] sm:$0xff]
        %v829 = vld [vmem:[#allocation10 + $0x518] sm:$0xff]
        %v830 = vld [vmem:[#allocation10 + $0x520] sm:$0xff]
        %v831 = vld [vmem:[#allocation10 + $0x528] sm:$0xff]
        %v832 = vld [vmem:[#allocation10 + $0x530] sm:$0xff]
        %v833 = vld [vmem:[#allocation10 + $0x538] sm:$0xff]
        %v834 = vld [vmem:[#allocation10 + $0x540] sm:$0xff]
        %v835 = vld [vmem:[#allocation10 + $0x548] sm:$0xff]
        %v836 = vld [vmem:[#allocation10 + $0x550] sm:$0xff]
        %v837 = vld [vmem:[#allocation10 + $0x558] sm:$0xff]
        %v838 = vld [vmem:[#allocation10 + $0x560] sm:$0xff]
        %v839 = vld [vmem:[#allocation10 + $0x568] sm:$0xff]
        %v840 = vld [vmem:[#allocation10 + $0x570] sm:$0xff]
        %v841 = vld [vmem:[#allocation10 + $0x578] sm:$0xff]
        %v842 = vld [vmem:[#allocation10 + $0x580] sm:$0xff]
        %v843 = vld [vmem:[#allocation10 + $0x588] sm:$0xff]
        %v844 = vld [vmem:[#allocation10 + $0x590] sm:$0xff]
        %v845 = vld [vmem:[#allocation10 + $0x598] sm:$0xff]
        %v846 = vld [vmem:[#allocation10 + $0x5a0] sm:$0xff]
        %v847 = vld [vmem:[#allocation10 + $0x5a8] sm:$0xff]
        %v848 = vld [vmem:[#allocation10 + $0x5b0] sm:$0xff]
        %v849 = vld [vmem:[#allocation10 + $0x5b8] sm:$0xff]
        %v850 = vld [vmem:[#allocation10 + $0x5c0] sm:$0xff]
        %v851 = vld [vmem:[#allocation10 + $0x5c8] sm:$0xff]
        %v852 = vld [vmem:[#allocation10 + $0x5d0] sm:$0xff]
        %v853 = vld [vmem:[#allocation10 + $0x5d8] sm:$0xff]
        %v854 = vld [vmem:[#allocation10 + $0x5e0] sm:$0xff]
        %v855 = vld [vmem:[#allocation10 + $0x5e8] sm:$0xff]
        %v856 = vld [vmem:[#allocation10 + $0x5f0] sm:$0xff]
        %v857 = vld [vmem:[#allocation10 + $0x5f8] sm:$0xff]
        %v858 = vld [vmem:[#allocation10 + $0x600] sm:$0xff]
        %v859 = vld [vmem:[#allocation10 + $0x608] sm:$0xff]
        %v860 = vld [vmem:[#allocation10 + $0x610] sm:$0xff]
        %v861 = vld [vmem:[#allocation10 + $0x618] sm:$0xff]
        %v862 = vld [vmem:[#allocation10 + $0x620] sm:$0xff]
        %v863 = vld [vmem:[#allocation10 + $0x628] sm:$0xff]
        %v864 = vld [vmem:[#allocation10 + $0x630] sm:$0xff]
        %v865 = vld [vmem:[#allocation10 + $0x638] sm:$0xff]
        %v866 = vld [vmem:[#allocation10 + $0x640] sm:$0xff]
        %v867 = vld [vmem:[#allocation10 + $0x648] sm:$0xff]
        %v868 = vld [vmem:[#allocation10 + $0x650] sm:$0xff]
        %v869 = vld [vmem:[#allocation10 + $0x658] sm:$0xff]
        %v870 = vld [vmem:[#allocation10 + $0x660] sm:$0xff]
        %v871 = vld [vmem:[#allocation10 + $0x668] sm:$0xff]
        %v872 = vld [vmem:[#allocation10 + $0x670] sm:$0xff]
        %v873 = vld [vmem:[#allocation10 + $0x678] sm:$0xff]
        %v874 = vld [vmem:[#allocation10 + $0x680] sm:$0xff]
        %v875 = vld [vmem:[#allocation10 + $0x688] sm:$0xff]
        %v876 = vld [vmem:[#allocation10 + $0x690] sm:$0xff]
        %v877 = vld [vmem:[#allocation10 + $0x698] sm:$0xff]
        %v878 = vld [vmem:[#allocation10 + $0x6a0] sm:$0xff]
        %v879 = vld [vmem:[#allocation10 + $0x6a8] sm:$0xff]
        %v880 = vld [vmem:[#allocation10 + $0x6b0] sm:$0xff]
        %v881 = vld [vmem:[#allocation10 + $0x6b8] sm:$0xff]
        %v882 = vld [vmem:[#allocation10 + $0x6c0] sm:$0xff]
        %v883 = vld [vmem:[#allocation10 + $0x6c8] sm:$0xff]
        %v884 = vld [vmem:[#allocation10 + $0x6d0] sm:$0xff]
        %v885 = vld [vmem:[#allocation10 + $0x6d8] sm:$0xff]
        %v886 = vld [vmem:[#allocation10 + $0x6e0] sm:$0xff]
        %v887 = vld [vmem:[#allocation10 + $0x6e8] sm:$0xff]
        %v888 = vld [vmem:[#allocation10 + $0x6f0] sm:$0xff]
        %v889 = vld [vmem:[#allocation10 + $0x6f8] sm:$0xff]
        %v890 = vld [vmem:[#allocation10 + $0x700] sm:$0xff]
        %v891 = vld [vmem:[#allocation10 + $0x708] sm:$0xff]
        %v892 = vld [vmem:[#allocation10 + $0x710] sm:$0xff]
        %v893 = vld [vmem:[#allocation10 + $0x718] sm:$0xff]
        %v894 = vld [vmem:[#allocation10 + $0x720] sm:$0xff]
        %v895 = vld [vmem:[#allocation10 + $0x728] sm:$0xff]
        %v896 = vld [vmem:[#allocation10 + $0x730] sm:$0xff]
        %v897 = vld [vmem:[#allocation10 + $0x738] sm:$0xff]
        %v898 = vld [vmem:[#allocation10 + $0x740] sm:$0xff]
        %v899 = vld [vmem:[#allocation10 + $0x748] sm:$0xff]
        %v900 = vld [vmem:[#allocation10 + $0x750] sm:$0xff]
        %v901 = vld [vmem:[#allocation10 + $0x758] sm:$0xff]
        %v902 = vld [vmem:[#allocation10 + $0x760] sm:$0xff]
        %v903 = vld [vmem:[#allocation10 + $0x768] sm:$0xff]
        %v904 = vld [vmem:[#allocation10 + $0x770] sm:$0xff]
        %v905 = vld [vmem:[#allocation10 + $0x778] sm:$0xff]
        %v906 = vld [vmem:[#allocation10 + $0x780] sm:$0xff]
        %v907 = vld [vmem:[#allocation10 + $0x788] sm:$0xff]
        %v908 = vld [vmem:[#allocation10 + $0x790] sm:$0xff]
        %v909 = vld [vmem:[#allocation10 + $0x798] sm:$0xff]
        %v910 = vld [vmem:[#allocation10 + $0x7a0] sm:$0xff]
        %v911 = vld [vmem:[#allocation10 + $0x7a8] sm:$0xff]
        %v912 = vld [vmem:[#allocation10 + $0x7b0] sm:$0xff]
        %v913 = vld [vmem:[#allocation10 + $0x7b8] sm:$0xff]
        %v914 = vld [vmem:[#allocation10 + $0x7c0] sm:$0xff]
        %v915 = vld [vmem:[#allocation10 + $0x7c8] sm:$0xff]
        %v916 = vld [vmem:[#allocation10 + $0x7d0] sm:$0xff]
        %v917 = vld [vmem:[#allocation10 + $0x7d8] sm:$0xff]
        %v918 = vld [vmem:[#allocation10 + $0x7e0] sm:$0xff]
        %v919 = vld [vmem:[#allocation10 + $0x7e8] sm:$0xff]
        %v920 = vld [vmem:[#allocation10 + $0x7f0] sm:$0xff]
        %v921 = vld [vmem:[#allocation10 + $0x7f8] sm:$0xff]
        %v922 = vld [vmem:[#allocation10 + $0x800] sm:$0xff]
        %v923 = vld [vmem:[#allocation10 + $0x808] sm:$0xff]
        %v924 = vld [vmem:[#allocation10 + $0x810] sm:$0xff]
        %v925 = vld [vmem:[#allocation10 + $0x818] sm:$0xff]
        %v926 = vld [vmem:[#allocation10 + $0x820] sm:$0xff]
        %v927 = vld [vmem:[#allocation10 + $0x828] sm:$0xff]
        %v928 = vld [vmem:[#allocation10 + $0x830] sm:$0xff]
        %v929 = vld [vmem:[#allocation10 + $0x838] sm:$0xff]
        %v930 = vld [vmem:[#allocation10 + $0x840] sm:$0xff]
        %v931 = vld [vmem:[#allocation10 + $0x848] sm:$0xff]
        %v932 = vld [vmem:[#allocation10 + $0x850] sm:$0xff]
        %v933 = vld [vmem:[#allocation10 + $0x858] sm:$0xff]
        %v934 = vld [vmem:[#allocation10 + $0x860] sm:$0xff]
        %v935 = vld [vmem:[#allocation10 + $0x868] sm:$0xff]
        %v936 = vld [vmem:[#allocation10 + $0x870] sm:$0xff]
        %v937 = vld [vmem:[#allocation10 + $0x878] sm:$0xff]
        %v938 = vld [vmem:[#allocation10 + $0x880] sm:$0xff]
        %v939 = vld [vmem:[#allocation10 + $0x888] sm:$0xff]
        %v940 = vld [vmem:[#allocation10 + $0x890] sm:$0xff]
        %v941 = vld [vmem:[#allocation10 + $0x898] sm:$0xff]
        %v942 = vld [vmem:[#allocation10 + $0x8a0] sm:$0xff]
        %v943 = vld [vmem:[#allocation10 + $0x8a8] sm:$0xff]
        %v944 = vld [vmem:[#allocation10 + $0x8b0] sm:$0xff]
        %v945 = vld [vmem:[#allocation10 + $0x8b8] sm:$0xff]
        %v946 = vld [vmem:[#allocation10 + $0x8c0] sm:$0xff]
        %v947 = vld [vmem:[#allocation10 + $0x8c8] sm:$0xff]
        %v948 = vld [vmem:[#allocation10 + $0x8d0] sm:$0xff]
        %v949 = vld [vmem:[#allocation10 + $0x8d8] sm:$0xff]
        %v950 = vld [vmem:[#allocation10 + $0x8e0] sm:$0xff]
        %v951 = vld [vmem:[#allocation10 + $0x8e8] sm:$0xff]
        %v952 = vld [vmem:[#allocation10 + $0x8f0] sm:$0xff]
        %v953 = vld [vmem:[#allocation10 + $0x8f8] sm:$0xff]
        %v954 = vld [vmem:[#allocation11] sm:$0xff]
        %v955 = vld [vmem:[#allocation11 + $0x8] sm:$0xff]
        %v956 = vld [vmem:[#allocation11 + $0x10] sm:$0xff]
        %v957 = vld [vmem:[#allocation11 + $0x18] sm:$0xff]
        %v958 = vld [vmem:[#allocation11 + $0x20] sm:$0xff]
        %v959 = vld [vmem:[#allocation11 + $0x28] sm:$0xff]
        %v960 = vld [vmem:[#allocation11 + $0x30] sm:$0xff]
        %v961 = vld [vmem:[#allocation11 + $0x38] sm:$0xff]
        %v962 = vld [vmem:[#allocation11 + $0x40] sm:$0xff]
        %v963 = vld [vmem:[#allocation11 + $0x48] sm:$0xff]
        %v964 = vld [vmem:[#allocation11 + $0x50] sm:$0xff]
        %v965 = vld [vmem:[#allocation11 + $0x58] sm:$0xff]
        %v966 = vld [vmem:[#allocation11 + $0x60] sm:$0xff]
        %v967 = vld [vmem:[#allocation11 + $0x68] sm:$0xff]
        %v968 = vld [vmem:[#allocation11 + $0x70] sm:$0xff]
        %v969 = vld [vmem:[#allocation11 + $0x78] sm:$0xff]
        %v970 = vld [vmem:[#allocation11 + $0x80] sm:$0xff]
        %v971 = vld [vmem:[#allocation11 + $0x88] sm:$0xff]
        %v972 = vld [vmem:[#allocation11 + $0x90] sm:$0xff]
        %v973 = vld [vmem:[#allocation11 + $0x98] sm:$0xff]
        %v974 = vld [vmem:[#allocation11 + $0xa0] sm:$0xff]
        %v975 = vld [vmem:[#allocation11 + $0xa8] sm:$0xff]
        %v976 = vld [vmem:[#allocation11 + $0xb0] sm:$0xff]
        %v977 = vld [vmem:[#allocation11 + $0xb8] sm:$0xff]
        %v978 = vld [vmem:[#allocation11 + $0xc0] sm:$0xff]
        %v979 = vld [vmem:[#allocation11 + $0xc8] sm:$0xff]
        %v980 = vld [vmem:[#allocation11 + $0xd0] sm:$0xff]
        %v981 = vld [vmem:[#allocation11 + $0xd8] sm:$0xff]
        %v982 = vld [vmem:[#allocation11 + $0xe0] sm:$0xff]
        %v983 = vld [vmem:[#allocation11 + $0xe8] sm:$0xff]
        %v984 = vld [vmem:[#allocation11 + $0xf0] sm:$0xff]
        %v985 = vld [vmem:[#allocation11 + $0xf8] sm:$0xff]
        %v986 = vld [vmem:[#allocation11 + $0x100] sm:$0xff]
        %v987 = vld [vmem:[#allocation11 + $0x108] sm:$0xff]
        %v988 = vld [vmem:[#allocation11 + $0x110] sm:$0xff]
        %v989 = vld [vmem:[#allocation11 + $0x118] sm:$0xff]
        %v990 = vld [vmem:[#allocation11 + $0x120] sm:$0xff]
        %v991 = vld [vmem:[#allocation11 + $0x128] sm:$0xff]
        %v992 = vld [vmem:[#allocation11 + $0x130] sm:$0xff]
        %v993 = vld [vmem:[#allocation11 + $0x138] sm:$0xff]
        %v994 = vld [vmem:[#allocation11 + $0x140] sm:$0xff]
        %v995 = vld [vmem:[#allocation11 + $0x148] sm:$0xff]
        %v996 = vld [vmem:[#allocation11 + $0x150] sm:$0xff]
        %v997 = vld [vmem:[#allocation11 + $0x158] sm:$0xff]
        %v998 = vld [vmem:[#allocation11 + $0x160] sm:$0xff]
        %v999 = vld [vmem:[#allocation11 + $0x168] sm:$0xff]
        %v1000 = vld [vmem:[#allocation11 + $0x170] sm:$0xff]
        %v1001 = vld [vmem:[#allocation11 + $0x178] sm:$0xff]
        %v1002 = vld [vmem:[#allocation11 + $0x180] sm:$0xff]
        %v1003 = vld [vmem:[#allocation11 + $0x188] sm:$0xff]
        %v1004 = vld [vmem:[#allocation11 + $0x190] sm:$0xff]
        %v1005 = vld [vmem:[#allocation11 + $0x198] sm:$0xff]
        %v1006 = vld [vmem:[#allocation11 + $0x1a0] sm:$0xff]
        %v1007 = vld [vmem:[#allocation11 + $0x1a8] sm:$0xff]
        %v1008 = vld [vmem:[#allocation11 + $0x1b0] sm:$0xff]
        %v1009 = vld [vmem:[#allocation11 + $0x1b8] sm:$0xff]
        %v1010 = vld [vmem:[#allocation11 + $0x1c0] sm:$0xff]
        %v1011 = vld [vmem:[#allocation11 + $0x1c8] sm:$0xff]
        %v1012 = vld [vmem:[#allocation11 + $0x1d0] sm:$0xff]
        %v1013 = vld [vmem:[#allocation11 + $0x1d8] sm:$0xff]
        %v1014 = vld [vmem:[#allocation11 + $0x1e0] sm:$0xff]
        %v1015 = vld [vmem:[#allocation11 + $0x1e8] sm:$0xff]
        %v1016 = vld [vmem:[#allocation11 + $0x1f0] sm:$0xff]
        %v1017 = vld [vmem:[#allocation11 + $0x1f8] sm:$0xff]
        %v1018 = vld [vmem:[#allocation11 + $0x200] sm:$0xff]
        %v1019 = vld [vmem:[#allocation11 + $0x208] sm:$0xff]
        %v1020 = vld [vmem:[#allocation11 + $0x210] sm:$0xff]
        %v1021 = vld [vmem:[#allocation11 + $0x218] sm:$0xff]
        %v1022 = vld [vmem:[#allocation11 + $0x220] sm:$0xff]
        %v1023 = vld [vmem:[#allocation11 + $0x228] sm:$0xff]
        %v1024 = vld [vmem:[#allocation11 + $0x230] sm:$0xff]
        %v1025 = vld [vmem:[#allocation11 + $0x238] sm:$0xff]
        %v1026 = vld [vmem:[#allocation11 + $0x240] sm:$0xff]
        %v1027 = vld [vmem:[#allocation11 + $0x248] sm:$0xff]
        %v1028 = vld [vmem:[#allocation11 + $0x250] sm:$0xff]
        %v1029 = vld [vmem:[#allocation11 + $0x258] sm:$0xff]
        %v1030 = vld [vmem:[#allocation11 + $0x260] sm:$0xff]
        %v1031 = vld [vmem:[#allocation11 + $0x268] sm:$0xff]
        %v1032 = vld [vmem:[#allocation11 + $0x270] sm:$0xff]
        %v1033 = vld [vmem:[#allocation11 + $0x278] sm:$0xff]
        %v1034 = vld [vmem:[#allocation11 + $0x280] sm:$0xff]
        %v1035 = vld [vmem:[#allocation11 + $0x288] sm:$0xff]
        %v1036 = vld [vmem:[#allocation11 + $0x290] sm:$0xff]
        %v1037 = vld [vmem:[#allocation11 + $0x298] sm:$0xff]
        %v1038 = vld [vmem:[#allocation11 + $0x2a0] sm:$0xff]
        %v1039 = vld [vmem:[#allocation11 + $0x2a8] sm:$0xff]
        %v1040 = vld [vmem:[#allocation11 + $0x2b0] sm:$0xff]
        %v1041 = vld [vmem:[#allocation11 + $0x2b8] sm:$0xff]
        %v1042 = vld [vmem:[#allocation11 + $0x2c0] sm:$0xff]
        %v1043 = vld [vmem:[#allocation11 + $0x2c8] sm:$0xff]
        %v1044 = vld [vmem:[#allocation11 + $0x2d0] sm:$0xff]
        %v1045 = vld [vmem:[#allocation11 + $0x2d8] sm:$0xff]
        %v1046 = vld [vmem:[#allocation11 + $0x2e0] sm:$0xff]
        %v1047 = vld [vmem:[#allocation11 + $0x2e8] sm:$0xff]
        %v1048 = vld [vmem:[#allocation11 + $0x2f0] sm:$0xff]
        %v1049 = vld [vmem:[#allocation11 + $0x2f8] sm:$0xff]
        %v1050 = vld [vmem:[#allocation11 + $0x300] sm:$0xff]
        %v1051 = vld [vmem:[#allocation11 + $0x308] sm:$0xff]
        %v1052 = vld [vmem:[#allocation11 + $0x310] sm:$0xff]
        %v1053 = vld [vmem:[#allocation11 + $0x318] sm:$0xff]
        %v1054 = vld [vmem:[#allocation11 + $0x320] sm:$0xff]
        %v1055 = vld [vmem:[#allocation11 + $0x328] sm:$0xff]
        %v1056 = vld [vmem:[#allocation11 + $0x330] sm:$0xff]
        %v1057 = vld [vmem:[#allocation11 + $0x338] sm:$0xff]
        %v1058 = vld [vmem:[#allocation11 + $0x340] sm:$0xff]
        %v1059 = vld [vmem:[#allocation11 + $0x348] sm:$0xff]
        %v1060 = vld [vmem:[#allocation11 + $0x350] sm:$0xff]
        %v1061 = vld [vmem:[#allocation11 + $0x358] sm:$0xff]
        %v1062 = vld [vmem:[#allocation11 + $0x360] sm:$0xff]
        %v1063 = vld [vmem:[#allocation11 + $0x368] sm:$0xff]
        %v1064 = vld [vmem:[#allocation11 + $0x370] sm:$0xff]
        %v1065 = vld [vmem:[#allocation11 + $0x378] sm:$0xff]
        %v1066 = vld [vmem:[#allocation11 + $0x380] sm:$0xff]
        %v1067 = vld [vmem:[#allocation11 + $0x388] sm:$0xff]
        %v1068 = vld [vmem:[#allocation11 + $0x390] sm:$0xff]
        %v1069 = vld [vmem:[#allocation11 + $0x398] sm:$0xff]
        %v1070 = vld [vmem:[#allocation11 + $0x3a0] sm:$0xff]
        %v1071 = vld [vmem:[#allocation11 + $0x3a8] sm:$0xff]
        %v1072 = vld [vmem:[#allocation11 + $0x3b0] sm:$0xff]
        %v1073 = vld [vmem:[#allocation11 + $0x3b8] sm:$0xff]
        %v1074 = vld [vmem:[#allocation11 + $0x3c0] sm:$0xff]
        %v1075 = vld [vmem:[#allocation11 + $0x3c8] sm:$0xff]
        %v1076 = vld [vmem:[#allocation11 + $0x3d0] sm:$0xff]
        %v1077 = vld [vmem:[#allocation11 + $0x3d8] sm:$0xff]
        %v1078 = vld [vmem:[#allocation11 + $0x3e0] sm:$0xff]
        %v1079 = vld [vmem:[#allocation11 + $0x3e8] sm:$0xff]
        %v1080 = vld [vmem:[#allocation11 + $0x3f0] sm:$0xff]
        %v1081 = vld [vmem:[#allocation11 + $0x3f8] sm:$0xff]
        %v1082 = vld [vmem:[#allocation11 + $0x400] sm:$0xff]
        %v1083 = vld [vmem:[#allocation11 + $0x408] sm:$0xff]
        %v1084 = vld [vmem:[#allocation11 + $0x410] sm:$0xff]
        %v1085 = vld [vmem:[#allocation11 + $0x418] sm:$0xff]
        %v1086 = vld [vmem:[#allocation11 + $0x420] sm:$0xff]
        %v1087 = vld [vmem:[#allocation11 + $0x428] sm:$0xff]
        %v1088 = vld [vmem:[#allocation11 + $0x430] sm:$0xff]
        %v1089 = vld [vmem:[#allocation11 + $0x438] sm:$0xff]
        %v1090 = vld [vmem:[#allocation11 + $0x440] sm:$0xff]
        %v1091 = vld [vmem:[#allocation11 + $0x448] sm:$0xff]
        %v1092 = vld [vmem:[#allocation11 + $0x450] sm:$0xff]
        %v1093 = vld [vmem:[#allocation11 + $0x458] sm:$0xff]
        %v1094 = vld [vmem:[#allocation11 + $0x460] sm:$0xff]
        %v1095 = vld [vmem:[#allocation11 + $0x468] sm:$0xff]
        %v1096 = vld [vmem:[#allocation11 + $0x470] sm:$0xff]
        %v1097 = vld [vmem:[#allocation11 + $0x478] sm:$0xff]
        %v1098 = vld [vmem:[#allocation11 + $0x480] sm:$0xff]
        %v1099 = vld [vmem:[#allocation11 + $0x488] sm:$0xff]
        %v1100 = vld [vmem:[#allocation11 + $0x490] sm:$0xff]
        %v1101 = vld [vmem:[#allocation11 + $0x498] sm:$0xff]
        %v1102 = vld [vmem:[#allocation11 + $0x4a0] sm:$0xff]
        %v1103 = vld [vmem:[#allocation11 + $0x4a8] sm:$0xff]
        %v1104 = vld [vmem:[#allocation11 + $0x4b0] sm:$0xff]
        %v1105 = vld [vmem:[#allocation11 + $0x4b8] sm:$0xff]
        %v1106 = vld [vmem:[#allocation11 + $0x4c0] sm:$0xff]
        %v1107 = vld [vmem:[#allocation11 + $0x4c8] sm:$0xff]
        %v1108 = vld [vmem:[#allocation11 + $0x4d0] sm:$0xff]
        %v1109 = vld [vmem:[#allocation11 + $0x4d8] sm:$0xff]
        %v1110 = vld [vmem:[#allocation11 + $0x4e0] sm:$0xff]
        %v1111 = vld [vmem:[#allocation11 + $0x4e8] sm:$0xff]
        %v1112 = vld [vmem:[#allocation11 + $0x4f0] sm:$0xff]
        %v1113 = vld [vmem:[#allocation11 + $0x4f8] sm:$0xff]
        %v1114 = vld [vmem:[#allocation11 + $0x500] sm:$0xff]
        %v1115 = vld [vmem:[#allocation11 + $0x508] sm:$0xff]
        %v1116 = vld [vmem:[#allocation11 + $0x510] sm:$0xff]
        %v1117 = vld [vmem:[#allocation11 + $0x518] sm:$0xff]
        %v1118 = vld [vmem:[#allocation11 + $0x520] sm:$0xff]
        %v1119 = vld [vmem:[#allocation11 + $0x528] sm:$0xff]
        %v1120 = vld [vmem:[#allocation11 + $0x530] sm:$0xff]
        %v1121 = vld [vmem:[#allocation11 + $0x538] sm:$0xff]
        %v1122 = vld [vmem:[#allocation11 + $0x540] sm:$0xff]
        %v1123 = vld [vmem:[#allocation11 + $0x548] sm:$0xff]
        %v1124 = vld [vmem:[#allocation11 + $0x550] sm:$0xff]
        %v1125 = vld [vmem:[#allocation11 + $0x558] sm:$0xff]
        %v1126 = vld [vmem:[#allocation11 + $0x560] sm:$0xff]
        %v1127 = vld [vmem:[#allocation11 + $0x568] sm:$0xff]
        %v1128 = vld [vmem:[#allocation11 + $0x570] sm:$0xff]
        %v1129 = vld [vmem:[#allocation11 + $0x578] sm:$0xff]
        %v1130 = vld [vmem:[#allocation11 + $0x580] sm:$0xff]
        %v1131 = vld [vmem:[#allocation11 + $0x588] sm:$0xff]
        %v1132 = vld [vmem:[#allocation11 + $0x590] sm:$0xff]
        %v1133 = vld [vmem:[#allocation11 + $0x598] sm:$0xff]
        %v1134 = vld [vmem:[#allocation11 + $0x5a0] sm:$0xff]
        %v1135 = vld [vmem:[#allocation11 + $0x5a8] sm:$0xff]
        %v1136 = vld [vmem:[#allocation11 + $0x5b0] sm:$0xff]
        %v1137 = vld [vmem:[#allocation11 + $0x5b8] sm:$0xff]
        %v1138 = vld [vmem:[#allocation11 + $0x5c0] sm:$0xff]
        %v1139 = vld [vmem:[#allocation11 + $0x5c8] sm:$0xff]
        %v1140 = vld [vmem:[#allocation11 + $0x5d0] sm:$0xff]
        %v1141 = vld [vmem:[#allocation11 + $0x5d8] sm:$0xff]
        %v1142 = vld [vmem:[#allocation11 + $0x5e0] sm:$0xff]
        %v1143 = vld [vmem:[#allocation11 + $0x5e8] sm:$0xff]
        %v1144 = vld [vmem:[#allocation11 + $0x5f0] sm:$0xff]
        %v1145 = vld [vmem:[#allocation11 + $0x5f8] sm:$0xff]
        %v1146 = vld [vmem:[#allocation11 + $0x600] sm:$0xff]
        %v1147 = vld [vmem:[#allocation11 + $0x608] sm:$0xff]
        %v1148 = vld [vmem:[#allocation11 + $0x610] sm:$0xff]
        %v1149 = vld [vmem:[#allocation11 + $0x618] sm:$0xff]
        %v1150 = vld [vmem:[#allocation11 + $0x620] sm:$0xff]
        %v1151 = vld [vmem:[#allocation11 + $0x628] sm:$0xff]
        %v1152 = vld [vmem:[#allocation11 + $0x630] sm:$0xff]
        %v1153 = vld [vmem:[#allocation11 + $0x638] sm:$0xff]
        %v1154 = vld [vmem:[#allocation11 + $0x640] sm:$0xff]
        %v1155 = vld [vmem:[#allocation11 + $0x648] sm:$0xff]
        %v1156 = vld [vmem:[#allocation11 + $0x650] sm:$0xff]
        %v1157 = vld [vmem:[#allocation11 + $0x658] sm:$0xff]
        %v1158 = vld [vmem:[#allocation11 + $0x660] sm:$0xff]
        %v1159 = vld [vmem:[#allocation11 + $0x668] sm:$0xff]
        %v1160 = vld [vmem:[#allocation11 + $0x670] sm:$0xff]
        %v1161 = vld [vmem:[#allocation11 + $0x678] sm:$0xff]
        %v1162 = vld [vmem:[#allocation11 + $0x680] sm:$0xff]
        %v1163 = vld [vmem:[#allocation11 + $0x688] sm:$0xff]
        %v1164 = vld [vmem:[#allocation11 + $0x690] sm:$0xff]
        %v1165 = vld [vmem:[#allocation11 + $0x698] sm:$0xff]
        %v1166 = vld [vmem:[#allocation11 + $0x6a0] sm:$0xff]
        %v1167 = vld [vmem:[#allocation11 + $0x6a8] sm:$0xff]
        %v1168 = vld [vmem:[#allocation11 + $0x6b0] sm:$0xff]
        %v1169 = vld [vmem:[#allocation11 + $0x6b8] sm:$0xff]
        %v1170 = vld [vmem:[#allocation11 + $0x6c0] sm:$0xff]
        %v1171 = vld [vmem:[#allocation11 + $0x6c8] sm:$0xff]
        %v1172 = vld [vmem:[#allocation11 + $0x6d0] sm:$0xff]
        %v1173 = vld [vmem:[#allocation11 + $0x6d8] sm:$0xff]
        %v1174 = vld [vmem:[#allocation11 + $0x6e0] sm:$0xff]
        %v1175 = vld [vmem:[#allocation11 + $0x6e8] sm:$0xff]
        %v1176 = vld [vmem:[#allocation11 + $0x6f0] sm:$0xff]
        %v1177 = vld [vmem:[#allocation11 + $0x6f8] sm:$0xff]
        %v1178 = vld [vmem:[#allocation11 + $0x700] sm:$0xff]
        %v1179 = vld [vmem:[#allocation11 + $0x708] sm:$0xff]
        %v1180 = vld [vmem:[#allocation11 + $0x710] sm:$0xff]
        %v1181 = vld [vmem:[#allocation11 + $0x718] sm:$0xff]
        %v1182 = vld [vmem:[#allocation11 + $0x720] sm:$0xff]
        %v1183 = vld [vmem:[#allocation11 + $0x728] sm:$0xff]
        %v1184 = vld [vmem:[#allocation11 + $0x730] sm:$0xff]
        %v1185 = vld [vmem:[#allocation11 + $0x738] sm:$0xff]
        %v1186 = vld [vmem:[#allocation11 + $0x740] sm:$0xff]
        %v1187 = vld [vmem:[#allocation11 + $0x748] sm:$0xff]
        %v1188 = vld [vmem:[#allocation11 + $0x750] sm:$0xff]
        %v1189 = vld [vmem:[#allocation11 + $0x758] sm:$0xff]
        %v1190 = vld [vmem:[#allocation11 + $0x760] sm:$0xff]
        %v1191 = vld [vmem:[#allocation11 + $0x768] sm:$0xff]
        %v1192 = vld [vmem:[#allocation11 + $0x770] sm:$0xff]
        %v1193 = vld [vmem:[#allocation11 + $0x778] sm:$0xff]
        %v1194 = vld [vmem:[#allocation11 + $0x780] sm:$0xff]
        %v1195 = vld [vmem:[#allocation11 + $0x788] sm:$0xff]
        %v1196 = vld [vmem:[#allocation11 + $0x790] sm:$0xff]
        %v1197 = vld [vmem:[#allocation11 + $0x798] sm:$0xff]
        %v1198 = vld [vmem:[#allocation11 + $0x7a0] sm:$0xff]
        %v1199 = vld [vmem:[#allocation11 + $0x7a8] sm:$0xff]
        %v1200 = vld [vmem:[#allocation11 + $0x7b0] sm:$0xff]
        %v1201 = vld [vmem:[#allocation11 + $0x7b8] sm:$0xff]
        %v1202 = vld [vmem:[#allocation11 + $0x7c0] sm:$0xff]
        %v1203 = vld [vmem:[#allocation11 + $0x7c8] sm:$0xff]
        %v1204 = vld [vmem:[#allocation11 + $0x7d0] sm:$0xff]
        %v1205 = vld [vmem:[#allocation11 + $0x7d8] sm:$0xff]
        %v1206 = vld [vmem:[#allocation11 + $0x7e0] sm:$0xff]
        %v1207 = vld [vmem:[#allocation11 + $0x7e8] sm:$0xff]
        %v1208 = vld [vmem:[#allocation11 + $0x7f0] sm:$0xff]
        %v1209 = vld [vmem:[#allocation11 + $0x7f8] sm:$0xff]
        %v1210 = vld [vmem:[#allocation11 + $0x800] sm:$0xff]
        %v1211 = vld [vmem:[#allocation11 + $0x808] sm:$0xff]
        %v1212 = vld [vmem:[#allocation11 + $0x810] sm:$0xff]
        %v1213 = vld [vmem:[#allocation11 + $0x818] sm:$0xff]
        %v1214 = vld [vmem:[#allocation11 + $0x820] sm:$0xff]
        %v1215 = vld [vmem:[#allocation11 + $0x828] sm:$0xff]
        %v1216 = vld [vmem:[#allocation11 + $0x830] sm:$0xff]
        %v1217 = vld [vmem:[#allocation11 + $0x838] sm:$0xff]
        %v1218 = vld [vmem:[#allocation11 + $0x840] sm:$0xff]
        %v1219 = vld [vmem:[#allocation11 + $0x848] sm:$0xff]
        %v1220 = vld [vmem:[#allocation11 + $0x850] sm:$0xff]
        %v1221 = vld [vmem:[#allocation11 + $0x858] sm:$0xff]
        %v1222 = vld [vmem:[#allocation11 + $0x860] sm:$0xff]
        %v1223 = vld [vmem:[#allocation11 + $0x868] sm:$0xff]
        %v1224 = vld [vmem:[#allocation11 + $0x870] sm:$0xff]
        %v1225 = vld [vmem:[#allocation11 + $0x878] sm:$0xff]
        %v1226 = vld [vmem:[#allocation11 + $0x880] sm:$0xff]
        %v1227 = vld [vmem:[#allocation11 + $0x888] sm:$0xff]
        %v1228 = vld [vmem:[#allocation11 + $0x890] sm:$0xff]
        %v1229 = vld [vmem:[#allocation11 + $0x898] sm:$0xff]
        %v1230 = vld [vmem:[#allocation11 + $0x8a0] sm:$0xff]
        %v1231 = vld [vmem:[#allocation11 + $0x8a8] sm:$0xff]
        %v1232 = vld [vmem:[#allocation11 + $0x8b0] sm:$0xff]
        %v1233 = vld [vmem:[#allocation11 + $0x8b8] sm:$0xff]
        %v1234 = vld [vmem:[#allocation11 + $0x8c0] sm:$0xff]
        %v1235 = vld [vmem:[#allocation11 + $0x8c8] sm:$0xff]
        %v1236 = vld [vmem:[#allocation11 + $0x8d0] sm:$0xff]
        %v1237 = vld [vmem:[#allocation11 + $0x8d8] sm:$0xff]
        %v1238 = vld [vmem:[#allocation11 + $0x8e0] sm:$0xff]
        %v1239 = vld [vmem:[#allocation11 + $0x8e8] sm:$0xff]
        %v1240 = vld [vmem:[#allocation11 + $0x8f0] sm:$0xff]
        %v1241 = vld [vmem:[#allocation11 + $0x8f8] sm:$0xff]
        %v1242 = vld [vmem:[#allocation11 + $0x900] sm:$0xff]
        %v1243 = vld [vmem:[#allocation11 + $0x908] sm:$0xff]
        %v1244 = vld [vmem:[#allocation11 + $0x910] sm:$0xff]
        %v1245 = vld [vmem:[#allocation11 + $0x918] sm:$0xff]
        %v1246 = vld [vmem:[#allocation11 + $0x920] sm:$0xff]
        %v1247 = vld [vmem:[#allocation11 + $0x928] sm:$0xff]
        %v1248 = vld [vmem:[#allocation11 + $0x930] sm:$0xff]
        %v1249 = vld [vmem:[#allocation11 + $0x938] sm:$0xff]
        %v1250 = vld [vmem:[#allocation11 + $0x940] sm:$0xff]
        %v1251 = vld [vmem:[#allocation11 + $0x948] sm:$0xff]
        %v1252 = vld [vmem:[#allocation11 + $0x950] sm:$0xff]
        %v1253 = vld [vmem:[#allocation11 + $0x958] sm:$0xff]
        %v1254 = vld [vmem:[#allocation11 + $0x960] sm:$0x33]
        %v1255 = vld [vmem:[#allocation11 + $0x968] sm:$0x33]
        %v1256 = vld [vmem:[#allocation11 + $0x970] sm:$0x33]
        %v1257 = vld [vmem:[#allocation11 + $0x978] sm:$0x33]
        %v1258 = vld [vmem:[#allocation11 + $0x980] sm:$0x33]
        %v1259 = vld [vmem:[#allocation11 + $0x988] sm:$0x33]
        %v1260 = vld [vmem:[#allocation13] sm:$0xff]
        %v1261 = vld [vmem:[#allocation13 + $0x8] sm:$0xf]
        %v1262 = vld [vmem:[#allocation14] sm:$0xff]
        %v1263 = vld [vmem:[#allocation14 + $0x8] sm:$0xf]
        %v1264 = vld [vmem:[#allocation16] sm:$0xf]
        %v1265 = vld [vmem:[#allocation16 + $0x4] sm:$0xf]
        %v1266 = vld [vmem:[#allocation16 + $0x8] sm:$0xf]
        %v1267 = vld [vmem:[#allocation16 + $0xc] sm:$0xf]
        %v1268 = vld [vmem:[#allocation16 + $0x10] sm:$0xf]
        %v1269 = vld [vmem:[#allocation16 + $0x14] sm:$0xf]
        %v1270 = vld [vmem:[#allocation16 + $0x18] sm:$0xf]
        %v1271 = vld [vmem:[#allocation16 + $0x1c] sm:$0xf]
        %v1272 = vld [vmem:[#allocation16 + $0x20] sm:$0xf]
        %v1273 = vld [vmem:[#allocation16 + $0x24] sm:$0xf]
        %v1274 = vld [vmem:[#allocation16 + $0x28] sm:$0xf]
        %v1275 = vld [vmem:[#allocation16 + $0x2c] sm:$0xf]
        %v1276 = vld [vmem:[#allocation16 + $0x30] sm:$0xf]
        %v1277 = vld [vmem:[#allocation16 + $0x34] sm:$0xf]
        %v1278 = vld [vmem:[#allocation16 + $0x38] sm:$0xf]
        %v1279 = vld [vmem:[#allocation16 + $0x3c] sm:$0xf]
        %v1280 = vld [vmem:[#allocation16 + $0x40] sm:$0xf]
        %v1281 = vld [vmem:[#allocation16 + $0x44] sm:$0xf]
        %v1282 = vld [vmem:[#allocation16 + $0x48] sm:$0xf]
        %v1283 = vld [vmem:[#allocation16 + $0x4c] sm:$0xf]
        %v1284 = vld [vmem:[#allocation16 + $0x50] sm:$0xf]
        %v1285 = vld [vmem:[#allocation16 + $0x54] sm:$0xf]
        %v1286 = vld [vmem:[#allocation16 + $0x58] sm:$0xf]
        %v1287 = vld [vmem:[#allocation16 + $0x5c] sm:$0xf]
        %v1288 = vld [vmem:[#allocation16 + $0x60] sm:$0xf]
        %v1289 = vld [vmem:[#allocation16 + $0x64] sm:$0xf]
        %v1290 = vld [vmem:[#allocation16 + $0x68] sm:$0xf]
        %v1291 = vld [vmem:[#allocation16 + $0x6c] sm:$0xf]
        %v1292 = vld [vmem:[#allocation16 + $0x70] sm:$0xf]
        %v1293 = vld [vmem:[#allocation16 + $0x74] sm:$0xf]
        %v1294 = vld [vmem:[#allocation16 + $0x78] sm:$0xf]
        %v1295 = vld [vmem:[#allocation16 + $0x7c] sm:$0xf]
        %v1296 = vld [vmem:[#allocation16 + $0x80] sm:$0xf]
        %v1297 = vld [vmem:[#allocation16 + $0x84] sm:$0xf]
        %v1298 = vld [vmem:[#allocation16 + $0x88] sm:$0xf]
        %v1299 = vld [vmem:[#allocation16 + $0x8c] sm:$0xf]
        %v1300 = vld [vmem:[#allocation16 + $0x90] sm:$0xf]
        %v1301 = vld [vmem:[#allocation16 + $0x94] sm:$0xf]
        %v1302 = vld [vmem:[#allocation16 + $0x98] sm:$0xf]
        %v1303 = vld [vmem:[#allocation16 + $0x9c] sm:$0xf]
        %v1304 = vld [vmem:[#allocation16 + $0xa0] sm:$0xf]
        %v1305 = vld [vmem:[#allocation16 + $0xa4] sm:$0xf]
        %v1306 = vld [vmem:[#allocation16 + $0xa8] sm:$0xf]
        %v1307 = vld [vmem:[#allocation16 + $0xac] sm:$0xf]
        %v1308 = vld [vmem:[#allocation16 + $0xb0] sm:$0xf]
        %v1309 = vld [vmem:[#allocation16 + $0xb4] sm:$0xf]
        %v1310 = vld [vmem:[#allocation16 + $0xb8] sm:$0xf]
        %v1311 = vld [vmem:[#allocation16 + $0xbc] sm:$0xf]
        %v1312 = vld [vmem:[#allocation16 + $0xc0] sm:$0xf]
        %v1313 = vld [vmem:[#allocation16 + $0xc4] sm:$0xf]
        %v1314 = vld [vmem:[#allocation16 + $0xc8] sm:$0xf]
        %v1315 = vld [vmem:[#allocation16 + $0xcc] sm:$0xf]
        %v1316 = vld [vmem:[#allocation16 + $0xd0] sm:$0xf]
        %v1317 = vld [vmem:[#allocation16 + $0xd4] sm:$0xf]
        %v1318 = vld [vmem:[#allocation16 + $0xd8] sm:$0xf]
        %v1319 = vld [vmem:[#allocation16 + $0xdc] sm:$0xf]
        %v1320 = vld [vmem:[#allocation16 + $0xe0] sm:$0xf]
        %v1321 = vld [vmem:[#allocation16 + $0xe4] sm:$0xf]
        %v1322 = vld [vmem:[#allocation16 + $0xe8] sm:$0xf]
        %v1323 = vld [vmem:[#allocation16 + $0xec] sm:$0xf]
        %v1324 = vld [vmem:[#allocation16 + $0xf0] sm:$0xf]
        %v1325 = vld [vmem:[#allocation16 + $0xf4] sm:$0xf]
        %v1326 = vld [vmem:[#allocation16 + $0xf8] sm:$0xf]
        %v1327 = vld [vmem:[#allocation16 + $0xfc] sm:$0xf]
        %v1328 = vld [vmem:[#allocation16 + $0x100] sm:$0xf]
        %v1329 = vld [vmem:[#allocation16 + $0x104] sm:$0xf]
        %v1330 = vld [vmem:[#allocation16 + $0x108] sm:$0x3]
        %v1331 = vld [vmem:[#allocation17] sm:$0x1]
        %v1332 = vld [vmem:[%s554] sm:$0xf]
        %v1333 = vld [vmem:[%s664] sm:$0x1]
        %v1334 = vpack.c.bf16 %v1333, %v1333
        %v1431 = vunpack.c.l.b16 %v858
        %v1432 = vunpack.c.h.b16 %v858
        %v1433 = vunpack.c.l.b16 %v859
        %v1434 = vunpack.c.h.b16 %v859
        %v1435 = vunpack.c.l.b16 %v860
        %v1436 = vunpack.c.h.b16 %v860
        %v1437 = vunpack.c.l.b16 %v861
        %v1438 = vunpack.c.h.b16 %v861
        %v1439 = vunpack.c.l.b16 %v862
        %v1440 = vunpack.c.h.b16 %v862
        %v1441 = vunpack.c.l.b16 %v863
        %v1442 = vunpack.c.h.b16 %v863
        %v1443 = vunpack.c.l.b16 %v864
        %v1444 = vunpack.c.h.b16 %v864
        %v1445 = vunpack.c.l.b16 %v865
        %v1446 = vunpack.c.h.b16 %v865
        %v1447 = vunpack.c.l.b16 %v866
        %v1448 = vunpack.c.h.b16 %v866
        %v1449 = vunpack.c.l.b16 %v867
        %v1450 = vunpack.c.h.b16 %v867
        %v1451 = vunpack.c.l.b16 %v868
        %v1452 = vunpack.c.h.b16 %v868
        %v1453 = vunpack.c.l.b16 %v869
        %v1454 = vunpack.c.h.b16 %v869
        %v1455 = vunpack.c.l.b16 %v870
        %v1456 = vunpack.c.h.b16 %v870
        %v1457 = vunpack.c.l.b16 %v871
        %v1458 = vunpack.c.h.b16 %v871
        %v1459 = vunpack.c.l.b16 %v872
        %v1460 = vunpack.c.h.b16 %v872
        %v1461 = vunpack.c.l.b16 %v873
        %v1462 = vunpack.c.h.b16 %v873
        %v1463 = vunpack.c.l.b16 %v874
        %v1464 = vunpack.c.h.b16 %v874
        %v1465 = vunpack.c.l.b16 %v875
        %v1466 = vunpack.c.h.b16 %v875
        %v1467 = vunpack.c.l.b16 %v876
        %v1468 = vunpack.c.h.b16 %v876
        %v1469 = vunpack.c.l.b16 %v877
        %v1470 = vunpack.c.h.b16 %v877
        %v1471 = vunpack.c.l.b16 %v878
        %v1472 = vunpack.c.h.b16 %v878
        %v1473 = vunpack.c.l.b16 %v879
        %v1474 = vunpack.c.h.b16 %v879
        %v1475 = vunpack.c.l.b16 %v880
        %v1476 = vunpack.c.h.b16 %v880
        %v1477 = vunpack.c.l.b16 %v881
        %v1478 = vunpack.c.h.b16 %v881
        %v1479 = vunpack.c.l.b16 %v882
        %v1480 = vunpack.c.h.b16 %v882
        %v1481 = vunpack.c.l.b16 %v883
        %v1482 = vunpack.c.h.b16 %v883
        %v1483 = vunpack.c.l.b16 %v884
        %v1484 = vunpack.c.h.b16 %v884
        %v1485 = vunpack.c.l.b16 %v885
        %v1486 = vunpack.c.h.b16 %v885
        %v1487 = vunpack.c.l.b16 %v886
        %v1488 = vunpack.c.h.b16 %v886
        %v1489 = vunpack.c.l.b16 %v887
        %v1490 = vunpack.c.h.b16 %v887
        %v1491 = vunpack.c.l.b16 %v888
        %v1492 = vunpack.c.h.b16 %v888
        %v1493 = vunpack.c.l.b16 %v889
        %v1494 = vunpack.c.h.b16 %v889
        %v1495 = vunpack.c.l.b16 %v890
        %v1496 = vunpack.c.h.b16 %v890
        %v1497 = vunpack.c.l.b16 %v891
        %v1498 = vunpack.c.h.b16 %v891
        %v1499 = vunpack.c.l.b16 %v892
        %v1500 = vunpack.c.h.b16 %v892
        %v1501 = vunpack.c.l.b16 %v893
        %v1502 = vunpack.c.h.b16 %v893
        %v1503 = vunpack.c.l.b16 %v894
        %v1504 = vunpack.c.h.b16 %v894
        %v1505 = vunpack.c.l.b16 %v895
        %v1506 = vunpack.c.h.b16 %v895
        %v1507 = vunpack.c.l.b16 %v896
        %v1508 = vunpack.c.h.b16 %v896
        %v1509 = vunpack.c.l.b16 %v897
        %v1510 = vunpack.c.h.b16 %v897
        %v1511 = vunpack.c.l.b16 %v898
        %v1512 = vunpack.c.h.b16 %v898
        %v1513 = vunpack.c.l.b16 %v899
        %v1514 = vunpack.c.h.b16 %v899
        %v1515 = vunpack.c.l.b16 %v900
        %v1516 = vunpack.c.h.b16 %v900
        %v1517 = vunpack.c.l.b16 %v901
        %v1518 = vunpack.c.h.b16 %v901
        %v1519 = vunpack.c.l.b16 %v902
        %v1520 = vunpack.c.h.b16 %v902
        %v1521 = vunpack.c.l.b16 %v903
        %v1522 = vunpack.c.h.b16 %v903
        %v1523 = vunpack.c.l.b16 %v904
        %v1524 = vunpack.c.h.b16 %v904
        %v1525 = vunpack.c.l.b16 %v905
        %v1526 = vunpack.c.h.b16 %v905
        %v1527 = vunpack.c.l.b16 %v906
        %v1528 = vunpack.c.h.b16 %v906
        %v1529 = vunpack.c.l.b16 %v907
        %v1530 = vunpack.c.h.b16 %v907
        %v1531 = vunpack.c.l.b16 %v908
        %v1532 = vunpack.c.h.b16 %v908
        %v1533 = vunpack.c.l.b16 %v909
        %v1534 = vunpack.c.h.b16 %v909
        %v1535 = vunpack.c.l.b16 %v910
        %v1536 = vunpack.c.h.b16 %v910
        %v1537 = vunpack.c.l.b16 %v911
        %v1538 = vunpack.c.h.b16 %v911
        %v1539 = vunpack.c.l.b16 %v912
        %v1540 = vunpack.c.h.b16 %v912
        %v1541 = vunpack.c.l.b16 %v913
        %v1542 = vunpack.c.h.b16 %v913
        %v1543 = vunpack.c.l.b16 %v914
        %v1544 = vunpack.c.h.b16 %v914
        %v1545 = vunpack.c.l.b16 %v915
        %v1546 = vunpack.c.h.b16 %v915
        %v1547 = vunpack.c.l.b16 %v916
        %v1548 = vunpack.c.h.b16 %v916
        %v1549 = vunpack.c.l.b16 %v917
        %v1550 = vunpack.c.h.b16 %v917
        %v1551 = vunpack.c.l.b16 %v918
        %v1552 = vunpack.c.h.b16 %v918
        %v1553 = vunpack.c.l.b16 %v919
        %v1554 = vunpack.c.h.b16 %v919
        %v1555 = vunpack.c.l.b16 %v920
        %v1556 = vunpack.c.h.b16 %v920
        %v1557 = vunpack.c.l.b16 %v921
        %v1558 = vunpack.c.h.b16 %v921
        %v1559 = vunpack.c.l.b16 %v922
        %v1560 = vunpack.c.h.b16 %v922
        %v1561 = vunpack.c.l.b16 %v923
        %v1562 = vunpack.c.h.b16 %v923
        %v1563 = vunpack.c.l.b16 %v924
        %v1564 = vunpack.c.h.b16 %v924
        %v1565 = vunpack.c.l.b16 %v925
        %v1566 = vunpack.c.h.b16 %v925
        %v1567 = vunpack.c.l.b16 %v926
        %v1568 = vunpack.c.h.b16 %v926
        %v1569 = vunpack.c.l.b16 %v927
        %v1570 = vunpack.c.h.b16 %v927
        %v1571 = vunpack.c.l.b16 %v928
        %v1572 = vunpack.c.h.b16 %v928
        %v1573 = vunpack.c.l.b16 %v929
        %v1574 = vunpack.c.h.b16 %v929
        %v1575 = vunpack.c.l.b16 %v930
        %v1576 = vunpack.c.h.b16 %v930
        %v1577 = vunpack.c.l.b16 %v931
        %v1578 = vunpack.c.h.b16 %v931
        %v1579 = vunpack.c.l.b16 %v932
        %v1580 = vunpack.c.h.b16 %v932
        %v1581 = vunpack.c.l.b16 %v933
        %v1582 = vunpack.c.h.b16 %v933
        %v1583 = vunpack.c.l.b16 %v934
        %v1584 = vunpack.c.h.b16 %v934
        %v1585 = vunpack.c.l.b16 %v935
        %v1586 = vunpack.c.h.b16 %v935
        %v1587 = vunpack.c.l.b16 %v936
        %v1588 = vunpack.c.h.b16 %v936
        %v1589 = vunpack.c.l.b16 %v937
        %v1590 = vunpack.c.h.b16 %v937
        %v1591 = vunpack.c.l.b16 %v938
        %v1592 = vunpack.c.h.b16 %v938
        %v1593 = vunpack.c.l.b16 %v939
        %v1594 = vunpack.c.h.b16 %v939
        %v1595 = vunpack.c.l.b16 %v940
        %v1596 = vunpack.c.h.b16 %v940
        %v1597 = vunpack.c.l.b16 %v941
        %v1598 = vunpack.c.h.b16 %v941
        %v1599 = vunpack.c.l.b16 %v942
        %v1600 = vunpack.c.h.b16 %v942
        %v1601 = vunpack.c.l.b16 %v943
        %v1602 = vunpack.c.h.b16 %v943
        %v1603 = vunpack.c.l.b16 %v944
        %v1604 = vunpack.c.h.b16 %v944
        %v1605 = vunpack.c.l.b16 %v945
        %v1606 = vunpack.c.h.b16 %v945
        %v1607 = vunpack.c.l.b16 %v946
        %v1608 = vunpack.c.h.b16 %v946
        %v1609 = vunpack.c.l.b16 %v947
        %v1610 = vunpack.c.h.b16 %v947
        %v1611 = vunpack.c.l.b16 %v948
        %v1612 = vunpack.c.h.b16 %v948
        %v1613 = vunpack.c.l.b16 %v949
        %v1614 = vunpack.c.h.b16 %v949
        %v1615 = vunpack.c.l.b16 %v950
        %v1616 = vunpack.c.h.b16 %v950
        %v1617 = vunpack.c.l.b16 %v951
        %v1618 = vunpack.c.h.b16 %v951
        %v1619 = vunpack.c.l.b16 %v952
        %v1620 = vunpack.c.h.b16 %v952
        %v1621 = vunpack.c.l.b16 %v953
        %v1622 = vunpack.c.h.b16 %v953
        %v1623 = vpack.c.b16 %v1443, %v1431
        %v1624 = vpack.c.b16 %v1444, %v1432
        %v1625 = vpack.c.b16 %v1445, %v1433
        %v1626 = vpack.c.b16 %v1446, %v1434
        %v1627 = vpack.c.b16 %v1447, %v1435
        %v1628 = vpack.c.b16 %v1448, %v1436
        %v1629 = vpack.c.b16 %v1449, %v1437
        %v1630 = vpack.c.b16 %v1450, %v1438
        %v1631 = vpack.c.b16 %v1451, %v1439
        %v1632 = vpack.c.b16 %v1452, %v1440
        %v1633 = vpack.c.b16 %v1453, %v1441
        %v1634 = vpack.c.b16 %v1454, %v1442
        %v1635 = vpack.c.b16 %v1467, %v1455
        %v1636 = vpack.c.b16 %v1468, %v1456
        %v1637 = vpack.c.b16 %v1469, %v1457
        %v1638 = vpack.c.b16 %v1470, %v1458
        %v1639 = vpack.c.b16 %v1471, %v1459
        %v1640 = vpack.c.b16 %v1472, %v1460
        %v1641 = vpack.c.b16 %v1473, %v1461
        %v1642 = vpack.c.b16 %v1474, %v1462
        %v1643 = vpack.c.b16 %v1475, %v1463
        %v1644 = vpack.c.b16 %v1476, %v1464
        %v1645 = vpack.c.b16 %v1477, %v1465
        %v1646 = vpack.c.b16 %v1478, %v1466
        %v1647 = vpack.c.b16 %v1491, %v1479
        %v1648 = vpack.c.b16 %v1492, %v1480
        %v1649 = vpack.c.b16 %v1493, %v1481
        %v1650 = vpack.c.b16 %v1494, %v1482
        %v1651 = vpack.c.b16 %v1495, %v1483
        %v1652 = vpack.c.b16 %v1496, %v1484
        %v1653 = vpack.c.b16 %v1497, %v1485
        %v1654 = vpack.c.b16 %v1498, %v1486
        %v1655 = vpack.c.b16 %v1499, %v1487
        %v1656 = vpack.c.b16 %v1500, %v1488
        %v1657 = vpack.c.b16 %v1501, %v1489
        %v1658 = vpack.c.b16 %v1502, %v1490
        %v1659 = vpack.c.b16 %v1515, %v1503
        %v1660 = vpack.c.b16 %v1516, %v1504
        %v1661 = vpack.c.b16 %v1517, %v1505
        %v1662 = vpack.c.b16 %v1518, %v1506
        %v1663 = vpack.c.b16 %v1519, %v1507
        %v1664 = vpack.c.b16 %v1520, %v1508
        %v1665 = vpack.c.b16 %v1521, %v1509
        %v1666 = vpack.c.b16 %v1522, %v1510
        %v1667 = vpack.c.b16 %v1523, %v1511
        %v1668 = vpack.c.b16 %v1524, %v1512
        %v1669 = vpack.c.b16 %v1525, %v1513
        %v1670 = vpack.c.b16 %v1526, %v1514
        %v1671 = vpack.c.b16 %v1539, %v1527
        %v1672 = vpack.c.b16 %v1540, %v1528
        %v1673 = vpack.c.b16 %v1541, %v1529
        %v1674 = vpack.c.b16 %v1542, %v1530
        %v1675 = vpack.c.b16 %v1543, %v1531
        %v1676 = vpack.c.b16 %v1544, %v1532
        %v1677 = vpack.c.b16 %v1545, %v1533
        %v1678 = vpack.c.b16 %v1546, %v1534
        %v1679 = vpack.c.b16 %v1547, %v1535
        %v1680 = vpack.c.b16 %v1548, %v1536
        %v1681 = vpack.c.b16 %v1549, %v1537
        %v1682 = vpack.c.b16 %v1550, %v1538
        %v1683 = vpack.c.b16 %v1563, %v1551
        %v1684 = vpack.c.b16 %v1564, %v1552
        %v1685 = vpack.c.b16 %v1565, %v1553
        %v1686 = vpack.c.b16 %v1566, %v1554
        %v1687 = vpack.c.b16 %v1567, %v1555
        %v1688 = vpack.c.b16 %v1568, %v1556
        %v1689 = vpack.c.b16 %v1569, %v1557
        %v1690 = vpack.c.b16 %v1570, %v1558
        %v1691 = vpack.c.b16 %v1571, %v1559
        %v1692 = vpack.c.b16 %v1572, %v1560
        %v1693 = vpack.c.b16 %v1573, %v1561
        %v1694 = vpack.c.b16 %v1574, %v1562
        %v1695 = vpack.c.b16 %v1587, %v1575
        %v1696 = vpack.c.b16 %v1588, %v1576
        %v1697 = vpack.c.b16 %v1589, %v1577
        %v1698 = vpack.c.b16 %v1590, %v1578
        %v1699 = vpack.c.b16 %v1591, %v1579
        %v1700 = vpack.c.b16 %v1592, %v1580
        %v1701 = vpack.c.b16 %v1593, %v1581
        %v1702 = vpack.c.b16 %v1594, %v1582
        %v1703 = vpack.c.b16 %v1595, %v1583
        %v1704 = vpack.c.b16 %v1596, %v1584
        %v1705 = vpack.c.b16 %v1597, %v1585
        %v1706 = vpack.c.b16 %v1598, %v1586
        %v1707 = vpack.c.b16 %v1611, %v1599
        %v1708 = vpack.c.b16 %v1612, %v1600
        %v1709 = vpack.c.b16 %v1613, %v1601
        %v1710 = vpack.c.b16 %v1614, %v1602
        %v1711 = vpack.c.b16 %v1615, %v1603
        %v1712 = vpack.c.b16 %v1616, %v1604
        %v1713 = vpack.c.b16 %v1617, %v1605
        %v1714 = vpack.c.b16 %v1618, %v1606
        %v1715 = vpack.c.b16 %v1619, %v1607
        %v1716 = vpack.c.b16 %v1620, %v1608
        %v1717 = vpack.c.b16 %v1621, %v1609
        %v1718 = vpack.c.b16 %v1622, %v1610
        %v1817 = vperm.slane %v1260, 0
        %v1818 = vperm.slane %v1260, 1
        %v1819 = vperm.slane %v1260, 2
        %v1820 = vperm.slane %v1260, 3
        %v1821 = vperm.slane %v1260, 4
        %v1822 = vperm.slane %v1260, 5
        %v1823 = vperm.slane %v1260, 6
        %v1824 = vperm.slane %v1260, 7
        %v1825 = vperm.slane %v1261, 0
        %v1826 = vperm.slane %v1261, 1
        %v1827 = vperm.slane %v1261, 2
        %v1828 = vperm.slane %v1261, 3
        %1841 = vmatpush.bf16.msra.mxu0 %v1707
        %1842 = vmatpush.bf16.msra.mxu0 %v1695
        %1843 = vmatpush.bf16.msra.mxu0 %v1683
        %1844 = vmatpush.bf16.msra.mxu0 %v1671
        %1845 = vmatpush.bf16.msra.mxu0 %v1659
        %1846 = vmatpush.bf16.msra.mxu0 %v1647
        %1847 = vmatpush.bf16.msra.mxu0 %v1635
        %1848 = vmatpush.bf16.msra.mxu0 %v1623
        %1849 = vmatmul.bf16.gmra.mxu0 %v1334
        %v1850 = vpop.f32.mrf.mxu0
        %v1851 = vadd.f32 %v1817, %v1850
        %v1852 = vpop.f32.mrf.mxu0
        %1853 = vdwg.mxu0
        %1854 = vmatpush.bf16.msra.mxu0 %v1708
        %1855 = vmatpush.bf16.msra.mxu0 %v1696
        %1856 = vmatpush.bf16.msra.mxu0 %v1684
        %1857 = vmatpush.bf16.msra.mxu0 %v1672
        %1858 = vmatpush.bf16.msra.mxu0 %v1660
        %1859 = vmatpush.bf16.msra.mxu0 %v1648
        %1860 = vmatpush.bf16.msra.mxu0 %v1636
        %1861 = vmatpush.bf16.msra.mxu0 %v1624
        %1862 = vmatmul.bf16.gmra.mxu0 %v1334
        %v1863 = vpop.f32.mrf.mxu0
        %v1864 = vadd.f32 %v1818, %v1863
        %v1865 = vpop.f32.mrf.mxu0
        %1866 = vdwg.mxu0
        %1867 = vmatpush.bf16.msra.mxu0 %v1709
        %1868 = vmatpush.bf16.msra.mxu0 %v1697
        %1869 = vmatpush.bf16.msra.mxu0 %v1685
        %1870 = vmatpush.bf16.msra.mxu0 %v1673
        %1871 = vmatpush.bf16.msra.mxu0 %v1661
        %1872 = vmatpush.bf16.msra.mxu0 %v1649
        %1873 = vmatpush.bf16.msra.mxu0 %v1637
        %1874 = vmatpush.bf16.msra.mxu0 %v1625
        %1875 = vmatmul.bf16.gmra.mxu0 %v1334
        %v1876 = vpop.f32.mrf.mxu0
        %v1877 = vadd.f32 %v1819, %v1876
        %v1878 = vpop.f32.mrf.mxu0
        %1879 = vdwg.mxu0
        %1880 = vmatpush.bf16.msra.mxu0 %v1710
        %1881 = vmatpush.bf16.msra.mxu0 %v1698
        %1882 = vmatpush.bf16.msra.mxu0 %v1686
        %1883 = vmatpush.bf16.msra.mxu0 %v1674
        %1884 = vmatpush.bf16.msra.mxu0 %v1662
        %1885 = vmatpush.bf16.msra.mxu0 %v1650
        %1886 = vmatpush.bf16.msra.mxu0 %v1638
        %1887 = vmatpush.bf16.msra.mxu0 %v1626
        %1888 = vmatmul.bf16.gmra.mxu0 %v1334
        %v1889 = vpop.f32.mrf.mxu0
        %v1890 = vadd.f32 %v1820, %v1889
        %v1891 = vpop.f32.mrf.mxu0
        %1892 = vdwg.mxu0
        %1893 = vmatpush.bf16.msra.mxu0 %v1711
        %1894 = vmatpush.bf16.msra.mxu0 %v1699
        %1895 = vmatpush.bf16.msra.mxu0 %v1687
        %1896 = vmatpush.bf16.msra.mxu0 %v1675
        %1897 = vmatpush.bf16.msra.mxu0 %v1663
        %1898 = vmatpush.bf16.msra.mxu0 %v1651
        %1899 = vmatpush.bf16.msra.mxu0 %v1639
        %1900 = vmatpush.bf16.msra.mxu0 %v1627
        %1901 = vmatmul.bf16.gmra.mxu0 %v1334
        %v1902 = vpop.f32.mrf.mxu0
        %v1903 = vadd.f32 %v1821, %v1902
        %v1904 = vpop.f32.mrf.mxu0
        %1905 = vdwg.mxu0
        %1906 = vmatpush.bf16.msra.mxu0 %v1712
        %1907 = vmatpush.bf16.msra.mxu0 %v1700
        %1908 = vmatpush.bf16.msra.mxu0 %v1688
        %1909 = vmatpush.bf16.msra.mxu0 %v1676
        %1910 = vmatpush.bf16.msra.mxu0 %v1664
        %1911 = vmatpush.bf16.msra.mxu0 %v1652
        %1912 = vmatpush.bf16.msra.mxu0 %v1640
        %1913 = vmatpush.bf16.msra.mxu0 %v1628
        %1914 = vmatmul.bf16.gmra.mxu0 %v1334
        %v1915 = vpop.f32.mrf.mxu0
        %v1916 = vadd.f32 %v1822, %v1915
        %v1917 = vpop.f32.mrf.mxu0
        %1918 = vdwg.mxu0
        %1919 = vmatpush.bf16.msra.mxu0 %v1713
        %1920 = vmatpush.bf16.msra.mxu0 %v1701
        %1921 = vmatpush.bf16.msra.mxu0 %v1689
        %1922 = vmatpush.bf16.msra.mxu0 %v1677
        %1923 = vmatpush.bf16.msra.mxu0 %v1665
        %1924 = vmatpush.bf16.msra.mxu0 %v1653
        %1925 = vmatpush.bf16.msra.mxu0 %v1641
        %1926 = vmatpush.bf16.msra.mxu0 %v1629
        %1927 = vmatmul.bf16.gmra.mxu0 %v1334
        %v1928 = vpop.f32.mrf.mxu0
        %v1929 = vadd.f32 %v1823, %v1928
        %v1930 = vpop.f32.mrf.mxu0
        %1931 = vdwg.mxu0
        %1932 = vmatpush.bf16.msra.mxu0 %v1714
        %1933 = vmatpush.bf16.msra.mxu0 %v1702
        %1934 = vmatpush.bf16.msra.mxu0 %v1690
        %1935 = vmatpush.bf16.msra.mxu0 %v1678
        %1936 = vmatpush.bf16.msra.mxu0 %v1666
        %1937 = vmatpush.bf16.msra.mxu0 %v1654
        %1938 = vmatpush.bf16.msra.mxu0 %v1642
        %1939 = vmatpush.bf16.msra.mxu0 %v1630
        %1940 = vmatmul.bf16.gmra.mxu0 %v1334
        %v1941 = vpop.f32.mrf.mxu0
        %v1942 = vadd.f32 %v1824, %v1941
        %v1943 = vpop.f32.mrf.mxu0
        %1944 = vdwg.mxu0
        %1945 = vmatpush.bf16.msra.mxu0 %v1715
        %1946 = vmatpush.bf16.msra.mxu0 %v1703
        %1947 = vmatpush.bf16.msra.mxu0 %v1691
        %1948 = vmatpush.bf16.msra.mxu0 %v1679
        %1949 = vmatpush.bf16.msra.mxu0 %v1667
        %1950 = vmatpush.bf16.msra.mxu0 %v1655
        %1951 = vmatpush.bf16.msra.mxu0 %v1643
        %1952 = vmatpush.bf16.msra.mxu0 %v1631
        %1953 = vmatmul.bf16.gmra.mxu0 %v1334
        %v1954 = vpop.f32.mrf.mxu0
        %v1955 = vadd.f32 %v1825, %v1954
        %v1956 = vpop.f32.mrf.mxu0
        %1957 = vdwg.mxu0
        %1958 = vmatpush.bf16.msra.mxu0 %v1716
        %1959 = vmatpush.bf16.msra.mxu0 %v1704
        %1960 = vmatpush.bf16.msra.mxu0 %v1692
        %1961 = vmatpush.bf16.msra.mxu0 %v1680
        %1962 = vmatpush.bf16.msra.mxu0 %v1668
        %1963 = vmatpush.bf16.msra.mxu0 %v1656
        %1964 = vmatpush.bf16.msra.mxu0 %v1644
        %1965 = vmatpush.bf16.msra.mxu0 %v1632
        %1966 = vmatmul.bf16.gmra.mxu0 %v1334
        %v1967 = vpop.f32.mrf.mxu0
        %v1968 = vadd.f32 %v1826, %v1967
        %v1969 = vpop.f32.mrf.mxu0
        %1970 = vdwg.mxu0
        %1971 = vmatpush.bf16.msra.mxu0 %v1717
        %1972 = vmatpush.bf16.msra.mxu0 %v1705
        %1973 = vmatpush.bf16.msra.mxu0 %v1693
        %1974 = vmatpush.bf16.msra.mxu0 %v1681
        %1975 = vmatpush.bf16.msra.mxu0 %v1669
        %1976 = vmatpush.bf16.msra.mxu0 %v1657
        %1977 = vmatpush.bf16.msra.mxu0 %v1645
        %1978 = vmatpush.bf16.msra.mxu0 %v1633
        %1979 = vmatmul.bf16.gmra.mxu0 %v1334
        %v1980 = vpop.f32.mrf.mxu0
        %v1981 = vadd.f32 %v1827, %v1980
        %v1982 = vpop.f32.mrf.mxu0
        %1983 = vdwg.mxu0
        %1984 = vmatpush.bf16.msra.mxu0 %v1718
        %1985 = vmatpush.bf16.msra.mxu0 %v1706
        %1986 = vmatpush.bf16.msra.mxu0 %v1694
        %1987 = vmatpush.bf16.msra.mxu0 %v1682
        %1988 = vmatpush.bf16.msra.mxu0 %v1670
        %1989 = vmatpush.bf16.msra.mxu0 %v1658
        %1990 = vmatpush.bf16.msra.mxu0 %v1646
        %1991 = vmatpush.bf16.msra.mxu0 %v1634
        %1992 = vmatmul.bf16.gmra.mxu0 %v1334
        %v1993 = vpop.f32.mrf.mxu0
        %v1994 = vadd.f32 %v1828, %v1993
        %v1995 = vpop.f32.mrf.mxu0
        %1996 = vdwg.mxu0
        %v1998 = vperm.slane %v1332, 0
        %v1999 = vperm.slane %v1332, 1
        %v2000 = vperm.slane %v1332, 2
        %v2001 = vperm.slane %v1332, 3
        %v2006 = vpack.c.bf16 %v1998, %v1998
        %v2007 = vpack.c.bf16 %v1999, %v1999
        %v2008 = vpack.c.bf16 %v2000, %v2000
        %v2009 = vpack.c.bf16 %v2001, %v2001
        %v2316 = vunpack.c.l.b16 %v954
        %v2317 = vunpack.c.h.b16 %v954
        %v2318 = vunpack.c.l.b16 %v955
        %v2319 = vunpack.c.h.b16 %v955
        %v2320 = vunpack.c.l.b16 %v956
        %v2321 = vunpack.c.h.b16 %v956
        %v2322 = vunpack.c.l.b16 %v957
        %v2323 = vunpack.c.h.b16 %v957
        %v2324 = vunpack.c.l.b16 %v958
        %v2325 = vunpack.c.h.b16 %v958
        %v2326 = vunpack.c.l.b16 %v959
        %v2327 = vunpack.c.h.b16 %v959
        %v2328 = vunpack.c.l.b16 %v960
        %v2329 = vunpack.c.h.b16 %v960
        %v2330 = vunpack.c.l.b16 %v961
        %v2331 = vunpack.c.h.b16 %v961
        %v2332 = vunpack.c.l.b16 %v962
        %v2333 = vunpack.c.h.b16 %v962
        %v2334 = vunpack.c.l.b16 %v963
        %v2335 = vunpack.c.h.b16 %v963
        %v2336 = vunpack.c.l.b16 %v964
        %v2337 = vunpack.c.h.b16 %v964
        %v2338 = vunpack.c.l.b16 %v965
        %v2339 = vunpack.c.h.b16 %v965
        %v2340 = vunpack.c.l.b16 %v966
        %v2341 = vunpack.c.h.b16 %v966
        %v2342 = vunpack.c.l.b16 %v967
        %v2343 = vunpack.c.h.b16 %v967
        %v2344 = vunpack.c.l.b16 %v968
        %v2345 = vunpack.c.h.b16 %v968
        %v2346 = vunpack.c.l.b16 %v969
        %v2347 = vunpack.c.h.b16 %v969
        %v2348 = vunpack.c.l.b16 %v970
        %v2349 = vunpack.c.h.b16 %v970
        %v2350 = vunpack.c.l.b16 %v971
        %v2351 = vunpack.c.h.b16 %v971
        %v2352 = vunpack.c.l.b16 %v972
        %v2353 = vunpack.c.h.b16 %v972
        %v2354 = vunpack.c.l.b16 %v973
        %v2355 = vunpack.c.h.b16 %v973
        %v2356 = vunpack.c.l.b16 %v974
        %v2357 = vunpack.c.h.b16 %v974
        %v2358 = vunpack.c.l.b16 %v975
        %v2359 = vunpack.c.h.b16 %v975
        %v2360 = vunpack.c.l.b16 %v976
        %v2361 = vunpack.c.h.b16 %v976
        %v2362 = vunpack.c.l.b16 %v977
        %v2363 = vunpack.c.h.b16 %v977
        %v2364 = vunpack.c.l.b16 %v978
        %v2365 = vunpack.c.h.b16 %v978
        %v2366 = vunpack.c.l.b16 %v979
        %v2367 = vunpack.c.h.b16 %v979
        %v2368 = vunpack.c.l.b16 %v980
        %v2369 = vunpack.c.h.b16 %v980
        %v2370 = vunpack.c.l.b16 %v981
        %v2371 = vunpack.c.h.b16 %v981
        %v2372 = vunpack.c.l.b16 %v982
        %v2373 = vunpack.c.h.b16 %v982
        %v2374 = vunpack.c.l.b16 %v983
        %v2375 = vunpack.c.h.b16 %v983
        %v2376 = vunpack.c.l.b16 %v984
        %v2377 = vunpack.c.h.b16 %v984
        %v2378 = vunpack.c.l.b16 %v985
        %v2379 = vunpack.c.h.b16 %v985
        %v2380 = vunpack.c.l.b16 %v986
        %v2381 = vunpack.c.h.b16 %v986
        %v2382 = vunpack.c.l.b16 %v987
        %v2383 = vunpack.c.h.b16 %v987
        %v2384 = vunpack.c.l.b16 %v988
        %v2385 = vunpack.c.h.b16 %v988
        %v2386 = vunpack.c.l.b16 %v989
        %v2387 = vunpack.c.h.b16 %v989
        %v2388 = vunpack.c.l.b16 %v990
        %v2389 = vunpack.c.h.b16 %v990
        %v2390 = vunpack.c.l.b16 %v991
        %v2391 = vunpack.c.h.b16 %v991
        %v2392 = vunpack.c.l.b16 %v992
        %v2393 = vunpack.c.h.b16 %v992
        %v2394 = vunpack.c.l.b16 %v993
        %v2395 = vunpack.c.h.b16 %v993
        %v2396 = vunpack.c.l.b16 %v994
        %v2397 = vunpack.c.h.b16 %v994
        %v2398 = vunpack.c.l.b16 %v995
        %v2399 = vunpack.c.h.b16 %v995
        %v2400 = vunpack.c.l.b16 %v996
        %v2401 = vunpack.c.h.b16 %v996
        %v2402 = vunpack.c.l.b16 %v997
        %v2403 = vunpack.c.h.b16 %v997
        %v2404 = vunpack.c.l.b16 %v998
        %v2405 = vunpack.c.h.b16 %v998
        %v2406 = vunpack.c.l.b16 %v999
        %v2407 = vunpack.c.h.b16 %v999
        %v2408 = vunpack.c.l.b16 %v1000
        %v2409 = vunpack.c.h.b16 %v1000
        %v2410 = vunpack.c.l.b16 %v1001
        %v2411 = vunpack.c.h.b16 %v1001
        %v2412 = vunpack.c.l.b16 %v1002
        %v2413 = vunpack.c.h.b16 %v1002
        %v2414 = vunpack.c.l.b16 %v1003
        %v2415 = vunpack.c.h.b16 %v1003
        %v2416 = vunpack.c.l.b16 %v1004
        %v2417 = vunpack.c.h.b16 %v1004
        %v2418 = vunpack.c.l.b16 %v1005
        %v2419 = vunpack.c.h.b16 %v1005
        %v2420 = vunpack.c.l.b16 %v1006
        %v2421 = vunpack.c.h.b16 %v1006
        %v2422 = vunpack.c.l.b16 %v1007
        %v2423 = vunpack.c.h.b16 %v1007
        %v2424 = vunpack.c.l.b16 %v1008
        %v2425 = vunpack.c.h.b16 %v1008
        %v2426 = vunpack.c.l.b16 %v1009
        %v2427 = vunpack.c.h.b16 %v1009
        %v2428 = vunpack.c.l.b16 %v1010
        %v2429 = vunpack.c.h.b16 %v1010
        %v2430 = vunpack.c.l.b16 %v1011
        %v2431 = vunpack.c.h.b16 %v1011
        %v2432 = vunpack.c.l.b16 %v1012
        %v2433 = vunpack.c.h.b16 %v1012
        %v2434 = vunpack.c.l.b16 %v1013
        %v2435 = vunpack.c.h.b16 %v1013
        %v2436 = vunpack.c.l.b16 %v1014
        %v2437 = vunpack.c.h.b16 %v1014
        %v2438 = vunpack.c.l.b16 %v1015
        %v2439 = vunpack.c.h.b16 %v1015
        %v2440 = vunpack.c.l.b16 %v1016
        %v2441 = vunpack.c.h.b16 %v1016
        %v2442 = vunpack.c.l.b16 %v1017
        %v2443 = vunpack.c.h.b16 %v1017
        %v2444 = vunpack.c.l.b16 %v1018
        %v2445 = vunpack.c.h.b16 %v1018
        %v2446 = vunpack.c.l.b16 %v1019
        %v2447 = vunpack.c.h.b16 %v1019
        %v2448 = vunpack.c.l.b16 %v1020
        %v2449 = vunpack.c.h.b16 %v1020
        %v2450 = vunpack.c.l.b16 %v1021
        %v2451 = vunpack.c.h.b16 %v1021
        %v2452 = vunpack.c.l.b16 %v1022
        %v2453 = vunpack.c.h.b16 %v1022
        %v2454 = vunpack.c.l.b16 %v1023
        %v2455 = vunpack.c.h.b16 %v1023
        %v2456 = vunpack.c.l.b16 %v1024
        %v2457 = vunpack.c.h.b16 %v1024
        %v2458 = vunpack.c.l.b16 %v1025
        %v2459 = vunpack.c.h.b16 %v1025
        %v2460 = vunpack.c.l.b16 %v1026
        %v2461 = vunpack.c.h.b16 %v1026
        %v2462 = vunpack.c.l.b16 %v1027
        %v2463 = vunpack.c.h.b16 %v1027
        %v2464 = vunpack.c.l.b16 %v1028
        %v2465 = vunpack.c.h.b16 %v1028
        %v2466 = vunpack.c.l.b16 %v1029
        %v2467 = vunpack.c.h.b16 %v1029
        %v2468 = vunpack.c.l.b16 %v1030
        %v2469 = vunpack.c.h.b16 %v1030
        %v2470 = vunpack.c.l.b16 %v1031
        %v2471 = vunpack.c.h.b16 %v1031
        %v2472 = vunpack.c.l.b16 %v1032
        %v2473 = vunpack.c.h.b16 %v1032
        %v2474 = vunpack.c.l.b16 %v1033
        %v2475 = vunpack.c.h.b16 %v1033
        %v2476 = vunpack.c.l.b16 %v1034
        %v2477 = vunpack.c.h.b16 %v1034
        %v2478 = vunpack.c.l.b16 %v1035
        %v2479 = vunpack.c.h.b16 %v1035
        %v2480 = vunpack.c.l.b16 %v1036
        %v2481 = vunpack.c.h.b16 %v1036
        %v2482 = vunpack.c.l.b16 %v1037
        %v2483 = vunpack.c.h.b16 %v1037
        %v2484 = vunpack.c.l.b16 %v1038
        %v2485 = vunpack.c.h.b16 %v1038
        %v2486 = vunpack.c.l.b16 %v1039
        %v2487 = vunpack.c.h.b16 %v1039
        %v2488 = vunpack.c.l.b16 %v1040
        %v2489 = vunpack.c.h.b16 %v1040
        %v2490 = vunpack.c.l.b16 %v1041
        %v2491 = vunpack.c.h.b16 %v1041
        %v2492 = vunpack.c.l.b16 %v1042
        %v2493 = vunpack.c.h.b16 %v1042
        %v2494 = vunpack.c.l.b16 %v1043
        %v2495 = vunpack.c.h.b16 %v1043
        %v2496 = vunpack.c.l.b16 %v1044
        %v2497 = vunpack.c.h.b16 %v1044
        %v2498 = vunpack.c.l.b16 %v1045
        %v2499 = vunpack.c.h.b16 %v1045
        %v2500 = vunpack.c.l.b16 %v1046
        %v2501 = vunpack.c.h.b16 %v1046
        %v2502 = vunpack.c.l.b16 %v1047
        %v2503 = vunpack.c.h.b16 %v1047
        %v2504 = vunpack.c.l.b16 %v1048
        %v2505 = vunpack.c.h.b16 %v1048
        %v2506 = vunpack.c.l.b16 %v1049
        %v2507 = vunpack.c.h.b16 %v1049
        %v2508 = vunpack.c.l.b16 %v1050
        %v2509 = vunpack.c.h.b16 %v1050
        %v2510 = vunpack.c.l.b16 %v1051
        %v2511 = vunpack.c.h.b16 %v1051
        %v2512 = vunpack.c.l.b16 %v1052
        %v2513 = vunpack.c.h.b16 %v1052
        %v2514 = vunpack.c.l.b16 %v1053
        %v2515 = vunpack.c.h.b16 %v1053
        %v2516 = vunpack.c.l.b16 %v1054
        %v2517 = vunpack.c.h.b16 %v1054
        %v2518 = vunpack.c.l.b16 %v1055
        %v2519 = vunpack.c.h.b16 %v1055
        %v2520 = vunpack.c.l.b16 %v1056
        %v2521 = vunpack.c.h.b16 %v1056
        %v2522 = vunpack.c.l.b16 %v1057
        %v2523 = vunpack.c.h.b16 %v1057
        %v2524 = vunpack.c.l.b16 %v1058
        %v2525 = vunpack.c.h.b16 %v1058
        %v2526 = vunpack.c.l.b16 %v1059
        %v2527 = vunpack.c.h.b16 %v1059
        %v2528 = vunpack.c.l.b16 %v1060
        %v2529 = vunpack.c.h.b16 %v1060
        %v2530 = vunpack.c.l.b16 %v1061
        %v2531 = vunpack.c.h.b16 %v1061
        %v2532 = vunpack.c.l.b16 %v1062
        %v2533 = vunpack.c.h.b16 %v1062
        %v2534 = vunpack.c.l.b16 %v1063
        %v2535 = vunpack.c.h.b16 %v1063
        %v2536 = vunpack.c.l.b16 %v1064
        %v2537 = vunpack.c.h.b16 %v1064
        %v2538 = vunpack.c.l.b16 %v1065
        %v2539 = vunpack.c.h.b16 %v1065
        %v2540 = vunpack.c.l.b16 %v1066
        %v2541 = vunpack.c.h.b16 %v1066
        %v2542 = vunpack.c.l.b16 %v1067
        %v2543 = vunpack.c.h.b16 %v1067
        %v2544 = vunpack.c.l.b16 %v1068
        %v2545 = vunpack.c.h.b16 %v1068
        %v2546 = vunpack.c.l.b16 %v1069
        %v2547 = vunpack.c.h.b16 %v1069
        %v2548 = vunpack.c.l.b16 %v1070
        %v2549 = vunpack.c.h.b16 %v1070
        %v2550 = vunpack.c.l.b16 %v1071
        %v2551 = vunpack.c.h.b16 %v1071
        %v2552 = vunpack.c.l.b16 %v1072
        %v2553 = vunpack.c.h.b16 %v1072
        %v2554 = vunpack.c.l.b16 %v1073
        %v2555 = vunpack.c.h.b16 %v1073
        %v2556 = vunpack.c.l.b16 %v1074
        %v2557 = vunpack.c.h.b16 %v1074
        %v2558 = vunpack.c.l.b16 %v1075
        %v2559 = vunpack.c.h.b16 %v1075
        %v2560 = vunpack.c.l.b16 %v1076
        %v2561 = vunpack.c.h.b16 %v1076
        %v2562 = vunpack.c.l.b16 %v1077
        %v2563 = vunpack.c.h.b16 %v1077
        %v2564 = vunpack.c.l.b16 %v1078
        %v2565 = vunpack.c.h.b16 %v1078
        %v2566 = vunpack.c.l.b16 %v1079
        %v2567 = vunpack.c.h.b16 %v1079
        %v2568 = vunpack.c.l.b16 %v1080
        %v2569 = vunpack.c.h.b16 %v1080
        %v2570 = vunpack.c.l.b16 %v1081
        %v2571 = vunpack.c.h.b16 %v1081
        %v2572 = vunpack.c.l.b16 %v1082
        %v2573 = vunpack.c.h.b16 %v1082
        %v2574 = vunpack.c.l.b16 %v1083
        %v2575 = vunpack.c.h.b16 %v1083
        %v2576 = vunpack.c.l.b16 %v1084
        %v2577 = vunpack.c.h.b16 %v1084
        %v2578 = vunpack.c.l.b16 %v1085
        %v2579 = vunpack.c.h.b16 %v1085
        %v2580 = vunpack.c.l.b16 %v1086
        %v2581 = vunpack.c.h.b16 %v1086
        %v2582 = vunpack.c.l.b16 %v1087
        %v2583 = vunpack.c.h.b16 %v1087
        %v2584 = vunpack.c.l.b16 %v1088
        %v2585 = vunpack.c.h.b16 %v1088
        %v2586 = vunpack.c.l.b16 %v1089
        %v2587 = vunpack.c.h.b16 %v1089
        %v2588 = vunpack.c.l.b16 %v1090
        %v2589 = vunpack.c.h.b16 %v1090
        %v2590 = vunpack.c.l.b16 %v1091
        %v2591 = vunpack.c.h.b16 %v1091
        %v2592 = vunpack.c.l.b16 %v1092
        %v2593 = vunpack.c.h.b16 %v1092
        %v2594 = vunpack.c.l.b16 %v1093
        %v2595 = vunpack.c.h.b16 %v1093
        %v2596 = vunpack.c.l.b16 %v1094
        %v2597 = vunpack.c.h.b16 %v1094
        %v2598 = vunpack.c.l.b16 %v1095
        %v2599 = vunpack.c.h.b16 %v1095
        %v2600 = vunpack.c.l.b16 %v1096
        %v2601 = vunpack.c.h.b16 %v1096
        %v2602 = vunpack.c.l.b16 %v1097
        %v2603 = vunpack.c.h.b16 %v1097
        %v2604 = vunpack.c.l.b16 %v1098
        %v2605 = vunpack.c.h.b16 %v1098
        %v2606 = vunpack.c.l.b16 %v1099
        %v2607 = vunpack.c.h.b16 %v1099
        %v2608 = vunpack.c.l.b16 %v1100
        %v2609 = vunpack.c.h.b16 %v1100
        %v2610 = vunpack.c.l.b16 %v1101
        %v2611 = vunpack.c.h.b16 %v1101
        %v2612 = vunpack.c.l.b16 %v1102
        %v2613 = vunpack.c.h.b16 %v1102
        %v2614 = vunpack.c.l.b16 %v1103
        %v2615 = vunpack.c.h.b16 %v1103
        %v2616 = vunpack.c.l.b16 %v1104
        %v2617 = vunpack.c.h.b16 %v1104
        %v2618 = vunpack.c.l.b16 %v1105
        %v2619 = vunpack.c.h.b16 %v1105
        %v2620 = vunpack.c.l.b16 %v1106
        %v2621 = vunpack.c.h.b16 %v1106
        %v2622 = vunpack.c.l.b16 %v1107
        %v2623 = vunpack.c.h.b16 %v1107
        %v2624 = vunpack.c.l.b16 %v1108
        %v2625 = vunpack.c.h.b16 %v1108
        %v2626 = vunpack.c.l.b16 %v1109
        %v2627 = vunpack.c.h.b16 %v1109
        %v2628 = vunpack.c.l.b16 %v1110
        %v2629 = vunpack.c.h.b16 %v1110
        %v2630 = vunpack.c.l.b16 %v1111
        %v2631 = vunpack.c.h.b16 %v1111
        %v2632 = vunpack.c.l.b16 %v1112
        %v2633 = vunpack.c.h.b16 %v1112
        %v2634 = vunpack.c.l.b16 %v1113
        %v2635 = vunpack.c.h.b16 %v1113
        %v2636 = vunpack.c.l.b16 %v1114
        %v2637 = vunpack.c.h.b16 %v1114
        %v2638 = vunpack.c.l.b16 %v1115
        %v2639 = vunpack.c.h.b16 %v1115
        %v2640 = vunpack.c.l.b16 %v1116
        %v2641 = vunpack.c.h.b16 %v1116
        %v2642 = vunpack.c.l.b16 %v1117
        %v2643 = vunpack.c.h.b16 %v1117
        %v2644 = vunpack.c.l.b16 %v1118
        %v2645 = vunpack.c.h.b16 %v1118
        %v2646 = vunpack.c.l.b16 %v1119
        %v2647 = vunpack.c.h.b16 %v1119
        %v2648 = vunpack.c.l.b16 %v1120
        %v2649 = vunpack.c.h.b16 %v1120
        %v2650 = vunpack.c.l.b16 %v1121
        %v2651 = vunpack.c.h.b16 %v1121
        %v2652 = vunpack.c.l.b16 %v1122
        %v2653 = vunpack.c.h.b16 %v1122
        %v2654 = vunpack.c.l.b16 %v1123
        %v2655 = vunpack.c.h.b16 %v1123
        %v2656 = vunpack.c.l.b16 %v1124
        %v2657 = vunpack.c.h.b16 %v1124
        %v2658 = vunpack.c.l.b16 %v1125
        %v2659 = vunpack.c.h.b16 %v1125
        %v2660 = vunpack.c.l.b16 %v1126
        %v2661 = vunpack.c.h.b16 %v1126
        %v2662 = vunpack.c.l.b16 %v1127
        %v2663 = vunpack.c.h.b16 %v1127
        %v2664 = vunpack.c.l.b16 %v1128
        %v2665 = vunpack.c.h.b16 %v1128
        %v2666 = vunpack.c.l.b16 %v1129
        %v2667 = vunpack.c.h.b16 %v1129
        %v2668 = vunpack.c.l.b16 %v1130
        %v2669 = vunpack.c.h.b16 %v1130
        %v2670 = vunpack.c.l.b16 %v1131
        %v2671 = vunpack.c.h.b16 %v1131
        %v2672 = vunpack.c.l.b16 %v1132
        %v2673 = vunpack.c.h.b16 %v1132
        %v2674 = vunpack.c.l.b16 %v1133
        %v2675 = vunpack.c.h.b16 %v1133
        %v2676 = vunpack.c.l.b16 %v1134
        %v2677 = vunpack.c.h.b16 %v1134
        %v2678 = vunpack.c.l.b16 %v1135
        %v2679 = vunpack.c.h.b16 %v1135
        %v2680 = vunpack.c.l.b16 %v1136
        %v2681 = vunpack.c.h.b16 %v1136
        %v2682 = vunpack.c.l.b16 %v1137
        %v2683 = vunpack.c.h.b16 %v1137
        %v2684 = vunpack.c.l.b16 %v1138
        %v2685 = vunpack.c.h.b16 %v1138
        %v2686 = vunpack.c.l.b16 %v1139
        %v2687 = vunpack.c.h.b16 %v1139
        %v2688 = vunpack.c.l.b16 %v1140
        %v2689 = vunpack.c.h.b16 %v1140
        %v2690 = vunpack.c.l.b16 %v1141
        %v2691 = vunpack.c.h.b16 %v1141
        %v2692 = vunpack.c.l.b16 %v1142
        %v2693 = vunpack.c.h.b16 %v1142
        %v2694 = vunpack.c.l.b16 %v1143
        %v2695 = vunpack.c.h.b16 %v1143
        %v2696 = vunpack.c.l.b16 %v1144
        %v2697 = vunpack.c.h.b16 %v1144
        %v2698 = vunpack.c.l.b16 %v1145
        %v2699 = vunpack.c.h.b16 %v1145
        %v2700 = vunpack.c.l.b16 %v1146
        %v2701 = vunpack.c.h.b16 %v1146
        %v2702 = vunpack.c.l.b16 %v1147
        %v2703 = vunpack.c.h.b16 %v1147
        %v2704 = vunpack.c.l.b16 %v1148
        %v2705 = vunpack.c.h.b16 %v1148
        %v2706 = vunpack.c.l.b16 %v1149
        %v2707 = vunpack.c.h.b16 %v1149
        %v2708 = vunpack.c.l.b16 %v1150
        %v2709 = vunpack.c.h.b16 %v1150
        %v2710 = vunpack.c.l.b16 %v1151
        %v2711 = vunpack.c.h.b16 %v1151
        %v2712 = vunpack.c.l.b16 %v1152
        %v2713 = vunpack.c.h.b16 %v1152
        %v2714 = vunpack.c.l.b16 %v1153
        %v2715 = vunpack.c.h.b16 %v1153
        %v2716 = vunpack.c.l.b16 %v1154
        %v2717 = vunpack.c.h.b16 %v1154
        %v2718 = vunpack.c.l.b16 %v1155
        %v2719 = vunpack.c.h.b16 %v1155
        %v2720 = vunpack.c.l.b16 %v1156
        %v2721 = vunpack.c.h.b16 %v1156
        %v2722 = vunpack.c.l.b16 %v1157
        %v2723 = vunpack.c.h.b16 %v1157
        %v2724 = vunpack.c.l.b16 %v1158
        %v2725 = vunpack.c.h.b16 %v1158
        %v2726 = vunpack.c.l.b16 %v1159
        %v2727 = vunpack.c.h.b16 %v1159
        %v2728 = vunpack.c.l.b16 %v1160
        %v2729 = vunpack.c.h.b16 %v1160
        %v2730 = vunpack.c.l.b16 %v1161
        %v2731 = vunpack.c.h.b16 %v1161
        %v2732 = vunpack.c.l.b16 %v1162
        %v2733 = vunpack.c.h.b16 %v1162
        %v2734 = vunpack.c.l.b16 %v1163
        %v2735 = vunpack.c.h.b16 %v1163
        %v2736 = vunpack.c.l.b16 %v1164
        %v2737 = vunpack.c.h.b16 %v1164
        %v2738 = vunpack.c.l.b16 %v1165
        %v2739 = vunpack.c.h.b16 %v1165
        %v2740 = vunpack.c.l.b16 %v1166
        %v2741 = vunpack.c.h.b16 %v1166
        %v2742 = vunpack.c.l.b16 %v1167
        %v2743 = vunpack.c.h.b16 %v1167
        %v2744 = vunpack.c.l.b16 %v1168
        %v2745 = vunpack.c.h.b16 %v1168
        %v2746 = vunpack.c.l.b16 %v1169
        %v2747 = vunpack.c.h.b16 %v1169
        %v2748 = vunpack.c.l.b16 %v1170
        %v2749 = vunpack.c.h.b16 %v1170
        %v2750 = vunpack.c.l.b16 %v1171
        %v2751 = vunpack.c.h.b16 %v1171
        %v2752 = vunpack.c.l.b16 %v1172
        %v2753 = vunpack.c.h.b16 %v1172
        %v2754 = vunpack.c.l.b16 %v1173
        %v2755 = vunpack.c.h.b16 %v1173
        %v2756 = vunpack.c.l.b16 %v1174
        %v2757 = vunpack.c.h.b16 %v1174
        %v2758 = vunpack.c.l.b16 %v1175
        %v2759 = vunpack.c.h.b16 %v1175
        %v2760 = vunpack.c.l.b16 %v1176
        %v2761 = vunpack.c.h.b16 %v1176
        %v2762 = vunpack.c.l.b16 %v1177
        %v2763 = vunpack.c.h.b16 %v1177
        %v2764 = vunpack.c.l.b16 %v1178
        %v2765 = vunpack.c.h.b16 %v1178
        %v2766 = vunpack.c.l.b16 %v1179
        %v2767 = vunpack.c.h.b16 %v1179
        %v2768 = vunpack.c.l.b16 %v1180
        %v2769 = vunpack.c.h.b16 %v1180
        %v2770 = vunpack.c.l.b16 %v1181
        %v2771 = vunpack.c.h.b16 %v1181
        %v2772 = vunpack.c.l.b16 %v1182
        %v2773 = vunpack.c.h.b16 %v1182
        %v2774 = vunpack.c.l.b16 %v1183
        %v2775 = vunpack.c.h.b16 %v1183
        %v2776 = vunpack.c.l.b16 %v1184
        %v2777 = vunpack.c.h.b16 %v1184
        %v2778 = vunpack.c.l.b16 %v1185
        %v2779 = vunpack.c.h.b16 %v1185
        %v2780 = vunpack.c.l.b16 %v1186
        %v2781 = vunpack.c.h.b16 %v1186
        %v2782 = vunpack.c.l.b16 %v1187
        %v2783 = vunpack.c.h.b16 %v1187
        %v2784 = vunpack.c.l.b16 %v1188
        %v2785 = vunpack.c.h.b16 %v1188
        %v2786 = vunpack.c.l.b16 %v1189
        %v2787 = vunpack.c.h.b16 %v1189
        %v2788 = vunpack.c.l.b16 %v1190
        %v2789 = vunpack.c.h.b16 %v1190
        %v2790 = vunpack.c.l.b16 %v1191
        %v2791 = vunpack.c.h.b16 %v1191
        %v2792 = vunpack.c.l.b16 %v1192
        %v2793 = vunpack.c.h.b16 %v1192
        %v2794 = vunpack.c.l.b16 %v1193
        %v2795 = vunpack.c.h.b16 %v1193
        %v2796 = vunpack.c.l.b16 %v1194
        %v2797 = vunpack.c.h.b16 %v1194
        %v2798 = vunpack.c.l.b16 %v1195
        %v2799 = vunpack.c.h.b16 %v1195
        %v2800 = vunpack.c.l.b16 %v1196
        %v2801 = vunpack.c.h.b16 %v1196
        %v2802 = vunpack.c.l.b16 %v1197
        %v2803 = vunpack.c.h.b16 %v1197
        %v2804 = vunpack.c.l.b16 %v1198
        %v2805 = vunpack.c.h.b16 %v1198
        %v2806 = vunpack.c.l.b16 %v1199
        %v2807 = vunpack.c.h.b16 %v1199
        %v2808 = vunpack.c.l.b16 %v1200
        %v2809 = vunpack.c.h.b16 %v1200
        %v2810 = vunpack.c.l.b16 %v1201
        %v2811 = vunpack.c.h.b16 %v1201
        %v2812 = vunpack.c.l.b16 %v1202
        %v2813 = vunpack.c.h.b16 %v1202
        %v2814 = vunpack.c.l.b16 %v1203
        %v2815 = vunpack.c.h.b16 %v1203
        %v2816 = vunpack.c.l.b16 %v1204
        %v2817 = vunpack.c.h.b16 %v1204
        %v2818 = vunpack.c.l.b16 %v1205
        %v2819 = vunpack.c.h.b16 %v1205
        %v2820 = vunpack.c.l.b16 %v1206
        %v2821 = vunpack.c.h.b16 %v1206
        %v2822 = vunpack.c.l.b16 %v1207
        %v2823 = vunpack.c.h.b16 %v1207
        %v2824 = vunpack.c.l.b16 %v1208
        %v2825 = vunpack.c.h.b16 %v1208
        %v2826 = vunpack.c.l.b16 %v1209
        %v2827 = vunpack.c.h.b16 %v1209
        %v2828 = vunpack.c.l.b16 %v1210
        %v2829 = vunpack.c.h.b16 %v1210
        %v2830 = vunpack.c.l.b16 %v1211
        %v2831 = vunpack.c.h.b16 %v1211
        %v2832 = vunpack.c.l.b16 %v1212
        %v2833 = vunpack.c.h.b16 %v1212
        %v2834 = vunpack.c.l.b16 %v1213
        %v2835 = vunpack.c.h.b16 %v1213
        %v2836 = vunpack.c.l.b16 %v1214
        %v2837 = vunpack.c.h.b16 %v1214
        %v2838 = vunpack.c.l.b16 %v1215
        %v2839 = vunpack.c.h.b16 %v1215
        %v2840 = vunpack.c.l.b16 %v1216
        %v2841 = vunpack.c.h.b16 %v1216
        %v2842 = vunpack.c.l.b16 %v1217
        %v2843 = vunpack.c.h.b16 %v1217
        %v2844 = vunpack.c.l.b16 %v1218
        %v2845 = vunpack.c.h.b16 %v1218
        %v2846 = vunpack.c.l.b16 %v1219
        %v2847 = vunpack.c.h.b16 %v1219
        %v2848 = vunpack.c.l.b16 %v1220
        %v2849 = vunpack.c.h.b16 %v1220
        %v2850 = vunpack.c.l.b16 %v1221
        %v2851 = vunpack.c.h.b16 %v1221
        %v2852 = vunpack.c.l.b16 %v1222
        %v2853 = vunpack.c.h.b16 %v1222
        %v2854 = vunpack.c.l.b16 %v1223
        %v2855 = vunpack.c.h.b16 %v1223
        %v2856 = vunpack.c.l.b16 %v1224
        %v2857 = vunpack.c.h.b16 %v1224
        %v2858 = vunpack.c.l.b16 %v1225
        %v2859 = vunpack.c.h.b16 %v1225
        %v2860 = vunpack.c.l.b16 %v1226
        %v2861 = vunpack.c.h.b16 %v1226
        %v2862 = vunpack.c.l.b16 %v1227
        %v2863 = vunpack.c.h.b16 %v1227
        %v2864 = vunpack.c.l.b16 %v1228
        %v2865 = vunpack.c.h.b16 %v1228
        %v2866 = vunpack.c.l.b16 %v1229
        %v2867 = vunpack.c.h.b16 %v1229
        %v2868 = vunpack.c.l.b16 %v1230
        %v2869 = vunpack.c.h.b16 %v1230
        %v2870 = vunpack.c.l.b16 %v1231
        %v2871 = vunpack.c.h.b16 %v1231
        %v2872 = vunpack.c.l.b16 %v1232
        %v2873 = vunpack.c.h.b16 %v1232
        %v2874 = vunpack.c.l.b16 %v1233
        %v2875 = vunpack.c.h.b16 %v1233
        %v2876 = vunpack.c.l.b16 %v1234
        %v2877 = vunpack.c.h.b16 %v1234
        %v2878 = vunpack.c.l.b16 %v1235
        %v2879 = vunpack.c.h.b16 %v1235
        %v2880 = vunpack.c.l.b16 %v1236
        %v2881 = vunpack.c.h.b16 %v1236
        %v2882 = vunpack.c.l.b16 %v1237
        %v2883 = vunpack.c.h.b16 %v1237
        %v2884 = vunpack.c.l.b16 %v1238
        %v2885 = vunpack.c.h.b16 %v1238
        %v2886 = vunpack.c.l.b16 %v1239
        %v2887 = vunpack.c.h.b16 %v1239
        %v2888 = vunpack.c.l.b16 %v1240
        %v2889 = vunpack.c.h.b16 %v1240
        %v2890 = vunpack.c.l.b16 %v1241
        %v2891 = vunpack.c.h.b16 %v1241
        %v2892 = vunpack.c.l.b16 %v1242
        %v2893 = vunpack.c.h.b16 %v1242
        %v2894 = vunpack.c.l.b16 %v1243
        %v2895 = vunpack.c.h.b16 %v1243
        %v2896 = vunpack.c.l.b16 %v1244
        %v2897 = vunpack.c.h.b16 %v1244
        %v2898 = vunpack.c.l.b16 %v1245
        %v2899 = vunpack.c.h.b16 %v1245
        %v2900 = vunpack.c.l.b16 %v1246
        %v2901 = vunpack.c.h.b16 %v1246
        %v2902 = vunpack.c.l.b16 %v1247
        %v2903 = vunpack.c.h.b16 %v1247
        %v2904 = vunpack.c.l.b16 %v1248
        %v2905 = vunpack.c.h.b16 %v1248
        %v2906 = vunpack.c.l.b16 %v1249
        %v2907 = vunpack.c.h.b16 %v1249
        %v2908 = vunpack.c.l.b16 %v1250
        %v2909 = vunpack.c.h.b16 %v1250
        %v2910 = vunpack.c.l.b16 %v1251
        %v2911 = vunpack.c.h.b16 %v1251
        %v2912 = vunpack.c.l.b16 %v1252
        %v2913 = vunpack.c.h.b16 %v1252
        %v2914 = vunpack.c.l.b16 %v1253
        %v2915 = vunpack.c.h.b16 %v1253
        %v2916 = vunpack.c.l.b16 %v1254
        %v2917 = vunpack.c.h.b16 %v1254
        %v2918 = vunpack.c.l.b16 %v1255
        %v2919 = vunpack.c.h.b16 %v1255
        %v2920 = vunpack.c.l.b16 %v1256
        %v2921 = vunpack.c.h.b16 %v1256
        %v2922 = vunpack.c.l.b16 %v1257
        %v2923 = vunpack.c.h.b16 %v1257
        %v2924 = vunpack.c.l.b16 %v1258
        %v2925 = vunpack.c.h.b16 %v1258
        %v2926 = vunpack.c.l.b16 %v1259
        %v2927 = vunpack.c.h.b16 %v1259
        %v2928 = vpack.c.b16 %v2328, %v2316
        %v2929 = vpack.c.b16 %v2329, %v2317
        %v2930 = vpack.c.b16 %v2330, %v2318
        %v2931 = vpack.c.b16 %v2331, %v2319
        %v2932 = vpack.c.b16 %v2332, %v2320
        %v2933 = vpack.c.b16 %v2333, %v2321
        %v2934 = vpack.c.b16 %v2334, %v2322
        %v2935 = vpack.c.b16 %v2335, %v2323
        %v2936 = vpack.c.b16 %v2336, %v2324
        %v2937 = vpack.c.b16 %v2337, %v2325
        %v2938 = vpack.c.b16 %v2338, %v2326
        %v2939 = vpack.c.b16 %v2339, %v2327
        %v2940 = vpack.c.b16 %v2352, %v2340
        %v2941 = vpack.c.b16 %v2353, %v2341
        %v2942 = vpack.c.b16 %v2354, %v2342
        %v2943 = vpack.c.b16 %v2355, %v2343
        %v2944 = vpack.c.b16 %v2356, %v2344
        %v2945 = vpack.c.b16 %v2357, %v2345
        %v2946 = vpack.c.b16 %v2358, %v2346
        %v2947 = vpack.c.b16 %v2359, %v2347
        %v2948 = vpack.c.b16 %v2360, %v2348
        %v2949 = vpack.c.b16 %v2361, %v2349
        %v2950 = vpack.c.b16 %v2362, %v2350
        %v2951 = vpack.c.b16 %v2363, %v2351
        %v2952 = vpack.c.b16 %v2376, %v2364
        %v2953 = vpack.c.b16 %v2377, %v2365
        %v2954 = vpack.c.b16 %v2378, %v2366
        %v2955 = vpack.c.b16 %v2379, %v2367
        %v2956 = vpack.c.b16 %v2380, %v2368
        %v2957 = vpack.c.b16 %v2381, %v2369
        %v2958 = vpack.c.b16 %v2382, %v2370
        %v2959 = vpack.c.b16 %v2383, %v2371
        %v2960 = vpack.c.b16 %v2384, %v2372
        %v2961 = vpack.c.b16 %v2385, %v2373
        %v2962 = vpack.c.b16 %v2386, %v2374
        %v2963 = vpack.c.b16 %v2387, %v2375
        %v2964 = vpack.c.b16 %v2400, %v2388
        %v2965 = vpack.c.b16 %v2401, %v2389
        %v2966 = vpack.c.b16 %v2402, %v2390
        %v2967 = vpack.c.b16 %v2403, %v2391
        %v2968 = vpack.c.b16 %v2404, %v2392
        %v2969 = vpack.c.b16 %v2405, %v2393
        %v2970 = vpack.c.b16 %v2406, %v2394
        %v2971 = vpack.c.b16 %v2407, %v2395
        %v2972 = vpack.c.b16 %v2408, %v2396
        %v2973 = vpack.c.b16 %v2409, %v2397
        %v2974 = vpack.c.b16 %v2410, %v2398
        %v2975 = vpack.c.b16 %v2411, %v2399
        %v2976 = vpack.c.b16 %v2424, %v2412
        %v2977 = vpack.c.b16 %v2425, %v2413
        %v2978 = vpack.c.b16 %v2426, %v2414
        %v2979 = vpack.c.b16 %v2427, %v2415
        %v2980 = vpack.c.b16 %v2428, %v2416
        %v2981 = vpack.c.b16 %v2429, %v2417
        %v2982 = vpack.c.b16 %v2430, %v2418
        %v2983 = vpack.c.b16 %v2431, %v2419
        %v2984 = vpack.c.b16 %v2432, %v2420
        %v2985 = vpack.c.b16 %v2433, %v2421
        %v2986 = vpack.c.b16 %v2434, %v2422
        %v2987 = vpack.c.b16 %v2435, %v2423
        %v2988 = vpack.c.b16 %v2448, %v2436
        %v2989 = vpack.c.b16 %v2449, %v2437
        %v2990 = vpack.c.b16 %v2450, %v2438
        %v2991 = vpack.c.b16 %v2451, %v2439
        %v2992 = vpack.c.b16 %v2452, %v2440
        %v2993 = vpack.c.b16 %v2453, %v2441
        %v2994 = vpack.c.b16 %v2454, %v2442
        %v2995 = vpack.c.b16 %v2455, %v2443
        %v2996 = vpack.c.b16 %v2456, %v2444
        %v2997 = vpack.c.b16 %v2457, %v2445
        %v2998 = vpack.c.b16 %v2458, %v2446
        %v2999 = vpack.c.b16 %v2459, %v2447
        %v3000 = vpack.c.b16 %v2472, %v2460
        %v3001 = vpack.c.b16 %v2473, %v2461
        %v3002 = vpack.c.b16 %v2474, %v2462
        %v3003 = vpack.c.b16 %v2475, %v2463
        %v3004 = vpack.c.b16 %v2476, %v2464
        %v3005 = vpack.c.b16 %v2477, %v2465
        %v3006 = vpack.c.b16 %v2478, %v2466
        %v3007 = vpack.c.b16 %v2479, %v2467
        %v3008 = vpack.c.b16 %v2480, %v2468
        %v3009 = vpack.c.b16 %v2481, %v2469
        %v3010 = vpack.c.b16 %v2482, %v2470
        %v3011 = vpack.c.b16 %v2483, %v2471
        %v3012 = vpack.c.b16 %v2496, %v2484
        %v3013 = vpack.c.b16 %v2497, %v2485
        %v3014 = vpack.c.b16 %v2498, %v2486
        %v3015 = vpack.c.b16 %v2499, %v2487
        %v3016 = vpack.c.b16 %v2500, %v2488
        %v3017 = vpack.c.b16 %v2501, %v2489
        %v3018 = vpack.c.b16 %v2502, %v2490
        %v3019 = vpack.c.b16 %v2503, %v2491
        %v3020 = vpack.c.b16 %v2504, %v2492
        %v3021 = vpack.c.b16 %v2505, %v2493
        %v3022 = vpack.c.b16 %v2506, %v2494
        %v3023 = vpack.c.b16 %v2507, %v2495
        %v3024 = vpack.c.b16 %v2520, %v2508
        %v3025 = vpack.c.b16 %v2521, %v2509
        %v3026 = vpack.c.b16 %v2522, %v2510
        %v3027 = vpack.c.b16 %v2523, %v2511
        %v3028 = vpack.c.b16 %v2524, %v2512
        %v3029 = vpack.c.b16 %v2525, %v2513
        %v3030 = vpack.c.b16 %v2526, %v2514
        %v3031 = vpack.c.b16 %v2527, %v2515
        %v3032 = vpack.c.b16 %v2528, %v2516
        %v3033 = vpack.c.b16 %v2529, %v2517
        %v3034 = vpack.c.b16 %v2530, %v2518
        %v3035 = vpack.c.b16 %v2531, %v2519
        %v3036 = vpack.c.b16 %v2544, %v2532
        %v3037 = vpack.c.b16 %v2545, %v2533
        %v3038 = vpack.c.b16 %v2546, %v2534
        %v3039 = vpack.c.b16 %v2547, %v2535
        %v3040 = vpack.c.b16 %v2548, %v2536
        %v3041 = vpack.c.b16 %v2549, %v2537
        %v3042 = vpack.c.b16 %v2550, %v2538
        %v3043 = vpack.c.b16 %v2551, %v2539
        %v3044 = vpack.c.b16 %v2552, %v2540
        %v3045 = vpack.c.b16 %v2553, %v2541
        %v3046 = vpack.c.b16 %v2554, %v2542
        %v3047 = vpack.c.b16 %v2555, %v2543
        %v3048 = vpack.c.b16 %v2568, %v2556
        %v3049 = vpack.c.b16 %v2569, %v2557
        %v3050 = vpack.c.b16 %v2570, %v2558
        %v3051 = vpack.c.b16 %v2571, %v2559
        %v3052 = vpack.c.b16 %v2572, %v2560
        %v3053 = vpack.c.b16 %v2573, %v2561
        %v3054 = vpack.c.b16 %v2574, %v2562
        %v3055 = vpack.c.b16 %v2575, %v2563
        %v3056 = vpack.c.b16 %v2576, %v2564
        %v3057 = vpack.c.b16 %v2577, %v2565
        %v3058 = vpack.c.b16 %v2578, %v2566
        %v3059 = vpack.c.b16 %v2579, %v2567
        %v3060 = vpack.c.b16 %v2592, %v2580
        %v3061 = vpack.c.b16 %v2593, %v2581
        %v3062 = vpack.c.b16 %v2594, %v2582
        %v3063 = vpack.c.b16 %v2595, %v2583
        %v3064 = vpack.c.b16 %v2596, %v2584
        %v3065 = vpack.c.b16 %v2597, %v2585
        %v3066 = vpack.c.b16 %v2598, %v2586
        %v3067 = vpack.c.b16 %v2599, %v2587
        %v3068 = vpack.c.b16 %v2600, %v2588
        %v3069 = vpack.c.b16 %v2601, %v2589
        %v3070 = vpack.c.b16 %v2602, %v2590
        %v3071 = vpack.c.b16 %v2603, %v2591
        %v3072 = vpack.c.b16 %v2616, %v2604
        %v3073 = vpack.c.b16 %v2617, %v2605
        %v3074 = vpack.c.b16 %v2618, %v2606
        %v3075 = vpack.c.b16 %v2619, %v2607
        %v3076 = vpack.c.b16 %v2620, %v2608
        %v3077 = vpack.c.b16 %v2621, %v2609
        %v3078 = vpack.c.b16 %v2622, %v2610
        %v3079 = vpack.c.b16 %v2623, %v2611
        %v3080 = vpack.c.b16 %v2624, %v2612
        %v3081 = vpack.c.b16 %v2625, %v2613
        %v3082 = vpack.c.b16 %v2626, %v2614
        %v3083 = vpack.c.b16 %v2627, %v2615
        %v3084 = vpack.c.b16 %v2640, %v2628
        %v3085 = vpack.c.b16 %v2641, %v2629
        %v3086 = vpack.c.b16 %v2642, %v2630
        %v3087 = vpack.c.b16 %v2643, %v2631
        %v3088 = vpack.c.b16 %v2644, %v2632
        %v3089 = vpack.c.b16 %v2645, %v2633
        %v3090 = vpack.c.b16 %v2646, %v2634
        %v3091 = vpack.c.b16 %v2647, %v2635
        %v3092 = vpack.c.b16 %v2648, %v2636
        %v3093 = vpack.c.b16 %v2649, %v2637
        %v3094 = vpack.c.b16 %v2650, %v2638
        %v3095 = vpack.c.b16 %v2651, %v2639
        %v3096 = vpack.c.b16 %v2664, %v2652
        %v3097 = vpack.c.b16 %v2665, %v2653
        %v3098 = vpack.c.b16 %v2666, %v2654
        %v3099 = vpack.c.b16 %v2667, %v2655
        %v3100 = vpack.c.b16 %v2668, %v2656
        %v3101 = vpack.c.b16 %v2669, %v2657
        %v3102 = vpack.c.b16 %v2670, %v2658
        %v3103 = vpack.c.b16 %v2671, %v2659
        %v3104 = vpack.c.b16 %v2672, %v2660
        %v3105 = vpack.c.b16 %v2673, %v2661
        %v3106 = vpack.c.b16 %v2674, %v2662
        %v3107 = vpack.c.b16 %v2675, %v2663
        %v3108 = vpack.c.b16 %v2688, %v2676
        %v3109 = vpack.c.b16 %v2689, %v2677
        %v3110 = vpack.c.b16 %v2690, %v2678
        %v3111 = vpack.c.b16 %v2691, %v2679
        %v3112 = vpack.c.b16 %v2692, %v2680
        %v3113 = vpack.c.b16 %v2693, %v2681
        %v3114 = vpack.c.b16 %v2694, %v2682
        %v3115 = vpack.c.b16 %v2695, %v2683
        %v3116 = vpack.c.b16 %v2696, %v2684
        %v3117 = vpack.c.b16 %v2697, %v2685
        %v3118 = vpack.c.b16 %v2698, %v2686
        %v3119 = vpack.c.b16 %v2699, %v2687
        %v3120 = vpack.c.b16 %v2712, %v2700
        %v3121 = vpack.c.b16 %v2713, %v2701
        %v3122 = vpack.c.b16 %v2714, %v2702
        %v3123 = vpack.c.b16 %v2715, %v2703
        %v3124 = vpack.c.b16 %v2716, %v2704
        %v3125 = vpack.c.b16 %v2717, %v2705
        %v3126 = vpack.c.b16 %v2718, %v2706
        %v3127 = vpack.c.b16 %v2719, %v2707
        %v3128 = vpack.c.b16 %v2720, %v2708
        %v3129 = vpack.c.b16 %v2721, %v2709
        %v3130 = vpack.c.b16 %v2722, %v2710
        %v3131 = vpack.c.b16 %v2723, %v2711
        %v3132 = vpack.c.b16 %v2736, %v2724
        %v3133 = vpack.c.b16 %v2737, %v2725
        %v3134 = vpack.c.b16 %v2738, %v2726
        %v3135 = vpack.c.b16 %v2739, %v2727
        %v3136 = vpack.c.b16 %v2740, %v2728
        %v3137 = vpack.c.b16 %v2741, %v2729
        %v3138 = vpack.c.b16 %v2742, %v2730
        %v3139 = vpack.c.b16 %v2743, %v2731
        %v3140 = vpack.c.b16 %v2744, %v2732
        %v3141 = vpack.c.b16 %v2745, %v2733
        %v3142 = vpack.c.b16 %v2746, %v2734
        %v3143 = vpack.c.b16 %v2747, %v2735
        %v3144 = vpack.c.b16 %v2760, %v2748
        %v3145 = vpack.c.b16 %v2761, %v2749
        %v3146 = vpack.c.b16 %v2762, %v2750
        %v3147 = vpack.c.b16 %v2763, %v2751
        %v3148 = vpack.c.b16 %v2764, %v2752
        %v3149 = vpack.c.b16 %v2765, %v2753
        %v3150 = vpack.c.b16 %v2766, %v2754
        %v3151 = vpack.c.b16 %v2767, %v2755
        %v3152 = vpack.c.b16 %v2768, %v2756
        %v3153 = vpack.c.b16 %v2769, %v2757
        %v3154 = vpack.c.b16 %v2770, %v2758
        %v3155 = vpack.c.b16 %v2771, %v2759
        %v3156 = vpack.c.b16 %v2784, %v2772
        %v3157 = vpack.c.b16 %v2785, %v2773
        %v3158 = vpack.c.b16 %v2786, %v2774
        %v3159 = vpack.c.b16 %v2787, %v2775
        %v3160 = vpack.c.b16 %v2788, %v2776
        %v3161 = vpack.c.b16 %v2789, %v2777
        %v3162 = vpack.c.b16 %v2790, %v2778
        %v3163 = vpack.c.b16 %v2791, %v2779
        %v3164 = vpack.c.b16 %v2792, %v2780
        %v3165 = vpack.c.b16 %v2793, %v2781
        %v3166 = vpack.c.b16 %v2794, %v2782
        %v3167 = vpack.c.b16 %v2795, %v2783
        %v3168 = vpack.c.b16 %v2808, %v2796
        %v3169 = vpack.c.b16 %v2809, %v2797
        %v3170 = vpack.c.b16 %v2810, %v2798
        %v3171 = vpack.c.b16 %v2811, %v2799
        %v3172 = vpack.c.b16 %v2812, %v2800
        %v3173 = vpack.c.b16 %v2813, %v2801
        %v3174 = vpack.c.b16 %v2814, %v2802
        %v3175 = vpack.c.b16 %v2815, %v2803
        %v3176 = vpack.c.b16 %v2816, %v2804
        %v3177 = vpack.c.b16 %v2817, %v2805
        %v3178 = vpack.c.b16 %v2818, %v2806
        %v3179 = vpack.c.b16 %v2819, %v2807
        %v3180 = vpack.c.b16 %v2832, %v2820
        %v3181 = vpack.c.b16 %v2833, %v2821
        %v3182 = vpack.c.b16 %v2834, %v2822
        %v3183 = vpack.c.b16 %v2835, %v2823
        %v3184 = vpack.c.b16 %v2836, %v2824
        %v3185 = vpack.c.b16 %v2837, %v2825
        %v3186 = vpack.c.b16 %v2838, %v2826
        %v3187 = vpack.c.b16 %v2839, %v2827
        %v3188 = vpack.c.b16 %v2840, %v2828
        %v3189 = vpack.c.b16 %v2841, %v2829
        %v3190 = vpack.c.b16 %v2842, %v2830
        %v3191 = vpack.c.b16 %v2843, %v2831
        %v3192 = vpack.c.b16 %v2856, %v2844
        %v3193 = vpack.c.b16 %v2857, %v2845
        %v3194 = vpack.c.b16 %v2858, %v2846
        %v3195 = vpack.c.b16 %v2859, %v2847
        %v3196 = vpack.c.b16 %v2860, %v2848
        %v3197 = vpack.c.b16 %v2861, %v2849
        %v3198 = vpack.c.b16 %v2862, %v2850
        %v3199 = vpack.c.b16 %v2863, %v2851
        %v3200 = vpack.c.b16 %v2864, %v2852
        %v3201 = vpack.c.b16 %v2865, %v2853
        %v3202 = vpack.c.b16 %v2866, %v2854
        %v3203 = vpack.c.b16 %v2867, %v2855
        %v3204 = vpack.c.b16 %v2880, %v2868
        %v3205 = vpack.c.b16 %v2881, %v2869
        %v3206 = vpack.c.b16 %v2882, %v2870
        %v3207 = vpack.c.b16 %v2883, %v2871
        %v3208 = vpack.c.b16 %v2884, %v2872
        %v3209 = vpack.c.b16 %v2885, %v2873
        %v3210 = vpack.c.b16 %v2886, %v2874
        %v3211 = vpack.c.b16 %v2887, %v2875
        %v3212 = vpack.c.b16 %v2888, %v2876
        %v3213 = vpack.c.b16 %v2889, %v2877
        %v3214 = vpack.c.b16 %v2890, %v2878
        %v3215 = vpack.c.b16 %v2891, %v2879
        %v3216 = vpack.c.b16 %v2904, %v2892
        %v3217 = vpack.c.b16 %v2905, %v2893
        %v3218 = vpack.c.b16 %v2906, %v2894
        %v3219 = vpack.c.b16 %v2907, %v2895
        %v3220 = vpack.c.b16 %v2908, %v2896
        %v3221 = vpack.c.b16 %v2909, %v2897
        %v3222 = vpack.c.b16 %v2910, %v2898
        %v3223 = vpack.c.b16 %v2911, %v2899
        %v3224 = vpack.c.b16 %v2912, %v2900
        %v3225 = vpack.c.b16 %v2913, %v2901
        %v3226 = vpack.c.b16 %v2914, %v2902
        %v3227 = vpack.c.b16 %v2915, %v2903
        %v3228 = vpack.c.b16 %v2916, %v2916
        %v3229 = vpack.c.b16 %v2917, %v2917
        %v3230 = vpack.c.b16 %v2918, %v2918
        %v3231 = vpack.c.b16 %v2919, %v2919
        %v3232 = vpack.c.b16 %v2920, %v2920
        %v3233 = vpack.c.b16 %v2921, %v2921
        %v3234 = vpack.c.b16 %v2922, %v2922
        %v3235 = vpack.c.b16 %v2923, %v2923
        %v3236 = vpack.c.b16 %v2924, %v2924
        %v3237 = vpack.c.b16 %v2925, %v2925
        %v3238 = vpack.c.b16 %v2926, %v2926
        %v3239 = vpack.c.b16 %v2927, %v2927
        %v3542 = vperm.slane %v1262, 0
        %v3543 = vperm.slane %v1262, 1
        %v3544 = vperm.slane %v1262, 2
        %v3545 = vperm.slane %v1262, 3
        %v3546 = vperm.slane %v1262, 4
        %v3547 = vperm.slane %v1262, 5
        %v3548 = vperm.slane %v1262, 6
        %v3549 = vperm.slane %v1262, 7
        %v3550 = vperm.slane %v1263, 0
        %v3551 = vperm.slane %v1263, 1
        %v3552 = vperm.slane %v1263, 2
        %v3553 = vperm.slane %v1263, 3
        %vm3566 = vcmask 162816
        %v3568 = vsel %vm3566, %v2009, 0
        %vm3570 = vcmask 1041408
        %v3572 = vsel %vm3570, %v3228, 0
        %v3575 = vsel %vm3570, %v3229, 0
        %v3578 = vsel %vm3570, %v3230, 0
        %v3581 = vsel %vm3570, %v3231, 0
        %v3584 = vsel %vm3570, %v3232, 0
        %v3587 = vsel %vm3570, %v3233, 0
        %v3590 = vsel %vm3570, %v3234, 0
        %v3593 = vsel %vm3570, %v3235, 0
        %v3596 = vsel %vm3570, %v3236, 0
        %v3599 = vsel %vm3570, %v3237, 0
        %v3602 = vsel %vm3570, %v3238, 0
        %v3605 = vsel %vm3570, %v3239, 0
        %3607 = vmatpush.bf16.msra.mxu0 %v3012
        %3608 = vmatpush.bf16.msra.mxu0 %v3000
        %3609 = vmatpush.bf16.msra.mxu0 %v2988
        %3610 = vmatpush.bf16.msra.mxu0 %v2976
        %3611 = vmatpush.bf16.msra.mxu0 %v2964
        %3612 = vmatpush.bf16.msra.mxu0 %v2952
        %3613 = vmatpush.bf16.msra.mxu0 %v2940
        %3614 = vmatpush.bf16.msra.mxu0 %v2928
        %3615 = vmatmul.bf16.gmra.mxu0 %v2006
        %v3616 = vpop.f32.mrf.mxu0
        %v3617 = vadd.f32 %v3542, %v3616
        %v3618 = vpop.f32.mrf.mxu0
        %3619 = vdwg.mxu0
        %3620 = vmatpush.bf16.msra.mxu0 %v3108
        %3621 = vmatpush.bf16.msra.mxu0 %v3096
        %3622 = vmatpush.bf16.msra.mxu0 %v3084
        %3623 = vmatpush.bf16.msra.mxu0 %v3072
        %3624 = vmatpush.bf16.msra.mxu0 %v3060
        %3625 = vmatpush.bf16.msra.mxu0 %v3048
        %3626 = vmatpush.bf16.msra.mxu0 %v3036
        %3627 = vmatpush.bf16.msra.mxu0 %v3024
        %3628 = vmatmul.bf16.gmra.mxu0 %v2007
        %v3629 = vpop.f32.mrf.mxu0
        %v3630 = vadd.f32 %v3617, %v3629
        %v3631 = vpop.f32.mrf.mxu0
        %3632 = vdwg.mxu0
        %3633 = vmatpush.bf16.msra.mxu0 %v3204
        %3634 = vmatpush.bf16.msra.mxu0 %v3192
        %3635 = vmatpush.bf16.msra.mxu0 %v3180
        %3636 = vmatpush.bf16.msra.mxu0 %v3168
        %3637 = vmatpush.bf16.msra.mxu0 %v3156
        %3638 = vmatpush.bf16.msra.mxu0 %v3144
        %3639 = vmatpush.bf16.msra.mxu0 %v3132
        %3640 = vmatpush.bf16.msra.mxu0 %v3120
        %3641 = vmatmul.bf16.gmra.mxu0 %v2008
        %v3642 = vpop.f32.mrf.mxu0
        %v3643 = vadd.f32 %v3630, %v3642
        %v3644 = vpop.f32.mrf.mxu0
        %3645 = vdwg.mxu0
        %3646 = vmatpush.bf16.msra.mxu0 0
        %3647 = vmatpush.bf16.msra.mxu0 0
        %3648 = vmatpush.bf16.msra.mxu0 0
        %3649 = vmatpush.bf16.msra.mxu0 0
        %3650 = vmatpush.bf16.msra.mxu0 0
        %3651 = vmatpush.bf16.msra.mxu0 0
        %3652 = vmatpush.bf16.msra.mxu0 %v3572
        %3653 = vmatpush.bf16.msra.mxu0 %v3216
        %3654 = vmatmul.bf16.gmra.mxu0 %v3568
        %v3655 = vpop.f32.mrf.mxu0
        %v3656 = vadd.f32 %v3643, %v3655
        %v3657 = vpop.f32.mrf.mxu0
        %3658 = vdwg.mxu0
        %3659 = vmatpush.bf16.msra.mxu0 %v3013
        %3660 = vmatpush.bf16.msra.mxu0 %v3001
        %3661 = vmatpush.bf16.msra.mxu0 %v2989
        %3662 = vmatpush.bf16.msra.mxu0 %v2977
        %3663 = vmatpush.bf16.msra.mxu0 %v2965
        %3664 = vmatpush.bf16.msra.mxu0 %v2953
        %3665 = vmatpush.bf16.msra.mxu0 %v2941
        %3666 = vmatpush.bf16.msra.mxu0 %v2929
        %3667 = vmatmul.bf16.gmra.mxu0 %v2006
        %v3668 = vpop.f32.mrf.mxu0
        %v3669 = vadd.f32 %v3543, %v3668
        %v3670 = vpop.f32.mrf.mxu0
        %3671 = vdwg.mxu0
        %3672 = vmatpush.bf16.msra.mxu0 %v3109
        %3673 = vmatpush.bf16.msra.mxu0 %v3097
        %3674 = vmatpush.bf16.msra.mxu0 %v3085
        %3675 = vmatpush.bf16.msra.mxu0 %v3073
        %3676 = vmatpush.bf16.msra.mxu0 %v3061
        %3677 = vmatpush.bf16.msra.mxu0 %v3049
        %3678 = vmatpush.bf16.msra.mxu0 %v3037
        %3679 = vmatpush.bf16.msra.mxu0 %v3025
        %3680 = vmatmul.bf16.gmra.mxu0 %v2007
        %v3681 = vpop.f32.mrf.mxu0
        %v3682 = vadd.f32 %v3669, %v3681
        %v3683 = vpop.f32.mrf.mxu0
        %3684 = vdwg.mxu0
        %3685 = vmatpush.bf16.msra.mxu0 %v3205
        %3686 = vmatpush.bf16.msra.mxu0 %v3193
        %3687 = vmatpush.bf16.msra.mxu0 %v3181
        %3688 = vmatpush.bf16.msra.mxu0 %v3169
        %3689 = vmatpush.bf16.msra.mxu0 %v3157
        %3690 = vmatpush.bf16.msra.mxu0 %v3145
        %3691 = vmatpush.bf16.msra.mxu0 %v3133
        %3692 = vmatpush.bf16.msra.mxu0 %v3121
        %3693 = vmatmul.bf16.gmra.mxu0 %v2008
        %v3694 = vpop.f32.mrf.mxu0
        %v3695 = vadd.f32 %v3682, %v3694
        %v3696 = vpop.f32.mrf.mxu0
        %3697 = vdwg.mxu0
        %3698 = vmatpush.bf16.msra.mxu0 0
        %3699 = vmatpush.bf16.msra.mxu0 0
        %3700 = vmatpush.bf16.msra.mxu0 0
        %3701 = vmatpush.bf16.msra.mxu0 0
        %3702 = vmatpush.bf16.msra.mxu0 0
        %3703 = vmatpush.bf16.msra.mxu0 0
        %3704 = vmatpush.bf16.msra.mxu0 %v3575
        %3705 = vmatpush.bf16.msra.mxu0 %v3217
        %3706 = vmatmul.bf16.gmra.mxu0 %v3568
        %v3707 = vpop.f32.mrf.mxu0
        %v3708 = vadd.f32 %v3695, %v3707
        %v3709 = vpop.f32.mrf.mxu0
        %3710 = vdwg.mxu0
        %3711 = vmatpush.bf16.msra.mxu0 %v3014
        %3712 = vmatpush.bf16.msra.mxu0 %v3002
        %3713 = vmatpush.bf16.msra.mxu0 %v2990
        %3714 = vmatpush.bf16.msra.mxu0 %v2978
        %3715 = vmatpush.bf16.msra.mxu0 %v2966
        %3716 = vmatpush.bf16.msra.mxu0 %v2954
        %3717 = vmatpush.bf16.msra.mxu0 %v2942
        %3718 = vmatpush.bf16.msra.mxu0 %v2930
        %3719 = vmatmul.bf16.gmra.mxu0 %v2006
        %v3720 = vpop.f32.mrf.mxu0
        %v3721 = vadd.f32 %v3544, %v3720
        %v3722 = vpop.f32.mrf.mxu0
        %3723 = vdwg.mxu0
        %3724 = vmatpush.bf16.msra.mxu0 %v3110
        %3725 = vmatpush.bf16.msra.mxu0 %v3098
        %3726 = vmatpush.bf16.msra.mxu0 %v3086
        %3727 = vmatpush.bf16.msra.mxu0 %v3074
        %3728 = vmatpush.bf16.msra.mxu0 %v3062
        %3729 = vmatpush.bf16.msra.mxu0 %v3050
        %3730 = vmatpush.bf16.msra.mxu0 %v3038
        %3731 = vmatpush.bf16.msra.mxu0 %v3026
        %3732 = vmatmul.bf16.gmra.mxu0 %v2007
        %v3733 = vpop.f32.mrf.mxu0
        %v3734 = vadd.f32 %v3721, %v3733
        %v3735 = vpop.f32.mrf.mxu0
        %3736 = vdwg.mxu0
        %3737 = vmatpush.bf16.msra.mxu0 %v3206
        %3738 = vmatpush.bf16.msra.mxu0 %v3194
        %3739 = vmatpush.bf16.msra.mxu0 %v3182
        %3740 = vmatpush.bf16.msra.mxu0 %v3170
        %3741 = vmatpush.bf16.msra.mxu0 %v3158
        %3742 = vmatpush.bf16.msra.mxu0 %v3146
        %3743 = vmatpush.bf16.msra.mxu0 %v3134
        %3744 = vmatpush.bf16.msra.mxu0 %v3122
        %3745 = vmatmul.bf16.gmra.mxu0 %v2008
        %v3746 = vpop.f32.mrf.mxu0
        %v3747 = vadd.f32 %v3734, %v3746
        %v3748 = vpop.f32.mrf.mxu0
        %3749 = vdwg.mxu0
        %3750 = vmatpush.bf16.msra.mxu0 0
        %3751 = vmatpush.bf16.msra.mxu0 0
        %3752 = vmatpush.bf16.msra.mxu0 0
        %3753 = vmatpush.bf16.msra.mxu0 0
        %3754 = vmatpush.bf16.msra.mxu0 0
        %3755 = vmatpush.bf16.msra.mxu0 0
        %3756 = vmatpush.bf16.msra.mxu0 %v3578
        %3757 = vmatpush.bf16.msra.mxu0 %v3218
        %3758 = vmatmul.bf16.gmra.mxu0 %v3568
        %v3759 = vpop.f32.mrf.mxu0
        %v3760 = vadd.f32 %v3747, %v3759
        %v3761 = vpop.f32.mrf.mxu0
        %3762 = vdwg.mxu0
        %3763 = vmatpush.bf16.msra.mxu0 %v3015
        %3764 = vmatpush.bf16.msra.mxu0 %v3003
        %3765 = vmatpush.bf16.msra.mxu0 %v2991
        %3766 = vmatpush.bf16.msra.mxu0 %v2979
        %3767 = vmatpush.bf16.msra.mxu0 %v2967
        %3768 = vmatpush.bf16.msra.mxu0 %v2955
        %3769 = vmatpush.bf16.msra.mxu0 %v2943
        %3770 = vmatpush.bf16.msra.mxu0 %v2931
        %3771 = vmatmul.bf16.gmra.mxu0 %v2006
        %v3772 = vpop.f32.mrf.mxu0
        %v3773 = vadd.f32 %v3545, %v3772
        %v3774 = vpop.f32.mrf.mxu0
        %3775 = vdwg.mxu0
        %3776 = vmatpush.bf16.msra.mxu0 %v3111
        %3777 = vmatpush.bf16.msra.mxu0 %v3099
        %3778 = vmatpush.bf16.msra.mxu0 %v3087
        %3779 = vmatpush.bf16.msra.mxu0 %v3075
        %3780 = vmatpush.bf16.msra.mxu0 %v3063
        %3781 = vmatpush.bf16.msra.mxu0 %v3051
        %3782 = vmatpush.bf16.msra.mxu0 %v3039
        %3783 = vmatpush.bf16.msra.mxu0 %v3027
        %3784 = vmatmul.bf16.gmra.mxu0 %v2007
        %v3785 = vpop.f32.mrf.mxu0
        %v3786 = vadd.f32 %v3773, %v3785
        %v3787 = vpop.f32.mrf.mxu0
        %3788 = vdwg.mxu0
        %3789 = vmatpush.bf16.msra.mxu0 %v3207
        %3790 = vmatpush.bf16.msra.mxu0 %v3195
        %3791 = vmatpush.bf16.msra.mxu0 %v3183
        %3792 = vmatpush.bf16.msra.mxu0 %v3171
        %3793 = vmatpush.bf16.msra.mxu0 %v3159
        %3794 = vmatpush.bf16.msra.mxu0 %v3147
        %3795 = vmatpush.bf16.msra.mxu0 %v3135
        %3796 = vmatpush.bf16.msra.mxu0 %v3123
        %3797 = vmatmul.bf16.gmra.mxu0 %v2008
        %v3798 = vpop.f32.mrf.mxu0
        %v3799 = vadd.f32 %v3786, %v3798
        %v3800 = vpop.f32.mrf.mxu0
        %3801 = vdwg.mxu0
        %3802 = vmatpush.bf16.msra.mxu0 0
        %3803 = vmatpush.bf16.msra.mxu0 0
        %3804 = vmatpush.bf16.msra.mxu0 0
        %3805 = vmatpush.bf16.msra.mxu0 0
        %3806 = vmatpush.bf16.msra.mxu0 0
        %3807 = vmatpush.bf16.msra.mxu0 0
        %3808 = vmatpush.bf16.msra.mxu0 %v3581
        %3809 = vmatpush.bf16.msra.mxu0 %v3219
        %3810 = vmatmul.bf16.gmra.mxu0 %v3568
        %v3811 = vpop.f32.mrf.mxu0
        %v3812 = vadd.f32 %v3799, %v3811
        %v3813 = vpop.f32.mrf.mxu0
        %3814 = vdwg.mxu0
        %3815 = vmatpush.bf16.msra.mxu0 %v3016
        %3816 = vmatpush.bf16.msra.mxu0 %v3004
        %3817 = vmatpush.bf16.msra.mxu0 %v2992
        %3818 = vmatpush.bf16.msra.mxu0 %v2980
        %3819 = vmatpush.bf16.msra.mxu0 %v2968
        %3820 = vmatpush.bf16.msra.mxu0 %v2956
        %3821 = vmatpush.bf16.msra.mxu0 %v2944
        %3822 = vmatpush.bf16.msra.mxu0 %v2932
        %3823 = vmatmul.bf16.gmra.mxu0 %v2006
        %v3824 = vpop.f32.mrf.mxu0
        %v3825 = vadd.f32 %v3546, %v3824
        %v3826 = vpop.f32.mrf.mxu0
        %3827 = vdwg.mxu0
        %3828 = vmatpush.bf16.msra.mxu0 %v3112
        %3829 = vmatpush.bf16.msra.mxu0 %v3100
        %3830 = vmatpush.bf16.msra.mxu0 %v3088
        %3831 = vmatpush.bf16.msra.mxu0 %v3076
        %3832 = vmatpush.bf16.msra.mxu0 %v3064
        %3833 = vmatpush.bf16.msra.mxu0 %v3052
        %3834 = vmatpush.bf16.msra.mxu0 %v3040
        %3835 = vmatpush.bf16.msra.mxu0 %v3028
        %3836 = vmatmul.bf16.gmra.mxu0 %v2007
        %v3837 = vpop.f32.mrf.mxu0
        %v3838 = vadd.f32 %v3825, %v3837
        %v3839 = vpop.f32.mrf.mxu0
        %3840 = vdwg.mxu0
        %3841 = vmatpush.bf16.msra.mxu0 %v3208
        %3842 = vmatpush.bf16.msra.mxu0 %v3196
        %3843 = vmatpush.bf16.msra.mxu0 %v3184
        %3844 = vmatpush.bf16.msra.mxu0 %v3172
        %3845 = vmatpush.bf16.msra.mxu0 %v3160
        %3846 = vmatpush.bf16.msra.mxu0 %v3148
        %3847 = vmatpush.bf16.msra.mxu0 %v3136
        %3848 = vmatpush.bf16.msra.mxu0 %v3124
        %3849 = vmatmul.bf16.gmra.mxu0 %v2008
        %v3850 = vpop.f32.mrf.mxu0
        %v3851 = vadd.f32 %v3838, %v3850
        %v3852 = vpop.f32.mrf.mxu0
        %3853 = vdwg.mxu0
        %3854 = vmatpush.bf16.msra.mxu0 0
        %3855 = vmatpush.bf16.msra.mxu0 0
        %3856 = vmatpush.bf16.msra.mxu0 0
        %3857 = vmatpush.bf16.msra.mxu0 0
        %3858 = vmatpush.bf16.msra.mxu0 0
        %3859 = vmatpush.bf16.msra.mxu0 0
        %3860 = vmatpush.bf16.msra.mxu0 %v3584
        %3861 = vmatpush.bf16.msra.mxu0 %v3220
        %3862 = vmatmul.bf16.gmra.mxu0 %v3568
        %v3863 = vpop.f32.mrf.mxu0
        %v3864 = vadd.f32 %v3851, %v3863
        %v3865 = vpop.f32.mrf.mxu0
        %3866 = vdwg.mxu0
        %3867 = vmatpush.bf16.msra.mxu0 %v3017
        %3868 = vmatpush.bf16.msra.mxu0 %v3005
        %3869 = vmatpush.bf16.msra.mxu0 %v2993
        %3870 = vmatpush.bf16.msra.mxu0 %v2981
        %3871 = vmatpush.bf16.msra.mxu0 %v2969
        %3872 = vmatpush.bf16.msra.mxu0 %v2957
        %3873 = vmatpush.bf16.msra.mxu0 %v2945
        %3874 = vmatpush.bf16.msra.mxu0 %v2933
        %3875 = vmatmul.bf16.gmra.mxu0 %v2006
        %v3876 = vpop.f32.mrf.mxu0
        %v3877 = vadd.f32 %v3547, %v3876
        %v3878 = vpop.f32.mrf.mxu0
        %3879 = vdwg.mxu0
        %3880 = vmatpush.bf16.msra.mxu0 %v3113
        %3881 = vmatpush.bf16.msra.mxu0 %v3101
        %3882 = vmatpush.bf16.msra.mxu0 %v3089
        %3883 = vmatpush.bf16.msra.mxu0 %v3077
        %3884 = vmatpush.bf16.msra.mxu0 %v3065
        %3885 = vmatpush.bf16.msra.mxu0 %v3053
        %3886 = vmatpush.bf16.msra.mxu0 %v3041
        %3887 = vmatpush.bf16.msra.mxu0 %v3029
        %3888 = vmatmul.bf16.gmra.mxu0 %v2007
        %v3889 = vpop.f32.mrf.mxu0
        %v3890 = vadd.f32 %v3877, %v3889
        %v3891 = vpop.f32.mrf.mxu0
        %3892 = vdwg.mxu0
        %3893 = vmatpush.bf16.msra.mxu0 %v3209
        %3894 = vmatpush.bf16.msra.mxu0 %v3197
        %3895 = vmatpush.bf16.msra.mxu0 %v3185
        %3896 = vmatpush.bf16.msra.mxu0 %v3173
        %3897 = vmatpush.bf16.msra.mxu0 %v3161
        %3898 = vmatpush.bf16.msra.mxu0 %v3149
        %3899 = vmatpush.bf16.msra.mxu0 %v3137
        %3900 = vmatpush.bf16.msra.mxu0 %v3125
        %3901 = vmatmul.bf16.gmra.mxu0 %v2008
        %v3902 = vpop.f32.mrf.mxu0
        %v3903 = vadd.f32 %v3890, %v3902
        %v3904 = vpop.f32.mrf.mxu0
        %3905 = vdwg.mxu0
        %3906 = vmatpush.bf16.msra.mxu0 0
        %3907 = vmatpush.bf16.msra.mxu0 0
        %3908 = vmatpush.bf16.msra.mxu0 0
        %3909 = vmatpush.bf16.msra.mxu0 0
        %3910 = vmatpush.bf16.msra.mxu0 0
        %3911 = vmatpush.bf16.msra.mxu0 0
        %3912 = vmatpush.bf16.msra.mxu0 %v3587
        %3913 = vmatpush.bf16.msra.mxu0 %v3221
        %3914 = vmatmul.bf16.gmra.mxu0 %v3568
        %v3915 = vpop.f32.mrf.mxu0
        %v3916 = vadd.f32 %v3903, %v3915
        %v3917 = vpop.f32.mrf.mxu0
        %3918 = vdwg.mxu0
        %3919 = vmatpush.bf16.msra.mxu0 %v3018
        %3920 = vmatpush.bf16.msra.mxu0 %v3006
        %3921 = vmatpush.bf16.msra.mxu0 %v2994
        %3922 = vmatpush.bf16.msra.mxu0 %v2982
        %3923 = vmatpush.bf16.msra.mxu0 %v2970
        %3924 = vmatpush.bf16.msra.mxu0 %v2958
        %3925 = vmatpush.bf16.msra.mxu0 %v2946
        %3926 = vmatpush.bf16.msra.mxu0 %v2934
        %3927 = vmatmul.bf16.gmra.mxu0 %v2006
        %v3928 = vpop.f32.mrf.mxu0
        %v3929 = vadd.f32 %v3548, %v3928
        %v3930 = vpop.f32.mrf.mxu0
        %3931 = vdwg.mxu0
        %3932 = vmatpush.bf16.msra.mxu0 %v3114
        %3933 = vmatpush.bf16.msra.mxu0 %v3102
        %3934 = vmatpush.bf16.msra.mxu0 %v3090
        %3935 = vmatpush.bf16.msra.mxu0 %v3078
        %3936 = vmatpush.bf16.msra.mxu0 %v3066
        %3937 = vmatpush.bf16.msra.mxu0 %v3054
        %3938 = vmatpush.bf16.msra.mxu0 %v3042
        %3939 = vmatpush.bf16.msra.mxu0 %v3030
        %3940 = vmatmul.bf16.gmra.mxu0 %v2007
        %v3941 = vpop.f32.mrf.mxu0
        %v3942 = vadd.f32 %v3929, %v3941
        %v3943 = vpop.f32.mrf.mxu0
        %3944 = vdwg.mxu0
        %3945 = vmatpush.bf16.msra.mxu0 %v3210
        %3946 = vmatpush.bf16.msra.mxu0 %v3198
        %3947 = vmatpush.bf16.msra.mxu0 %v3186
        %3948 = vmatpush.bf16.msra.mxu0 %v3174
        %3949 = vmatpush.bf16.msra.mxu0 %v3162
        %3950 = vmatpush.bf16.msra.mxu0 %v3150
        %3951 = vmatpush.bf16.msra.mxu0 %v3138
        %3952 = vmatpush.bf16.msra.mxu0 %v3126
        %3953 = vmatmul.bf16.gmra.mxu0 %v2008
        %v3954 = vpop.f32.mrf.mxu0
        %v3955 = vadd.f32 %v3942, %v3954
        %v3956 = vpop.f32.mrf.mxu0
        %3957 = vdwg.mxu0
        %3958 = vmatpush.bf16.msra.mxu0 0
        %3959 = vmatpush.bf16.msra.mxu0 0
        %3960 = vmatpush.bf16.msra.mxu0 0
        %3961 = vmatpush.bf16.msra.mxu0 0
        %3962 = vmatpush.bf16.msra.mxu0 0
        %3963 = vmatpush.bf16.msra.mxu0 0
        %3964 = vmatpush.bf16.msra.mxu0 %v3590
        %3965 = vmatpush.bf16.msra.mxu0 %v3222
        %3966 = vmatmul.bf16.gmra.mxu0 %v3568
        %v3967 = vpop.f32.mrf.mxu0
        %v3968 = vadd.f32 %v3955, %v3967
        %v3969 = vpop.f32.mrf.mxu0
        %3970 = vdwg.mxu0
        %3971 = vmatpush.bf16.msra.mxu0 %v3019
        %3972 = vmatpush.bf16.msra.mxu0 %v3007
        %3973 = vmatpush.bf16.msra.mxu0 %v2995
        %3974 = vmatpush.bf16.msra.mxu0 %v2983
        %3975 = vmatpush.bf16.msra.mxu0 %v2971
        %3976 = vmatpush.bf16.msra.mxu0 %v2959
        %3977 = vmatpush.bf16.msra.mxu0 %v2947
        %3978 = vmatpush.bf16.msra.mxu0 %v2935
        %3979 = vmatmul.bf16.gmra.mxu0 %v2006
        %v3980 = vpop.f32.mrf.mxu0
        %v3981 = vadd.f32 %v3549, %v3980
        %v3982 = vpop.f32.mrf.mxu0
        %3983 = vdwg.mxu0
        %3984 = vmatpush.bf16.msra.mxu0 %v3115
        %3985 = vmatpush.bf16.msra.mxu0 %v3103
        %3986 = vmatpush.bf16.msra.mxu0 %v3091
        %3987 = vmatpush.bf16.msra.mxu0 %v3079
        %3988 = vmatpush.bf16.msra.mxu0 %v3067
        %3989 = vmatpush.bf16.msra.mxu0 %v3055
        %3990 = vmatpush.bf16.msra.mxu0 %v3043
        %3991 = vmatpush.bf16.msra.mxu0 %v3031
        %3992 = vmatmul.bf16.gmra.mxu0 %v2007
        %v3993 = vpop.f32.mrf.mxu0
        %v3994 = vadd.f32 %v3981, %v3993
        %v3995 = vpop.f32.mrf.mxu0
        %3996 = vdwg.mxu0
        %3997 = vmatpush.bf16.msra.mxu0 %v3211
        %3998 = vmatpush.bf16.msra.mxu0 %v3199
        %3999 = vmatpush.bf16.msra.mxu0 %v3187
        %4000 = vmatpush.bf16.msra.mxu0 %v3175
        %4001 = vmatpush.bf16.msra.mxu0 %v3163
        %4002 = vmatpush.bf16.msra.mxu0 %v3151
        %4003 = vmatpush.bf16.msra.mxu0 %v3139
        %4004 = vmatpush.bf16.msra.mxu0 %v3127
        %4005 = vmatmul.bf16.gmra.mxu0 %v2008
        %v4006 = vpop.f32.mrf.mxu0
        %v4007 = vadd.f32 %v3994, %v4006
        %v4008 = vpop.f32.mrf.mxu0
        %4009 = vdwg.mxu0
        %4010 = vmatpush.bf16.msra.mxu0 0
        %4011 = vmatpush.bf16.msra.mxu0 0
        %4012 = vmatpush.bf16.msra.mxu0 0
        %4013 = vmatpush.bf16.msra.mxu0 0
        %4014 = vmatpush.bf16.msra.mxu0 0
        %4015 = vmatpush.bf16.msra.mxu0 0
        %4016 = vmatpush.bf16.msra.mxu0 %v3593
        %4017 = vmatpush.bf16.msra.mxu0 %v3223
        %4018 = vmatmul.bf16.gmra.mxu0 %v3568
        %v4019 = vpop.f32.mrf.mxu0
        %v4020 = vadd.f32 %v4007, %v4019
        %v4021 = vpop.f32.mrf.mxu0
        %4022 = vdwg.mxu0
        %4023 = vmatpush.bf16.msra.mxu0 %v3020
        %4024 = vmatpush.bf16.msra.mxu0 %v3008
        %4025 = vmatpush.bf16.msra.mxu0 %v2996
        %4026 = vmatpush.bf16.msra.mxu0 %v2984
        %4027 = vmatpush.bf16.msra.mxu0 %v2972
        %4028 = vmatpush.bf16.msra.mxu0 %v2960
        %4029 = vmatpush.bf16.msra.mxu0 %v2948
        %4030 = vmatpush.bf16.msra.mxu0 %v2936
        %4031 = vmatmul.bf16.gmra.mxu0 %v2006
        %v4032 = vpop.f32.mrf.mxu0
        %v4033 = vadd.f32 %v3550, %v4032
        %v4034 = vpop.f32.mrf.mxu0
        %4035 = vdwg.mxu0
        %4036 = vmatpush.bf16.msra.mxu0 %v3116
        %4037 = vmatpush.bf16.msra.mxu0 %v3104
        %4038 = vmatpush.bf16.msra.mxu0 %v3092
        %4039 = vmatpush.bf16.msra.mxu0 %v3080
        %4040 = vmatpush.bf16.msra.mxu0 %v3068
        %4041 = vmatpush.bf16.msra.mxu0 %v3056
        %4042 = vmatpush.bf16.msra.mxu0 %v3044
        %4043 = vmatpush.bf16.msra.mxu0 %v3032
        %4044 = vmatmul.bf16.gmra.mxu0 %v2007
        %v4045 = vpop.f32.mrf.mxu0
        %v4046 = vadd.f32 %v4033, %v4045
        %v4047 = vpop.f32.mrf.mxu0
        %4048 = vdwg.mxu0
        %4049 = vmatpush.bf16.msra.mxu0 %v3212
        %4050 = vmatpush.bf16.msra.mxu0 %v3200
        %4051 = vmatpush.bf16.msra.mxu0 %v3188
        %4052 = vmatpush.bf16.msra.mxu0 %v3176
        %4053 = vmatpush.bf16.msra.mxu0 %v3164
        %4054 = vmatpush.bf16.msra.mxu0 %v3152
        %4055 = vmatpush.bf16.msra.mxu0 %v3140
        %4056 = vmatpush.bf16.msra.mxu0 %v3128
        %4057 = vmatmul.bf16.gmra.mxu0 %v2008
        %v4058 = vpop.f32.mrf.mxu0
        %v4059 = vadd.f32 %v4046, %v4058
        %v4060 = vpop.f32.mrf.mxu0
        %4061 = vdwg.mxu0
        %4062 = vmatpush.bf16.msra.mxu0 0
        %4063 = vmatpush.bf16.msra.mxu0 0
        %4064 = vmatpush.bf16.msra.mxu0 0
        %4065 = vmatpush.bf16.msra.mxu0 0
        %4066 = vmatpush.bf16.msra.mxu0 0
        %4067 = vmatpush.bf16.msra.mxu0 0
        %4068 = vmatpush.bf16.msra.mxu0 %v3596
        %4069 = vmatpush.bf16.msra.mxu0 %v3224
        %4070 = vmatmul.bf16.gmra.mxu0 %v3568
        %v4071 = vpop.f32.mrf.mxu0
        %v4072 = vadd.f32 %v4059, %v4071
        %v4073 = vpop.f32.mrf.mxu0
        %4074 = vdwg.mxu0
        %4075 = vmatpush.bf16.msra.mxu0 %v3021
        %4076 = vmatpush.bf16.msra.mxu0 %v3009
        %4077 = vmatpush.bf16.msra.mxu0 %v2997
        %4078 = vmatpush.bf16.msra.mxu0 %v2985
        %4079 = vmatpush.bf16.msra.mxu0 %v2973
        %4080 = vmatpush.bf16.msra.mxu0 %v2961
        %4081 = vmatpush.bf16.msra.mxu0 %v2949
        %4082 = vmatpush.bf16.msra.mxu0 %v2937
        %4083 = vmatmul.bf16.gmra.mxu0 %v2006
        %v4084 = vpop.f32.mrf.mxu0
        %v4085 = vadd.f32 %v3551, %v4084
        %v4086 = vpop.f32.mrf.mxu0
        %4087 = vdwg.mxu0
        %4088 = vmatpush.bf16.msra.mxu0 %v3117
        %4089 = vmatpush.bf16.msra.mxu0 %v3105
        %4090 = vmatpush.bf16.msra.mxu0 %v3093
        %4091 = vmatpush.bf16.msra.mxu0 %v3081
        %4092 = vmatpush.bf16.msra.mxu0 %v3069
        %4093 = vmatpush.bf16.msra.mxu0 %v3057
        %4094 = vmatpush.bf16.msra.mxu0 %v3045
        %4095 = vmatpush.bf16.msra.mxu0 %v3033
        %4096 = vmatmul.bf16.gmra.mxu0 %v2007
        %v4097 = vpop.f32.mrf.mxu0
        %v4098 = vadd.f32 %v4085, %v4097
        %v4099 = vpop.f32.mrf.mxu0
        %4100 = vdwg.mxu0
        %4101 = vmatpush.bf16.msra.mxu0 %v3213
        %4102 = vmatpush.bf16.msra.mxu0 %v3201
        %4103 = vmatpush.bf16.msra.mxu0 %v3189
        %4104 = vmatpush.bf16.msra.mxu0 %v3177
        %4105 = vmatpush.bf16.msra.mxu0 %v3165
        %4106 = vmatpush.bf16.msra.mxu0 %v3153
        %4107 = vmatpush.bf16.msra.mxu0 %v3141
        %4108 = vmatpush.bf16.msra.mxu0 %v3129
        %4109 = vmatmul.bf16.gmra.mxu0 %v2008
        %v4110 = vpop.f32.mrf.mxu0
        %v4111 = vadd.f32 %v4098, %v4110
        %v4112 = vpop.f32.mrf.mxu0
        %4113 = vdwg.mxu0
        %4114 = vmatpush.bf16.msra.mxu0 0
        %4115 = vmatpush.bf16.msra.mxu0 0
        %4116 = vmatpush.bf16.msra.mxu0 0
        %4117 = vmatpush.bf16.msra.mxu0 0
        %4118 = vmatpush.bf16.msra.mxu0 0
        %4119 = vmatpush.bf16.msra.mxu0 0
        %4120 = vmatpush.bf16.msra.mxu0 %v3599
        %4121 = vmatpush.bf16.msra.mxu0 %v3225
        %4122 = vmatmul.bf16.gmra.mxu0 %v3568
        %v4123 = vpop.f32.mrf.mxu0
        %v4124 = vadd.f32 %v4111, %v4123
        %v4125 = vpop.f32.mrf.mxu0
        %4126 = vdwg.mxu0
        %4127 = vmatpush.bf16.msra.mxu0 %v3022
        %4128 = vmatpush.bf16.msra.mxu0 %v3010
        %4129 = vmatpush.bf16.msra.mxu0 %v2998
        %4130 = vmatpush.bf16.msra.mxu0 %v2986
        %4131 = vmatpush.bf16.msra.mxu0 %v2974
        %4132 = vmatpush.bf16.msra.mxu0 %v2962
        %4133 = vmatpush.bf16.msra.mxu0 %v2950
        %4134 = vmatpush.bf16.msra.mxu0 %v2938
        %4135 = vmatmul.bf16.gmra.mxu0 %v2006
        %v4136 = vpop.f32.mrf.mxu0
        %v4137 = vadd.f32 %v3552, %v4136
        %v4138 = vpop.f32.mrf.mxu0
        %4139 = vdwg.mxu0
        %4140 = vmatpush.bf16.msra.mxu0 %v3118
        %4141 = vmatpush.bf16.msra.mxu0 %v3106
        %4142 = vmatpush.bf16.msra.mxu0 %v3094
        %4143 = vmatpush.bf16.msra.mxu0 %v3082
        %4144 = vmatpush.bf16.msra.mxu0 %v3070
        %4145 = vmatpush.bf16.msra.mxu0 %v3058
        %4146 = vmatpush.bf16.msra.mxu0 %v3046
        %4147 = vmatpush.bf16.msra.mxu0 %v3034
        %4148 = vmatmul.bf16.gmra.mxu0 %v2007
        %v4149 = vpop.f32.mrf.mxu0
        %v4150 = vadd.f32 %v4137, %v4149
        %v4151 = vpop.f32.mrf.mxu0
        %4152 = vdwg.mxu0
        %4153 = vmatpush.bf16.msra.mxu0 %v3214
        %4154 = vmatpush.bf16.msra.mxu0 %v3202
        %4155 = vmatpush.bf16.msra.mxu0 %v3190
        %4156 = vmatpush.bf16.msra.mxu0 %v3178
        %4157 = vmatpush.bf16.msra.mxu0 %v3166
        %4158 = vmatpush.bf16.msra.mxu0 %v3154
        %4159 = vmatpush.bf16.msra.mxu0 %v3142
        %4160 = vmatpush.bf16.msra.mxu0 %v3130
        %4161 = vmatmul.bf16.gmra.mxu0 %v2008
        %v4162 = vpop.f32.mrf.mxu0
        %v4163 = vadd.f32 %v4150, %v4162
        %v4164 = vpop.f32.mrf.mxu0
        %4165 = vdwg.mxu0
        %4166 = vmatpush.bf16.msra.mxu0 0
        %4167 = vmatpush.bf16.msra.mxu0 0
        %4168 = vmatpush.bf16.msra.mxu0 0
        %4169 = vmatpush.bf16.msra.mxu0 0
        %4170 = vmatpush.bf16.msra.mxu0 0
        %4171 = vmatpush.bf16.msra.mxu0 0
        %4172 = vmatpush.bf16.msra.mxu0 %v3602
        %4173 = vmatpush.bf16.msra.mxu0 %v3226
        %4174 = vmatmul.bf16.gmra.mxu0 %v3568
        %v4175 = vpop.f32.mrf.mxu0
        %v4176 = vadd.f32 %v4163, %v4175
        %v4177 = vpop.f32.mrf.mxu0
        %4178 = vdwg.mxu0
        %4179 = vmatpush.bf16.msra.mxu0 %v3023
        %4180 = vmatpush.bf16.msra.mxu0 %v3011
        %4181 = vmatpush.bf16.msra.mxu0 %v2999
        %4182 = vmatpush.bf16.msra.mxu0 %v2987
        %4183 = vmatpush.bf16.msra.mxu0 %v2975
        %4184 = vmatpush.bf16.msra.mxu0 %v2963
        %4185 = vmatpush.bf16.msra.mxu0 %v2951
        %4186 = vmatpush.bf16.msra.mxu0 %v2939
        %4187 = vmatmul.bf16.gmra.mxu0 %v2006
        %v4188 = vpop.f32.mrf.mxu0
        %v4189 = vadd.f32 %v3553, %v4188
        %v4190 = vpop.f32.mrf.mxu0
        %4191 = vdwg.mxu0
        %4192 = vmatpush.bf16.msra.mxu0 %v3119
        %4193 = vmatpush.bf16.msra.mxu0 %v3107
        %4194 = vmatpush.bf16.msra.mxu0 %v3095
        %4195 = vmatpush.bf16.msra.mxu0 %v3083
        %4196 = vmatpush.bf16.msra.mxu0 %v3071
        %4197 = vmatpush.bf16.msra.mxu0 %v3059
        %4198 = vmatpush.bf16.msra.mxu0 %v3047
        %4199 = vmatpush.bf16.msra.mxu0 %v3035
        %4200 = vmatmul.bf16.gmra.mxu0 %v2007
        %v4201 = vpop.f32.mrf.mxu0
        %v4202 = vadd.f32 %v4189, %v4201
        %v4203 = vpop.f32.mrf.mxu0
        %4204 = vdwg.mxu0
        %4205 = vmatpush.bf16.msra.mxu0 %v3215
        %4206 = vmatpush.bf16.msra.mxu0 %v3203
        %4207 = vmatpush.bf16.msra.mxu0 %v3191
        %4208 = vmatpush.bf16.msra.mxu0 %v3179
        %4209 = vmatpush.bf16.msra.mxu0 %v3167
        %4210 = vmatpush.bf16.msra.mxu0 %v3155
        %4211 = vmatpush.bf16.msra.mxu0 %v3143
        %4212 = vmatpush.bf16.msra.mxu0 %v3131
        %4213 = vmatmul.bf16.gmra.mxu0 %v2008
        %v4214 = vpop.f32.mrf.mxu0
        %v4215 = vadd.f32 %v4202, %v4214
        %v4216 = vpop.f32.mrf.mxu0
        %4217 = vdwg.mxu0
        %4218 = vmatpush.bf16.msra.mxu0 0
        %4219 = vmatpush.bf16.msra.mxu0 0
        %4220 = vmatpush.bf16.msra.mxu0 0
        %4221 = vmatpush.bf16.msra.mxu0 0
        %4222 = vmatpush.bf16.msra.mxu0 0
        %4223 = vmatpush.bf16.msra.mxu0 0
        %4224 = vmatpush.bf16.msra.mxu0 %v3605
        %4225 = vmatpush.bf16.msra.mxu0 %v3227
        %4226 = vmatmul.bf16.gmra.mxu0 %v3568
        %v4227 = vpop.f32.mrf.mxu0
        %v4228 = vadd.f32 %v4215, %v4227
        %v4229 = vpop.f32.mrf.mxu0
        %4230 = vdwg.mxu0
        %v4231 = vadd.f32 %v1851, %v3656
        %v4232 = vadd.f32 %v1864, %v3708
        %v4233 = vadd.f32 %v1877, %v3760
        %v4234 = vadd.f32 %v1890, %v3812
        %v4235 = vxor.u32 %v4231, 2147483648
        %v4236 = vxor.u32 %v4232, 2147483648
        %v4237 = vxor.u32 %v4233, 2147483648
        %v4238 = vxor.u32 %v4234, 2147483648
        %v4239 = vmul.f32 %v4235, 1.442695
        %v4240 = vpow.pop %v4239
        %v4241 = vmul.f32 %v4236, 1.442695
        %v4242 = vpow.pop %v4241
        %v4243 = vmul.f32 %v4237, 1.442695
        %v4244 = vpow.pop %v4243
        %v4245 = vmul.f32 %v4238, 1.442695
        %v4246 = vpow.pop %v4245
        %v4247 = vadd.f32 %v4240, 1.0
        %v4248 = vadd.f32 %v4242, 1.0
        %v4249 = vadd.f32 %v4244, 1.0
        %v4250 = vadd.f32 %v4246, 1.0
        %v4251 = vrcp.pop %v4247
        %v4252 = vmul.f32 %v4247, %v4251
        %v4253 = vsub.f32 1.0, %v4252
        %v4254 = vmul.f32 %v4251, %v4253
        %v4255 = vadd.f32 %v4251, %v4254
        %vm4256 = vweird.f32 %v4247
        %vm4257 = vweird.f32 %v4251
        %vm4258 = vmor %vm4256, %vm4257
        %v4259 = vsel %vm4258, %v4251, %v4255
        %v4260 = vand.u32 2147483647, %v4247
        %vm4261 = vcmp.eq.f32.partialorder %v4260, 8.507059e+37
        %v4262 = vand.u32 %v4247, 2147483648
        %v4263 = vor.u32 1.1754944e-38, %v4262
        %v4264 = vsel %vm4261, %v4263, %v4259
        %v4265 = vmul.f32 1.0, %v4264
        %v4266 = vrcp.pop %v4248
        %v4267 = vmul.f32 %v4248, %v4266
        %v4268 = vsub.f32 1.0, %v4267
        %v4269 = vmul.f32 %v4266, %v4268
        %v4270 = vadd.f32 %v4266, %v4269
        %vm4271 = vweird.f32 %v4248
        %vm4272 = vweird.f32 %v4266
        %vm4273 = vmor %vm4271, %vm4272
        %v4274 = vsel %vm4273, %v4266, %v4270
        %v4275 = vand.u32 2147483647, %v4248
        %vm4276 = vcmp.eq.f32.partialorder %v4275, 8.507059e+37
        %v4277 = vand.u32 %v4248, 2147483648
        %v4278 = vor.u32 1.1754944e-38, %v4277
        %v4279 = vsel %vm4276, %v4278, %v4274
        %v4280 = vmul.f32 1.0, %v4279
        %v4281 = vrcp.pop %v4249
        %v4282 = vmul.f32 %v4249, %v4281
        %v4283 = vsub.f32 1.0, %v4282
        %v4284 = vmul.f32 %v4281, %v4283
        %v4285 = vadd.f32 %v4281, %v4284
        %vm4286 = vweird.f32 %v4249
        %vm4287 = vweird.f32 %v4281
        %vm4288 = vmor %vm4286, %vm4287
        %v4289 = vsel %vm4288, %v4281, %v4285
        %v4290 = vand.u32 2147483647, %v4249
        %vm4291 = vcmp.eq.f32.partialorder %v4290, 8.507059e+37
        %v4292 = vand.u32 %v4249, 2147483648
        %v4293 = vor.u32 1.1754944e-38, %v4292
        %v4294 = vsel %vm4291, %v4293, %v4289
        %v4295 = vmul.f32 1.0, %v4294
        %v4296 = vrcp.pop %v4250
        %v4297 = vmul.f32 %v4250, %v4296
        %v4298 = vsub.f32 1.0, %v4297
        %v4299 = vmul.f32 %v4296, %v4298
        %v4300 = vadd.f32 %v4296, %v4299
        %vm4301 = vweird.f32 %v4250
        %vm4302 = vweird.f32 %v4296
        %vm4303 = vmor %vm4301, %vm4302
        %v4304 = vsel %vm4303, %v4296, %v4300
        %v4305 = vand.u32 2147483647, %v4250
        %vm4306 = vcmp.eq.f32.partialorder %v4305, 8.507059e+37
        %v4307 = vand.u32 %v4250, 2147483648
        %v4308 = vor.u32 1.1754944e-38, %v4307
        %v4309 = vsel %vm4306, %v4308, %v4304
        %v4310 = vmul.f32 1.0, %v4309
        %v4311 = vadd.f32 %v1903, %v3864
        %v4312 = vadd.f32 %v1916, %v3916
        %v4313 = vadd.f32 %v1929, %v3968
        %v4314 = vadd.f32 %v1942, %v4020
        %v4315 = vxor.u32 %v4311, 2147483648
        %v4316 = vxor.u32 %v4312, 2147483648
        %v4317 = vxor.u32 %v4313, 2147483648
        %v4318 = vxor.u32 %v4314, 2147483648
        %v4319 = vmul.f32 %v4315, 1.442695
        %v4320 = vpow.pop %v4319
        %v4321 = vmul.f32 %v4316, 1.442695
        %v4322 = vpow.pop %v4321
        %v4323 = vmul.f32 %v4317, 1.442695
        %v4324 = vpow.pop %v4323
        %v4325 = vmul.f32 %v4318, 1.442695
        %v4326 = vpow.pop %v4325
        %v4327 = vadd.f32 %v4320, 1.0
        %v4328 = vadd.f32 %v4322, 1.0
        %v4329 = vadd.f32 %v4324, 1.0
        %v4330 = vadd.f32 %v4326, 1.0
        %v4331 = vrcp.pop %v4327
        %v4332 = vmul.f32 %v4327, %v4331
        %v4333 = vsub.f32 1.0, %v4332
        %v4334 = vmul.f32 %v4331, %v4333
        %v4335 = vadd.f32 %v4331, %v4334
        %vm4336 = vweird.f32 %v4327
        %vm4337 = vweird.f32 %v4331
        %vm4338 = vmor %vm4336, %vm4337
        %v4339 = vsel %vm4338, %v4331, %v4335
        %v4340 = vand.u32 2147483647, %v4327
        %vm4341 = vcmp.eq.f32.partialorder %v4340, 8.507059e+37
        %v4342 = vand.u32 %v4327, 2147483648
        %v4343 = vor.u32 1.1754944e-38, %v4342
        %v4344 = vsel %vm4341, %v4343, %v4339
        %v4345 = vmul.f32 1.0, %v4344
        %v4346 = vrcp.pop %v4328
        %v4347 = vmul.f32 %v4328, %v4346
        %v4348 = vsub.f32 1.0, %v4347
        %v4349 = vmul.f32 %v4346, %v4348
        %v4350 = vadd.f32 %v4346, %v4349
        %vm4351 = vweird.f32 %v4328
        %vm4352 = vweird.f32 %v4346
        %vm4353 = vmor %vm4351, %vm4352
        %v4354 = vsel %vm4353, %v4346, %v4350
        %v4355 = vand.u32 2147483647, %v4328
        %vm4356 = vcmp.eq.f32.partialorder %v4355, 8.507059e+37
        %v4357 = vand.u32 %v4328, 2147483648
        %v4358 = vor.u32 1.1754944e-38, %v4357
        %v4359 = vsel %vm4356, %v4358, %v4354
        %v4360 = vmul.f32 1.0, %v4359
        %v4361 = vrcp.pop %v4329
        %v4362 = vmul.f32 %v4329, %v4361
        %v4363 = vsub.f32 1.0, %v4362
        %v4364 = vmul.f32 %v4361, %v4363
        %v4365 = vadd.f32 %v4361, %v4364
        %vm4366 = vweird.f32 %v4329
        %vm4367 = vweird.f32 %v4361
        %vm4368 = vmor %vm4366, %vm4367
        %v4369 = vsel %vm4368, %v4361, %v4365
        %v4370 = vand.u32 2147483647, %v4329
        %vm4371 = vcmp.eq.f32.partialorder %v4370, 8.507059e+37
        %v4372 = vand.u32 %v4329, 2147483648
        %v4373 = vor.u32 1.1754944e-38, %v4372
        %v4374 = vsel %vm4371, %v4373, %v4369
        %v4375 = vmul.f32 1.0, %v4374
        %v4376 = vrcp.pop %v4330
        %v4377 = vmul.f32 %v4330, %v4376
        %v4378 = vsub.f32 1.0, %v4377
        %v4379 = vmul.f32 %v4376, %v4378
        %v4380 = vadd.f32 %v4376, %v4379
        %vm4381 = vweird.f32 %v4330
        %vm4382 = vweird.f32 %v4376
        %vm4383 = vmor %vm4381, %vm4382
        %v4384 = vsel %vm4383, %v4376, %v4380
        %v4385 = vand.u32 2147483647, %v4330
        %vm4386 = vcmp.eq.f32.partialorder %v4385, 8.507059e+37
        %v4387 = vand.u32 %v4330, 2147483648
        %v4388 = vor.u32 1.1754944e-38, %v4387
        %v4389 = vsel %vm4386, %v4388, %v4384
        %v4390 = vmul.f32 1.0, %v4389
        %v4391 = vmul.f32 %v4265, %v4072
        %v4392 = vmul.f32 %v4280, %v4124
        %v4393 = vmul.f32 %v4295, %v4176
        %v4394 = vmul.f32 %v4310, %v4228
        %v4395 = vadd.f32 %v1955, %v4391
        %v4396 = vadd.f32 %v1968, %v4392
        %v4397 = vadd.f32 %v1981, %v4393
        %v4398 = vadd.f32 %v1994, %v4394
        %v4399 = vtanh.pop %v4395
        %v4400 = vtanh.pop %v4396
        %v4401 = vtanh.pop %v4397
        %v4402 = vtanh.pop %v4398
        %v4403 = vsub.f32 1.0, %v4345
        %v4404 = vsub.f32 1.0, %v4360
        %v4405 = vsub.f32 1.0, %v4375
        %v4406 = vsub.f32 1.0, %v4390
        %v4407 = vmul.f32 %v4403, %v4399
        %v4408 = vmul.f32 %v4404, %v4400
        %v4409 = vmul.f32 %v4405, %v4401
        %v4410 = vmul.f32 %v4406, %v4402
        %v4411 = vmul.f32 %v4345, %v1998
        %v4412 = vmul.f32 %v4360, %v1999
        %v4413 = vmul.f32 %v4375, %v2000
        %v4414 = vmul.f32 %v4390, %v2001
        %v4415 = vadd.f32 %v4407, %v4411
        %v4416 = vadd.f32 %v4408, %v4412
        %v4417 = vadd.f32 %v4409, %v4413
        %v4418 = vadd.f32 %v4410, %v4414
        %v4419 = vlaneseq
        %v4420 = vshrl.u32 %v4419, 7
        %v4421 = vld [vmem:[%s564] sm:$0xff]
        %v4422 = vld [vmem:[%s564 + $0x8] sm:$0xff]
        %v4423 = vld [vmem:[%s564 + $0x10] sm:$0xff]
        %v4424 = vld [vmem:[%s564 + $0x18] sm:$0xff]
        %v4425 = vld [vmem:[%s564 + $0x20] sm:$0xff]
        %v4426 = vpack.c.bf16 %v4421, %v4421
        %v4427 = vpack.c.bf16 %v4422, %v4422
        %v4428 = vpack.c.bf16 %v4423, %v4423
        %v4429 = vpack.c.bf16 %v4424, %v4424
        %v4430 = vpack.c.bf16 %v4425, %v4425
        %v4432 = vperm.slane %v1331, 0
        %v4501 = vunpack.c.l.b16 %v1264
        %v4502 = vunpack.c.l.b16 %v1265
        %v4503 = vunpack.c.l.b16 %v1266
        %v4504 = vunpack.c.l.b16 %v1267
        %v4505 = vunpack.c.l.b16 %v1268
        %v4506 = vunpack.c.l.b16 %v1269
        %v4507 = vunpack.c.l.b16 %v1270
        %v4508 = vunpack.c.l.b16 %v1271
        %v4509 = vunpack.c.l.b16 %v1272
        %v4510 = vunpack.c.l.b16 %v1273
        %v4511 = vunpack.c.l.b16 %v1274
        %v4512 = vunpack.c.l.b16 %v1275
        %v4513 = vunpack.c.l.b16 %v1276
        %v4514 = vunpack.c.l.b16 %v1277
        %v4515 = vunpack.c.l.b16 %v1278
        %v4516 = vunpack.c.l.b16 %v1279
        %v4517 = vunpack.c.l.b16 %v1280
        %v4518 = vunpack.c.l.b16 %v1281
        %v4519 = vunpack.c.l.b16 %v1282
        %v4520 = vunpack.c.l.b16 %v1283
        %v4521 = vunpack.c.l.b16 %v1284
        %v4522 = vunpack.c.l.b16 %v1285
        %v4523 = vunpack.c.l.b16 %v1286
        %v4524 = vunpack.c.l.b16 %v1287
        %v4525 = vunpack.c.l.b16 %v1288
        %v4526 = vunpack.c.l.b16 %v1289
        %v4527 = vunpack.c.l.b16 %v1290
        %v4528 = vunpack.c.l.b16 %v1291
        %v4529 = vunpack.c.l.b16 %v1292
        %v4530 = vunpack.c.l.b16 %v1293
        %v4531 = vunpack.c.l.b16 %v1294
        %v4532 = vunpack.c.l.b16 %v1295
        %v4533 = vunpack.c.l.b16 %v1296
        %v4534 = vunpack.c.l.b16 %v1297
        %v4535 = vunpack.c.l.b16 %v1298
        %v4536 = vunpack.c.l.b16 %v1299
        %v4537 = vunpack.c.l.b16 %v1300
        %v4538 = vunpack.c.l.b16 %v1301
        %v4539 = vunpack.c.l.b16 %v1302
        %v4540 = vunpack.c.l.b16 %v1303
        %v4541 = vunpack.c.l.b16 %v1304
        %v4542 = vunpack.c.l.b16 %v1305
        %v4543 = vunpack.c.l.b16 %v1306
        %v4544 = vunpack.c.l.b16 %v1307
        %v4545 = vunpack.c.l.b16 %v1308
        %v4546 = vunpack.c.l.b16 %v1309
        %v4547 = vunpack.c.l.b16 %v1310
        %v4548 = vunpack.c.l.b16 %v1311
        %v4549 = vunpack.c.l.b16 %v1312
        %v4550 = vunpack.c.l.b16 %v1313
        %v4551 = vunpack.c.l.b16 %v1314
        %v4552 = vunpack.c.l.b16 %v1315
        %v4553 = vunpack.c.l.b16 %v1316
        %v4554 = vunpack.c.l.b16 %v1317
        %v4555 = vunpack.c.l.b16 %v1318
        %v4556 = vunpack.c.l.b16 %v1319
        %v4557 = vunpack.c.l.b16 %v1320
        %v4558 = vunpack.c.l.b16 %v1321
        %v4559 = vunpack.c.l.b16 %v1322
        %v4560 = vunpack.c.l.b16 %v1323
        %v4561 = vunpack.c.l.b16 %v1324
        %v4562 = vunpack.c.l.b16 %v1325
        %v4563 = vunpack.c.l.b16 %v1326
        %v4564 = vunpack.c.l.b16 %v1327
        %v4565 = vunpack.c.l.b16 %v1328
        %v4566 = vunpack.c.l.b16 %v1329
        %v4567 = vunpack.c.l.b16 %v1330
        %v4568 = vpack.c.b16 %v4502, %v4501
        %v4569 = vpack.c.b16 %v4504, %v4503
        %v4570 = vpack.c.b16 %v4506, %v4505
        %v4571 = vpack.c.b16 %v4508, %v4507
        %v4572 = vpack.c.b16 %v4510, %v4509
        %v4573 = vpack.c.b16 %v4512, %v4511
        %v4574 = vpack.c.b16 %v4514, %v4513
        %v4575 = vpack.c.b16 %v4516, %v4515
        %v4576 = vpack.c.b16 %v4518, %v4517
        %v4577 = vpack.c.b16 %v4520, %v4519
        %v4578 = vpack.c.b16 %v4522, %v4521
        %v4579 = vpack.c.b16 %v4524, %v4523
        %v4580 = vpack.c.b16 %v4526, %v4525
        %v4581 = vpack.c.b16 %v4528, %v4527
        %v4582 = vpack.c.b16 %v4530, %v4529
        %v4583 = vpack.c.b16 %v4532, %v4531
        %v4584 = vpack.c.b16 %v4534, %v4533
        %v4585 = vpack.c.b16 %v4536, %v4535
        %v4586 = vpack.c.b16 %v4538, %v4537
        %v4587 = vpack.c.b16 %v4540, %v4539
        %v4588 = vpack.c.b16 %v4542, %v4541
        %v4589 = vpack.c.b16 %v4544, %v4543
        %v4590 = vpack.c.b16 %v4546, %v4545
        %v4591 = vpack.c.b16 %v4548, %v4547
        %v4592 = vpack.c.b16 %v4550, %v4549
        %v4593 = vpack.c.b16 %v4552, %v4551
        %v4594 = vpack.c.b16 %v4554, %v4553
        %v4595 = vpack.c.b16 %v4556, %v4555
        %v4596 = vpack.c.b16 %v4558, %v4557
        %v4597 = vpack.c.b16 %v4560, %v4559
        %v4598 = vpack.c.b16 %v4562, %v4561
        %v4599 = vpack.c.b16 %v4564, %v4563
        %v4600 = vpack.c.b16 %v4566, %v4565
        %v4601 = vpack.c.b16 %v4567, %v4567
        %v4636 = vsel %vm3566, %v4430, 0
        %v4639 = vsel %vm3570, %v4601, 0
        %4641 = vmatpush.bf16.msra.mxu0 %v4575
        %4642 = vmatpush.bf16.msra.mxu0 %v4574
        %4643 = vmatpush.bf16.msra.mxu0 %v4573
        %4644 = vmatpush.bf16.msra.mxu0 %v4572
        %4645 = vmatpush.bf16.msra.mxu0 %v4571
        %4646 = vmatpush.bf16.msra.mxu0 %v4570
        %4647 = vmatpush.bf16.msra.mxu0 %v4569
        %4648 = vmatpush.bf16.msra.mxu0 %v4568
        %4649 = vmatmul.bf16.gmra.mxu0 %v4426
        %v4650 = vpop.f32.mrf.mxu0
        %v4651 = vadd.f32 %v4432, %v4650
        %v4652 = vpop.f32.mrf.mxu0
        %4653 = vdwg.mxu0
        %4654 = vmatpush.bf16.msra.mxu0 %v4583
        %4655 = vmatpush.bf16.msra.mxu0 %v4582
        %4656 = vmatpush.bf16.msra.mxu0 %v4581
        %4657 = vmatpush.bf16.msra.mxu0 %v4580
        %4658 = vmatpush.bf16.msra.mxu0 %v4579
        %4659 = vmatpush.bf16.msra.mxu0 %v4578
        %4660 = vmatpush.bf16.msra.mxu0 %v4577
        %4661 = vmatpush.bf16.msra.mxu0 %v4576
        %4662 = vmatmul.bf16.gmra.mxu0 %v4427
        %v4663 = vpop.f32.mrf.mxu0
        %v4664 = vadd.f32 %v4651, %v4663
        %v4665 = vpop.f32.mrf.mxu0
        %4666 = vdwg.mxu0
        %4667 = vmatpush.bf16.msra.mxu0 %v4591
        %4668 = vmatpush.bf16.msra.mxu0 %v4590
        %4669 = vmatpush.bf16.msra.mxu0 %v4589
        %4670 = vmatpush.bf16.msra.mxu0 %v4588
        %4671 = vmatpush.bf16.msra.mxu0 %v4587
        %4672 = vmatpush.bf16.msra.mxu0 %v4586
        %4673 = vmatpush.bf16.msra.mxu0 %v4585
        %4674 = vmatpush.bf16.msra.mxu0 %v4584
        %4675 = vmatmul.bf16.gmra.mxu0 %v4428
        %v4676 = vpop.f32.mrf.mxu0
        %v4677 = vadd.f32 %v4664, %v4676
        %v4678 = vpop.f32.mrf.mxu0
        %4679 = vdwg.mxu0
        %4680 = vmatpush.bf16.msra.mxu0 %v4599
        %4681 = vmatpush.bf16.msra.mxu0 %v4598
        %4682 = vmatpush.bf16.msra.mxu0 %v4597
        %4683 = vmatpush.bf16.msra.mxu0 %v4596
        %4684 = vmatpush.bf16.msra.mxu0 %v4595
        %4685 = vmatpush.bf16.msra.mxu0 %v4594
        %4686 = vmatpush.bf16.msra.mxu0 %v4593
        %4687 = vmatpush.bf16.msra.mxu0 %v4592
        %4688 = vmatmul.bf16.gmra.mxu0 %v4429
        %v4689 = vpop.f32.mrf.mxu0
        %v4690 = vadd.f32 %v4677, %v4689
        %v4691 = vpop.f32.mrf.mxu0
        %4692 = vdwg.mxu0
        %4693 = vmatpush.bf16.msra.mxu0 0
        %4694 = vmatpush.bf16.msra.mxu0 0
        %4695 = vmatpush.bf16.msra.mxu0 0
        %4696 = vmatpush.bf16.msra.mxu0 0
        %4697 = vmatpush.bf16.msra.mxu0 0
        %4698 = vmatpush.bf16.msra.mxu0 0
        %4699 = vmatpush.bf16.msra.mxu0 %v4639
        %4700 = vmatpush.bf16.msra.mxu0 %v4600
        %4701 = vmatmul.bf16.gmra.mxu0 %v4636
        %v4702 = vpop.f32.mrf.mxu0
        %v4703 = vadd.f32 %v4690, %v4702
        %v4704 = vpop.f32.mrf.mxu0
        %4705 = vdwg.mxu0
        %v4706 = vrot.slane %v4703, 4
        %v4707 = vmax.f32 %v4703, %v4706
        %v4708 = vrot.slane %v4707, 2
        %v4709 = vmax.f32 %v4707, %v4708
        %v4710 = vrot.slane %v4709, 1
        %v4711 = vmax.f32 %v4709, %v4710
        %s4712 = smul.u32 %s48, 128
        %s4713 = sld [smem:[#allocation3 + %s4712]]
        %v4714 = vstv %s4713
        %vm4715 = vcmp.eq.s32.totalorder %v4420, %v4714
        %v4716 = vsel %vm4715, 1, 0
        %vm4717 = vcmp.eq.s32.totalorder %v4716, 1
        %v4718 = vsel %vm4717, %v4703, 0.0
        %v4719 = vrot.slane %v4718, 4
        %v4720 = vadd.f32 %v4718, %v4719
        %v4721 = vrot.slane %v4720, 2
        %v4722 = vadd.f32 %v4720, %v4721
        %v4723 = vrot.slane %v4722, 1
        %v4724 = vadd.f32 %v4722, %v4723
        %v4725 = vld [vmem:[%s664 + $0x1] sm:$0x1]
        %v4726 = vpack.c.bf16 %v4711, %v4711
        %v4727 = vpack.c.bf16 %v4724, %v4724
        %v4728 = vpack.c.bf16 %v4725, %v4725
        %v4921 = vunpack.c.l.b16 %v666
        %v4922 = vunpack.c.h.b16 %v666
        %v4923 = vunpack.c.l.b16 %v667
        %v4924 = vunpack.c.h.b16 %v667
        %v4925 = vunpack.c.l.b16 %v668
        %v4926 = vunpack.c.h.b16 %v668
        %v4927 = vunpack.c.l.b16 %v669
        %v4928 = vunpack.c.h.b16 %v669
        %v4929 = vunpack.c.l.b16 %v670
        %v4930 = vunpack.c.h.b16 %v670
        %v4931 = vunpack.c.l.b16 %v671
        %v4932 = vunpack.c.h.b16 %v671
        %v4933 = vunpack.c.l.b16 %v672
        %v4934 = vunpack.c.h.b16 %v672
        %v4935 = vunpack.c.l.b16 %v673
        %v4936 = vunpack.c.h.b16 %v673
        %v4937 = vunpack.c.l.b16 %v674
        %v4938 = vunpack.c.h.b16 %v674
        %v4939 = vunpack.c.l.b16 %v675
        %v4940 = vunpack.c.h.b16 %v675
        %v4941 = vunpack.c.l.b16 %v676
        %v4942 = vunpack.c.h.b16 %v676
        %v4943 = vunpack.c.l.b16 %v677
        %v4944 = vunpack.c.h.b16 %v677
        %v4945 = vunpack.c.l.b16 %v678
        %v4946 = vunpack.c.h.b16 %v678
        %v4947 = vunpack.c.l.b16 %v679
        %v4948 = vunpack.c.h.b16 %v679
        %v4949 = vunpack.c.l.b16 %v680
        %v4950 = vunpack.c.h.b16 %v680
        %v4951 = vunpack.c.l.b16 %v681
        %v4952 = vunpack.c.h.b16 %v681
        %v4953 = vunpack.c.l.b16 %v682
        %v4954 = vunpack.c.h.b16 %v682
        %v4955 = vunpack.c.l.b16 %v683
        %v4956 = vunpack.c.h.b16 %v683
        %v4957 = vunpack.c.l.b16 %v684
        %v4958 = vunpack.c.h.b16 %v684
        %v4959 = vunpack.c.l.b16 %v685
        %v4960 = vunpack.c.h.b16 %v685
        %v4961 = vunpack.c.l.b16 %v686
        %v4962 = vunpack.c.h.b16 %v686
        %v4963 = vunpack.c.l.b16 %v687
        %v4964 = vunpack.c.h.b16 %v687
        %v4965 = vunpack.c.l.b16 %v688
        %v4966 = vunpack.c.h.b16 %v688
        %v4967 = vunpack.c.l.b16 %v689
        %v4968 = vunpack.c.h.b16 %v689
        %v4969 = vunpack.c.l.b16 %v690
        %v4970 = vunpack.c.h.b16 %v690
        %v4971 = vunpack.c.l.b16 %v691
        %v4972 = vunpack.c.h.b16 %v691
        %v4973 = vunpack.c.l.b16 %v692
        %v4974 = vunpack.c.h.b16 %v692
        %v4975 = vunpack.c.l.b16 %v693
        %v4976 = vunpack.c.h.b16 %v693
        %v4977 = vunpack.c.l.b16 %v694
        %v4978 = vunpack.c.h.b16 %v694
        %v4979 = vunpack.c.l.b16 %v695
        %v4980 = vunpack.c.h.b16 %v695
        %v4981 = vunpack.c.l.b16 %v696
        %v4982 = vunpack.c.h.b16 %v696
        %v4983 = vunpack.c.l.b16 %v697
        %v4984 = vunpack.c.h.b16 %v697
        %v4985 = vunpack.c.l.b16 %v698
        %v4986 = vunpack.c.h.b16 %v698
        %v4987 = vunpack.c.l.b16 %v699
        %v4988 = vunpack.c.h.b16 %v699
        %v4989 = vunpack.c.l.b16 %v700
        %v4990 = vunpack.c.h.b16 %v700
        %v4991 = vunpack.c.l.b16 %v701
        %v4992 = vunpack.c.h.b16 %v701
        %v4993 = vunpack.c.l.b16 %v702
        %v4994 = vunpack.c.h.b16 %v702
        %v4995 = vunpack.c.l.b16 %v703
        %v4996 = vunpack.c.h.b16 %v703
        %v4997 = vunpack.c.l.b16 %v704
        %v4998 = vunpack.c.h.b16 %v704
        %v4999 = vunpack.c.l.b16 %v705
        %v5000 = vunpack.c.h.b16 %v705
        %v5001 = vunpack.c.l.b16 %v706
        %v5002 = vunpack.c.h.b16 %v706
        %v5003 = vunpack.c.l.b16 %v707
        %v5004 = vunpack.c.h.b16 %v707
        %v5005 = vunpack.c.l.b16 %v708
        %v5006 = vunpack.c.h.b16 %v708
        %v5007 = vunpack.c.l.b16 %v709
        %v5008 = vunpack.c.h.b16 %v709
        %v5009 = vunpack.c.l.b16 %v710
        %v5010 = vunpack.c.h.b16 %v710
        %v5011 = vunpack.c.l.b16 %v711
        %v5012 = vunpack.c.h.b16 %v711
        %v5013 = vunpack.c.l.b16 %v712
        %v5014 = vunpack.c.h.b16 %v712
        %v5015 = vunpack.c.l.b16 %v713
        %v5016 = vunpack.c.h.b16 %v713
        %v5017 = vunpack.c.l.b16 %v714
        %v5018 = vunpack.c.h.b16 %v714
        %v5019 = vunpack.c.l.b16 %v715
        %v5020 = vunpack.c.h.b16 %v715
        %v5021 = vunpack.c.l.b16 %v716
        %v5022 = vunpack.c.h.b16 %v716
        %v5023 = vunpack.c.l.b16 %v717
        %v5024 = vunpack.c.h.b16 %v717
        %v5025 = vunpack.c.l.b16 %v718
        %v5026 = vunpack.c.h.b16 %v718
        %v5027 = vunpack.c.l.b16 %v719
        %v5028 = vunpack.c.h.b16 %v719
        %v5029 = vunpack.c.l.b16 %v720
        %v5030 = vunpack.c.h.b16 %v720
        %v5031 = vunpack.c.l.b16 %v721
        %v5032 = vunpack.c.h.b16 %v721
        %v5033 = vunpack.c.l.b16 %v722
        %v5034 = vunpack.c.h.b16 %v722
        %v5035 = vunpack.c.l.b16 %v723
        %v5036 = vunpack.c.h.b16 %v723
        %v5037 = vunpack.c.l.b16 %v724
        %v5038 = vunpack.c.h.b16 %v724
        %v5039 = vunpack.c.l.b16 %v725
        %v5040 = vunpack.c.h.b16 %v725
        %v5041 = vunpack.c.l.b16 %v726
        %v5042 = vunpack.c.h.b16 %v726
        %v5043 = vunpack.c.l.b16 %v727
        %v5044 = vunpack.c.h.b16 %v727
        %v5045 = vunpack.c.l.b16 %v728
        %v5046 = vunpack.c.h.b16 %v728
        %v5047 = vunpack.c.l.b16 %v729
        %v5048 = vunpack.c.h.b16 %v729
        %v5049 = vunpack.c.l.b16 %v730
        %v5050 = vunpack.c.h.b16 %v730
        %v5051 = vunpack.c.l.b16 %v731
        %v5052 = vunpack.c.h.b16 %v731
        %v5053 = vunpack.c.l.b16 %v732
        %v5054 = vunpack.c.h.b16 %v732
        %v5055 = vunpack.c.l.b16 %v733
        %v5056 = vunpack.c.h.b16 %v733
        %v5057 = vunpack.c.l.b16 %v734
        %v5058 = vunpack.c.h.b16 %v734
        %v5059 = vunpack.c.l.b16 %v735
        %v5060 = vunpack.c.h.b16 %v735
        %v5061 = vunpack.c.l.b16 %v736
        %v5062 = vunpack.c.h.b16 %v736
        %v5063 = vunpack.c.l.b16 %v737
        %v5064 = vunpack.c.h.b16 %v737
        %v5065 = vunpack.c.l.b16 %v738
        %v5066 = vunpack.c.h.b16 %v738
        %v5067 = vunpack.c.l.b16 %v739
        %v5068 = vunpack.c.h.b16 %v739
        %v5069 = vunpack.c.l.b16 %v740
        %v5070 = vunpack.c.h.b16 %v740
        %v5071 = vunpack.c.l.b16 %v741
        %v5072 = vunpack.c.h.b16 %v741
        %v5073 = vunpack.c.l.b16 %v742
        %v5074 = vunpack.c.h.b16 %v742
        %v5075 = vunpack.c.l.b16 %v743
        %v5076 = vunpack.c.h.b16 %v743
        %v5077 = vunpack.c.l.b16 %v744
        %v5078 = vunpack.c.h.b16 %v744
        %v5079 = vunpack.c.l.b16 %v745
        %v5080 = vunpack.c.h.b16 %v745
        %v5081 = vunpack.c.l.b16 %v746
        %v5082 = vunpack.c.h.b16 %v746
        %v5083 = vunpack.c.l.b16 %v747
        %v5084 = vunpack.c.h.b16 %v747
        %v5085 = vunpack.c.l.b16 %v748
        %v5086 = vunpack.c.h.b16 %v748
        %v5087 = vunpack.c.l.b16 %v749
        %v5088 = vunpack.c.h.b16 %v749
        %v5089 = vunpack.c.l.b16 %v750
        %v5090 = vunpack.c.h.b16 %v750
        %v5091 = vunpack.c.l.b16 %v751
        %v5092 = vunpack.c.h.b16 %v751
        %v5093 = vunpack.c.l.b16 %v752
        %v5094 = vunpack.c.h.b16 %v752
        %v5095 = vunpack.c.l.b16 %v753
        %v5096 = vunpack.c.h.b16 %v753
        %v5097 = vunpack.c.l.b16 %v754
        %v5098 = vunpack.c.h.b16 %v754
        %v5099 = vunpack.c.l.b16 %v755
        %v5100 = vunpack.c.h.b16 %v755
        %v5101 = vunpack.c.l.b16 %v756
        %v5102 = vunpack.c.h.b16 %v756
        %v5103 = vunpack.c.l.b16 %v757
        %v5104 = vunpack.c.h.b16 %v757
        %v5105 = vunpack.c.l.b16 %v758
        %v5106 = vunpack.c.h.b16 %v758
        %v5107 = vunpack.c.l.b16 %v759
        %v5108 = vunpack.c.h.b16 %v759
        %v5109 = vunpack.c.l.b16 %v760
        %v5110 = vunpack.c.h.b16 %v760
        %v5111 = vunpack.c.l.b16 %v761
        %v5112 = vunpack.c.h.b16 %v761
        %v5113 = vunpack.c.l.b16 %v762
        %v5114 = vunpack.c.h.b16 %v762
        %v5115 = vunpack.c.l.b16 %v763
        %v5116 = vunpack.c.h.b16 %v763
        %v5117 = vunpack.c.l.b16 %v764
        %v5118 = vunpack.c.h.b16 %v764
        %v5119 = vunpack.c.l.b16 %v765
        %v5120 = vunpack.c.h.b16 %v765
        %v5121 = vunpack.c.l.b16 %v766
        %v5122 = vunpack.c.h.b16 %v766
        %v5123 = vunpack.c.l.b16 %v767
        %v5124 = vunpack.c.h.b16 %v767
        %v5125 = vunpack.c.l.b16 %v768
        %v5126 = vunpack.c.h.b16 %v768
        %v5127 = vunpack.c.l.b16 %v769
        %v5128 = vunpack.c.h.b16 %v769
        %v5129 = vunpack.c.l.b16 %v770
        %v5130 = vunpack.c.h.b16 %v770
        %v5131 = vunpack.c.l.b16 %v771
        %v5132 = vunpack.c.h.b16 %v771
        %v5133 = vunpack.c.l.b16 %v772
        %v5134 = vunpack.c.h.b16 %v772
        %v5135 = vunpack.c.l.b16 %v773
        %v5136 = vunpack.c.h.b16 %v773
        %v5137 = vunpack.c.l.b16 %v774
        %v5138 = vunpack.c.h.b16 %v774
        %v5139 = vunpack.c.l.b16 %v775
        %v5140 = vunpack.c.h.b16 %v775
        %v5141 = vunpack.c.l.b16 %v776
        %v5142 = vunpack.c.h.b16 %v776
        %v5143 = vunpack.c.l.b16 %v777
        %v5144 = vunpack.c.h.b16 %v777
        %v5145 = vunpack.c.l.b16 %v778
        %v5146 = vunpack.c.h.b16 %v778
        %v5147 = vunpack.c.l.b16 %v779
        %v5148 = vunpack.c.h.b16 %v779
        %v5149 = vunpack.c.l.b16 %v780
        %v5150 = vunpack.c.h.b16 %v780
        %v5151 = vunpack.c.l.b16 %v781
        %v5152 = vunpack.c.h.b16 %v781
        %v5153 = vunpack.c.l.b16 %v782
        %v5154 = vunpack.c.h.b16 %v782
        %v5155 = vunpack.c.l.b16 %v783
        %v5156 = vunpack.c.h.b16 %v783
        %v5157 = vunpack.c.l.b16 %v784
        %v5158 = vunpack.c.h.b16 %v784
        %v5159 = vunpack.c.l.b16 %v785
        %v5160 = vunpack.c.h.b16 %v785
        %v5161 = vunpack.c.l.b16 %v786
        %v5162 = vunpack.c.h.b16 %v786
        %v5163 = vunpack.c.l.b16 %v787
        %v5164 = vunpack.c.h.b16 %v787
        %v5165 = vunpack.c.l.b16 %v788
        %v5166 = vunpack.c.h.b16 %v788
        %v5167 = vunpack.c.l.b16 %v789
        %v5168 = vunpack.c.h.b16 %v789
        %v5169 = vunpack.c.l.b16 %v790
        %v5170 = vunpack.c.h.b16 %v790
        %v5171 = vunpack.c.l.b16 %v791
        %v5172 = vunpack.c.h.b16 %v791
        %v5173 = vunpack.c.l.b16 %v792
        %v5174 = vunpack.c.h.b16 %v792
        %v5175 = vunpack.c.l.b16 %v793
        %v5176 = vunpack.c.h.b16 %v793
        %v5177 = vunpack.c.l.b16 %v794
        %v5178 = vunpack.c.h.b16 %v794
        %v5179 = vunpack.c.l.b16 %v795
        %v5180 = vunpack.c.h.b16 %v795
        %v5181 = vunpack.c.l.b16 %v796
        %v5182 = vunpack.c.h.b16 %v796
        %v5183 = vunpack.c.l.b16 %v797
        %v5184 = vunpack.c.h.b16 %v797
        %v5185 = vunpack.c.l.b16 %v798
        %v5186 = vunpack.c.h.b16 %v798
        %v5187 = vunpack.c.l.b16 %v799
        %v5188 = vunpack.c.h.b16 %v799
        %v5189 = vunpack.c.l.b16 %v800
        %v5190 = vunpack.c.h.b16 %v800
        %v5191 = vunpack.c.l.b16 %v801
        %v5192 = vunpack.c.h.b16 %v801
        %v5193 = vunpack.c.l.b16 %v802
        %v5194 = vunpack.c.h.b16 %v802
        %v5195 = vunpack.c.l.b16 %v803
        %v5196 = vunpack.c.h.b16 %v803
        %v5197 = vunpack.c.l.b16 %v804
        %v5198 = vunpack.c.h.b16 %v804
        %v5199 = vunpack.c.l.b16 %v805
        %v5200 = vunpack.c.h.b16 %v805
        %v5201 = vunpack.c.l.b16 %v806
        %v5202 = vunpack.c.h.b16 %v806
        %v5203 = vunpack.c.l.b16 %v807
        %v5204 = vunpack.c.h.b16 %v807
        %v5205 = vunpack.c.l.b16 %v808
        %v5206 = vunpack.c.h.b16 %v808
        %v5207 = vunpack.c.l.b16 %v809
        %v5208 = vunpack.c.h.b16 %v809
        %v5209 = vunpack.c.l.b16 %v810
        %v5210 = vunpack.c.h.b16 %v810
        %v5211 = vunpack.c.l.b16 %v811
        %v5212 = vunpack.c.h.b16 %v811
        %v5213 = vunpack.c.l.b16 %v812
        %v5214 = vunpack.c.h.b16 %v812
        %v5215 = vunpack.c.l.b16 %v813
        %v5216 = vunpack.c.h.b16 %v813
        %v5217 = vunpack.c.l.b16 %v814
        %v5218 = vunpack.c.h.b16 %v814
        %v5219 = vunpack.c.l.b16 %v815
        %v5220 = vunpack.c.h.b16 %v815
        %v5221 = vunpack.c.l.b16 %v816
        %v5222 = vunpack.c.h.b16 %v816
        %v5223 = vunpack.c.l.b16 %v817
        %v5224 = vunpack.c.h.b16 %v817
        %v5225 = vunpack.c.l.b16 %v818
        %v5226 = vunpack.c.h.b16 %v818
        %v5227 = vunpack.c.l.b16 %v819
        %v5228 = vunpack.c.h.b16 %v819
        %v5229 = vunpack.c.l.b16 %v820
        %v5230 = vunpack.c.h.b16 %v820
        %v5231 = vunpack.c.l.b16 %v821
        %v5232 = vunpack.c.h.b16 %v821
        %v5233 = vunpack.c.l.b16 %v822
        %v5234 = vunpack.c.h.b16 %v822
        %v5235 = vunpack.c.l.b16 %v823
        %v5236 = vunpack.c.h.b16 %v823
        %v5237 = vunpack.c.l.b16 %v824
        %v5238 = vunpack.c.h.b16 %v824
        %v5239 = vunpack.c.l.b16 %v825
        %v5240 = vunpack.c.h.b16 %v825
        %v5241 = vunpack.c.l.b16 %v826
        %v5242 = vunpack.c.h.b16 %v826
        %v5243 = vunpack.c.l.b16 %v827
        %v5244 = vunpack.c.h.b16 %v827
        %v5245 = vunpack.c.l.b16 %v828
        %v5246 = vunpack.c.h.b16 %v828
        %v5247 = vunpack.c.l.b16 %v829
        %v5248 = vunpack.c.h.b16 %v829
        %v5249 = vunpack.c.l.b16 %v830
        %v5250 = vunpack.c.h.b16 %v830
        %v5251 = vunpack.c.l.b16 %v831
        %v5252 = vunpack.c.h.b16 %v831
        %v5253 = vunpack.c.l.b16 %v832
        %v5254 = vunpack.c.h.b16 %v832
        %v5255 = vunpack.c.l.b16 %v833
        %v5256 = vunpack.c.h.b16 %v833
        %v5257 = vunpack.c.l.b16 %v834
        %v5258 = vunpack.c.h.b16 %v834
        %v5259 = vunpack.c.l.b16 %v835
        %v5260 = vunpack.c.h.b16 %v835
        %v5261 = vunpack.c.l.b16 %v836
        %v5262 = vunpack.c.h.b16 %v836
        %v5263 = vunpack.c.l.b16 %v837
        %v5264 = vunpack.c.h.b16 %v837
        %v5265 = vunpack.c.l.b16 %v838
        %v5266 = vunpack.c.h.b16 %v838
        %v5267 = vunpack.c.l.b16 %v839
        %v5268 = vunpack.c.h.b16 %v839
        %v5269 = vunpack.c.l.b16 %v840
        %v5270 = vunpack.c.h.b16 %v840
        %v5271 = vunpack.c.l.b16 %v841
        %v5272 = vunpack.c.h.b16 %v841
        %v5273 = vunpack.c.l.b16 %v842
        %v5274 = vunpack.c.h.b16 %v842
        %v5275 = vunpack.c.l.b16 %v843
        %v5276 = vunpack.c.h.b16 %v843
        %v5277 = vunpack.c.l.b16 %v844
        %v5278 = vunpack.c.h.b16 %v844
        %v5279 = vunpack.c.l.b16 %v845
        %v5280 = vunpack.c.h.b16 %v845
        %v5281 = vunpack.c.l.b16 %v846
        %v5282 = vunpack.c.h.b16 %v846
        %v5283 = vunpack.c.l.b16 %v847
        %v5284 = vunpack.c.h.b16 %v847
        %v5285 = vunpack.c.l.b16 %v848
        %v5286 = vunpack.c.h.b16 %v848
        %v5287 = vunpack.c.l.b16 %v849
        %v5288 = vunpack.c.h.b16 %v849
        %v5289 = vunpack.c.l.b16 %v850
        %v5290 = vunpack.c.h.b16 %v850
        %v5291 = vunpack.c.l.b16 %v851
        %v5292 = vunpack.c.h.b16 %v851
        %v5293 = vunpack.c.l.b16 %v852
        %v5294 = vunpack.c.h.b16 %v852
        %v5295 = vunpack.c.l.b16 %v853
        %v5296 = vunpack.c.h.b16 %v853
        %v5297 = vunpack.c.l.b16 %v854
        %v5298 = vunpack.c.h.b16 %v854
        %v5299 = vunpack.c.l.b16 %v855
        %v5300 = vunpack.c.h.b16 %v855
        %v5301 = vunpack.c.l.b16 %v856
        %v5302 = vunpack.c.h.b16 %v856
        %v5303 = vunpack.c.l.b16 %v857
        %v5304 = vunpack.c.h.b16 %v857
        %v5305 = vpack.c.b16 %v4933, %v4921
        %v5306 = vpack.c.b16 %v4934, %v4922
        %v5307 = vpack.c.b16 %v4935, %v4923
        %v5308 = vpack.c.b16 %v4936, %v4924
        %v5309 = vpack.c.b16 %v4937, %v4925
        %v5310 = vpack.c.b16 %v4938, %v4926
        %v5311 = vpack.c.b16 %v4939, %v4927
        %v5312 = vpack.c.b16 %v4940, %v4928
        %v5313 = vpack.c.b16 %v4941, %v4929
        %v5314 = vpack.c.b16 %v4942, %v4930
        %v5315 = vpack.c.b16 %v4943, %v4931
        %v5316 = vpack.c.b16 %v4944, %v4932
        %v5317 = vpack.c.b16 %v4957, %v4945
        %v5318 = vpack.c.b16 %v4958, %v4946
        %v5319 = vpack.c.b16 %v4959, %v4947
        %v5320 = vpack.c.b16 %v4960, %v4948
        %v5321 = vpack.c.b16 %v4961, %v4949
        %v5322 = vpack.c.b16 %v4962, %v4950
        %v5323 = vpack.c.b16 %v4963, %v4951
        %v5324 = vpack.c.b16 %v4964, %v4952
        %v5325 = vpack.c.b16 %v4965, %v4953
        %v5326 = vpack.c.b16 %v4966, %v4954
        %v5327 = vpack.c.b16 %v4967, %v4955
        %v5328 = vpack.c.b16 %v4968, %v4956
        %v5329 = vpack.c.b16 %v4981, %v4969
        %v5330 = vpack.c.b16 %v4982, %v4970
        %v5331 = vpack.c.b16 %v4983, %v4971
        %v5332 = vpack.c.b16 %v4984, %v4972
        %v5333 = vpack.c.b16 %v4985, %v4973
        %v5334 = vpack.c.b16 %v4986, %v4974
        %v5335 = vpack.c.b16 %v4987, %v4975
        %v5336 = vpack.c.b16 %v4988, %v4976
        %v5337 = vpack.c.b16 %v4989, %v4977
        %v5338 = vpack.c.b16 %v4990, %v4978
        %v5339 = vpack.c.b16 %v4991, %v4979
        %v5340 = vpack.c.b16 %v4992, %v4980
        %v5341 = vpack.c.b16 %v5005, %v4993
        %v5342 = vpack.c.b16 %v5006, %v4994
        %v5343 = vpack.c.b16 %v5007, %v4995
        %v5344 = vpack.c.b16 %v5008, %v4996
        %v5345 = vpack.c.b16 %v5009, %v4997
        %v5346 = vpack.c.b16 %v5010, %v4998
        %v5347 = vpack.c.b16 %v5011, %v4999
        %v5348 = vpack.c.b16 %v5012, %v5000
        %v5349 = vpack.c.b16 %v5013, %v5001
        %v5350 = vpack.c.b16 %v5014, %v5002
        %v5351 = vpack.c.b16 %v5015, %v5003
        %v5352 = vpack.c.b16 %v5016, %v5004
        %v5353 = vpack.c.b16 %v5029, %v5017
        %v5354 = vpack.c.b16 %v5030, %v5018
        %v5355 = vpack.c.b16 %v5031, %v5019
        %v5356 = vpack.c.b16 %v5032, %v5020
        %v5357 = vpack.c.b16 %v5033, %v5021
        %v5358 = vpack.c.b16 %v5034, %v5022
        %v5359 = vpack.c.b16 %v5035, %v5023
        %v5360 = vpack.c.b16 %v5036, %v5024
        %v5361 = vpack.c.b16 %v5037, %v5025
        %v5362 = vpack.c.b16 %v5038, %v5026
        %v5363 = vpack.c.b16 %v5039, %v5027
        %v5364 = vpack.c.b16 %v5040, %v5028
        %v5365 = vpack.c.b16 %v5053, %v5041
        %v5366 = vpack.c.b16 %v5054, %v5042
        %v5367 = vpack.c.b16 %v5055, %v5043
        %v5368 = vpack.c.b16 %v5056, %v5044
        %v5369 = vpack.c.b16 %v5057, %v5045
        %v5370 = vpack.c.b16 %v5058, %v5046
        %v5371 = vpack.c.b16 %v5059, %v5047
        %v5372 = vpack.c.b16 %v5060, %v5048
        %v5373 = vpack.c.b16 %v5061, %v5049
        %v5374 = vpack.c.b16 %v5062, %v5050
        %v5375 = vpack.c.b16 %v5063, %v5051
        %v5376 = vpack.c.b16 %v5064, %v5052
        %v5377 = vpack.c.b16 %v5077, %v5065
        %v5378 = vpack.c.b16 %v5078, %v5066
        %v5379 = vpack.c.b16 %v5079, %v5067
        %v5380 = vpack.c.b16 %v5080, %v5068
        %v5381 = vpack.c.b16 %v5081, %v5069
        %v5382 = vpack.c.b16 %v5082, %v5070
        %v5383 = vpack.c.b16 %v5083, %v5071
        %v5384 = vpack.c.b16 %v5084, %v5072
        %v5385 = vpack.c.b16 %v5085, %v5073
        %v5386 = vpack.c.b16 %v5086, %v5074
        %v5387 = vpack.c.b16 %v5087, %v5075
        %v5388 = vpack.c.b16 %v5088, %v5076
        %v5389 = vpack.c.b16 %v5101, %v5089
        %v5390 = vpack.c.b16 %v5102, %v5090
        %v5391 = vpack.c.b16 %v5103, %v5091
        %v5392 = vpack.c.b16 %v5104, %v5092
        %v5393 = vpack.c.b16 %v5105, %v5093
        %v5394 = vpack.c.b16 %v5106, %v5094
        %v5395 = vpack.c.b16 %v5107, %v5095
        %v5396 = vpack.c.b16 %v5108, %v5096
        %v5397 = vpack.c.b16 %v5109, %v5097
        %v5398 = vpack.c.b16 %v5110, %v5098
        %v5399 = vpack.c.b16 %v5111, %v5099
        %v5400 = vpack.c.b16 %v5112, %v5100
        %v5401 = vpack.c.b16 %v5125, %v5113
        %v5402 = vpack.c.b16 %v5126, %v5114
        %v5403 = vpack.c.b16 %v5127, %v5115
        %v5404 = vpack.c.b16 %v5128, %v5116
        %v5405 = vpack.c.b16 %v5129, %v5117
        %v5406 = vpack.c.b16 %v5130, %v5118
        %v5407 = vpack.c.b16 %v5131, %v5119
        %v5408 = vpack.c.b16 %v5132, %v5120
        %v5409 = vpack.c.b16 %v5133, %v5121
        %v5410 = vpack.c.b16 %v5134, %v5122
        %v5411 = vpack.c.b16 %v5135, %v5123
        %v5412 = vpack.c.b16 %v5136, %v5124
        %v5413 = vpack.c.b16 %v5149, %v5137
        %v5414 = vpack.c.b16 %v5150, %v5138
        %v5415 = vpack.c.b16 %v5151, %v5139
        %v5416 = vpack.c.b16 %v5152, %v5140
        %v5417 = vpack.c.b16 %v5153, %v5141
        %v5418 = vpack.c.b16 %v5154, %v5142
        %v5419 = vpack.c.b16 %v5155, %v5143
        %v5420 = vpack.c.b16 %v5156, %v5144
        %v5421 = vpack.c.b16 %v5157, %v5145
        %v5422 = vpack.c.b16 %v5158, %v5146
        %v5423 = vpack.c.b16 %v5159, %v5147
        %v5424 = vpack.c.b16 %v5160, %v5148
        %v5425 = vpack.c.b16 %v5173, %v5161
        %v5426 = vpack.c.b16 %v5174, %v5162
        %v5427 = vpack.c.b16 %v5175, %v5163
        %v5428 = vpack.c.b16 %v5176, %v5164
        %v5429 = vpack.c.b16 %v5177, %v5165
        %v5430 = vpack.c.b16 %v5178, %v5166
        %v5431 = vpack.c.b16 %v5179, %v5167
        %v5432 = vpack.c.b16 %v5180, %v5168
        %v5433 = vpack.c.b16 %v5181, %v5169
        %v5434 = vpack.c.b16 %v5182, %v5170
        %v5435 = vpack.c.b16 %v5183, %v5171
        %v5436 = vpack.c.b16 %v5184, %v5172
        %v5437 = vpack.c.b16 %v5197, %v5185
        %v5438 = vpack.c.b16 %v5198, %v5186
        %v5439 = vpack.c.b16 %v5199, %v5187
        %v5440 = vpack.c.b16 %v5200, %v5188
        %v5441 = vpack.c.b16 %v5201, %v5189
        %v5442 = vpack.c.b16 %v5202, %v5190
        %v5443 = vpack.c.b16 %v5203, %v5191
        %v5444 = vpack.c.b16 %v5204, %v5192
        %v5445 = vpack.c.b16 %v5205, %v5193
        %v5446 = vpack.c.b16 %v5206, %v5194
        %v5447 = vpack.c.b16 %v5207, %v5195
        %v5448 = vpack.c.b16 %v5208, %v5196
        %v5449 = vpack.c.b16 %v5221, %v5209
        %v5450 = vpack.c.b16 %v5222, %v5210
        %v5451 = vpack.c.b16 %v5223, %v5211
        %v5452 = vpack.c.b16 %v5224, %v5212
        %v5453 = vpack.c.b16 %v5225, %v5213
        %v5454 = vpack.c.b16 %v5226, %v5214
        %v5455 = vpack.c.b16 %v5227, %v5215
        %v5456 = vpack.c.b16 %v5228, %v5216
        %v5457 = vpack.c.b16 %v5229, %v5217
        %v5458 = vpack.c.b16 %v5230, %v5218
        %v5459 = vpack.c.b16 %v5231, %v5219
        %v5460 = vpack.c.b16 %v5232, %v5220
        %v5461 = vpack.c.b16 %v5245, %v5233
        %v5462 = vpack.c.b16 %v5246, %v5234
        %v5463 = vpack.c.b16 %v5247, %v5235
        %v5464 = vpack.c.b16 %v5248, %v5236
        %v5465 = vpack.c.b16 %v5249, %v5237
        %v5466 = vpack.c.b16 %v5250, %v5238
        %v5467 = vpack.c.b16 %v5251, %v5239
        %v5468 = vpack.c.b16 %v5252, %v5240
        %v5469 = vpack.c.b16 %v5253, %v5241
        %v5470 = vpack.c.b16 %v5254, %v5242
        %v5471 = vpack.c.b16 %v5255, %v5243
        %v5472 = vpack.c.b16 %v5256, %v5244
        %v5473 = vpack.c.b16 %v5269, %v5257
        %v5474 = vpack.c.b16 %v5270, %v5258
        %v5475 = vpack.c.b16 %v5271, %v5259
        %v5476 = vpack.c.b16 %v5272, %v5260
        %v5477 = vpack.c.b16 %v5273, %v5261
        %v5478 = vpack.c.b16 %v5274, %v5262
        %v5479 = vpack.c.b16 %v5275, %v5263
        %v5480 = vpack.c.b16 %v5276, %v5264
        %v5481 = vpack.c.b16 %v5277, %v5265
        %v5482 = vpack.c.b16 %v5278, %v5266
        %v5483 = vpack.c.b16 %v5279, %v5267
        %v5484 = vpack.c.b16 %v5280, %v5268
        %v5485 = vpack.c.b16 %v5293, %v5281
        %v5486 = vpack.c.b16 %v5294, %v5282
        %v5487 = vpack.c.b16 %v5295, %v5283
        %v5488 = vpack.c.b16 %v5296, %v5284
        %v5489 = vpack.c.b16 %v5297, %v5285
        %v5490 = vpack.c.b16 %v5298, %v5286
        %v5491 = vpack.c.b16 %v5299, %v5287
        %v5492 = vpack.c.b16 %v5300, %v5288
        %v5493 = vpack.c.b16 %v5301, %v5289
        %v5494 = vpack.c.b16 %v5302, %v5290
        %v5495 = vpack.c.b16 %v5303, %v5291
        %v5496 = vpack.c.b16 %v5304, %v5292
        %5689 = vmatpush.bf16.msra.mxu0 %v5389
        %5690 = vmatpush.bf16.msra.mxu0 %v5377
        %5691 = vmatpush.bf16.msra.mxu0 %v5365
        %5692 = vmatpush.bf16.msra.mxu0 %v5353
        %5693 = vmatpush.bf16.msra.mxu0 %v5341
        %5694 = vmatpush.bf16.msra.mxu0 %v5329
        %5695 = vmatpush.bf16.msra.mxu0 %v5317
        %5696 = vmatpush.bf16.msra.mxu0 %v5305
        %5697 = vmatmul.bf16.gmra.mxu0 %v4726
        %v5698 = vpop.f32.mrf.mxu0
        %v5699 = vadd.f32 %v1817, %v5698
        %v5700 = vpop.f32.mrf.mxu0
        %5701 = vdwg.mxu0
        %5702 = vmatpush.bf16.msra.mxu0 %v5485
        %5703 = vmatpush.bf16.msra.mxu0 %v5473
        %5704 = vmatpush.bf16.msra.mxu0 %v5461
        %5705 = vmatpush.bf16.msra.mxu0 %v5449
        %5706 = vmatpush.bf16.msra.mxu0 %v5437
        %5707 = vmatpush.bf16.msra.mxu0 %v5425
        %5708 = vmatpush.bf16.msra.mxu0 %v5413
        %5709 = vmatpush.bf16.msra.mxu0 %v5401
        %5710 = vmatmul.bf16.gmra.mxu0 %v4727
        %v5711 = vpop.f32.mrf.mxu0
        %v5712 = vadd.f32 %v5699, %v5711
        %v5713 = vpop.f32.mrf.mxu0
        %5714 = vdwg.mxu0
        %5715 = vmatpush.bf16.msra.mxu0 %v1707
        %5716 = vmatpush.bf16.msra.mxu0 %v1695
        %5717 = vmatpush.bf16.msra.mxu0 %v1683
        %5718 = vmatpush.bf16.msra.mxu0 %v1671
        %5719 = vmatpush.bf16.msra.mxu0 %v1659
        %5720 = vmatpush.bf16.msra.mxu0 %v1647
        %5721 = vmatpush.bf16.msra.mxu0 %v1635
        %5722 = vmatpush.bf16.msra.mxu0 %v1623
        %5723 = vmatmul.bf16.gmra.mxu0 %v4728
        %v5724 = vpop.f32.mrf.mxu0
        %v5725 = vadd.f32 %v5712, %v5724
        %v5726 = vpop.f32.mrf.mxu0
        %5727 = vdwg.mxu0
        %5728 = vmatpush.bf16.msra.mxu0 %v5390
        %5729 = vmatpush.bf16.msra.mxu0 %v5378
        %5730 = vmatpush.bf16.msra.mxu0 %v5366
        %5731 = vmatpush.bf16.msra.mxu0 %v5354
        %5732 = vmatpush.bf16.msra.mxu0 %v5342
        %5733 = vmatpush.bf16.msra.mxu0 %v5330
        %5734 = vmatpush.bf16.msra.mxu0 %v5318
        %5735 = vmatpush.bf16.msra.mxu0 %v5306
        %5736 = vmatmul.bf16.gmra.mxu0 %v4726
        %v5737 = vpop.f32.mrf.mxu0
        %v5738 = vadd.f32 %v1818, %v5737
        %v5739 = vpop.f32.mrf.mxu0
        %5740 = vdwg.mxu0
        %5741 = vmatpush.bf16.msra.mxu0 %v5486
        %5742 = vmatpush.bf16.msra.mxu0 %v5474
        %5743 = vmatpush.bf16.msra.mxu0 %v5462
        %5744 = vmatpush.bf16.msra.mxu0 %v5450
        %5745 = vmatpush.bf16.msra.mxu0 %v5438
        %5746 = vmatpush.bf16.msra.mxu0 %v5426
        %5747 = vmatpush.bf16.msra.mxu0 %v5414
        %5748 = vmatpush.bf16.msra.mxu0 %v5402
        %5749 = vmatmul.bf16.gmra.mxu0 %v4727
        %v5750 = vpop.f32.mrf.mxu0
        %v5751 = vadd.f32 %v5738, %v5750
        %v5752 = vpop.f32.mrf.mxu0
        %5753 = vdwg.mxu0
        %5754 = vmatpush.bf16.msra.mxu0 %v1708
        %5755 = vmatpush.bf16.msra.mxu0 %v1696
        %5756 = vmatpush.bf16.msra.mxu0 %v1684
        %5757 = vmatpush.bf16.msra.mxu0 %v1672
        %5758 = vmatpush.bf16.msra.mxu0 %v1660
        %5759 = vmatpush.bf16.msra.mxu0 %v1648
        %5760 = vmatpush.bf16.msra.mxu0 %v1636
        %5761 = vmatpush.bf16.msra.mxu0 %v1624
        %5762 = vmatmul.bf16.gmra.mxu0 %v4728
        %v5763 = vpop.f32.mrf.mxu0
        %v5764 = vadd.f32 %v5751, %v5763
        %v5765 = vpop.f32.mrf.mxu0
        %5766 = vdwg.mxu0
        %5767 = vmatpush.bf16.msra.mxu0 %v5391
        %5768 = vmatpush.bf16.msra.mxu0 %v5379
        %5769 = vmatpush.bf16.msra.mxu0 %v5367
        %5770 = vmatpush.bf16.msra.mxu0 %v5355
        %5771 = vmatpush.bf16.msra.mxu0 %v5343
        %5772 = vmatpush.bf16.msra.mxu0 %v5331
        %5773 = vmatpush.bf16.msra.mxu0 %v5319
        %5774 = vmatpush.bf16.msra.mxu0 %v5307
        %5775 = vmatmul.bf16.gmra.mxu0 %v4726
        %v5776 = vpop.f32.mrf.mxu0
        %v5777 = vadd.f32 %v1819, %v5776
        %v5778 = vpop.f32.mrf.mxu0
        %5779 = vdwg.mxu0
        %5780 = vmatpush.bf16.msra.mxu0 %v5487
        %5781 = vmatpush.bf16.msra.mxu0 %v5475
        %5782 = vmatpush.bf16.msra.mxu0 %v5463
        %5783 = vmatpush.bf16.msra.mxu0 %v5451
        %5784 = vmatpush.bf16.msra.mxu0 %v5439
        %5785 = vmatpush.bf16.msra.mxu0 %v5427
        %5786 = vmatpush.bf16.msra.mxu0 %v5415
        %5787 = vmatpush.bf16.msra.mxu0 %v5403
        %5788 = vmatmul.bf16.gmra.mxu0 %v4727
        %v5789 = vpop.f32.mrf.mxu0
        %v5790 = vadd.f32 %v5777, %v5789
        %v5791 = vpop.f32.mrf.mxu0
        %5792 = vdwg.mxu0
        %5793 = vmatpush.bf16.msra.mxu0 %v1709
        %5794 = vmatpush.bf16.msra.mxu0 %v1697
        %5795 = vmatpush.bf16.msra.mxu0 %v1685
        %5796 = vmatpush.bf16.msra.mxu0 %v1673
        %5797 = vmatpush.bf16.msra.mxu0 %v1661
        %5798 = vmatpush.bf16.msra.mxu0 %v1649
        %5799 = vmatpush.bf16.msra.mxu0 %v1637
        %5800 = vmatpush.bf16.msra.mxu0 %v1625
        %5801 = vmatmul.bf16.gmra.mxu0 %v4728
        %v5802 = vpop.f32.mrf.mxu0
        %v5803 = vadd.f32 %v5790, %v5802
        %v5804 = vpop.f32.mrf.mxu0
        %5805 = vdwg.mxu0
        %5806 = vmatpush.bf16.msra.mxu0 %v5392
        %5807 = vmatpush.bf16.msra.mxu0 %v5380
        %5808 = vmatpush.bf16.msra.mxu0 %v5368
        %5809 = vmatpush.bf16.msra.mxu0 %v5356
        %5810 = vmatpush.bf16.msra.mxu0 %v5344
        %5811 = vmatpush.bf16.msra.mxu0 %v5332
        %5812 = vmatpush.bf16.msra.mxu0 %v5320
        %5813 = vmatpush.bf16.msra.mxu0 %v5308
        %5814 = vmatmul.bf16.gmra.mxu0 %v4726
        %v5815 = vpop.f32.mrf.mxu0
        %v5816 = vadd.f32 %v1820, %v5815
        %v5817 = vpop.f32.mrf.mxu0
        %5818 = vdwg.mxu0
        %5819 = vmatpush.bf16.msra.mxu0 %v5488
        %5820 = vmatpush.bf16.msra.mxu0 %v5476
        %5821 = vmatpush.bf16.msra.mxu0 %v5464
        %5822 = vmatpush.bf16.msra.mxu0 %v5452
        %5823 = vmatpush.bf16.msra.mxu0 %v5440
        %5824 = vmatpush.bf16.msra.mxu0 %v5428
        %5825 = vmatpush.bf16.msra.mxu0 %v5416
        %5826 = vmatpush.bf16.msra.mxu0 %v5404
        %5827 = vmatmul.bf16.gmra.mxu0 %v4727
        %v5828 = vpop.f32.mrf.mxu0
        %v5829 = vadd.f32 %v5816, %v5828
        %v5830 = vpop.f32.mrf.mxu0
        %5831 = vdwg.mxu0
        %5832 = vmatpush.bf16.msra.mxu0 %v1710
        %5833 = vmatpush.bf16.msra.mxu0 %v1698
        %5834 = vmatpush.bf16.msra.mxu0 %v1686
        %5835 = vmatpush.bf16.msra.mxu0 %v1674
        %5836 = vmatpush.bf16.msra.mxu0 %v1662
        %5837 = vmatpush.bf16.msra.mxu0 %v1650
        %5838 = vmatpush.bf16.msra.mxu0 %v1638
        %5839 = vmatpush.bf16.msra.mxu0 %v1626
        %5840 = vmatmul.bf16.gmra.mxu0 %v4728
        %v5841 = vpop.f32.mrf.mxu0
        %v5842 = vadd.f32 %v5829, %v5841
        %v5843 = vpop.f32.mrf.mxu0
        %5844 = vdwg.mxu0
        %5845 = vmatpush.bf16.msra.mxu0 %v5393
        %5846 = vmatpush.bf16.msra.mxu0 %v5381
        %5847 = vmatpush.bf16.msra.mxu0 %v5369
        %5848 = vmatpush.bf16.msra.mxu0 %v5357
        %5849 = vmatpush.bf16.msra.mxu0 %v5345
        %5850 = vmatpush.bf16.msra.mxu0 %v5333
        %5851 = vmatpush.bf16.msra.mxu0 %v5321
        %5852 = vmatpush.bf16.msra.mxu0 %v5309
        %5853 = vmatmul.bf16.gmra.mxu0 %v4726
        %v5854 = vpop.f32.mrf.mxu0
        %v5855 = vadd.f32 %v1821, %v5854
        %v5856 = vpop.f32.mrf.mxu0
        %5857 = vdwg.mxu0
        %5858 = vmatpush.bf16.msra.mxu0 %v5489
        %5859 = vmatpush.bf16.msra.mxu0 %v5477
        %5860 = vmatpush.bf16.msra.mxu0 %v5465
        %5861 = vmatpush.bf16.msra.mxu0 %v5453
        %5862 = vmatpush.bf16.msra.mxu0 %v5441
        %5863 = vmatpush.bf16.msra.mxu0 %v5429
        %5864 = vmatpush.bf16.msra.mxu0 %v5417
        %5865 = vmatpush.bf16.msra.mxu0 %v5405
        %5866 = vmatmul.bf16.gmra.mxu0 %v4727
        %v5867 = vpop.f32.mrf.mxu0
        %v5868 = vadd.f32 %v5855, %v5867
        %v5869 = vpop.f32.mrf.mxu0
        %5870 = vdwg.mxu0
        %5871 = vmatpush.bf16.msra.mxu0 %v1711
        %5872 = vmatpush.bf16.msra.mxu0 %v1699
        %5873 = vmatpush.bf16.msra.mxu0 %v1687
        %5874 = vmatpush.bf16.msra.mxu0 %v1675
        %5875 = vmatpush.bf16.msra.mxu0 %v1663
        %5876 = vmatpush.bf16.msra.mxu0 %v1651
        %5877 = vmatpush.bf16.msra.mxu0 %v1639
        %5878 = vmatpush.bf16.msra.mxu0 %v1627
        %5879 = vmatmul.bf16.gmra.mxu0 %v4728
        %v5880 = vpop.f32.mrf.mxu0
        %v5881 = vadd.f32 %v5868, %v5880
        %v5882 = vpop.f32.mrf.mxu0
        %5883 = vdwg.mxu0
        %5884 = vmatpush.bf16.msra.mxu0 %v5394
        %5885 = vmatpush.bf16.msra.mxu0 %v5382
        %5886 = vmatpush.bf16.msra.mxu0 %v5370
        %5887 = vmatpush.bf16.msra.mxu0 %v5358
        %5888 = vmatpush.bf16.msra.mxu0 %v5346
        %5889 = vmatpush.bf16.msra.mxu0 %v5334
        %5890 = vmatpush.bf16.msra.mxu0 %v5322
        %5891 = vmatpush.bf16.msra.mxu0 %v5310
        %5892 = vmatmul.bf16.gmra.mxu0 %v4726
        %v5893 = vpop.f32.mrf.mxu0
        %v5894 = vadd.f32 %v1822, %v5893
        %v5895 = vpop.f32.mrf.mxu0
        %5896 = vdwg.mxu0
        %5897 = vmatpush.bf16.msra.mxu0 %v5490
        %5898 = vmatpush.bf16.msra.mxu0 %v5478
        %5899 = vmatpush.bf16.msra.mxu0 %v5466
        %5900 = vmatpush.bf16.msra.mxu0 %v5454
        %5901 = vmatpush.bf16.msra.mxu0 %v5442
        %5902 = vmatpush.bf16.msra.mxu0 %v5430
        %5903 = vmatpush.bf16.msra.mxu0 %v5418
        %5904 = vmatpush.bf16.msra.mxu0 %v5406
        %5905 = vmatmul.bf16.gmra.mxu0 %v4727
        %v5906 = vpop.f32.mrf.mxu0
        %v5907 = vadd.f32 %v5894, %v5906
        %v5908 = vpop.f32.mrf.mxu0
        %5909 = vdwg.mxu0
        %5910 = vmatpush.bf16.msra.mxu0 %v1712
        %5911 = vmatpush.bf16.msra.mxu0 %v1700
        %5912 = vmatpush.bf16.msra.mxu0 %v1688
        %5913 = vmatpush.bf16.msra.mxu0 %v1676
        %5914 = vmatpush.bf16.msra.mxu0 %v1664
        %5915 = vmatpush.bf16.msra.mxu0 %v1652
        %5916 = vmatpush.bf16.msra.mxu0 %v1640
        %5917 = vmatpush.bf16.msra.mxu0 %v1628
        %5918 = vmatmul.bf16.gmra.mxu0 %v4728
        %v5919 = vpop.f32.mrf.mxu0
        %v5920 = vadd.f32 %v5907, %v5919
        %v5921 = vpop.f32.mrf.mxu0
        %5922 = vdwg.mxu0
        %5923 = vmatpush.bf16.msra.mxu0 %v5395
        %5924 = vmatpush.bf16.msra.mxu0 %v5383
        %5925 = vmatpush.bf16.msra.mxu0 %v5371
        %5926 = vmatpush.bf16.msra.mxu0 %v5359
        %5927 = vmatpush.bf16.msra.mxu0 %v5347
        %5928 = vmatpush.bf16.msra.mxu0 %v5335
        %5929 = vmatpush.bf16.msra.mxu0 %v5323
        %5930 = vmatpush.bf16.msra.mxu0 %v5311
        %5931 = vmatmul.bf16.gmra.mxu0 %v4726
        %v5932 = vpop.f32.mrf.mxu0
        %v5933 = vadd.f32 %v1823, %v5932
        %v5934 = vpop.f32.mrf.mxu0
        %5935 = vdwg.mxu0
        %5936 = vmatpush.bf16.msra.mxu0 %v5491
        %5937 = vmatpush.bf16.msra.mxu0 %v5479
        %5938 = vmatpush.bf16.msra.mxu0 %v5467
        %5939 = vmatpush.bf16.msra.mxu0 %v5455
        %5940 = vmatpush.bf16.msra.mxu0 %v5443
        %5941 = vmatpush.bf16.msra.mxu0 %v5431
        %5942 = vmatpush.bf16.msra.mxu0 %v5419
        %5943 = vmatpush.bf16.msra.mxu0 %v5407
        %5944 = vmatmul.bf16.gmra.mxu0 %v4727
        %v5945 = vpop.f32.mrf.mxu0
        %v5946 = vadd.f32 %v5933, %v5945
        %v5947 = vpop.f32.mrf.mxu0
        %5948 = vdwg.mxu0
        %5949 = vmatpush.bf16.msra.mxu0 %v1713
        %5950 = vmatpush.bf16.msra.mxu0 %v1701
        %5951 = vmatpush.bf16.msra.mxu0 %v1689
        %5952 = vmatpush.bf16.msra.mxu0 %v1677
        %5953 = vmatpush.bf16.msra.mxu0 %v1665
        %5954 = vmatpush.bf16.msra.mxu0 %v1653
        %5955 = vmatpush.bf16.msra.mxu0 %v1641
        %5956 = vmatpush.bf16.msra.mxu0 %v1629
        %5957 = vmatmul.bf16.gmra.mxu0 %v4728
        %v5958 = vpop.f32.mrf.mxu0
        %v5959 = vadd.f32 %v5946, %v5958
        %v5960 = vpop.f32.mrf.mxu0
        %5961 = vdwg.mxu0
        %5962 = vmatpush.bf16.msra.mxu0 %v5396
        %5963 = vmatpush.bf16.msra.mxu0 %v5384
        %5964 = vmatpush.bf16.msra.mxu0 %v5372
        %5965 = vmatpush.bf16.msra.mxu0 %v5360
        %5966 = vmatpush.bf16.msra.mxu0 %v5348
        %5967 = vmatpush.bf16.msra.mxu0 %v5336
        %5968 = vmatpush.bf16.msra.mxu0 %v5324
        %5969 = vmatpush.bf16.msra.mxu0 %v5312
        %5970 = vmatmul.bf16.gmra.mxu0 %v4726
        %v5971 = vpop.f32.mrf.mxu0
        %v5972 = vadd.f32 %v1824, %v5971
        %v5973 = vpop.f32.mrf.mxu0
        %5974 = vdwg.mxu0
        %5975 = vmatpush.bf16.msra.mxu0 %v5492
        %5976 = vmatpush.bf16.msra.mxu0 %v5480
        %5977 = vmatpush.bf16.msra.mxu0 %v5468
        %5978 = vmatpush.bf16.msra.mxu0 %v5456
        %5979 = vmatpush.bf16.msra.mxu0 %v5444
        %5980 = vmatpush.bf16.msra.mxu0 %v5432
        %5981 = vmatpush.bf16.msra.mxu0 %v5420
        %5982 = vmatpush.bf16.msra.mxu0 %v5408
        %5983 = vmatmul.bf16.gmra.mxu0 %v4727
        %v5984 = vpop.f32.mrf.mxu0
        %v5985 = vadd.f32 %v5972, %v5984
        %v5986 = vpop.f32.mrf.mxu0
        %5987 = vdwg.mxu0
        %5988 = vmatpush.bf16.msra.mxu0 %v1714
        %5989 = vmatpush.bf16.msra.mxu0 %v1702
        %5990 = vmatpush.bf16.msra.mxu0 %v1690
        %5991 = vmatpush.bf16.msra.mxu0 %v1678
        %5992 = vmatpush.bf16.msra.mxu0 %v1666
        %5993 = vmatpush.bf16.msra.mxu0 %v1654
        %5994 = vmatpush.bf16.msra.mxu0 %v1642
        %5995 = vmatpush.bf16.msra.mxu0 %v1630
        %5996 = vmatmul.bf16.gmra.mxu0 %v4728
        %v5997 = vpop.f32.mrf.mxu0
        %v5998 = vadd.f32 %v5985, %v5997
        %v5999 = vpop.f32.mrf.mxu0
        %6000 = vdwg.mxu0
        %6001 = vmatpush.bf16.msra.mxu0 %v5397
        %6002 = vmatpush.bf16.msra.mxu0 %v5385
        %6003 = vmatpush.bf16.msra.mxu0 %v5373
        %6004 = vmatpush.bf16.msra.mxu0 %v5361
        %6005 = vmatpush.bf16.msra.mxu0 %v5349
        %6006 = vmatpush.bf16.msra.mxu0 %v5337
        %6007 = vmatpush.bf16.msra.mxu0 %v5325
        %6008 = vmatpush.bf16.msra.mxu0 %v5313
        %6009 = vmatmul.bf16.gmra.mxu0 %v4726
        %v6010 = vpop.f32.mrf.mxu0
        %v6011 = vadd.f32 %v1825, %v6010
        %v6012 = vpop.f32.mrf.mxu0
        %6013 = vdwg.mxu0
        %6014 = vmatpush.bf16.msra.mxu0 %v5493
        %6015 = vmatpush.bf16.msra.mxu0 %v5481
        %6016 = vmatpush.bf16.msra.mxu0 %v5469
        %6017 = vmatpush.bf16.msra.mxu0 %v5457
        %6018 = vmatpush.bf16.msra.mxu0 %v5445
        %6019 = vmatpush.bf16.msra.mxu0 %v5433
        %6020 = vmatpush.bf16.msra.mxu0 %v5421
        %6021 = vmatpush.bf16.msra.mxu0 %v5409
        %6022 = vmatmul.bf16.gmra.mxu0 %v4727
        %v6023 = vpop.f32.mrf.mxu0
        %v6024 = vadd.f32 %v6011, %v6023
        %v6025 = vpop.f32.mrf.mxu0
        %6026 = vdwg.mxu0
        %6027 = vmatpush.bf16.msra.mxu0 %v1715
        %6028 = vmatpush.bf16.msra.mxu0 %v1703
        %6029 = vmatpush.bf16.msra.mxu0 %v1691
        %6030 = vmatpush.bf16.msra.mxu0 %v1679
        %6031 = vmatpush.bf16.msra.mxu0 %v1667
        %6032 = vmatpush.bf16.msra.mxu0 %v1655
        %6033 = vmatpush.bf16.msra.mxu0 %v1643
        %6034 = vmatpush.bf16.msra.mxu0 %v1631
        %6035 = vmatmul.bf16.gmra.mxu0 %v4728
        %v6036 = vpop.f32.mrf.mxu0
        %v6037 = vadd.f32 %v6024, %v6036
        %v6038 = vpop.f32.mrf.mxu0
        %6039 = vdwg.mxu0
        %6040 = vmatpush.bf16.msra.mxu0 %v5398
        %6041 = vmatpush.bf16.msra.mxu0 %v5386
        %6042 = vmatpush.bf16.msra.mxu0 %v5374
        %6043 = vmatpush.bf16.msra.mxu0 %v5362
        %6044 = vmatpush.bf16.msra.mxu0 %v5350
        %6045 = vmatpush.bf16.msra.mxu0 %v5338
        %6046 = vmatpush.bf16.msra.mxu0 %v5326
        %6047 = vmatpush.bf16.msra.mxu0 %v5314
        %6048 = vmatmul.bf16.gmra.mxu0 %v4726
        %v6049 = vpop.f32.mrf.mxu0
        %v6050 = vadd.f32 %v1826, %v6049
        %v6051 = vpop.f32.mrf.mxu0
        %6052 = vdwg.mxu0
        %6053 = vmatpush.bf16.msra.mxu0 %v5494
        %6054 = vmatpush.bf16.msra.mxu0 %v5482
        %6055 = vmatpush.bf16.msra.mxu0 %v5470
        %6056 = vmatpush.bf16.msra.mxu0 %v5458
        %6057 = vmatpush.bf16.msra.mxu0 %v5446
        %6058 = vmatpush.bf16.msra.mxu0 %v5434
        %6059 = vmatpush.bf16.msra.mxu0 %v5422
        %6060 = vmatpush.bf16.msra.mxu0 %v5410
        %6061 = vmatmul.bf16.gmra.mxu0 %v4727
        %v6062 = vpop.f32.mrf.mxu0
        %v6063 = vadd.f32 %v6050, %v6062
        %v6064 = vpop.f32.mrf.mxu0
        %6065 = vdwg.mxu0
        %6066 = vmatpush.bf16.msra.mxu0 %v1716
        %6067 = vmatpush.bf16.msra.mxu0 %v1704
        %6068 = vmatpush.bf16.msra.mxu0 %v1692
        %6069 = vmatpush.bf16.msra.mxu0 %v1680
        %6070 = vmatpush.bf16.msra.mxu0 %v1668
        %6071 = vmatpush.bf16.msra.mxu0 %v1656
        %6072 = vmatpush.bf16.msra.mxu0 %v1644
        %6073 = vmatpush.bf16.msra.mxu0 %v1632
        %6074 = vmatmul.bf16.gmra.mxu0 %v4728
        %v6075 = vpop.f32.mrf.mxu0
        %v6076 = vadd.f32 %v6063, %v6075
        %v6077 = vpop.f32.mrf.mxu0
        %6078 = vdwg.mxu0
        %6079 = vmatpush.bf16.msra.mxu0 %v5399
        %6080 = vmatpush.bf16.msra.mxu0 %v5387
        %6081 = vmatpush.bf16.msra.mxu0 %v5375
        %6082 = vmatpush.bf16.msra.mxu0 %v5363
        %6083 = vmatpush.bf16.msra.mxu0 %v5351
        %6084 = vmatpush.bf16.msra.mxu0 %v5339
        %6085 = vmatpush.bf16.msra.mxu0 %v5327
        %6086 = vmatpush.bf16.msra.mxu0 %v5315
        %6087 = vmatmul.bf16.gmra.mxu0 %v4726
        %v6088 = vpop.f32.mrf.mxu0
        %v6089 = vadd.f32 %v1827, %v6088
        %v6090 = vpop.f32.mrf.mxu0
        %6091 = vdwg.mxu0
        %6092 = vmatpush.bf16.msra.mxu0 %v5495
        %6093 = vmatpush.bf16.msra.mxu0 %v5483
        %6094 = vmatpush.bf16.msra.mxu0 %v5471
        %6095 = vmatpush.bf16.msra.mxu0 %v5459
        %6096 = vmatpush.bf16.msra.mxu0 %v5447
        %6097 = vmatpush.bf16.msra.mxu0 %v5435
        %6098 = vmatpush.bf16.msra.mxu0 %v5423
        %6099 = vmatpush.bf16.msra.mxu0 %v5411
        %6100 = vmatmul.bf16.gmra.mxu0 %v4727
        %v6101 = vpop.f32.mrf.mxu0
        %v6102 = vadd.f32 %v6089, %v6101
        %v6103 = vpop.f32.mrf.mxu0
        %6104 = vdwg.mxu0
        %6105 = vmatpush.bf16.msra.mxu0 %v1717
        %6106 = vmatpush.bf16.msra.mxu0 %v1705
        %6107 = vmatpush.bf16.msra.mxu0 %v1693
        %6108 = vmatpush.bf16.msra.mxu0 %v1681
        %6109 = vmatpush.bf16.msra.mxu0 %v1669
        %6110 = vmatpush.bf16.msra.mxu0 %v1657
        %6111 = vmatpush.bf16.msra.mxu0 %v1645
        %6112 = vmatpush.bf16.msra.mxu0 %v1633
        %6113 = vmatmul.bf16.gmra.mxu0 %v4728
        %v6114 = vpop.f32.mrf.mxu0
        %v6115 = vadd.f32 %v6102, %v6114
        %v6116 = vpop.f32.mrf.mxu0
        %6117 = vdwg.mxu0
        %6118 = vmatpush.bf16.msra.mxu0 %v5400
        %6119 = vmatpush.bf16.msra.mxu0 %v5388
        %6120 = vmatpush.bf16.msra.mxu0 %v5376
        %6121 = vmatpush.bf16.msra.mxu0 %v5364
        %6122 = vmatpush.bf16.msra.mxu0 %v5352
        %6123 = vmatpush.bf16.msra.mxu0 %v5340
        %6124 = vmatpush.bf16.msra.mxu0 %v5328
        %6125 = vmatpush.bf16.msra.mxu0 %v5316
        %6126 = vmatmul.bf16.gmra.mxu0 %v4726
        %v6127 = vpop.f32.mrf.mxu0
        %v6128 = vadd.f32 %v1828, %v6127
        %v6129 = vpop.f32.mrf.mxu0
        %6130 = vdwg.mxu0
        %6131 = vmatpush.bf16.msra.mxu0 %v5496
        %6132 = vmatpush.bf16.msra.mxu0 %v5484
        %6133 = vmatpush.bf16.msra.mxu0 %v5472
        %6134 = vmatpush.bf16.msra.mxu0 %v5460
        %6135 = vmatpush.bf16.msra.mxu0 %v5448
        %6136 = vmatpush.bf16.msra.mxu0 %v5436
        %6137 = vmatpush.bf16.msra.mxu0 %v5424
        %6138 = vmatpush.bf16.msra.mxu0 %v5412
        %6139 = vmatmul.bf16.gmra.mxu0 %v4727
        %v6140 = vpop.f32.mrf.mxu0
        %v6141 = vadd.f32 %v6128, %v6140
        %v6142 = vpop.f32.mrf.mxu0
        %6143 = vdwg.mxu0
        %6144 = vmatpush.bf16.msra.mxu0 %v1718
        %6145 = vmatpush.bf16.msra.mxu0 %v1706
        %6146 = vmatpush.bf16.msra.mxu0 %v1694
        %6147 = vmatpush.bf16.msra.mxu0 %v1682
        %6148 = vmatpush.bf16.msra.mxu0 %v1670
        %6149 = vmatpush.bf16.msra.mxu0 %v1658
        %6150 = vmatpush.bf16.msra.mxu0 %v1646
        %6151 = vmatpush.bf16.msra.mxu0 %v1634
        %6152 = vmatmul.bf16.gmra.mxu0 %v4728
        %v6153 = vpop.f32.mrf.mxu0
        %v6154 = vadd.f32 %v6141, %v6153
        %v6155 = vpop.f32.mrf.mxu0
        %6156 = vdwg.mxu0
        %v6157 = vpack.c.bf16 %v4415, %v4415
        %v6158 = vpack.c.bf16 %v4416, %v4416
        %v6159 = vpack.c.bf16 %v4417, %v4417
        %v6160 = vpack.c.bf16 %v4418, %v4418
        %v6162 = vsel %vm3566, %v6160, 0
        %6164 = vmatpush.bf16.msra.mxu0 %v3012
        %6165 = vmatpush.bf16.msra.mxu0 %v3000
        %6166 = vmatpush.bf16.msra.mxu0 %v2988
        %6167 = vmatpush.bf16.msra.mxu0 %v2976
        %6168 = vmatpush.bf16.msra.mxu0 %v2964
        %6169 = vmatpush.bf16.msra.mxu0 %v2952
        %6170 = vmatpush.bf16.msra.mxu0 %v2940
        %6171 = vmatpush.bf16.msra.mxu0 %v2928
        %6172 = vmatmul.bf16.gmra.mxu0 %v6157
        %v6173 = vpop.f32.mrf.mxu0
        %v6174 = vadd.f32 %v3542, %v6173
        %v6175 = vpop.f32.mrf.mxu0
        %6176 = vdwg.mxu0
        %6177 = vmatpush.bf16.msra.mxu0 %v3108
        %6178 = vmatpush.bf16.msra.mxu0 %v3096
        %6179 = vmatpush.bf16.msra.mxu0 %v3084
        %6180 = vmatpush.bf16.msra.mxu0 %v3072
        %6181 = vmatpush.bf16.msra.mxu0 %v3060
        %6182 = vmatpush.bf16.msra.mxu0 %v3048
        %6183 = vmatpush.bf16.msra.mxu0 %v3036
        %6184 = vmatpush.bf16.msra.mxu0 %v3024
        %6185 = vmatmul.bf16.gmra.mxu0 %v6158
        %v6186 = vpop.f32.mrf.mxu0
        %v6187 = vadd.f32 %v6174, %v6186
        %v6188 = vpop.f32.mrf.mxu0
        %6189 = vdwg.mxu0
        %6190 = vmatpush.bf16.msra.mxu0 %v3204
        %6191 = vmatpush.bf16.msra.mxu0 %v3192
        %6192 = vmatpush.bf16.msra.mxu0 %v3180
        %6193 = vmatpush.bf16.msra.mxu0 %v3168
        %6194 = vmatpush.bf16.msra.mxu0 %v3156
        %6195 = vmatpush.bf16.msra.mxu0 %v3144
        %6196 = vmatpush.bf16.msra.mxu0 %v3132
        %6197 = vmatpush.bf16.msra.mxu0 %v3120
        %6198 = vmatmul.bf16.gmra.mxu0 %v6159
        %v6199 = vpop.f32.mrf.mxu0
        %v6200 = vadd.f32 %v6187, %v6199
        %v6201 = vpop.f32.mrf.mxu0
        %6202 = vdwg.mxu0
        %6203 = vmatpush.bf16.msra.mxu0 0
        %6204 = vmatpush.bf16.msra.mxu0 0
        %6205 = vmatpush.bf16.msra.mxu0 0
        %6206 = vmatpush.bf16.msra.mxu0 0
        %6207 = vmatpush.bf16.msra.mxu0 0
        %6208 = vmatpush.bf16.msra.mxu0 0
        %6209 = vmatpush.bf16.msra.mxu0 %v3572
        %6210 = vmatpush.bf16.msra.mxu0 %v3216
        %6211 = vmatmul.bf16.gmra.mxu0 %v6162
        %v6212 = vpop.f32.mrf.mxu0
        %v6213 = vadd.f32 %v6200, %v6212
        %v6214 = vpop.f32.mrf.mxu0
        %6215 = vdwg.mxu0
        %6216 = vmatpush.bf16.msra.mxu0 %v3013
        %6217 = vmatpush.bf16.msra.mxu0 %v3001
        %6218 = vmatpush.bf16.msra.mxu0 %v2989
        %6219 = vmatpush.bf16.msra.mxu0 %v2977
        %6220 = vmatpush.bf16.msra.mxu0 %v2965
        %6221 = vmatpush.bf16.msra.mxu0 %v2953
        %6222 = vmatpush.bf16.msra.mxu0 %v2941
        %6223 = vmatpush.bf16.msra.mxu0 %v2929
        %6224 = vmatmul.bf16.gmra.mxu0 %v6157
        %v6225 = vpop.f32.mrf.mxu0
        %v6226 = vadd.f32 %v3543, %v6225
        %v6227 = vpop.f32.mrf.mxu0
        %6228 = vdwg.mxu0
        %6229 = vmatpush.bf16.msra.mxu0 %v3109
        %6230 = vmatpush.bf16.msra.mxu0 %v3097
        %6231 = vmatpush.bf16.msra.mxu0 %v3085
        %6232 = vmatpush.bf16.msra.mxu0 %v3073
        %6233 = vmatpush.bf16.msra.mxu0 %v3061
        %6234 = vmatpush.bf16.msra.mxu0 %v3049
        %6235 = vmatpush.bf16.msra.mxu0 %v3037
        %6236 = vmatpush.bf16.msra.mxu0 %v3025
        %6237 = vmatmul.bf16.gmra.mxu0 %v6158
        %v6238 = vpop.f32.mrf.mxu0
        %v6239 = vadd.f32 %v6226, %v6238
        %v6240 = vpop.f32.mrf.mxu0
        %6241 = vdwg.mxu0
        %6242 = vmatpush.bf16.msra.mxu0 %v3205
        %6243 = vmatpush.bf16.msra.mxu0 %v3193
        %6244 = vmatpush.bf16.msra.mxu0 %v3181
        %6245 = vmatpush.bf16.msra.mxu0 %v3169
        %6246 = vmatpush.bf16.msra.mxu0 %v3157
        %6247 = vmatpush.bf16.msra.mxu0 %v3145
        %6248 = vmatpush.bf16.msra.mxu0 %v3133
        %6249 = vmatpush.bf16.msra.mxu0 %v3121
        %6250 = vmatmul.bf16.gmra.mxu0 %v6159
        %v6251 = vpop.f32.mrf.mxu0
        %v6252 = vadd.f32 %v6239, %v6251
        %v6253 = vpop.f32.mrf.mxu0
        %6254 = vdwg.mxu0
        %6255 = vmatpush.bf16.msra.mxu0 0
        %6256 = vmatpush.bf16.msra.mxu0 0
        %6257 = vmatpush.bf16.msra.mxu0 0
        %6258 = vmatpush.bf16.msra.mxu0 0
        %6259 = vmatpush.bf16.msra.mxu0 0
        %6260 = vmatpush.bf16.msra.mxu0 0
        %6261 = vmatpush.bf16.msra.mxu0 %v3575
        %6262 = vmatpush.bf16.msra.mxu0 %v3217
        %6263 = vmatmul.bf16.gmra.mxu0 %v6162
        %v6264 = vpop.f32.mrf.mxu0
        %v6265 = vadd.f32 %v6252, %v6264
        %v6266 = vpop.f32.mrf.mxu0
        %6267 = vdwg.mxu0
        %6268 = vmatpush.bf16.msra.mxu0 %v3014
        %6269 = vmatpush.bf16.msra.mxu0 %v3002
        %6270 = vmatpush.bf16.msra.mxu0 %v2990
        %6271 = vmatpush.bf16.msra.mxu0 %v2978
        %6272 = vmatpush.bf16.msra.mxu0 %v2966
        %6273 = vmatpush.bf16.msra.mxu0 %v2954
        %6274 = vmatpush.bf16.msra.mxu0 %v2942
        %6275 = vmatpush.bf16.msra.mxu0 %v2930
        %6276 = vmatmul.bf16.gmra.mxu0 %v6157
        %v6277 = vpop.f32.mrf.mxu0
        %v6278 = vadd.f32 %v3544, %v6277
        %v6279 = vpop.f32.mrf.mxu0
        %6280 = vdwg.mxu0
        %6281 = vmatpush.bf16.msra.mxu0 %v3110
        %6282 = vmatpush.bf16.msra.mxu0 %v3098
        %6283 = vmatpush.bf16.msra.mxu0 %v3086
        %6284 = vmatpush.bf16.msra.mxu0 %v3074
        %6285 = vmatpush.bf16.msra.mxu0 %v3062
        %6286 = vmatpush.bf16.msra.mxu0 %v3050
        %6287 = vmatpush.bf16.msra.mxu0 %v3038
        %6288 = vmatpush.bf16.msra.mxu0 %v3026
        %6289 = vmatmul.bf16.gmra.mxu0 %v6158
        %v6290 = vpop.f32.mrf.mxu0
        %v6291 = vadd.f32 %v6278, %v6290
        %v6292 = vpop.f32.mrf.mxu0
        %6293 = vdwg.mxu0
        %6294 = vmatpush.bf16.msra.mxu0 %v3206
        %6295 = vmatpush.bf16.msra.mxu0 %v3194
        %6296 = vmatpush.bf16.msra.mxu0 %v3182
        %6297 = vmatpush.bf16.msra.mxu0 %v3170
        %6298 = vmatpush.bf16.msra.mxu0 %v3158
        %6299 = vmatpush.bf16.msra.mxu0 %v3146
        %6300 = vmatpush.bf16.msra.mxu0 %v3134
        %6301 = vmatpush.bf16.msra.mxu0 %v3122
        %6302 = vmatmul.bf16.gmra.mxu0 %v6159
        %v6303 = vpop.f32.mrf.mxu0
        %v6304 = vadd.f32 %v6291, %v6303
        %v6305 = vpop.f32.mrf.mxu0
        %6306 = vdwg.mxu0
        %6307 = vmatpush.bf16.msra.mxu0 0
        %6308 = vmatpush.bf16.msra.mxu0 0
        %6309 = vmatpush.bf16.msra.mxu0 0
        %6310 = vmatpush.bf16.msra.mxu0 0
        %6311 = vmatpush.bf16.msra.mxu0 0
        %6312 = vmatpush.bf16.msra.mxu0 0
        %6313 = vmatpush.bf16.msra.mxu0 %v3578
        %6314 = vmatpush.bf16.msra.mxu0 %v3218
        %6315 = vmatmul.bf16.gmra.mxu0 %v6162
        %v6316 = vpop.f32.mrf.mxu0
        %v6317 = vadd.f32 %v6304, %v6316
        %v6318 = vpop.f32.mrf.mxu0
        %6319 = vdwg.mxu0
        %6320 = vmatpush.bf16.msra.mxu0 %v3015
        %6321 = vmatpush.bf16.msra.mxu0 %v3003
        %6322 = vmatpush.bf16.msra.mxu0 %v2991
        %6323 = vmatpush.bf16.msra.mxu0 %v2979
        %6324 = vmatpush.bf16.msra.mxu0 %v2967
        %6325 = vmatpush.bf16.msra.mxu0 %v2955
        %6326 = vmatpush.bf16.msra.mxu0 %v2943
        %6327 = vmatpush.bf16.msra.mxu0 %v2931
        %6328 = vmatmul.bf16.gmra.mxu0 %v6157
        %v6329 = vpop.f32.mrf.mxu0
        %v6330 = vadd.f32 %v3545, %v6329
        %v6331 = vpop.f32.mrf.mxu0
        %6332 = vdwg.mxu0
        %6333 = vmatpush.bf16.msra.mxu0 %v3111
        %6334 = vmatpush.bf16.msra.mxu0 %v3099
        %6335 = vmatpush.bf16.msra.mxu0 %v3087
        %6336 = vmatpush.bf16.msra.mxu0 %v3075
        %6337 = vmatpush.bf16.msra.mxu0 %v3063
        %6338 = vmatpush.bf16.msra.mxu0 %v3051
        %6339 = vmatpush.bf16.msra.mxu0 %v3039
        %6340 = vmatpush.bf16.msra.mxu0 %v3027
        %6341 = vmatmul.bf16.gmra.mxu0 %v6158
        %v6342 = vpop.f32.mrf.mxu0
        %v6343 = vadd.f32 %v6330, %v6342
        %v6344 = vpop.f32.mrf.mxu0
        %6345 = vdwg.mxu0
        %6346 = vmatpush.bf16.msra.mxu0 %v3207
        %6347 = vmatpush.bf16.msra.mxu0 %v3195
        %6348 = vmatpush.bf16.msra.mxu0 %v3183
        %6349 = vmatpush.bf16.msra.mxu0 %v3171
        %6350 = vmatpush.bf16.msra.mxu0 %v3159
        %6351 = vmatpush.bf16.msra.mxu0 %v3147
        %6352 = vmatpush.bf16.msra.mxu0 %v3135
        %6353 = vmatpush.bf16.msra.mxu0 %v3123
        %6354 = vmatmul.bf16.gmra.mxu0 %v6159
        %v6355 = vpop.f32.mrf.mxu0
        %v6356 = vadd.f32 %v6343, %v6355
        %v6357 = vpop.f32.mrf.mxu0
        %6358 = vdwg.mxu0
        %6359 = vmatpush.bf16.msra.mxu0 0
        %6360 = vmatpush.bf16.msra.mxu0 0
        %6361 = vmatpush.bf16.msra.mxu0 0
        %6362 = vmatpush.bf16.msra.mxu0 0
        %6363 = vmatpush.bf16.msra.mxu0 0
        %6364 = vmatpush.bf16.msra.mxu0 0
        %6365 = vmatpush.bf16.msra.mxu0 %v3581
        %6366 = vmatpush.bf16.msra.mxu0 %v3219
        %6367 = vmatmul.bf16.gmra.mxu0 %v6162
        %v6368 = vpop.f32.mrf.mxu0
        %v6369 = vadd.f32 %v6356, %v6368
        %v6370 = vpop.f32.mrf.mxu0
        %6371 = vdwg.mxu0
        %6372 = vmatpush.bf16.msra.mxu0 %v3016
        %6373 = vmatpush.bf16.msra.mxu0 %v3004
        %6374 = vmatpush.bf16.msra.mxu0 %v2992
        %6375 = vmatpush.bf16.msra.mxu0 %v2980
        %6376 = vmatpush.bf16.msra.mxu0 %v2968
        %6377 = vmatpush.bf16.msra.mxu0 %v2956
        %6378 = vmatpush.bf16.msra.mxu0 %v2944
        %6379 = vmatpush.bf16.msra.mxu0 %v2932
        %6380 = vmatmul.bf16.gmra.mxu0 %v6157
        %v6381 = vpop.f32.mrf.mxu0
        %v6382 = vadd.f32 %v3546, %v6381
        %v6383 = vpop.f32.mrf.mxu0
        %6384 = vdwg.mxu0
        %6385 = vmatpush.bf16.msra.mxu0 %v3112
        %6386 = vmatpush.bf16.msra.mxu0 %v3100
        %6387 = vmatpush.bf16.msra.mxu0 %v3088
        %6388 = vmatpush.bf16.msra.mxu0 %v3076
        %6389 = vmatpush.bf16.msra.mxu0 %v3064
        %6390 = vmatpush.bf16.msra.mxu0 %v3052
        %6391 = vmatpush.bf16.msra.mxu0 %v3040
        %6392 = vmatpush.bf16.msra.mxu0 %v3028
        %6393 = vmatmul.bf16.gmra.mxu0 %v6158
        %v6394 = vpop.f32.mrf.mxu0
        %v6395 = vadd.f32 %v6382, %v6394
        %v6396 = vpop.f32.mrf.mxu0
        %6397 = vdwg.mxu0
        %6398 = vmatpush.bf16.msra.mxu0 %v3208
        %6399 = vmatpush.bf16.msra.mxu0 %v3196
        %6400 = vmatpush.bf16.msra.mxu0 %v3184
        %6401 = vmatpush.bf16.msra.mxu0 %v3172
        %6402 = vmatpush.bf16.msra.mxu0 %v3160
        %6403 = vmatpush.bf16.msra.mxu0 %v3148
        %6404 = vmatpush.bf16.msra.mxu0 %v3136
        %6405 = vmatpush.bf16.msra.mxu0 %v3124
        %6406 = vmatmul.bf16.gmra.mxu0 %v6159
        %v6407 = vpop.f32.mrf.mxu0
        %v6408 = vadd.f32 %v6395, %v6407
        %v6409 = vpop.f32.mrf.mxu0
        %6410 = vdwg.mxu0
        %6411 = vmatpush.bf16.msra.mxu0 0
        %6412 = vmatpush.bf16.msra.mxu0 0
        %6413 = vmatpush.bf16.msra.mxu0 0
        %6414 = vmatpush.bf16.msra.mxu0 0
        %6415 = vmatpush.bf16.msra.mxu0 0
        %6416 = vmatpush.bf16.msra.mxu0 0
        %6417 = vmatpush.bf16.msra.mxu0 %v3584
        %6418 = vmatpush.bf16.msra.mxu0 %v3220
        %6419 = vmatmul.bf16.gmra.mxu0 %v6162
        %v6420 = vpop.f32.mrf.mxu0
        %v6421 = vadd.f32 %v6408, %v6420
        %v6422 = vpop.f32.mrf.mxu0
        %6423 = vdwg.mxu0
        %6424 = vmatpush.bf16.msra.mxu0 %v3017
        %6425 = vmatpush.bf16.msra.mxu0 %v3005
        %6426 = vmatpush.bf16.msra.mxu0 %v2993
        %6427 = vmatpush.bf16.msra.mxu0 %v2981
        %6428 = vmatpush.bf16.msra.mxu0 %v2969
        %6429 = vmatpush.bf16.msra.mxu0 %v2957
        %6430 = vmatpush.bf16.msra.mxu0 %v2945
        %6431 = vmatpush.bf16.msra.mxu0 %v2933
        %6432 = vmatmul.bf16.gmra.mxu0 %v6157
        %v6433 = vpop.f32.mrf.mxu0
        %v6434 = vadd.f32 %v3547, %v6433
        %v6435 = vpop.f32.mrf.mxu0
        %6436 = vdwg.mxu0
        %6437 = vmatpush.bf16.msra.mxu0 %v3113
        %6438 = vmatpush.bf16.msra.mxu0 %v3101
        %6439 = vmatpush.bf16.msra.mxu0 %v3089
        %6440 = vmatpush.bf16.msra.mxu0 %v3077
        %6441 = vmatpush.bf16.msra.mxu0 %v3065
        %6442 = vmatpush.bf16.msra.mxu0 %v3053
        %6443 = vmatpush.bf16.msra.mxu0 %v3041
        %6444 = vmatpush.bf16.msra.mxu0 %v3029
        %6445 = vmatmul.bf16.gmra.mxu0 %v6158
        %v6446 = vpop.f32.mrf.mxu0
        %v6447 = vadd.f32 %v6434, %v6446
        %v6448 = vpop.f32.mrf.mxu0
        %6449 = vdwg.mxu0
        %6450 = vmatpush.bf16.msra.mxu0 %v3209
        %6451 = vmatpush.bf16.msra.mxu0 %v3197
        %6452 = vmatpush.bf16.msra.mxu0 %v3185
        %6453 = vmatpush.bf16.msra.mxu0 %v3173
        %6454 = vmatpush.bf16.msra.mxu0 %v3161
        %6455 = vmatpush.bf16.msra.mxu0 %v3149
        %6456 = vmatpush.bf16.msra.mxu0 %v3137
        %6457 = vmatpush.bf16.msra.mxu0 %v3125
        %6458 = vmatmul.bf16.gmra.mxu0 %v6159
        %v6459 = vpop.f32.mrf.mxu0
        %v6460 = vadd.f32 %v6447, %v6459
        %v6461 = vpop.f32.mrf.mxu0
        %6462 = vdwg.mxu0
        %6463 = vmatpush.bf16.msra.mxu0 0
        %6464 = vmatpush.bf16.msra.mxu0 0
        %6465 = vmatpush.bf16.msra.mxu0 0
        %6466 = vmatpush.bf16.msra.mxu0 0
        %6467 = vmatpush.bf16.msra.mxu0 0
        %6468 = vmatpush.bf16.msra.mxu0 0
        %6469 = vmatpush.bf16.msra.mxu0 %v3587
        %6470 = vmatpush.bf16.msra.mxu0 %v3221
        %6471 = vmatmul.bf16.gmra.mxu0 %v6162
        %v6472 = vpop.f32.mrf.mxu0
        %v6473 = vadd.f32 %v6460, %v6472
        %v6474 = vpop.f32.mrf.mxu0
        %6475 = vdwg.mxu0
        %6476 = vmatpush.bf16.msra.mxu0 %v3018
        %6477 = vmatpush.bf16.msra.mxu0 %v3006
        %6478 = vmatpush.bf16.msra.mxu0 %v2994
        %6479 = vmatpush.bf16.msra.mxu0 %v2982
        %6480 = vmatpush.bf16.msra.mxu0 %v2970
        %6481 = vmatpush.bf16.msra.mxu0 %v2958
        %6482 = vmatpush.bf16.msra.mxu0 %v2946
        %6483 = vmatpush.bf16.msra.mxu0 %v2934
        %6484 = vmatmul.bf16.gmra.mxu0 %v6157
        %v6485 = vpop.f32.mrf.mxu0
        %v6486 = vadd.f32 %v3548, %v6485
        %v6487 = vpop.f32.mrf.mxu0
        %6488 = vdwg.mxu0
        %6489 = vmatpush.bf16.msra.mxu0 %v3114
        %6490 = vmatpush.bf16.msra.mxu0 %v3102
        %6491 = vmatpush.bf16.msra.mxu0 %v3090
        %6492 = vmatpush.bf16.msra.mxu0 %v3078
        %6493 = vmatpush.bf16.msra.mxu0 %v3066
        %6494 = vmatpush.bf16.msra.mxu0 %v3054
        %6495 = vmatpush.bf16.msra.mxu0 %v3042
        %6496 = vmatpush.bf16.msra.mxu0 %v3030
        %6497 = vmatmul.bf16.gmra.mxu0 %v6158
        %v6498 = vpop.f32.mrf.mxu0
        %v6499 = vadd.f32 %v6486, %v6498
        %v6500 = vpop.f32.mrf.mxu0
        %6501 = vdwg.mxu0
        %6502 = vmatpush.bf16.msra.mxu0 %v3210
        %6503 = vmatpush.bf16.msra.mxu0 %v3198
        %6504 = vmatpush.bf16.msra.mxu0 %v3186
        %6505 = vmatpush.bf16.msra.mxu0 %v3174
        %6506 = vmatpush.bf16.msra.mxu0 %v3162
        %6507 = vmatpush.bf16.msra.mxu0 %v3150
        %6508 = vmatpush.bf16.msra.mxu0 %v3138
        %6509 = vmatpush.bf16.msra.mxu0 %v3126
        %6510 = vmatmul.bf16.gmra.mxu0 %v6159
        %v6511 = vpop.f32.mrf.mxu0
        %v6512 = vadd.f32 %v6499, %v6511
        %v6513 = vpop.f32.mrf.mxu0
        %6514 = vdwg.mxu0
        %6515 = vmatpush.bf16.msra.mxu0 0
        %6516 = vmatpush.bf16.msra.mxu0 0
        %6517 = vmatpush.bf16.msra.mxu0 0
        %6518 = vmatpush.bf16.msra.mxu0 0
        %6519 = vmatpush.bf16.msra.mxu0 0
        %6520 = vmatpush.bf16.msra.mxu0 0
        %6521 = vmatpush.bf16.msra.mxu0 %v3590
        %6522 = vmatpush.bf16.msra.mxu0 %v3222
        %6523 = vmatmul.bf16.gmra.mxu0 %v6162
        %v6524 = vpop.f32.mrf.mxu0
        %v6525 = vadd.f32 %v6512, %v6524
        %v6526 = vpop.f32.mrf.mxu0
        %6527 = vdwg.mxu0
        %6528 = vmatpush.bf16.msra.mxu0 %v3019
        %6529 = vmatpush.bf16.msra.mxu0 %v3007
        %6530 = vmatpush.bf16.msra.mxu0 %v2995
        %6531 = vmatpush.bf16.msra.mxu0 %v2983
        %6532 = vmatpush.bf16.msra.mxu0 %v2971
        %6533 = vmatpush.bf16.msra.mxu0 %v2959
        %6534 = vmatpush.bf16.msra.mxu0 %v2947
        %6535 = vmatpush.bf16.msra.mxu0 %v2935
        %6536 = vmatmul.bf16.gmra.mxu0 %v6157
        %v6537 = vpop.f32.mrf.mxu0
        %v6538 = vadd.f32 %v3549, %v6537
        %v6539 = vpop.f32.mrf.mxu0
        %6540 = vdwg.mxu0
        %6541 = vmatpush.bf16.msra.mxu0 %v3115
        %6542 = vmatpush.bf16.msra.mxu0 %v3103
        %6543 = vmatpush.bf16.msra.mxu0 %v3091
        %6544 = vmatpush.bf16.msra.mxu0 %v3079
        %6545 = vmatpush.bf16.msra.mxu0 %v3067
        %6546 = vmatpush.bf16.msra.mxu0 %v3055
        %6547 = vmatpush.bf16.msra.mxu0 %v3043
        %6548 = vmatpush.bf16.msra.mxu0 %v3031
        %6549 = vmatmul.bf16.gmra.mxu0 %v6158
        %v6550 = vpop.f32.mrf.mxu0
        %v6551 = vadd.f32 %v6538, %v6550
        %v6552 = vpop.f32.mrf.mxu0
        %6553 = vdwg.mxu0
        %6554 = vmatpush.bf16.msra.mxu0 %v3211
        %6555 = vmatpush.bf16.msra.mxu0 %v3199
        %6556 = vmatpush.bf16.msra.mxu0 %v3187
        %6557 = vmatpush.bf16.msra.mxu0 %v3175
        %6558 = vmatpush.bf16.msra.mxu0 %v3163
        %6559 = vmatpush.bf16.msra.mxu0 %v3151
        %6560 = vmatpush.bf16.msra.mxu0 %v3139
        %6561 = vmatpush.bf16.msra.mxu0 %v3127
        %6562 = vmatmul.bf16.gmra.mxu0 %v6159
        %v6563 = vpop.f32.mrf.mxu0
        %v6564 = vadd.f32 %v6551, %v6563
        %v6565 = vpop.f32.mrf.mxu0
        %6566 = vdwg.mxu0
        %6567 = vmatpush.bf16.msra.mxu0 0
        %6568 = vmatpush.bf16.msra.mxu0 0
        %6569 = vmatpush.bf16.msra.mxu0 0
        %6570 = vmatpush.bf16.msra.mxu0 0
        %6571 = vmatpush.bf16.msra.mxu0 0
        %6572 = vmatpush.bf16.msra.mxu0 0
        %6573 = vmatpush.bf16.msra.mxu0 %v3593
        %6574 = vmatpush.bf16.msra.mxu0 %v3223
        %6575 = vmatmul.bf16.gmra.mxu0 %v6162
        %v6576 = vpop.f32.mrf.mxu0
        %v6577 = vadd.f32 %v6564, %v6576
        %v6578 = vpop.f32.mrf.mxu0
        %6579 = vdwg.mxu0
        %6580 = vmatpush.bf16.msra.mxu0 %v3020
        %6581 = vmatpush.bf16.msra.mxu0 %v3008
        %6582 = vmatpush.bf16.msra.mxu0 %v2996
        %6583 = vmatpush.bf16.msra.mxu0 %v2984
        %6584 = vmatpush.bf16.msra.mxu0 %v2972
        %6585 = vmatpush.bf16.msra.mxu0 %v2960
        %6586 = vmatpush.bf16.msra.mxu0 %v2948
        %6587 = vmatpush.bf16.msra.mxu0 %v2936
        %6588 = vmatmul.bf16.gmra.mxu0 %v6157
        %v6589 = vpop.f32.mrf.mxu0
        %v6590 = vadd.f32 %v3550, %v6589
        %v6591 = vpop.f32.mrf.mxu0
        %6592 = vdwg.mxu0
        %6593 = vmatpush.bf16.msra.mxu0 %v3116
        %6594 = vmatpush.bf16.msra.mxu0 %v3104
        %6595 = vmatpush.bf16.msra.mxu0 %v3092
        %6596 = vmatpush.bf16.msra.mxu0 %v3080
        %6597 = vmatpush.bf16.msra.mxu0 %v3068
        %6598 = vmatpush.bf16.msra.mxu0 %v3056
        %6599 = vmatpush.bf16.msra.mxu0 %v3044
        %6600 = vmatpush.bf16.msra.mxu0 %v3032
        %6601 = vmatmul.bf16.gmra.mxu0 %v6158
        %v6602 = vpop.f32.mrf.mxu0
        %v6603 = vadd.f32 %v6590, %v6602
        %v6604 = vpop.f32.mrf.mxu0
        %6605 = vdwg.mxu0
        %6606 = vmatpush.bf16.msra.mxu0 %v3212
        %6607 = vmatpush.bf16.msra.mxu0 %v3200
        %6608 = vmatpush.bf16.msra.mxu0 %v3188
        %6609 = vmatpush.bf16.msra.mxu0 %v3176
        %6610 = vmatpush.bf16.msra.mxu0 %v3164
        %6611 = vmatpush.bf16.msra.mxu0 %v3152
        %6612 = vmatpush.bf16.msra.mxu0 %v3140
        %6613 = vmatpush.bf16.msra.mxu0 %v3128
        %6614 = vmatmul.bf16.gmra.mxu0 %v6159
        %v6615 = vpop.f32.mrf.mxu0
        %v6616 = vadd.f32 %v6603, %v6615
        %v6617 = vpop.f32.mrf.mxu0
        %6618 = vdwg.mxu0
        %6619 = vmatpush.bf16.msra.mxu0 0
        %6620 = vmatpush.bf16.msra.mxu0 0
        %6621 = vmatpush.bf16.msra.mxu0 0
        %6622 = vmatpush.bf16.msra.mxu0 0
        %6623 = vmatpush.bf16.msra.mxu0 0
        %6624 = vmatpush.bf16.msra.mxu0 0
        %6625 = vmatpush.bf16.msra.mxu0 %v3596
        %6626 = vmatpush.bf16.msra.mxu0 %v3224
        %6627 = vmatmul.bf16.gmra.mxu0 %v6162
        %v6628 = vpop.f32.mrf.mxu0
        %v6629 = vadd.f32 %v6616, %v6628
        %v6630 = vpop.f32.mrf.mxu0
        %6631 = vdwg.mxu0
        %6632 = vmatpush.bf16.msra.mxu0 %v3021
        %6633 = vmatpush.bf16.msra.mxu0 %v3009
        %6634 = vmatpush.bf16.msra.mxu0 %v2997
        %6635 = vmatpush.bf16.msra.mxu0 %v2985
        %6636 = vmatpush.bf16.msra.mxu0 %v2973
        %6637 = vmatpush.bf16.msra.mxu0 %v2961
        %6638 = vmatpush.bf16.msra.mxu0 %v2949
        %6639 = vmatpush.bf16.msra.mxu0 %v2937
        %6640 = vmatmul.bf16.gmra.mxu0 %v6157
        %v6641 = vpop.f32.mrf.mxu0
        %v6642 = vadd.f32 %v3551, %v6641
        %v6643 = vpop.f32.mrf.mxu0
        %6644 = vdwg.mxu0
        %6645 = vmatpush.bf16.msra.mxu0 %v3117
        %6646 = vmatpush.bf16.msra.mxu0 %v3105
        %6647 = vmatpush.bf16.msra.mxu0 %v3093
        %6648 = vmatpush.bf16.msra.mxu0 %v3081
        %6649 = vmatpush.bf16.msra.mxu0 %v3069
        %6650 = vmatpush.bf16.msra.mxu0 %v3057
        %6651 = vmatpush.bf16.msra.mxu0 %v3045
        %6652 = vmatpush.bf16.msra.mxu0 %v3033
        %6653 = vmatmul.bf16.gmra.mxu0 %v6158
        %v6654 = vpop.f32.mrf.mxu0
        %v6655 = vadd.f32 %v6642, %v6654
        %v6656 = vpop.f32.mrf.mxu0
        %6657 = vdwg.mxu0
        %6658 = vmatpush.bf16.msra.mxu0 %v3213
        %6659 = vmatpush.bf16.msra.mxu0 %v3201
        %6660 = vmatpush.bf16.msra.mxu0 %v3189
        %6661 = vmatpush.bf16.msra.mxu0 %v3177
        %6662 = vmatpush.bf16.msra.mxu0 %v3165
        %6663 = vmatpush.bf16.msra.mxu0 %v3153
        %6664 = vmatpush.bf16.msra.mxu0 %v3141
        %6665 = vmatpush.bf16.msra.mxu0 %v3129
        %6666 = vmatmul.bf16.gmra.mxu0 %v6159
        %v6667 = vpop.f32.mrf.mxu0
        %v6668 = vadd.f32 %v6655, %v6667
        %v6669 = vpop.f32.mrf.mxu0
        %6670 = vdwg.mxu0
        %6671 = vmatpush.bf16.msra.mxu0 0
        %6672 = vmatpush.bf16.msra.mxu0 0
        %6673 = vmatpush.bf16.msra.mxu0 0
        %6674 = vmatpush.bf16.msra.mxu0 0
        %6675 = vmatpush.bf16.msra.mxu0 0
        %6676 = vmatpush.bf16.msra.mxu0 0
        %6677 = vmatpush.bf16.msra.mxu0 %v3599
        %6678 = vmatpush.bf16.msra.mxu0 %v3225
        %6679 = vmatmul.bf16.gmra.mxu0 %v6162
        %v6680 = vpop.f32.mrf.mxu0
        %v6681 = vadd.f32 %v6668, %v6680
        %v6682 = vpop.f32.mrf.mxu0
        %6683 = vdwg.mxu0
        %6684 = vmatpush.bf16.msra.mxu0 %v3022
        %6685 = vmatpush.bf16.msra.mxu0 %v3010
        %6686 = vmatpush.bf16.msra.mxu0 %v2998
        %6687 = vmatpush.bf16.msra.mxu0 %v2986
        %6688 = vmatpush.bf16.msra.mxu0 %v2974
        %6689 = vmatpush.bf16.msra.mxu0 %v2962
        %6690 = vmatpush.bf16.msra.mxu0 %v2950
        %6691 = vmatpush.bf16.msra.mxu0 %v2938
        %6692 = vmatmul.bf16.gmra.mxu0 %v6157
        %v6693 = vpop.f32.mrf.mxu0
        %v6694 = vadd.f32 %v3552, %v6693
        %v6695 = vpop.f32.mrf.mxu0
        %6696 = vdwg.mxu0
        %6697 = vmatpush.bf16.msra.mxu0 %v3118
        %6698 = vmatpush.bf16.msra.mxu0 %v3106
        %6699 = vmatpush.bf16.msra.mxu0 %v3094
        %6700 = vmatpush.bf16.msra.mxu0 %v3082
        %6701 = vmatpush.bf16.msra.mxu0 %v3070
        %6702 = vmatpush.bf16.msra.mxu0 %v3058
        %6703 = vmatpush.bf16.msra.mxu0 %v3046
        %6704 = vmatpush.bf16.msra.mxu0 %v3034
        %6705 = vmatmul.bf16.gmra.mxu0 %v6158
        %v6706 = vpop.f32.mrf.mxu0
        %v6707 = vadd.f32 %v6694, %v6706
        %v6708 = vpop.f32.mrf.mxu0
        %6709 = vdwg.mxu0
        %6710 = vmatpush.bf16.msra.mxu0 %v3214
        %6711 = vmatpush.bf16.msra.mxu0 %v3202
        %6712 = vmatpush.bf16.msra.mxu0 %v3190
        %6713 = vmatpush.bf16.msra.mxu0 %v3178
        %6714 = vmatpush.bf16.msra.mxu0 %v3166
        %6715 = vmatpush.bf16.msra.mxu0 %v3154
        %6716 = vmatpush.bf16.msra.mxu0 %v3142
        %6717 = vmatpush.bf16.msra.mxu0 %v3130
        %6718 = vmatmul.bf16.gmra.mxu0 %v6159
        %v6719 = vpop.f32.mrf.mxu0
        %v6720 = vadd.f32 %v6707, %v6719
        %v6721 = vpop.f32.mrf.mxu0
        %6722 = vdwg.mxu0
        %6723 = vmatpush.bf16.msra.mxu0 0
        %6724 = vmatpush.bf16.msra.mxu0 0
        %6725 = vmatpush.bf16.msra.mxu0 0
        %6726 = vmatpush.bf16.msra.mxu0 0
        %6727 = vmatpush.bf16.msra.mxu0 0
        %6728 = vmatpush.bf16.msra.mxu0 0
        %6729 = vmatpush.bf16.msra.mxu0 %v3602
        %6730 = vmatpush.bf16.msra.mxu0 %v3226
        %6731 = vmatmul.bf16.gmra.mxu0 %v6162
        %v6732 = vpop.f32.mrf.mxu0
        %v6733 = vadd.f32 %v6720, %v6732
        %v6734 = vpop.f32.mrf.mxu0
        %6735 = vdwg.mxu0
        %6736 = vmatpush.bf16.msra.mxu0 %v3023
        %6737 = vmatpush.bf16.msra.mxu0 %v3011
        %6738 = vmatpush.bf16.msra.mxu0 %v2999
        %6739 = vmatpush.bf16.msra.mxu0 %v2987
        %6740 = vmatpush.bf16.msra.mxu0 %v2975
        %6741 = vmatpush.bf16.msra.mxu0 %v2963
        %6742 = vmatpush.bf16.msra.mxu0 %v2951
        %6743 = vmatpush.bf16.msra.mxu0 %v2939
        %6744 = vmatmul.bf16.gmra.mxu0 %v6157
        %v6745 = vpop.f32.mrf.mxu0
        %v6746 = vadd.f32 %v3553, %v6745
        %v6747 = vpop.f32.mrf.mxu0
        %6748 = vdwg.mxu0
        %6749 = vmatpush.bf16.msra.mxu0 %v3119
        %6750 = vmatpush.bf16.msra.mxu0 %v3107
        %6751 = vmatpush.bf16.msra.mxu0 %v3095
        %6752 = vmatpush.bf16.msra.mxu0 %v3083
        %6753 = vmatpush.bf16.msra.mxu0 %v3071
        %6754 = vmatpush.bf16.msra.mxu0 %v3059
        %6755 = vmatpush.bf16.msra.mxu0 %v3047
        %6756 = vmatpush.bf16.msra.mxu0 %v3035
        %6757 = vmatmul.bf16.gmra.mxu0 %v6158
        %v6758 = vpop.f32.mrf.mxu0
        %v6759 = vadd.f32 %v6746, %v6758
        %v6760 = vpop.f32.mrf.mxu0
        %6761 = vdwg.mxu0
        %6762 = vmatpush.bf16.msra.mxu0 %v3215
        %6763 = vmatpush.bf16.msra.mxu0 %v3203
        %6764 = vmatpush.bf16.msra.mxu0 %v3191
        %6765 = vmatpush.bf16.msra.mxu0 %v3179
        %6766 = vmatpush.bf16.msra.mxu0 %v3167
        %6767 = vmatpush.bf16.msra.mxu0 %v3155
        %6768 = vmatpush.bf16.msra.mxu0 %v3143
        %6769 = vmatpush.bf16.msra.mxu0 %v3131
        %6770 = vmatmul.bf16.gmra.mxu0 %v6159
        %v6771 = vpop.f32.mrf.mxu0
        %v6772 = vadd.f32 %v6759, %v6771
        %v6773 = vpop.f32.mrf.mxu0
        %6774 = vdwg.mxu0
        %6775 = vmatpush.bf16.msra.mxu0 0
        %6776 = vmatpush.bf16.msra.mxu0 0
        %6777 = vmatpush.bf16.msra.mxu0 0
        %6778 = vmatpush.bf16.msra.mxu0 0
        %6779 = vmatpush.bf16.msra.mxu0 0
        %6780 = vmatpush.bf16.msra.mxu0 0
        %6781 = vmatpush.bf16.msra.mxu0 %v3605
        %6782 = vmatpush.bf16.msra.mxu0 %v3227
        %6783 = vmatmul.bf16.gmra.mxu0 %v6162
        %v6784 = vpop.f32.mrf.mxu0
        %v6785 = vadd.f32 %v6772, %v6784
        %v6786 = vpop.f32.mrf.mxu0
        %6787 = vdwg.mxu0
        %v6788 = vadd.f32 %v5725, %v6213
        %v6789 = vadd.f32 %v5764, %v6265
        %v6790 = vadd.f32 %v5803, %v6317
        %v6791 = vadd.f32 %v5842, %v6369
        %v6792 = vxor.u32 %v6788, 2147483648
        %v6793 = vxor.u32 %v6789, 2147483648
        %v6794 = vxor.u32 %v6790, 2147483648
        %v6795 = vxor.u32 %v6791, 2147483648
        %v6796 = vmul.f32 %v6792, 1.442695
        %v6797 = vpow.pop %v6796
        %v6798 = vmul.f32 %v6793, 1.442695
        %v6799 = vpow.pop %v6798
        %v6800 = vmul.f32 %v6794, 1.442695
        %v6801 = vpow.pop %v6800
        %v6802 = vmul.f32 %v6795, 1.442695
        %v6803 = vpow.pop %v6802
        %v6804 = vadd.f32 %v6797, 1.0
        %v6805 = vadd.f32 %v6799, 1.0
        %v6806 = vadd.f32 %v6801, 1.0
        %v6807 = vadd.f32 %v6803, 1.0
        %v6808 = vrcp.pop %v6804
        %v6809 = vmul.f32 %v6804, %v6808
        %v6810 = vsub.f32 1.0, %v6809
        %v6811 = vmul.f32 %v6808, %v6810
        %v6812 = vadd.f32 %v6808, %v6811
        %vm6813 = vweird.f32 %v6804
        %vm6814 = vweird.f32 %v6808
        %vm6815 = vmor %vm6813, %vm6814
        %v6816 = vsel %vm6815, %v6808, %v6812
        %v6817 = vand.u32 2147483647, %v6804
        %vm6818 = vcmp.eq.f32.partialorder %v6817, 8.507059e+37
        %v6819 = vand.u32 %v6804, 2147483648
        %v6820 = vor.u32 1.1754944e-38, %v6819
        %v6821 = vsel %vm6818, %v6820, %v6816
        %v6822 = vmul.f32 1.0, %v6821
        %v6823 = vrcp.pop %v6805
        %v6824 = vmul.f32 %v6805, %v6823
        %v6825 = vsub.f32 1.0, %v6824
        %v6826 = vmul.f32 %v6823, %v6825
        %v6827 = vadd.f32 %v6823, %v6826
        %vm6828 = vweird.f32 %v6805
        %vm6829 = vweird.f32 %v6823
        %vm6830 = vmor %vm6828, %vm6829
        %v6831 = vsel %vm6830, %v6823, %v6827
        %v6832 = vand.u32 2147483647, %v6805
        %vm6833 = vcmp.eq.f32.partialorder %v6832, 8.507059e+37
        %v6834 = vand.u32 %v6805, 2147483648
        %v6835 = vor.u32 1.1754944e-38, %v6834
        %v6836 = vsel %vm6833, %v6835, %v6831
        %v6837 = vmul.f32 1.0, %v6836
        %v6838 = vrcp.pop %v6806
        %v6839 = vmul.f32 %v6806, %v6838
        %v6840 = vsub.f32 1.0, %v6839
        %v6841 = vmul.f32 %v6838, %v6840
        %v6842 = vadd.f32 %v6838, %v6841
        %vm6843 = vweird.f32 %v6806
        %vm6844 = vweird.f32 %v6838
        %vm6845 = vmor %vm6843, %vm6844
        %v6846 = vsel %vm6845, %v6838, %v6842
        %v6847 = vand.u32 2147483647, %v6806
        %vm6848 = vcmp.eq.f32.partialorder %v6847, 8.507059e+37
        %v6849 = vand.u32 %v6806, 2147483648
        %v6850 = vor.u32 1.1754944e-38, %v6849
        %v6851 = vsel %vm6848, %v6850, %v6846
        %v6852 = vmul.f32 1.0, %v6851
        %v6853 = vrcp.pop %v6807
        %v6854 = vmul.f32 %v6807, %v6853
        %v6855 = vsub.f32 1.0, %v6854
        %v6856 = vmul.f32 %v6853, %v6855
        %v6857 = vadd.f32 %v6853, %v6856
        %vm6858 = vweird.f32 %v6807
        %vm6859 = vweird.f32 %v6853
        %vm6860 = vmor %vm6858, %vm6859
        %v6861 = vsel %vm6860, %v6853, %v6857
        %v6862 = vand.u32 2147483647, %v6807
        %vm6863 = vcmp.eq.f32.partialorder %v6862, 8.507059e+37
        %v6864 = vand.u32 %v6807, 2147483648
        %v6865 = vor.u32 1.1754944e-38, %v6864
        %v6866 = vsel %vm6863, %v6865, %v6861
        %v6867 = vmul.f32 1.0, %v6866
        %v6868 = vadd.f32 %v5881, %v6421
        %v6869 = vadd.f32 %v5920, %v6473
        %v6870 = vadd.f32 %v5959, %v6525
        %v6871 = vadd.f32 %v5998, %v6577
        %v6872 = vxor.u32 %v6868, 2147483648
        %v6873 = vxor.u32 %v6869, 2147483648
        %v6874 = vxor.u32 %v6870, 2147483648
        %v6875 = vxor.u32 %v6871, 2147483648
        %v6876 = vmul.f32 %v6872, 1.442695
        %v6877 = vpow.pop %v6876
        %v6878 = vmul.f32 %v6873, 1.442695
        %v6879 = vpow.pop %v6878
        %v6880 = vmul.f32 %v6874, 1.442695
        %v6881 = vpow.pop %v6880
        %v6882 = vmul.f32 %v6875, 1.442695
        %v6883 = vpow.pop %v6882
        %v6884 = vadd.f32 %v6877, 1.0
        %v6885 = vadd.f32 %v6879, 1.0
        %v6886 = vadd.f32 %v6881, 1.0
        %v6887 = vadd.f32 %v6883, 1.0
        %v6888 = vrcp.pop %v6884
        %v6889 = vmul.f32 %v6884, %v6888
        %v6890 = vsub.f32 1.0, %v6889
        %v6891 = vmul.f32 %v6888, %v6890
        %v6892 = vadd.f32 %v6888, %v6891
        %vm6893 = vweird.f32 %v6884
        %vm6894 = vweird.f32 %v6888
        %vm6895 = vmor %vm6893, %vm6894
        %v6896 = vsel %vm6895, %v6888, %v6892
        %v6897 = vand.u32 2147483647, %v6884
        %vm6898 = vcmp.eq.f32.partialorder %v6897, 8.507059e+37
        %v6899 = vand.u32 %v6884, 2147483648
        %v6900 = vor.u32 1.1754944e-38, %v6899
        %v6901 = vsel %vm6898, %v6900, %v6896
        %v6902 = vmul.f32 1.0, %v6901
        %v6903 = vrcp.pop %v6885
        %v6904 = vmul.f32 %v6885, %v6903
        %v6905 = vsub.f32 1.0, %v6904
        %v6906 = vmul.f32 %v6903, %v6905
        %v6907 = vadd.f32 %v6903, %v6906
        %vm6908 = vweird.f32 %v6885
        %vm6909 = vweird.f32 %v6903
        %vm6910 = vmor %vm6908, %vm6909
        %v6911 = vsel %vm6910, %v6903, %v6907
        %v6912 = vand.u32 2147483647, %v6885
        %vm6913 = vcmp.eq.f32.partialorder %v6912, 8.507059e+37
        %v6914 = vand.u32 %v6885, 2147483648
        %v6915 = vor.u32 1.1754944e-38, %v6914
        %v6916 = vsel %vm6913, %v6915, %v6911
        %v6917 = vmul.f32 1.0, %v6916
        %v6918 = vrcp.pop %v6886
        %v6919 = vmul.f32 %v6886, %v6918
        %v6920 = vsub.f32 1.0, %v6919
        %v6921 = vmul.f32 %v6918, %v6920
        %v6922 = vadd.f32 %v6918, %v6921
        %vm6923 = vweird.f32 %v6886
        %vm6924 = vweird.f32 %v6918
        %vm6925 = vmor %vm6923, %vm6924
        %v6926 = vsel %vm6925, %v6918, %v6922
        %v6927 = vand.u32 2147483647, %v6886
        %vm6928 = vcmp.eq.f32.partialorder %v6927, 8.507059e+37
        %v6929 = vand.u32 %v6886, 2147483648
        %v6930 = vor.u32 1.1754944e-38, %v6929
        %v6931 = vsel %vm6928, %v6930, %v6926
        %v6932 = vmul.f32 1.0, %v6931
        %v6933 = vrcp.pop %v6887
        %v6934 = vmul.f32 %v6887, %v6933
        %v6935 = vsub.f32 1.0, %v6934
        %v6936 = vmul.f32 %v6933, %v6935
        %v6937 = vadd.f32 %v6933, %v6936
        %vm6938 = vweird.f32 %v6887
        %vm6939 = vweird.f32 %v6933
        %vm6940 = vmor %vm6938, %vm6939
        %v6941 = vsel %vm6940, %v6933, %v6937
        %v6942 = vand.u32 2147483647, %v6887
        %vm6943 = vcmp.eq.f32.partialorder %v6942, 8.507059e+37
        %v6944 = vand.u32 %v6887, 2147483648
        %v6945 = vor.u32 1.1754944e-38, %v6944
        %v6946 = vsel %vm6943, %v6945, %v6941
        %v6947 = vmul.f32 1.0, %v6946
        %v6948 = vmul.f32 %v6822, %v6629
        %v6949 = vmul.f32 %v6837, %v6681
        %v6950 = vmul.f32 %v6852, %v6733
        %v6951 = vmul.f32 %v6867, %v6785
        %v6952 = vadd.f32 %v6037, %v6948
        %v6953 = vadd.f32 %v6076, %v6949
        %v6954 = vadd.f32 %v6115, %v6950
        %v6955 = vadd.f32 %v6154, %v6951
        %v6956 = vtanh.pop %v6952
        %v6957 = vtanh.pop %v6953
        %v6958 = vtanh.pop %v6954
        %v6959 = vtanh.pop %v6955
        %v6960 = vsub.f32 1.0, %v6902
        %v6961 = vsub.f32 1.0, %v6917
        %v6962 = vsub.f32 1.0, %v6932
        %v6963 = vsub.f32 1.0, %v6947
        %v6964 = vmul.f32 %v6960, %v6956
        %v6965 = vmul.f32 %v6961, %v6957
        %v6966 = vmul.f32 %v6962, %v6958
        %v6967 = vmul.f32 %v6963, %v6959
        %v6968 = vmul.f32 %v6902, %v4415
        %v6969 = vmul.f32 %v6917, %v4416
        %v6970 = vmul.f32 %v6932, %v4417
        %v6971 = vmul.f32 %v6947, %v4418
        %v6972 = vadd.f32 %v6964, %v6968
        %v6973 = vadd.f32 %v6965, %v6969
        %v6974 = vadd.f32 %v6966, %v6970
        %v6975 = vadd.f32 %v6967, %v6971
        %s6976 = scalar_lea.vmem %s564, 40 [#allocation8]
        %v6977 = vld [vmem:[%s6976] sm:$0xff]
        %v6978 = vld [vmem:[%s6976 + $0x8] sm:$0xff]
        %v6979 = vld [vmem:[%s6976 + $0x10] sm:$0xff]
        %v6980 = vld [vmem:[%s6976 + $0x18] sm:$0xff]
        %v6981 = vld [vmem:[%s6976 + $0x20] sm:$0xff]
        %v6982 = vpack.c.bf16 %v6977, %v6977
        %v6983 = vpack.c.bf16 %v6978, %v6978
        %v6984 = vpack.c.bf16 %v6979, %v6979
        %v6985 = vpack.c.bf16 %v6980, %v6980
        %v6986 = vpack.c.bf16 %v6981, %v6981
        %v6988 = vsel %vm3566, %v6986, 0
        %6990 = vmatpush.bf16.msra.mxu0 %v4575
        %6991 = vmatpush.bf16.msra.mxu0 %v4574
        %6992 = vmatpush.bf16.msra.mxu0 %v4573
        %6993 = vmatpush.bf16.msra.mxu0 %v4572
        %6994 = vmatpush.bf16.msra.mxu0 %v4571
        %6995 = vmatpush.bf16.msra.mxu0 %v4570
        %6996 = vmatpush.bf16.msra.mxu0 %v4569
        %6997 = vmatpush.bf16.msra.mxu0 %v4568
        %6998 = vmatmul.bf16.gmra.mxu0 %v6982
        %v6999 = vpop.f32.mrf.mxu0
        %v7000 = vadd.f32 %v4432, %v6999
        %v7001 = vpop.f32.mrf.mxu0
        %7002 = vdwg.mxu0
        %7003 = vmatpush.bf16.msra.mxu0 %v4583
        %7004 = vmatpush.bf16.msra.mxu0 %v4582
        %7005 = vmatpush.bf16.msra.mxu0 %v4581
        %7006 = vmatpush.bf16.msra.mxu0 %v4580
        %7007 = vmatpush.bf16.msra.mxu0 %v4579
        %7008 = vmatpush.bf16.msra.mxu0 %v4578
        %7009 = vmatpush.bf16.msra.mxu0 %v4577
        %7010 = vmatpush.bf16.msra.mxu0 %v4576
        %7011 = vmatmul.bf16.gmra.mxu0 %v6983
        %v7012 = vpop.f32.mrf.mxu0
        %v7013 = vadd.f32 %v7000, %v7012
        %v7014 = vpop.f32.mrf.mxu0
        %7015 = vdwg.mxu0
        %7016 = vmatpush.bf16.msra.mxu0 %v4591
        %7017 = vmatpush.bf16.msra.mxu0 %v4590
        %7018 = vmatpush.bf16.msra.mxu0 %v4589
        %7019 = vmatpush.bf16.msra.mxu0 %v4588
        %7020 = vmatpush.bf16.msra.mxu0 %v4587
        %7021 = vmatpush.bf16.msra.mxu0 %v4586
        %7022 = vmatpush.bf16.msra.mxu0 %v4585
        %7023 = vmatpush.bf16.msra.mxu0 %v4584
        %7024 = vmatmul.bf16.gmra.mxu0 %v6984
        %v7025 = vpop.f32.mrf.mxu0
        %v7026 = vadd.f32 %v7013, %v7025
        %v7027 = vpop.f32.mrf.mxu0
        %7028 = vdwg.mxu0
        %7029 = vmatpush.bf16.msra.mxu0 %v4599
        %7030 = vmatpush.bf16.msra.mxu0 %v4598
        %7031 = vmatpush.bf16.msra.mxu0 %v4597
        %7032 = vmatpush.bf16.msra.mxu0 %v4596
        %7033 = vmatpush.bf16.msra.mxu0 %v4595
        %7034 = vmatpush.bf16.msra.mxu0 %v4594
        %7035 = vmatpush.bf16.msra.mxu0 %v4593
        %7036 = vmatpush.bf16.msra.mxu0 %v4592
        %7037 = vmatmul.bf16.gmra.mxu0 %v6985
        %v7038 = vpop.f32.mrf.mxu0
        %v7039 = vadd.f32 %v7026, %v7038
        %v7040 = vpop.f32.mrf.mxu0
        %7041 = vdwg.mxu0
        %7042 = vmatpush.bf16.msra.mxu0 0
        %7043 = vmatpush.bf16.msra.mxu0 0
        %7044 = vmatpush.bf16.msra.mxu0 0
        %7045 = vmatpush.bf16.msra.mxu0 0
        %7046 = vmatpush.bf16.msra.mxu0 0
        %7047 = vmatpush.bf16.msra.mxu0 0
        %7048 = vmatpush.bf16.msra.mxu0 %v4639
        %7049 = vmatpush.bf16.msra.mxu0 %v4600
        %7050 = vmatmul.bf16.gmra.mxu0 %v6988
        %v7051 = vpop.f32.mrf.mxu0
        %v7052 = vadd.f32 %v7039, %v7051
        %v7053 = vpop.f32.mrf.mxu0
        %7054 = vdwg.mxu0
        %v7055 = vrot.slane %v7052, 4
        %v7056 = vmax.f32 %v7052, %v7055
        %v7057 = vrot.slane %v7056, 2
        %v7058 = vmax.f32 %v7056, %v7057
        %v7059 = vrot.slane %v7058, 1
        %v7060 = vmax.f32 %v7058, %v7059
        %s7061 = sadd.s32 %s4712, 1
        %s7062 = sld [smem:[#allocation3 + %s7061]]
        %v7063 = vstv %s7062
        %vm7064 = vcmp.eq.s32.totalorder %v4420, %v7063
        %v7065 = vsel %vm7064, 1, 0
        %vm7066 = vcmp.eq.s32.totalorder %v7065, 1
        %v7067 = vsel %vm7066, %v7052, 0.0
        %v7068 = vrot.slane %v7067, 4
        %v7069 = vadd.f32 %v7067, %v7068
        %v7070 = vrot.slane %v7069, 2
        %v7071 = vadd.f32 %v7069, %v7070
        %v7072 = vrot.slane %v7071, 1
        %v7073 = vadd.f32 %v7071, %v7072
        %v7074 = vld [vmem:[%s664 + $0x2] sm:$0x1]
        %v7075 = vpack.c.bf16 %v7060, %v7060
        %v7076 = vpack.c.bf16 %v7073, %v7073
        %v7077 = vpack.c.bf16 %v7074, %v7074
        %7078 = vmatpush.bf16.msra.mxu0 %v5389
        %7079 = vmatpush.bf16.msra.mxu0 %v5377
        %7080 = vmatpush.bf16.msra.mxu0 %v5365
        %7081 = vmatpush.bf16.msra.mxu0 %v5353
        %7082 = vmatpush.bf16.msra.mxu0 %v5341
        %7083 = vmatpush.bf16.msra.mxu0 %v5329
        %7084 = vmatpush.bf16.msra.mxu0 %v5317
        %7085 = vmatpush.bf16.msra.mxu0 %v5305
        %7086 = vmatmul.bf16.gmra.mxu0 %v7075
        %v7087 = vpop.f32.mrf.mxu0
        %v7088 = vadd.f32 %v1817, %v7087
        %v7089 = vpop.f32.mrf.mxu0
        %7090 = vdwg.mxu0
        %7091 = vmatpush.bf16.msra.mxu0 %v5485
        %7092 = vmatpush.bf16.msra.mxu0 %v5473
        %7093 = vmatpush.bf16.msra.mxu0 %v5461
        %7094 = vmatpush.bf16.msra.mxu0 %v5449
        %7095 = vmatpush.bf16.msra.mxu0 %v5437
        %7096 = vmatpush.bf16.msra.mxu0 %v5425
        %7097 = vmatpush.bf16.msra.mxu0 %v5413
        %7098 = vmatpush.bf16.msra.mxu0 %v5401
        %7099 = vmatmul.bf16.gmra.mxu0 %v7076
        %v7100 = vpop.f32.mrf.mxu0
        %v7101 = vadd.f32 %v7088, %v7100
        %v7102 = vpop.f32.mrf.mxu0
        %7103 = vdwg.mxu0
        %7104 = vmatpush.bf16.msra.mxu0 %v1707
        %7105 = vmatpush.bf16.msra.mxu0 %v1695
        %7106 = vmatpush.bf16.msra.mxu0 %v1683
        %7107 = vmatpush.bf16.msra.mxu0 %v1671
        %7108 = vmatpush.bf16.msra.mxu0 %v1659
        %7109 = vmatpush.bf16.msra.mxu0 %v1647
        %7110 = vmatpush.bf16.msra.mxu0 %v1635
        %7111 = vmatpush.bf16.msra.mxu0 %v1623
        %7112 = vmatmul.bf16.gmra.mxu0 %v7077
        %v7113 = vpop.f32.mrf.mxu0
        %v7114 = vadd.f32 %v7101, %v7113
        %v7115 = vpop.f32.mrf.mxu0
        %7116 = vdwg.mxu0
        %7117 = vmatpush.bf16.msra.mxu0 %v5390
        %7118 = vmatpush.bf16.msra.mxu0 %v5378
        %7119 = vmatpush.bf16.msra.mxu0 %v5366
        %7120 = vmatpush.bf16.msra.mxu0 %v5354
        %7121 = vmatpush.bf16.msra.mxu0 %v5342
        %7122 = vmatpush.bf16.msra.mxu0 %v5330
        %7123 = vmatpush.bf16.msra.mxu0 %v5318
        %7124 = vmatpush.bf16.msra.mxu0 %v5306
        %7125 = vmatmul.bf16.gmra.mxu0 %v7075
        %v7126 = vpop.f32.mrf.mxu0
        %v7127 = vadd.f32 %v1818, %v7126
        %v7128 = vpop.f32.mrf.mxu0
        %7129 = vdwg.mxu0
        %7130 = vmatpush.bf16.msra.mxu0 %v5486
        %7131 = vmatpush.bf16.msra.mxu0 %v5474
        %7132 = vmatpush.bf16.msra.mxu0 %v5462
        %7133 = vmatpush.bf16.msra.mxu0 %v5450
        %7134 = vmatpush.bf16.msra.mxu0 %v5438
        %7135 = vmatpush.bf16.msra.mxu0 %v5426
        %7136 = vmatpush.bf16.msra.mxu0 %v5414
        %7137 = vmatpush.bf16.msra.mxu0 %v5402
        %7138 = vmatmul.bf16.gmra.mxu0 %v7076
        %v7139 = vpop.f32.mrf.mxu0
        %v7140 = vadd.f32 %v7127, %v7139
        %v7141 = vpop.f32.mrf.mxu0
        %7142 = vdwg.mxu0
        %7143 = vmatpush.bf16.msra.mxu0 %v1708
        %7144 = vmatpush.bf16.msra.mxu0 %v1696
        %7145 = vmatpush.bf16.msra.mxu0 %v1684
        %7146 = vmatpush.bf16.msra.mxu0 %v1672
        %7147 = vmatpush.bf16.msra.mxu0 %v1660
        %7148 = vmatpush.bf16.msra.mxu0 %v1648
        %7149 = vmatpush.bf16.msra.mxu0 %v1636
        %7150 = vmatpush.bf16.msra.mxu0 %v1624
        %7151 = vmatmul.bf16.gmra.mxu0 %v7077
        %v7152 = vpop.f32.mrf.mxu0
        %v7153 = vadd.f32 %v7140, %v7152
        %v7154 = vpop.f32.mrf.mxu0
        %7155 = vdwg.mxu0
        %7156 = vmatpush.bf16.msra.mxu0 %v5391
        %7157 = vmatpush.bf16.msra.mxu0 %v5379
        %7158 = vmatpush.bf16.msra.mxu0 %v5367
        %7159 = vmatpush.bf16.msra.mxu0 %v5355
        %7160 = vmatpush.bf16.msra.mxu0 %v5343
        %7161 = vmatpush.bf16.msra.mxu0 %v5331
        %7162 = vmatpush.bf16.msra.mxu0 %v5319
        %7163 = vmatpush.bf16.msra.mxu0 %v5307
        %7164 = vmatmul.bf16.gmra.mxu0 %v7075
        %v7165 = vpop.f32.mrf.mxu0
        %v7166 = vadd.f32 %v1819, %v7165
        %v7167 = vpop.f32.mrf.mxu0
        %7168 = vdwg.mxu0
        %7169 = vmatpush.bf16.msra.mxu0 %v5487
        %7170 = vmatpush.bf16.msra.mxu0 %v5475
        %7171 = vmatpush.bf16.msra.mxu0 %v5463
        %7172 = vmatpush.bf16.msra.mxu0 %v5451
        %7173 = vmatpush.bf16.msra.mxu0 %v5439
        %7174 = vmatpush.bf16.msra.mxu0 %v5427
        %7175 = vmatpush.bf16.msra.mxu0 %v5415
        %7176 = vmatpush.bf16.msra.mxu0 %v5403
        %7177 = vmatmul.bf16.gmra.mxu0 %v7076
        %v7178 = vpop.f32.mrf.mxu0
        %v7179 = vadd.f32 %v7166, %v7178
        %v7180 = vpop.f32.mrf.mxu0
        %7181 = vdwg.mxu0
        %7182 = vmatpush.bf16.msra.mxu0 %v1709
        %7183 = vmatpush.bf16.msra.mxu0 %v1697
        %7184 = vmatpush.bf16.msra.mxu0 %v1685
        %7185 = vmatpush.bf16.msra.mxu0 %v1673
        %7186 = vmatpush.bf16.msra.mxu0 %v1661
        %7187 = vmatpush.bf16.msra.mxu0 %v1649
        %7188 = vmatpush.bf16.msra.mxu0 %v1637
        %7189 = vmatpush.bf16.msra.mxu0 %v1625
        %7190 = vmatmul.bf16.gmra.mxu0 %v7077
        %v7191 = vpop.f32.mrf.mxu0
        %v7192 = vadd.f32 %v7179, %v7191
        %v7193 = vpop.f32.mrf.mxu0
        %7194 = vdwg.mxu0
        %7195 = vmatpush.bf16.msra.mxu0 %v5392
        %7196 = vmatpush.bf16.msra.mxu0 %v5380
        %7197 = vmatpush.bf16.msra.mxu0 %v5368
        %7198 = vmatpush.bf16.msra.mxu0 %v5356
        %7199 = vmatpush.bf16.msra.mxu0 %v5344
        %7200 = vmatpush.bf16.msra.mxu0 %v5332
        %7201 = vmatpush.bf16.msra.mxu0 %v5320
        %7202 = vmatpush.bf16.msra.mxu0 %v5308
        %7203 = vmatmul.bf16.gmra.mxu0 %v7075
        %v7204 = vpop.f32.mrf.mxu0
        %v7205 = vadd.f32 %v1820, %v7204
        %v7206 = vpop.f32.mrf.mxu0
        %7207 = vdwg.mxu0
        %7208 = vmatpush.bf16.msra.mxu0 %v5488
        %7209 = vmatpush.bf16.msra.mxu0 %v5476
        %7210 = vmatpush.bf16.msra.mxu0 %v5464
        %7211 = vmatpush.bf16.msra.mxu0 %v5452
        %7212 = vmatpush.bf16.msra.mxu0 %v5440
        %7213 = vmatpush.bf16.msra.mxu0 %v5428
        %7214 = vmatpush.bf16.msra.mxu0 %v5416
        %7215 = vmatpush.bf16.msra.mxu0 %v5404
        %7216 = vmatmul.bf16.gmra.mxu0 %v7076
        %v7217 = vpop.f32.mrf.mxu0
        %v7218 = vadd.f32 %v7205, %v7217
        %v7219 = vpop.f32.mrf.mxu0
        %7220 = vdwg.mxu0
        %7221 = vmatpush.bf16.msra.mxu0 %v1710
        %7222 = vmatpush.bf16.msra.mxu0 %v1698
        %7223 = vmatpush.bf16.msra.mxu0 %v1686
        %7224 = vmatpush.bf16.msra.mxu0 %v1674
        %7225 = vmatpush.bf16.msra.mxu0 %v1662
        %7226 = vmatpush.bf16.msra.mxu0 %v1650
        %7227 = vmatpush.bf16.msra.mxu0 %v1638
        %7228 = vmatpush.bf16.msra.mxu0 %v1626
        %7229 = vmatmul.bf16.gmra.mxu0 %v7077
        %v7230 = vpop.f32.mrf.mxu0
        %v7231 = vadd.f32 %v7218, %v7230
        %v7232 = vpop.f32.mrf.mxu0
        %7233 = vdwg.mxu0
        %7234 = vmatpush.bf16.msra.mxu0 %v5393
        %7235 = vmatpush.bf16.msra.mxu0 %v5381
        %7236 = vmatpush.bf16.msra.mxu0 %v5369
        %7237 = vmatpush.bf16.msra.mxu0 %v5357
        %7238 = vmatpush.bf16.msra.mxu0 %v5345
        %7239 = vmatpush.bf16.msra.mxu0 %v5333
        %7240 = vmatpush.bf16.msra.mxu0 %v5321
        %7241 = vmatpush.bf16.msra.mxu0 %v5309
        %7242 = vmatmul.bf16.gmra.mxu0 %v7075
        %v7243 = vpop.f32.mrf.mxu0
        %v7244 = vadd.f32 %v1821, %v7243
        %v7245 = vpop.f32.mrf.mxu0
        %7246 = vdwg.mxu0
        %7247 = vmatpush.bf16.msra.mxu0 %v5489
        %7248 = vmatpush.bf16.msra.mxu0 %v5477
        %7249 = vmatpush.bf16.msra.mxu0 %v5465
        %7250 = vmatpush.bf16.msra.mxu0 %v5453
        %7251 = vmatpush.bf16.msra.mxu0 %v5441
        %7252 = vmatpush.bf16.msra.mxu0 %v5429
        %7253 = vmatpush.bf16.msra.mxu0 %v5417
        %7254 = vmatpush.bf16.msra.mxu0 %v5405
        %7255 = vmatmul.bf16.gmra.mxu0 %v7076
        %v7256 = vpop.f32.mrf.mxu0
        %v7257 = vadd.f32 %v7244, %v7256
        %v7258 = vpop.f32.mrf.mxu0
        %7259 = vdwg.mxu0
        %7260 = vmatpush.bf16.msra.mxu0 %v1711
        %7261 = vmatpush.bf16.msra.mxu0 %v1699
        %7262 = vmatpush.bf16.msra.mxu0 %v1687
        %7263 = vmatpush.bf16.msra.mxu0 %v1675
        %7264 = vmatpush.bf16.msra.mxu0 %v1663
        %7265 = vmatpush.bf16.msra.mxu0 %v1651
        %7266 = vmatpush.bf16.msra.mxu0 %v1639
        %7267 = vmatpush.bf16.msra.mxu0 %v1627
        %7268 = vmatmul.bf16.gmra.mxu0 %v7077
        %v7269 = vpop.f32.mrf.mxu0
        %v7270 = vadd.f32 %v7257, %v7269
        %v7271 = vpop.f32.mrf.mxu0
        %7272 = vdwg.mxu0
        %7273 = vmatpush.bf16.msra.mxu0 %v5394
        %7274 = vmatpush.bf16.msra.mxu0 %v5382
        %7275 = vmatpush.bf16.msra.mxu0 %v5370
        %7276 = vmatpush.bf16.msra.mxu0 %v5358
        %7277 = vmatpush.bf16.msra.mxu0 %v5346
        %7278 = vmatpush.bf16.msra.mxu0 %v5334
        %7279 = vmatpush.bf16.msra.mxu0 %v5322
        %7280 = vmatpush.bf16.msra.mxu0 %v5310
        %7281 = vmatmul.bf16.gmra.mxu0 %v7075
        %v7282 = vpop.f32.mrf.mxu0
        %v7283 = vadd.f32 %v1822, %v7282
        %v7284 = vpop.f32.mrf.mxu0
        %7285 = vdwg.mxu0
        %7286 = vmatpush.bf16.msra.mxu0 %v5490
        %7287 = vmatpush.bf16.msra.mxu0 %v5478
        %7288 = vmatpush.bf16.msra.mxu0 %v5466
        %7289 = vmatpush.bf16.msra.mxu0 %v5454
        %7290 = vmatpush.bf16.msra.mxu0 %v5442
        %7291 = vmatpush.bf16.msra.mxu0 %v5430
        %7292 = vmatpush.bf16.msra.mxu0 %v5418
        %7293 = vmatpush.bf16.msra.mxu0 %v5406
        %7294 = vmatmul.bf16.gmra.mxu0 %v7076
        %v7295 = vpop.f32.mrf.mxu0
        %v7296 = vadd.f32 %v7283, %v7295
        %v7297 = vpop.f32.mrf.mxu0
        %7298 = vdwg.mxu0
        %7299 = vmatpush.bf16.msra.mxu0 %v1712
        %7300 = vmatpush.bf16.msra.mxu0 %v1700
        %7301 = vmatpush.bf16.msra.mxu0 %v1688
        %7302 = vmatpush.bf16.msra.mxu0 %v1676
        %7303 = vmatpush.bf16.msra.mxu0 %v1664
        %7304 = vmatpush.bf16.msra.mxu0 %v1652
        %7305 = vmatpush.bf16.msra.mxu0 %v1640
        %7306 = vmatpush.bf16.msra.mxu0 %v1628
        %7307 = vmatmul.bf16.gmra.mxu0 %v7077
        %v7308 = vpop.f32.mrf.mxu0
        %v7309 = vadd.f32 %v7296, %v7308
        %v7310 = vpop.f32.mrf.mxu0
        %7311 = vdwg.mxu0
        %7312 = vmatpush.bf16.msra.mxu0 %v5395
        %7313 = vmatpush.bf16.msra.mxu0 %v5383
        %7314 = vmatpush.bf16.msra.mxu0 %v5371
        %7315 = vmatpush.bf16.msra.mxu0 %v5359
        %7316 = vmatpush.bf16.msra.mxu0 %v5347
        %7317 = vmatpush.bf16.msra.mxu0 %v5335
        %7318 = vmatpush.bf16.msra.mxu0 %v5323
        %7319 = vmatpush.bf16.msra.mxu0 %v5311
        %7320 = vmatmul.bf16.gmra.mxu0 %v7075
        %v7321 = vpop.f32.mrf.mxu0
        %v7322 = vadd.f32 %v1823, %v7321
        %v7323 = vpop.f32.mrf.mxu0
        %7324 = vdwg.mxu0
        %7325 = vmatpush.bf16.msra.mxu0 %v5491
        %7326 = vmatpush.bf16.msra.mxu0 %v5479
        %7327 = vmatpush.bf16.msra.mxu0 %v5467
        %7328 = vmatpush.bf16.msra.mxu0 %v5455
        %7329 = vmatpush.bf16.msra.mxu0 %v5443
        %7330 = vmatpush.bf16.msra.mxu0 %v5431
        %7331 = vmatpush.bf16.msra.mxu0 %v5419
        %7332 = vmatpush.bf16.msra.mxu0 %v5407
        %7333 = vmatmul.bf16.gmra.mxu0 %v7076
        %v7334 = vpop.f32.mrf.mxu0
        %v7335 = vadd.f32 %v7322, %v7334
        %v7336 = vpop.f32.mrf.mxu0
        %7337 = vdwg.mxu0
        %7338 = vmatpush.bf16.msra.mxu0 %v1713
        %7339 = vmatpush.bf16.msra.mxu0 %v1701
        %7340 = vmatpush.bf16.msra.mxu0 %v1689
        %7341 = vmatpush.bf16.msra.mxu0 %v1677
        %7342 = vmatpush.bf16.msra.mxu0 %v1665
        %7343 = vmatpush.bf16.msra.mxu0 %v1653
        %7344 = vmatpush.bf16.msra.mxu0 %v1641
        %7345 = vmatpush.bf16.msra.mxu0 %v1629
        %7346 = vmatmul.bf16.gmra.mxu0 %v7077
        %v7347 = vpop.f32.mrf.mxu0
        %v7348 = vadd.f32 %v7335, %v7347
        %v7349 = vpop.f32.mrf.mxu0
        %7350 = vdwg.mxu0
        %7351 = vmatpush.bf16.msra.mxu0 %v5396
        %7352 = vmatpush.bf16.msra.mxu0 %v5384
        %7353 = vmatpush.bf16.msra.mxu0 %v5372
        %7354 = vmatpush.bf16.msra.mxu0 %v5360
        %7355 = vmatpush.bf16.msra.mxu0 %v5348
        %7356 = vmatpush.bf16.msra.mxu0 %v5336
        %7357 = vmatpush.bf16.msra.mxu0 %v5324
        %7358 = vmatpush.bf16.msra.mxu0 %v5312
        %7359 = vmatmul.bf16.gmra.mxu0 %v7075
        %v7360 = vpop.f32.mrf.mxu0
        %v7361 = vadd.f32 %v1824, %v7360
        %v7362 = vpop.f32.mrf.mxu0
        %7363 = vdwg.mxu0
        %7364 = vmatpush.bf16.msra.mxu0 %v5492
        %7365 = vmatpush.bf16.msra.mxu0 %v5480
        %7366 = vmatpush.bf16.msra.mxu0 %v5468
        %7367 = vmatpush.bf16.msra.mxu0 %v5456
        %7368 = vmatpush.bf16.msra.mxu0 %v5444
        %7369 = vmatpush.bf16.msra.mxu0 %v5432
        %7370 = vmatpush.bf16.msra.mxu0 %v5420
        %7371 = vmatpush.bf16.msra.mxu0 %v5408
        %7372 = vmatmul.bf16.gmra.mxu0 %v7076
        %v7373 = vpop.f32.mrf.mxu0
        %v7374 = vadd.f32 %v7361, %v7373
        %v7375 = vpop.f32.mrf.mxu0
        %7376 = vdwg.mxu0
        %7377 = vmatpush.bf16.msra.mxu0 %v1714
        %7378 = vmatpush.bf16.msra.mxu0 %v1702
        %7379 = vmatpush.bf16.msra.mxu0 %v1690
        %7380 = vmatpush.bf16.msra.mxu0 %v1678
        %7381 = vmatpush.bf16.msra.mxu0 %v1666
        %7382 = vmatpush.bf16.msra.mxu0 %v1654
        %7383 = vmatpush.bf16.msra.mxu0 %v1642
        %7384 = vmatpush.bf16.msra.mxu0 %v1630
        %7385 = vmatmul.bf16.gmra.mxu0 %v7077
        %v7386 = vpop.f32.mrf.mxu0
        %v7387 = vadd.f32 %v7374, %v7386
        %v7388 = vpop.f32.mrf.mxu0
        %7389 = vdwg.mxu0
        %7390 = vmatpush.bf16.msra.mxu0 %v5397
        %7391 = vmatpush.bf16.msra.mxu0 %v5385
        %7392 = vmatpush.bf16.msra.mxu0 %v5373
        %7393 = vmatpush.bf16.msra.mxu0 %v5361
        %7394 = vmatpush.bf16.msra.mxu0 %v5349
        %7395 = vmatpush.bf16.msra.mxu0 %v5337
        %7396 = vmatpush.bf16.msra.mxu0 %v5325
        %7397 = vmatpush.bf16.msra.mxu0 %v5313
        %7398 = vmatmul.bf16.gmra.mxu0 %v7075
        %v7399 = vpop.f32.mrf.mxu0
        %v7400 = vadd.f32 %v1825, %v7399
        %v7401 = vpop.f32.mrf.mxu0
        %7402 = vdwg.mxu0
        %7403 = vmatpush.bf16.msra.mxu0 %v5493
        %7404 = vmatpush.bf16.msra.mxu0 %v5481
        %7405 = vmatpush.bf16.msra.mxu0 %v5469
        %7406 = vmatpush.bf16.msra.mxu0 %v5457
        %7407 = vmatpush.bf16.msra.mxu0 %v5445
        %7408 = vmatpush.bf16.msra.mxu0 %v5433
        %7409 = vmatpush.bf16.msra.mxu0 %v5421
        %7410 = vmatpush.bf16.msra.mxu0 %v5409
        %7411 = vmatmul.bf16.gmra.mxu0 %v7076
        %v7412 = vpop.f32.mrf.mxu0
        %v7413 = vadd.f32 %v7400, %v7412
        %v7414 = vpop.f32.mrf.mxu0
        %7415 = vdwg.mxu0
        %7416 = vmatpush.bf16.msra.mxu0 %v1715
        %7417 = vmatpush.bf16.msra.mxu0 %v1703
        %7418 = vmatpush.bf16.msra.mxu0 %v1691
        %7419 = vmatpush.bf16.msra.mxu0 %v1679
        %7420 = vmatpush.bf16.msra.mxu0 %v1667
        %7421 = vmatpush.bf16.msra.mxu0 %v1655
        %7422 = vmatpush.bf16.msra.mxu0 %v1643
        %7423 = vmatpush.bf16.msra.mxu0 %v1631
        %7424 = vmatmul.bf16.gmra.mxu0 %v7077
        %v7425 = vpop.f32.mrf.mxu0
        %v7426 = vadd.f32 %v7413, %v7425
        %v7427 = vpop.f32.mrf.mxu0
        %7428 = vdwg.mxu0
        %7429 = vmatpush.bf16.msra.mxu0 %v5398
        %7430 = vmatpush.bf16.msra.mxu0 %v5386
        %7431 = vmatpush.bf16.msra.mxu0 %v5374
        %7432 = vmatpush.bf16.msra.mxu0 %v5362
        %7433 = vmatpush.bf16.msra.mxu0 %v5350
        %7434 = vmatpush.bf16.msra.mxu0 %v5338
        %7435 = vmatpush.bf16.msra.mxu0 %v5326
        %7436 = vmatpush.bf16.msra.mxu0 %v5314
        %7437 = vmatmul.bf16.gmra.mxu0 %v7075
        %v7438 = vpop.f32.mrf.mxu0
        %v7439 = vadd.f32 %v1826, %v7438
        %v7440 = vpop.f32.mrf.mxu0
        %7441 = vdwg.mxu0
        %7442 = vmatpush.bf16.msra.mxu0 %v5494
        %7443 = vmatpush.bf16.msra.mxu0 %v5482
        %7444 = vmatpush.bf16.msra.mxu0 %v5470
        %7445 = vmatpush.bf16.msra.mxu0 %v5458
        %7446 = vmatpush.bf16.msra.mxu0 %v5446
        %7447 = vmatpush.bf16.msra.mxu0 %v5434
        %7448 = vmatpush.bf16.msra.mxu0 %v5422
        %7449 = vmatpush.bf16.msra.mxu0 %v5410
        %7450 = vmatmul.bf16.gmra.mxu0 %v7076
        %v7451 = vpop.f32.mrf.mxu0
        %v7452 = vadd.f32 %v7439, %v7451
        %v7453 = vpop.f32.mrf.mxu0
        %7454 = vdwg.mxu0
        %7455 = vmatpush.bf16.msra.mxu0 %v1716
        %7456 = vmatpush.bf16.msra.mxu0 %v1704
        %7457 = vmatpush.bf16.msra.mxu0 %v1692
        %7458 = vmatpush.bf16.msra.mxu0 %v1680
        %7459 = vmatpush.bf16.msra.mxu0 %v1668
        %7460 = vmatpush.bf16.msra.mxu0 %v1656
        %7461 = vmatpush.bf16.msra.mxu0 %v1644
        %7462 = vmatpush.bf16.msra.mxu0 %v1632
        %7463 = vmatmul.bf16.gmra.mxu0 %v7077
        %v7464 = vpop.f32.mrf.mxu0
        %v7465 = vadd.f32 %v7452, %v7464
        %v7466 = vpop.f32.mrf.mxu0
        %7467 = vdwg.mxu0
        %7468 = vmatpush.bf16.msra.mxu0 %v5399
        %7469 = vmatpush.bf16.msra.mxu0 %v5387
        %7470 = vmatpush.bf16.msra.mxu0 %v5375
        %7471 = vmatpush.bf16.msra.mxu0 %v5363
        %7472 = vmatpush.bf16.msra.mxu0 %v5351
        %7473 = vmatpush.bf16.msra.mxu0 %v5339
        %7474 = vmatpush.bf16.msra.mxu0 %v5327
        %7475 = vmatpush.bf16.msra.mxu0 %v5315
        %7476 = vmatmul.bf16.gmra.mxu0 %v7075
        %v7477 = vpop.f32.mrf.mxu0
        %v7478 = vadd.f32 %v1827, %v7477
        %v7479 = vpop.f32.mrf.mxu0
        %7480 = vdwg.mxu0
        %7481 = vmatpush.bf16.msra.mxu0 %v5495
        %7482 = vmatpush.bf16.msra.mxu0 %v5483
        %7483 = vmatpush.bf16.msra.mxu0 %v5471
        %7484 = vmatpush.bf16.msra.mxu0 %v5459
        %7485 = vmatpush.bf16.msra.mxu0 %v5447
        %7486 = vmatpush.bf16.msra.mxu0 %v5435
        %7487 = vmatpush.bf16.msra.mxu0 %v5423
        %7488 = vmatpush.bf16.msra.mxu0 %v5411
        %7489 = vmatmul.bf16.gmra.mxu0 %v7076
        %v7490 = vpop.f32.mrf.mxu0
        %v7491 = vadd.f32 %v7478, %v7490
        %v7492 = vpop.f32.mrf.mxu0
        %7493 = vdwg.mxu0
        %7494 = vmatpush.bf16.msra.mxu0 %v1717
        %7495 = vmatpush.bf16.msra.mxu0 %v1705
        %7496 = vmatpush.bf16.msra.mxu0 %v1693
        %7497 = vmatpush.bf16.msra.mxu0 %v1681
        %7498 = vmatpush.bf16.msra.mxu0 %v1669
        %7499 = vmatpush.bf16.msra.mxu0 %v1657
        %7500 = vmatpush.bf16.msra.mxu0 %v1645
        %7501 = vmatpush.bf16.msra.mxu0 %v1633
        %7502 = vmatmul.bf16.gmra.mxu0 %v7077
        %v7503 = vpop.f32.mrf.mxu0
        %v7504 = vadd.f32 %v7491, %v7503
        %v7505 = vpop.f32.mrf.mxu0
        %7506 = vdwg.mxu0
        %7507 = vmatpush.bf16.msra.mxu0 %v5400
        %7508 = vmatpush.bf16.msra.mxu0 %v5388
        %7509 = vmatpush.bf16.msra.mxu0 %v5376
        %7510 = vmatpush.bf16.msra.mxu0 %v5364
        %7511 = vmatpush.bf16.msra.mxu0 %v5352
        %7512 = vmatpush.bf16.msra.mxu0 %v5340
        %7513 = vmatpush.bf16.msra.mxu0 %v5328
        %7514 = vmatpush.bf16.msra.mxu0 %v5316
        %7515 = vmatmul.bf16.gmra.mxu0 %v7075
        %v7516 = vpop.f32.mrf.mxu0
        %v7517 = vadd.f32 %v1828, %v7516
        %v7518 = vpop.f32.mrf.mxu0
        %7519 = vdwg.mxu0
        %7520 = vmatpush.bf16.msra.mxu0 %v5496
        %7521 = vmatpush.bf16.msra.mxu0 %v5484
        %7522 = vmatpush.bf16.msra.mxu0 %v5472
        %7523 = vmatpush.bf16.msra.mxu0 %v5460
        %7524 = vmatpush.bf16.msra.mxu0 %v5448
        %7525 = vmatpush.bf16.msra.mxu0 %v5436
        %7526 = vmatpush.bf16.msra.mxu0 %v5424
        %7527 = vmatpush.bf16.msra.mxu0 %v5412
        %7528 = vmatmul.bf16.gmra.mxu0 %v7076
        %v7529 = vpop.f32.mrf.mxu0
        %v7530 = vadd.f32 %v7517, %v7529
        %v7531 = vpop.f32.mrf.mxu0
        %7532 = vdwg.mxu0
        %7533 = vmatpush.bf16.msra.mxu0 %v1718
        %7534 = vmatpush.bf16.msra.mxu0 %v1706
        %7535 = vmatpush.bf16.msra.mxu0 %v1694
        %7536 = vmatpush.bf16.msra.mxu0 %v1682
        %7537 = vmatpush.bf16.msra.mxu0 %v1670
        %7538 = vmatpush.bf16.msra.mxu0 %v1658
        %7539 = vmatpush.bf16.msra.mxu0 %v1646
        %7540 = vmatpush.bf16.msra.mxu0 %v1634
        %7541 = vmatmul.bf16.gmra.mxu0 %v7077
        %v7542 = vpop.f32.mrf.mxu0
        %v7543 = vadd.f32 %v7530, %v7542
        %v7544 = vpop.f32.mrf.mxu0
        %7545 = vdwg.mxu0
        %v7546 = vpack.c.bf16 %v6972, %v6972
        %v7547 = vpack.c.bf16 %v6973, %v6973
        %v7548 = vpack.c.bf16 %v6974, %v6974
        %v7549 = vpack.c.bf16 %v6975, %v6975
        %v7551 = vsel %vm3566, %v7549, 0
        %7553 = vmatpush.bf16.msra.mxu0 %v3012
        %7554 = vmatpush.bf16.msra.mxu0 %v3000
        %7555 = vmatpush.bf16.msra.mxu0 %v2988
        %7556 = vmatpush.bf16.msra.mxu0 %v2976
        %7557 = vmatpush.bf16.msra.mxu0 %v2964
        %7558 = vmatpush.bf16.msra.mxu0 %v2952
        %7559 = vmatpush.bf16.msra.mxu0 %v2940
        %7560 = vmatpush.bf16.msra.mxu0 %v2928
        %7561 = vmatmul.bf16.gmra.mxu0 %v7546
        %v7562 = vpop.f32.mrf.mxu0
        %v7563 = vadd.f32 %v3542, %v7562
        %v7564 = vpop.f32.mrf.mxu0
        %7565 = vdwg.mxu0
        %7566 = vmatpush.bf16.msra.mxu0 %v3108
        %7567 = vmatpush.bf16.msra.mxu0 %v3096
        %7568 = vmatpush.bf16.msra.mxu0 %v3084
        %7569 = vmatpush.bf16.msra.mxu0 %v3072
        %7570 = vmatpush.bf16.msra.mxu0 %v3060
        %7571 = vmatpush.bf16.msra.mxu0 %v3048
        %7572 = vmatpush.bf16.msra.mxu0 %v3036
        %7573 = vmatpush.bf16.msra.mxu0 %v3024
        %7574 = vmatmul.bf16.gmra.mxu0 %v7547
        %v7575 = vpop.f32.mrf.mxu0
        %v7576 = vadd.f32 %v7563, %v7575
        %v7577 = vpop.f32.mrf.mxu0
        %7578 = vdwg.mxu0
        %7579 = vmatpush.bf16.msra.mxu0 %v3204
        %7580 = vmatpush.bf16.msra.mxu0 %v3192
        %7581 = vmatpush.bf16.msra.mxu0 %v3180
        %7582 = vmatpush.bf16.msra.mxu0 %v3168
        %7583 = vmatpush.bf16.msra.mxu0 %v3156
        %7584 = vmatpush.bf16.msra.mxu0 %v3144
        %7585 = vmatpush.bf16.msra.mxu0 %v3132
        %7586 = vmatpush.bf16.msra.mxu0 %v3120
        %7587 = vmatmul.bf16.gmra.mxu0 %v7548
        %v7588 = vpop.f32.mrf.mxu0
        %v7589 = vadd.f32 %v7576, %v7588
        %v7590 = vpop.f32.mrf.mxu0
        %7591 = vdwg.mxu0
        %7592 = vmatpush.bf16.msra.mxu0 0
        %7593 = vmatpush.bf16.msra.mxu0 0
        %7594 = vmatpush.bf16.msra.mxu0 0
        %7595 = vmatpush.bf16.msra.mxu0 0
        %7596 = vmatpush.bf16.msra.mxu0 0
        %7597 = vmatpush.bf16.msra.mxu0 0
        %7598 = vmatpush.bf16.msra.mxu0 %v3572
        %7599 = vmatpush.bf16.msra.mxu0 %v3216
        %7600 = vmatmul.bf16.gmra.mxu0 %v7551
        %v7601 = vpop.f32.mrf.mxu0
        %v7602 = vadd.f32 %v7589, %v7601
        %v7603 = vpop.f32.mrf.mxu0
        %7604 = vdwg.mxu0
        %7605 = vmatpush.bf16.msra.mxu0 %v3013
        %7606 = vmatpush.bf16.msra.mxu0 %v3001
        %7607 = vmatpush.bf16.msra.mxu0 %v2989
        %7608 = vmatpush.bf16.msra.mxu0 %v2977
        %7609 = vmatpush.bf16.msra.mxu0 %v2965
        %7610 = vmatpush.bf16.msra.mxu0 %v2953
        %7611 = vmatpush.bf16.msra.mxu0 %v2941
        %7612 = vmatpush.bf16.msra.mxu0 %v2929
        %7613 = vmatmul.bf16.gmra.mxu0 %v7546
        %v7614 = vpop.f32.mrf.mxu0
        %v7615 = vadd.f32 %v3543, %v7614
        %v7616 = vpop.f32.mrf.mxu0
        %7617 = vdwg.mxu0
        %7618 = vmatpush.bf16.msra.mxu0 %v3109
        %7619 = vmatpush.bf16.msra.mxu0 %v3097
        %7620 = vmatpush.bf16.msra.mxu0 %v3085
        %7621 = vmatpush.bf16.msra.mxu0 %v3073
        %7622 = vmatpush.bf16.msra.mxu0 %v3061
        %7623 = vmatpush.bf16.msra.mxu0 %v3049
        %7624 = vmatpush.bf16.msra.mxu0 %v3037
        %7625 = vmatpush.bf16.msra.mxu0 %v3025
        %7626 = vmatmul.bf16.gmra.mxu0 %v7547
        %v7627 = vpop.f32.mrf.mxu0
        %v7628 = vadd.f32 %v7615, %v7627
        %v7629 = vpop.f32.mrf.mxu0
        %7630 = vdwg.mxu0
        %7631 = vmatpush.bf16.msra.mxu0 %v3205
        %7632 = vmatpush.bf16.msra.mxu0 %v3193
        %7633 = vmatpush.bf16.msra.mxu0 %v3181
        %7634 = vmatpush.bf16.msra.mxu0 %v3169
        %7635 = vmatpush.bf16.msra.mxu0 %v3157
        %7636 = vmatpush.bf16.msra.mxu0 %v3145
        %7637 = vmatpush.bf16.msra.mxu0 %v3133
        %7638 = vmatpush.bf16.msra.mxu0 %v3121
        %7639 = vmatmul.bf16.gmra.mxu0 %v7548
        %v7640 = vpop.f32.mrf.mxu0
        %v7641 = vadd.f32 %v7628, %v7640
        %v7642 = vpop.f32.mrf.mxu0
        %7643 = vdwg.mxu0
        %7644 = vmatpush.bf16.msra.mxu0 0
        %7645 = vmatpush.bf16.msra.mxu0 0
        %7646 = vmatpush.bf16.msra.mxu0 0
        %7647 = vmatpush.bf16.msra.mxu0 0
        %7648 = vmatpush.bf16.msra.mxu0 0
        %7649 = vmatpush.bf16.msra.mxu0 0
        %7650 = vmatpush.bf16.msra.mxu0 %v3575
        %7651 = vmatpush.bf16.msra.mxu0 %v3217
        %7652 = vmatmul.bf16.gmra.mxu0 %v7551
        %v7653 = vpop.f32.mrf.mxu0
        %v7654 = vadd.f32 %v7641, %v7653
        %v7655 = vpop.f32.mrf.mxu0
        %7656 = vdwg.mxu0
        %7657 = vmatpush.bf16.msra.mxu0 %v3014
        %7658 = vmatpush.bf16.msra.mxu0 %v3002
        %7659 = vmatpush.bf16.msra.mxu0 %v2990
        %7660 = vmatpush.bf16.msra.mxu0 %v2978
        %7661 = vmatpush.bf16.msra.mxu0 %v2966
        %7662 = vmatpush.bf16.msra.mxu0 %v2954
        %7663 = vmatpush.bf16.msra.mxu0 %v2942
        %7664 = vmatpush.bf16.msra.mxu0 %v2930
        %7665 = vmatmul.bf16.gmra.mxu0 %v7546
        %v7666 = vpop.f32.mrf.mxu0
        %v7667 = vadd.f32 %v3544, %v7666
        %v7668 = vpop.f32.mrf.mxu0
        %7669 = vdwg.mxu0
        %7670 = vmatpush.bf16.msra.mxu0 %v3110
        %7671 = vmatpush.bf16.msra.mxu0 %v3098
        %7672 = vmatpush.bf16.msra.mxu0 %v3086
        %7673 = vmatpush.bf16.msra.mxu0 %v3074
        %7674 = vmatpush.bf16.msra.mxu0 %v3062
        %7675 = vmatpush.bf16.msra.mxu0 %v3050
        %7676 = vmatpush.bf16.msra.mxu0 %v3038
        %7677 = vmatpush.bf16.msra.mxu0 %v3026
        %7678 = vmatmul.bf16.gmra.mxu0 %v7547
        %v7679 = vpop.f32.mrf.mxu0
        %v7680 = vadd.f32 %v7667, %v7679
        %v7681 = vpop.f32.mrf.mxu0
        %7682 = vdwg.mxu0
        %7683 = vmatpush.bf16.msra.mxu0 %v3206
        %7684 = vmatpush.bf16.msra.mxu0 %v3194
        %7685 = vmatpush.bf16.msra.mxu0 %v3182
        %7686 = vmatpush.bf16.msra.mxu0 %v3170
        %7687 = vmatpush.bf16.msra.mxu0 %v3158
        %7688 = vmatpush.bf16.msra.mxu0 %v3146
        %7689 = vmatpush.bf16.msra.mxu0 %v3134
        %7690 = vmatpush.bf16.msra.mxu0 %v3122
        %7691 = vmatmul.bf16.gmra.mxu0 %v7548
        %v7692 = vpop.f32.mrf.mxu0
        %v7693 = vadd.f32 %v7680, %v7692
        %v7694 = vpop.f32.mrf.mxu0
        %7695 = vdwg.mxu0
        %7696 = vmatpush.bf16.msra.mxu0 0
        %7697 = vmatpush.bf16.msra.mxu0 0
        %7698 = vmatpush.bf16.msra.mxu0 0
        %7699 = vmatpush.bf16.msra.mxu0 0
        %7700 = vmatpush.bf16.msra.mxu0 0
        %7701 = vmatpush.bf16.msra.mxu0 0
        %7702 = vmatpush.bf16.msra.mxu0 %v3578
        %7703 = vmatpush.bf16.msra.mxu0 %v3218
        %7704 = vmatmul.bf16.gmra.mxu0 %v7551
        %v7705 = vpop.f32.mrf.mxu0
        %v7706 = vadd.f32 %v7693, %v7705
        %v7707 = vpop.f32.mrf.mxu0
        %7708 = vdwg.mxu0
        %7709 = vmatpush.bf16.msra.mxu0 %v3015
        %7710 = vmatpush.bf16.msra.mxu0 %v3003
        %7711 = vmatpush.bf16.msra.mxu0 %v2991
        %7712 = vmatpush.bf16.msra.mxu0 %v2979
        %7713 = vmatpush.bf16.msra.mxu0 %v2967
        %7714 = vmatpush.bf16.msra.mxu0 %v2955
        %7715 = vmatpush.bf16.msra.mxu0 %v2943
        %7716 = vmatpush.bf16.msra.mxu0 %v2931
        %7717 = vmatmul.bf16.gmra.mxu0 %v7546
        %v7718 = vpop.f32.mrf.mxu0
        %v7719 = vadd.f32 %v3545, %v7718
        %v7720 = vpop.f32.mrf.mxu0
        %7721 = vdwg.mxu0
        %7722 = vmatpush.bf16.msra.mxu0 %v3111
        %7723 = vmatpush.bf16.msra.mxu0 %v3099
        %7724 = vmatpush.bf16.msra.mxu0 %v3087
        %7725 = vmatpush.bf16.msra.mxu0 %v3075
        %7726 = vmatpush.bf16.msra.mxu0 %v3063
        %7727 = vmatpush.bf16.msra.mxu0 %v3051
        %7728 = vmatpush.bf16.msra.mxu0 %v3039
        %7729 = vmatpush.bf16.msra.mxu0 %v3027
        %7730 = vmatmul.bf16.gmra.mxu0 %v7547
        %v7731 = vpop.f32.mrf.mxu0
        %v7732 = vadd.f32 %v7719, %v7731
        %v7733 = vpop.f32.mrf.mxu0
        %7734 = vdwg.mxu0
        %7735 = vmatpush.bf16.msra.mxu0 %v3207
        %7736 = vmatpush.bf16.msra.mxu0 %v3195
        %7737 = vmatpush.bf16.msra.mxu0 %v3183
        %7738 = vmatpush.bf16.msra.mxu0 %v3171
        %7739 = vmatpush.bf16.msra.mxu0 %v3159
        %7740 = vmatpush.bf16.msra.mxu0 %v3147
        %7741 = vmatpush.bf16.msra.mxu0 %v3135
        %7742 = vmatpush.bf16.msra.mxu0 %v3123
        %7743 = vmatmul.bf16.gmra.mxu0 %v7548
        %v7744 = vpop.f32.mrf.mxu0
        %v7745 = vadd.f32 %v7732, %v7744
        %v7746 = vpop.f32.mrf.mxu0
        %7747 = vdwg.mxu0
        %7748 = vmatpush.bf16.msra.mxu0 0
        %7749 = vmatpush.bf16.msra.mxu0 0
        %7750 = vmatpush.bf16.msra.mxu0 0
        %7751 = vmatpush.bf16.msra.mxu0 0
        %7752 = vmatpush.bf16.msra.mxu0 0
        %7753 = vmatpush.bf16.msra.mxu0 0
        %7754 = vmatpush.bf16.msra.mxu0 %v3581
        %7755 = vmatpush.bf16.msra.mxu0 %v3219
        %7756 = vmatmul.bf16.gmra.mxu0 %v7551
        %v7757 = vpop.f32.mrf.mxu0
        %v7758 = vadd.f32 %v7745, %v7757
        %v7759 = vpop.f32.mrf.mxu0
        %7760 = vdwg.mxu0
        %7761 = vmatpush.bf16.msra.mxu0 %v3016
        %7762 = vmatpush.bf16.msra.mxu0 %v3004
        %7763 = vmatpush.bf16.msra.mxu0 %v2992
        %7764 = vmatpush.bf16.msra.mxu0 %v2980
        %7765 = vmatpush.bf16.msra.mxu0 %v2968
        %7766 = vmatpush.bf16.msra.mxu0 %v2956
        %7767 = vmatpush.bf16.msra.mxu0 %v2944
        %7768 = vmatpush.bf16.msra.mxu0 %v2932
        %7769 = vmatmul.bf16.gmra.mxu0 %v7546
        %v7770 = vpop.f32.mrf.mxu0
        %v7771 = vadd.f32 %v3546, %v7770
        %v7772 = vpop.f32.mrf.mxu0
        %7773 = vdwg.mxu0
        %7774 = vmatpush.bf16.msra.mxu0 %v3112
        %7775 = vmatpush.bf16.msra.mxu0 %v3100
        %7776 = vmatpush.bf16.msra.mxu0 %v3088
        %7777 = vmatpush.bf16.msra.mxu0 %v3076
        %7778 = vmatpush.bf16.msra.mxu0 %v3064
        %7779 = vmatpush.bf16.msra.mxu0 %v3052
        %7780 = vmatpush.bf16.msra.mxu0 %v3040
        %7781 = vmatpush.bf16.msra.mxu0 %v3028
        %7782 = vmatmul.bf16.gmra.mxu0 %v7547
        %v7783 = vpop.f32.mrf.mxu0
        %v7784 = vadd.f32 %v7771, %v7783
        %v7785 = vpop.f32.mrf.mxu0
        %7786 = vdwg.mxu0
        %7787 = vmatpush.bf16.msra.mxu0 %v3208
        %7788 = vmatpush.bf16.msra.mxu0 %v3196
        %7789 = vmatpush.bf16.msra.mxu0 %v3184
        %7790 = vmatpush.bf16.msra.mxu0 %v3172
        %7791 = vmatpush.bf16.msra.mxu0 %v3160
        %7792 = vmatpush.bf16.msra.mxu0 %v3148
        %7793 = vmatpush.bf16.msra.mxu0 %v3136
        %7794 = vmatpush.bf16.msra.mxu0 %v3124
        %7795 = vmatmul.bf16.gmra.mxu0 %v7548
        %v7796 = vpop.f32.mrf.mxu0
        %v7797 = vadd.f32 %v7784, %v7796
        %v7798 = vpop.f32.mrf.mxu0
        %7799 = vdwg.mxu0
        %7800 = vmatpush.bf16.msra.mxu0 0
        %7801 = vmatpush.bf16.msra.mxu0 0
        %7802 = vmatpush.bf16.msra.mxu0 0
        %7803 = vmatpush.bf16.msra.mxu0 0
        %7804 = vmatpush.bf16.msra.mxu0 0
        %7805 = vmatpush.bf16.msra.mxu0 0
        %7806 = vmatpush.bf16.msra.mxu0 %v3584
        %7807 = vmatpush.bf16.msra.mxu0 %v3220
        %7808 = vmatmul.bf16.gmra.mxu0 %v7551
        %v7809 = vpop.f32.mrf.mxu0
        %v7810 = vadd.f32 %v7797, %v7809
        %v7811 = vpop.f32.mrf.mxu0
        %7812 = vdwg.mxu0
        %7813 = vmatpush.bf16.msra.mxu0 %v3017
        %7814 = vmatpush.bf16.msra.mxu0 %v3005
        %7815 = vmatpush.bf16.msra.mxu0 %v2993
        %7816 = vmatpush.bf16.msra.mxu0 %v2981
        %7817 = vmatpush.bf16.msra.mxu0 %v2969
        %7818 = vmatpush.bf16.msra.mxu0 %v2957
        %7819 = vmatpush.bf16.msra.mxu0 %v2945
        %7820 = vmatpush.bf16.msra.mxu0 %v2933
        %7821 = vmatmul.bf16.gmra.mxu0 %v7546
        %v7822 = vpop.f32.mrf.mxu0
        %v7823 = vadd.f32 %v3547, %v7822
        %v7824 = vpop.f32.mrf.mxu0
        %7825 = vdwg.mxu0
        %7826 = vmatpush.bf16.msra.mxu0 %v3113
        %7827 = vmatpush.bf16.msra.mxu0 %v3101
        %7828 = vmatpush.bf16.msra.mxu0 %v3089
        %7829 = vmatpush.bf16.msra.mxu0 %v3077
        %7830 = vmatpush.bf16.msra.mxu0 %v3065
        %7831 = vmatpush.bf16.msra.mxu0 %v3053
        %7832 = vmatpush.bf16.msra.mxu0 %v3041
        %7833 = vmatpush.bf16.msra.mxu0 %v3029
        %7834 = vmatmul.bf16.gmra.mxu0 %v7547
        %v7835 = vpop.f32.mrf.mxu0
        %v7836 = vadd.f32 %v7823, %v7835
        %v7837 = vpop.f32.mrf.mxu0
        %7838 = vdwg.mxu0
        %7839 = vmatpush.bf16.msra.mxu0 %v3209
        %7840 = vmatpush.bf16.msra.mxu0 %v3197
        %7841 = vmatpush.bf16.msra.mxu0 %v3185
        %7842 = vmatpush.bf16.msra.mxu0 %v3173
        %7843 = vmatpush.bf16.msra.mxu0 %v3161
        %7844 = vmatpush.bf16.msra.mxu0 %v3149
        %7845 = vmatpush.bf16.msra.mxu0 %v3137
        %7846 = vmatpush.bf16.msra.mxu0 %v3125
        %7847 = vmatmul.bf16.gmra.mxu0 %v7548
        %v7848 = vpop.f32.mrf.mxu0
        %v7849 = vadd.f32 %v7836, %v7848
        %v7850 = vpop.f32.mrf.mxu0
        %7851 = vdwg.mxu0
        %7852 = vmatpush.bf16.msra.mxu0 0
        %7853 = vmatpush.bf16.msra.mxu0 0
        %7854 = vmatpush.bf16.msra.mxu0 0
        %7855 = vmatpush.bf16.msra.mxu0 0
        %7856 = vmatpush.bf16.msra.mxu0 0
        %7857 = vmatpush.bf16.msra.mxu0 0
        %7858 = vmatpush.bf16.msra.mxu0 %v3587
        %7859 = vmatpush.bf16.msra.mxu0 %v3221
        %7860 = vmatmul.bf16.gmra.mxu0 %v7551
        %v7861 = vpop.f32.mrf.mxu0
        %v7862 = vadd.f32 %v7849, %v7861
        %v7863 = vpop.f32.mrf.mxu0
        %7864 = vdwg.mxu0
        %7865 = vmatpush.bf16.msra.mxu0 %v3018
        %7866 = vmatpush.bf16.msra.mxu0 %v3006
        %7867 = vmatpush.bf16.msra.mxu0 %v2994
        %7868 = vmatpush.bf16.msra.mxu0 %v2982
        %7869 = vmatpush.bf16.msra.mxu0 %v2970
        %7870 = vmatpush.bf16.msra.mxu0 %v2958
        %7871 = vmatpush.bf16.msra.mxu0 %v2946
        %7872 = vmatpush.bf16.msra.mxu0 %v2934
        %7873 = vmatmul.bf16.gmra.mxu0 %v7546
        %v7874 = vpop.f32.mrf.mxu0
        %v7875 = vadd.f32 %v3548, %v7874
        %v7876 = vpop.f32.mrf.mxu0
        %7877 = vdwg.mxu0
        %7878 = vmatpush.bf16.msra.mxu0 %v3114
        %7879 = vmatpush.bf16.msra.mxu0 %v3102
        %7880 = vmatpush.bf16.msra.mxu0 %v3090
        %7881 = vmatpush.bf16.msra.mxu0 %v3078
        %7882 = vmatpush.bf16.msra.mxu0 %v3066
        %7883 = vmatpush.bf16.msra.mxu0 %v3054
        %7884 = vmatpush.bf16.msra.mxu0 %v3042
        %7885 = vmatpush.bf16.msra.mxu0 %v3030
        %7886 = vmatmul.bf16.gmra.mxu0 %v7547
        %v7887 = vpop.f32.mrf.mxu0
        %v7888 = vadd.f32 %v7875, %v7887
        %v7889 = vpop.f32.mrf.mxu0
        %7890 = vdwg.mxu0
        %7891 = vmatpush.bf16.msra.mxu0 %v3210
        %7892 = vmatpush.bf16.msra.mxu0 %v3198
        %7893 = vmatpush.bf16.msra.mxu0 %v3186
        %7894 = vmatpush.bf16.msra.mxu0 %v3174
        %7895 = vmatpush.bf16.msra.mxu0 %v3162
        %7896 = vmatpush.bf16.msra.mxu0 %v3150
        %7897 = vmatpush.bf16.msra.mxu0 %v3138
        %7898 = vmatpush.bf16.msra.mxu0 %v3126
        %7899 = vmatmul.bf16.gmra.mxu0 %v7548
        %v7900 = vpop.f32.mrf.mxu0
        %v7901 = vadd.f32 %v7888, %v7900
        %v7902 = vpop.f32.mrf.mxu0
        %7903 = vdwg.mxu0
        %7904 = vmatpush.bf16.msra.mxu0 0
        %7905 = vmatpush.bf16.msra.mxu0 0
        %7906 = vmatpush.bf16.msra.mxu0 0
        %7907 = vmatpush.bf16.msra.mxu0 0
        %7908 = vmatpush.bf16.msra.mxu0 0
        %7909 = vmatpush.bf16.msra.mxu0 0
        %7910 = vmatpush.bf16.msra.mxu0 %v3590
        %7911 = vmatpush.bf16.msra.mxu0 %v3222
        %7912 = vmatmul.bf16.gmra.mxu0 %v7551
        %v7913 = vpop.f32.mrf.mxu0
        %v7914 = vadd.f32 %v7901, %v7913
        %v7915 = vpop.f32.mrf.mxu0
        %7916 = vdwg.mxu0
        %7917 = vmatpush.bf16.msra.mxu0 %v3019
        %7918 = vmatpush.bf16.msra.mxu0 %v3007
        %7919 = vmatpush.bf16.msra.mxu0 %v2995
        %7920 = vmatpush.bf16.msra.mxu0 %v2983
        %7921 = vmatpush.bf16.msra.mxu0 %v2971
        %7922 = vmatpush.bf16.msra.mxu0 %v2959
        %7923 = vmatpush.bf16.msra.mxu0 %v2947
        %7924 = vmatpush.bf16.msra.mxu0 %v2935
        %7925 = vmatmul.bf16.gmra.mxu0 %v7546
        %v7926 = vpop.f32.mrf.mxu0
        %v7927 = vadd.f32 %v3549, %v7926
        %v7928 = vpop.f32.mrf.mxu0
        %7929 = vdwg.mxu0
        %7930 = vmatpush.bf16.msra.mxu0 %v3115
        %7931 = vmatpush.bf16.msra.mxu0 %v3103
        %7932 = vmatpush.bf16.msra.mxu0 %v3091
        %7933 = vmatpush.bf16.msra.mxu0 %v3079
        %7934 = vmatpush.bf16.msra.mxu0 %v3067
        %7935 = vmatpush.bf16.msra.mxu0 %v3055
        %7936 = vmatpush.bf16.msra.mxu0 %v3043
        %7937 = vmatpush.bf16.msra.mxu0 %v3031
        %7938 = vmatmul.bf16.gmra.mxu0 %v7547
        %v7939 = vpop.f32.mrf.mxu0
        %v7940 = vadd.f32 %v7927, %v7939
        %v7941 = vpop.f32.mrf.mxu0
        %7942 = vdwg.mxu0
        %7943 = vmatpush.bf16.msra.mxu0 %v3211
        %7944 = vmatpush.bf16.msra.mxu0 %v3199
        %7945 = vmatpush.bf16.msra.mxu0 %v3187
        %7946 = vmatpush.bf16.msra.mxu0 %v3175
        %7947 = vmatpush.bf16.msra.mxu0 %v3163
        %7948 = vmatpush.bf16.msra.mxu0 %v3151
        %7949 = vmatpush.bf16.msra.mxu0 %v3139
        %7950 = vmatpush.bf16.msra.mxu0 %v3127
        %7951 = vmatmul.bf16.gmra.mxu0 %v7548
        %v7952 = vpop.f32.mrf.mxu0
        %v7953 = vadd.f32 %v7940, %v7952
        %v7954 = vpop.f32.mrf.mxu0
        %7955 = vdwg.mxu0
        %7956 = vmatpush.bf16.msra.mxu0 0
        %7957 = vmatpush.bf16.msra.mxu0 0
        %7958 = vmatpush.bf16.msra.mxu0 0
        %7959 = vmatpush.bf16.msra.mxu0 0
        %7960 = vmatpush.bf16.msra.mxu0 0
        %7961 = vmatpush.bf16.msra.mxu0 0
        %7962 = vmatpush.bf16.msra.mxu0 %v3593
        %7963 = vmatpush.bf16.msra.mxu0 %v3223
        %7964 = vmatmul.bf16.gmra.mxu0 %v7551
        %v7965 = vpop.f32.mrf.mxu0
        %v7966 = vadd.f32 %v7953, %v7965
        %v7967 = vpop.f32.mrf.mxu0
        %7968 = vdwg.mxu0
        %7969 = vmatpush.bf16.msra.mxu0 %v3020
        %7970 = vmatpush.bf16.msra.mxu0 %v3008
        %7971 = vmatpush.bf16.msra.mxu0 %v2996
        %7972 = vmatpush.bf16.msra.mxu0 %v2984
        %7973 = vmatpush.bf16.msra.mxu0 %v2972
        %7974 = vmatpush.bf16.msra.mxu0 %v2960
        %7975 = vmatpush.bf16.msra.mxu0 %v2948
        %7976 = vmatpush.bf16.msra.mxu0 %v2936
        %7977 = vmatmul.bf16.gmra.mxu0 %v7546
        %v7978 = vpop.f32.mrf.mxu0
        %v7979 = vadd.f32 %v3550, %v7978
        %v7980 = vpop.f32.mrf.mxu0
        %7981 = vdwg.mxu0
        %7982 = vmatpush.bf16.msra.mxu0 %v3116
        %7983 = vmatpush.bf16.msra.mxu0 %v3104
        %7984 = vmatpush.bf16.msra.mxu0 %v3092
        %7985 = vmatpush.bf16.msra.mxu0 %v3080
        %7986 = vmatpush.bf16.msra.mxu0 %v3068
        %7987 = vmatpush.bf16.msra.mxu0 %v3056
        %7988 = vmatpush.bf16.msra.mxu0 %v3044
        %7989 = vmatpush.bf16.msra.mxu0 %v3032
        %7990 = vmatmul.bf16.gmra.mxu0 %v7547
        %v7991 = vpop.f32.mrf.mxu0
        %v7992 = vadd.f32 %v7979, %v7991
        %v7993 = vpop.f32.mrf.mxu0
        %7994 = vdwg.mxu0
        %7995 = vmatpush.bf16.msra.mxu0 %v3212
        %7996 = vmatpush.bf16.msra.mxu0 %v3200
        %7997 = vmatpush.bf16.msra.mxu0 %v3188
        %7998 = vmatpush.bf16.msra.mxu0 %v3176
        %7999 = vmatpush.bf16.msra.mxu0 %v3164
        %8000 = vmatpush.bf16.msra.mxu0 %v3152
        %8001 = vmatpush.bf16.msra.mxu0 %v3140
        %8002 = vmatpush.bf16.msra.mxu0 %v3128
        %8003 = vmatmul.bf16.gmra.mxu0 %v7548
        %v8004 = vpop.f32.mrf.mxu0
        %v8005 = vadd.f32 %v7992, %v8004
        %v8006 = vpop.f32.mrf.mxu0
        %8007 = vdwg.mxu0
        %8008 = vmatpush.bf16.msra.mxu0 0
        %8009 = vmatpush.bf16.msra.mxu0 0
        %8010 = vmatpush.bf16.msra.mxu0 0
        %8011 = vmatpush.bf16.msra.mxu0 0
        %8012 = vmatpush.bf16.msra.mxu0 0
        %8013 = vmatpush.bf16.msra.mxu0 0
        %8014 = vmatpush.bf16.msra.mxu0 %v3596
        %8015 = vmatpush.bf16.msra.mxu0 %v3224
        %8016 = vmatmul.bf16.gmra.mxu0 %v7551
        %v8017 = vpop.f32.mrf.mxu0
        %v8018 = vadd.f32 %v8005, %v8017
        %v8019 = vpop.f32.mrf.mxu0
        %8020 = vdwg.mxu0
        %8021 = vmatpush.bf16.msra.mxu0 %v3021
        %8022 = vmatpush.bf16.msra.mxu0 %v3009
        %8023 = vmatpush.bf16.msra.mxu0 %v2997
        %8024 = vmatpush.bf16.msra.mxu0 %v2985
        %8025 = vmatpush.bf16.msra.mxu0 %v2973
        %8026 = vmatpush.bf16.msra.mxu0 %v2961
        %8027 = vmatpush.bf16.msra.mxu0 %v2949
        %8028 = vmatpush.bf16.msra.mxu0 %v2937
        %8029 = vmatmul.bf16.gmra.mxu0 %v7546
        %v8030 = vpop.f32.mrf.mxu0
        %v8031 = vadd.f32 %v3551, %v8030
        %v8032 = vpop.f32.mrf.mxu0
        %8033 = vdwg.mxu0
        %8034 = vmatpush.bf16.msra.mxu0 %v3117
        %8035 = vmatpush.bf16.msra.mxu0 %v3105
        %8036 = vmatpush.bf16.msra.mxu0 %v3093
        %8037 = vmatpush.bf16.msra.mxu0 %v3081
        %8038 = vmatpush.bf16.msra.mxu0 %v3069
        %8039 = vmatpush.bf16.msra.mxu0 %v3057
        %8040 = vmatpush.bf16.msra.mxu0 %v3045
        %8041 = vmatpush.bf16.msra.mxu0 %v3033
        %8042 = vmatmul.bf16.gmra.mxu0 %v7547
        %v8043 = vpop.f32.mrf.mxu0
        %v8044 = vadd.f32 %v8031, %v8043
        %v8045 = vpop.f32.mrf.mxu0
        %8046 = vdwg.mxu0
        %8047 = vmatpush.bf16.msra.mxu0 %v3213
        %8048 = vmatpush.bf16.msra.mxu0 %v3201
        %8049 = vmatpush.bf16.msra.mxu0 %v3189
        %8050 = vmatpush.bf16.msra.mxu0 %v3177
        %8051 = vmatpush.bf16.msra.mxu0 %v3165
        %8052 = vmatpush.bf16.msra.mxu0 %v3153
        %8053 = vmatpush.bf16.msra.mxu0 %v3141
        %8054 = vmatpush.bf16.msra.mxu0 %v3129
        %8055 = vmatmul.bf16.gmra.mxu0 %v7548
        %v8056 = vpop.f32.mrf.mxu0
        %v8057 = vadd.f32 %v8044, %v8056
        %v8058 = vpop.f32.mrf.mxu0
        %8059 = vdwg.mxu0
        %8060 = vmatpush.bf16.msra.mxu0 0
        %8061 = vmatpush.bf16.msra.mxu0 0
        %8062 = vmatpush.bf16.msra.mxu0 0
        %8063 = vmatpush.bf16.msra.mxu0 0
        %8064 = vmatpush.bf16.msra.mxu0 0
        %8065 = vmatpush.bf16.msra.mxu0 0
        %8066 = vmatpush.bf16.msra.mxu0 %v3599
        %8067 = vmatpush.bf16.msra.mxu0 %v3225
        %8068 = vmatmul.bf16.gmra.mxu0 %v7551
        %v8069 = vpop.f32.mrf.mxu0
        %v8070 = vadd.f32 %v8057, %v8069
        %v8071 = vpop.f32.mrf.mxu0
        %8072 = vdwg.mxu0
        %8073 = vmatpush.bf16.msra.mxu0 %v3022
        %8074 = vmatpush.bf16.msra.mxu0 %v3010
        %8075 = vmatpush.bf16.msra.mxu0 %v2998
        %8076 = vmatpush.bf16.msra.mxu0 %v2986
        %8077 = vmatpush.bf16.msra.mxu0 %v2974
        %8078 = vmatpush.bf16.msra.mxu0 %v2962
        %8079 = vmatpush.bf16.msra.mxu0 %v2950
        %8080 = vmatpush.bf16.msra.mxu0 %v2938
        %8081 = vmatmul.bf16.gmra.mxu0 %v7546
        %v8082 = vpop.f32.mrf.mxu0
        %v8083 = vadd.f32 %v3552, %v8082
        %v8084 = vpop.f32.mrf.mxu0
        %8085 = vdwg.mxu0
        %8086 = vmatpush.bf16.msra.mxu0 %v3118
        %8087 = vmatpush.bf16.msra.mxu0 %v3106
        %8088 = vmatpush.bf16.msra.mxu0 %v3094
        %8089 = vmatpush.bf16.msra.mxu0 %v3082
        %8090 = vmatpush.bf16.msra.mxu0 %v3070
        %8091 = vmatpush.bf16.msra.mxu0 %v3058
        %8092 = vmatpush.bf16.msra.mxu0 %v3046
        %8093 = vmatpush.bf16.msra.mxu0 %v3034
        %8094 = vmatmul.bf16.gmra.mxu0 %v7547
        %v8095 = vpop.f32.mrf.mxu0
        %v8096 = vadd.f32 %v8083, %v8095
        %v8097 = vpop.f32.mrf.mxu0
        %8098 = vdwg.mxu0
        %8099 = vmatpush.bf16.msra.mxu0 %v3214
        %8100 = vmatpush.bf16.msra.mxu0 %v3202
        %8101 = vmatpush.bf16.msra.mxu0 %v3190
        %8102 = vmatpush.bf16.msra.mxu0 %v3178
        %8103 = vmatpush.bf16.msra.mxu0 %v3166
        %8104 = vmatpush.bf16.msra.mxu0 %v3154
        %8105 = vmatpush.bf16.msra.mxu0 %v3142
        %8106 = vmatpush.bf16.msra.mxu0 %v3130
        %8107 = vmatmul.bf16.gmra.mxu0 %v7548
        %v8108 = vpop.f32.mrf.mxu0
        %v8109 = vadd.f32 %v8096, %v8108
        %v8110 = vpop.f32.mrf.mxu0
        %8111 = vdwg.mxu0
        %8112 = vmatpush.bf16.msra.mxu0 0
        %8113 = vmatpush.bf16.msra.mxu0 0
        %8114 = vmatpush.bf16.msra.mxu0 0
        %8115 = vmatpush.bf16.msra.mxu0 0
        %8116 = vmatpush.bf16.msra.mxu0 0
        %8117 = vmatpush.bf16.msra.mxu0 0
        %8118 = vmatpush.bf16.msra.mxu0 %v3602
        %8119 = vmatpush.bf16.msra.mxu0 %v3226
        %8120 = vmatmul.bf16.gmra.mxu0 %v7551
        %v8121 = vpop.f32.mrf.mxu0
        %v8122 = vadd.f32 %v8109, %v8121
        %v8123 = vpop.f32.mrf.mxu0
        %8124 = vdwg.mxu0
        %8125 = vmatpush.bf16.msra.mxu0 %v3023
        %8126 = vmatpush.bf16.msra.mxu0 %v3011
        %8127 = vmatpush.bf16.msra.mxu0 %v2999
        %8128 = vmatpush.bf16.msra.mxu0 %v2987
        %8129 = vmatpush.bf16.msra.mxu0 %v2975
        %8130 = vmatpush.bf16.msra.mxu0 %v2963
        %8131 = vmatpush.bf16.msra.mxu0 %v2951
        %8132 = vmatpush.bf16.msra.mxu0 %v2939
        %8133 = vmatmul.bf16.gmra.mxu0 %v7546
        %v8134 = vpop.f32.mrf.mxu0
        %v8135 = vadd.f32 %v3553, %v8134
        %v8136 = vpop.f32.mrf.mxu0
        %8137 = vdwg.mxu0
        %8138 = vmatpush.bf16.msra.mxu0 %v3119
        %8139 = vmatpush.bf16.msra.mxu0 %v3107
        %8140 = vmatpush.bf16.msra.mxu0 %v3095
        %8141 = vmatpush.bf16.msra.mxu0 %v3083
        %8142 = vmatpush.bf16.msra.mxu0 %v3071
        %8143 = vmatpush.bf16.msra.mxu0 %v3059
        %8144 = vmatpush.bf16.msra.mxu0 %v3047
        %8145 = vmatpush.bf16.msra.mxu0 %v3035
        %8146 = vmatmul.bf16.gmra.mxu0 %v7547
        %v8147 = vpop.f32.mrf.mxu0
        %v8148 = vadd.f32 %v8135, %v8147
        %v8149 = vpop.f32.mrf.mxu0
        %8150 = vdwg.mxu0
        %8151 = vmatpush.bf16.msra.mxu0 %v3215
        %8152 = vmatpush.bf16.msra.mxu0 %v3203
        %8153 = vmatpush.bf16.msra.mxu0 %v3191
        %8154 = vmatpush.bf16.msra.mxu0 %v3179
        %8155 = vmatpush.bf16.msra.mxu0 %v3167
        %8156 = vmatpush.bf16.msra.mxu0 %v3155
        %8157 = vmatpush.bf16.msra.mxu0 %v3143
        %8158 = vmatpush.bf16.msra.mxu0 %v3131
        %8159 = vmatmul.bf16.gmra.mxu0 %v7548
        %v8160 = vpop.f32.mrf.mxu0
        %v8161 = vadd.f32 %v8148, %v8160
        %v8162 = vpop.f32.mrf.mxu0
        %8163 = vdwg.mxu0
        %8164 = vmatpush.bf16.msra.mxu0 0
        %8165 = vmatpush.bf16.msra.mxu0 0
        %8166 = vmatpush.bf16.msra.mxu0 0
        %8167 = vmatpush.bf16.msra.mxu0 0
        %8168 = vmatpush.bf16.msra.mxu0 0
        %8169 = vmatpush.bf16.msra.mxu0 0
        %8170 = vmatpush.bf16.msra.mxu0 %v3605
        %8171 = vmatpush.bf16.msra.mxu0 %v3227
        %8172 = vmatmul.bf16.gmra.mxu0 %v7551
        %v8173 = vpop.f32.mrf.mxu0
        %v8174 = vadd.f32 %v8161, %v8173
        %v8175 = vpop.f32.mrf.mxu0
        %8176 = vdwg.mxu0
        %v8177 = vadd.f32 %v7114, %v7602
        %v8178 = vadd.f32 %v7153, %v7654
        %v8179 = vadd.f32 %v7192, %v7706
        %v8180 = vadd.f32 %v7231, %v7758
        %v8181 = vxor.u32 %v8177, 2147483648
        %v8182 = vxor.u32 %v8178, 2147483648
        %v8183 = vxor.u32 %v8179, 2147483648
        %v8184 = vxor.u32 %v8180, 2147483648
        %v8185 = vmul.f32 %v8181, 1.442695
        %v8186 = vpow.pop %v8185
        %v8187 = vmul.f32 %v8182, 1.442695
        %v8188 = vpow.pop %v8187
        %v8189 = vmul.f32 %v8183, 1.442695
        %v8190 = vpow.pop %v8189
        %v8191 = vmul.f32 %v8184, 1.442695
        %v8192 = vpow.pop %v8191
        %v8193 = vadd.f32 %v8186, 1.0
        %v8194 = vadd.f32 %v8188, 1.0
        %v8195 = vadd.f32 %v8190, 1.0
        %v8196 = vadd.f32 %v8192, 1.0
        %v8197 = vrcp.pop %v8193
        %v8198 = vmul.f32 %v8193, %v8197
        %v8199 = vsub.f32 1.0, %v8198
        %v8200 = vmul.f32 %v8197, %v8199
        %v8201 = vadd.f32 %v8197, %v8200
        %vm8202 = vweird.f32 %v8193
        %vm8203 = vweird.f32 %v8197
        %vm8204 = vmor %vm8202, %vm8203
        %v8205 = vsel %vm8204, %v8197, %v8201
        %v8206 = vand.u32 2147483647, %v8193
        %vm8207 = vcmp.eq.f32.partialorder %v8206, 8.507059e+37
        %v8208 = vand.u32 %v8193, 2147483648
        %v8209 = vor.u32 1.1754944e-38, %v8208
        %v8210 = vsel %vm8207, %v8209, %v8205
        %v8211 = vmul.f32 1.0, %v8210
        %v8212 = vrcp.pop %v8194
        %v8213 = vmul.f32 %v8194, %v8212
        %v8214 = vsub.f32 1.0, %v8213
        %v8215 = vmul.f32 %v8212, %v8214
        %v8216 = vadd.f32 %v8212, %v8215
        %vm8217 = vweird.f32 %v8194
        %vm8218 = vweird.f32 %v8212
        %vm8219 = vmor %vm8217, %vm8218
        %v8220 = vsel %vm8219, %v8212, %v8216
        %v8221 = vand.u32 2147483647, %v8194
        %vm8222 = vcmp.eq.f32.partialorder %v8221, 8.507059e+37
        %v8223 = vand.u32 %v8194, 2147483648
        %v8224 = vor.u32 1.1754944e-38, %v8223
        %v8225 = vsel %vm8222, %v8224, %v8220
        %v8226 = vmul.f32 1.0, %v8225
        %v8227 = vrcp.pop %v8195
        %v8228 = vmul.f32 %v8195, %v8227
        %v8229 = vsub.f32 1.0, %v8228
        %v8230 = vmul.f32 %v8227, %v8229
        %v8231 = vadd.f32 %v8227, %v8230
        %vm8232 = vweird.f32 %v8195
        %vm8233 = vweird.f32 %v8227
        %vm8234 = vmor %vm8232, %vm8233
        %v8235 = vsel %vm8234, %v8227, %v8231
        %v8236 = vand.u32 2147483647, %v8195
        %vm8237 = vcmp.eq.f32.partialorder %v8236, 8.507059e+37
        %v8238 = vand.u32 %v8195, 2147483648
        %v8239 = vor.u32 1.1754944e-38, %v8238
        %v8240 = vsel %vm8237, %v8239, %v8235
        %v8241 = vmul.f32 1.0, %v8240
        %v8242 = vrcp.pop %v8196
        %v8243 = vmul.f32 %v8196, %v8242
        %v8244 = vsub.f32 1.0, %v8243
        %v8245 = vmul.f32 %v8242, %v8244
        %v8246 = vadd.f32 %v8242, %v8245
        %vm8247 = vweird.f32 %v8196
        %vm8248 = vweird.f32 %v8242
        %vm8249 = vmor %vm8247, %vm8248
        %v8250 = vsel %vm8249, %v8242, %v8246
        %v8251 = vand.u32 2147483647, %v8196
        %vm8252 = vcmp.eq.f32.partialorder %v8251, 8.507059e+37
        %v8253 = vand.u32 %v8196, 2147483648
        %v8254 = vor.u32 1.1754944e-38, %v8253
        %v8255 = vsel %vm8252, %v8254, %v8250
        %v8256 = vmul.f32 1.0, %v8255
        %v8257 = vadd.f32 %v7270, %v7810
        %v8258 = vadd.f32 %v7309, %v7862
        %v8259 = vadd.f32 %v7348, %v7914
        %v8260 = vadd.f32 %v7387, %v7966
        %v8261 = vxor.u32 %v8257, 2147483648
        %v8262 = vxor.u32 %v8258, 2147483648
        %v8263 = vxor.u32 %v8259, 2147483648
        %v8264 = vxor.u32 %v8260, 2147483648
        %v8265 = vmul.f32 %v8261, 1.442695
        %v8266 = vpow.pop %v8265
        %v8267 = vmul.f32 %v8262, 1.442695
        %v8268 = vpow.pop %v8267
        %v8269 = vmul.f32 %v8263, 1.442695
        %v8270 = vpow.pop %v8269
        %v8271 = vmul.f32 %v8264, 1.442695
        %v8272 = vpow.pop %v8271
        %v8273 = vadd.f32 %v8266, 1.0
        %v8274 = vadd.f32 %v8268, 1.0
        %v8275 = vadd.f32 %v8270, 1.0
        %v8276 = vadd.f32 %v8272, 1.0
        %v8277 = vrcp.pop %v8273
        %v8278 = vmul.f32 %v8273, %v8277
        %v8279 = vsub.f32 1.0, %v8278
        %v8280 = vmul.f32 %v8277, %v8279
        %v8281 = vadd.f32 %v8277, %v8280
        %vm8282 = vweird.f32 %v8273
        %vm8283 = vweird.f32 %v8277
        %vm8284 = vmor %vm8282, %vm8283
        %v8285 = vsel %vm8284, %v8277, %v8281
        %v8286 = vand.u32 2147483647, %v8273
        %vm8287 = vcmp.eq.f32.partialorder %v8286, 8.507059e+37
        %v8288 = vand.u32 %v8273, 2147483648
        %v8289 = vor.u32 1.1754944e-38, %v8288
        %v8290 = vsel %vm8287, %v8289, %v8285
        %v8291 = vmul.f32 1.0, %v8290
        %v8292 = vrcp.pop %v8274
        %v8293 = vmul.f32 %v8274, %v8292
        %v8294 = vsub.f32 1.0, %v8293
        %v8295 = vmul.f32 %v8292, %v8294
        %v8296 = vadd.f32 %v8292, %v8295
        %vm8297 = vweird.f32 %v8274
        %vm8298 = vweird.f32 %v8292
        %vm8299 = vmor %vm8297, %vm8298
        %v8300 = vsel %vm8299, %v8292, %v8296
        %v8301 = vand.u32 2147483647, %v8274
        %vm8302 = vcmp.eq.f32.partialorder %v8301, 8.507059e+37
        %v8303 = vand.u32 %v8274, 2147483648
        %v8304 = vor.u32 1.1754944e-38, %v8303
        %v8305 = vsel %vm8302, %v8304, %v8300
        %v8306 = vmul.f32 1.0, %v8305
        %v8307 = vrcp.pop %v8275
        %v8308 = vmul.f32 %v8275, %v8307
        %v8309 = vsub.f32 1.0, %v8308
        %v8310 = vmul.f32 %v8307, %v8309
        %v8311 = vadd.f32 %v8307, %v8310
        %vm8312 = vweird.f32 %v8275
        %vm8313 = vweird.f32 %v8307
        %vm8314 = vmor %vm8312, %vm8313
        %v8315 = vsel %vm8314, %v8307, %v8311
        %v8316 = vand.u32 2147483647, %v8275
        %vm8317 = vcmp.eq.f32.partialorder %v8316, 8.507059e+37
        %v8318 = vand.u32 %v8275, 2147483648
        %v8319 = vor.u32 1.1754944e-38, %v8318
        %v8320 = vsel %vm8317, %v8319, %v8315
        %v8321 = vmul.f32 1.0, %v8320
        %v8322 = vrcp.pop %v8276
        %v8323 = vmul.f32 %v8276, %v8322
        %v8324 = vsub.f32 1.0, %v8323
        %v8325 = vmul.f32 %v8322, %v8324
        %v8326 = vadd.f32 %v8322, %v8325
        %vm8327 = vweird.f32 %v8276
        %vm8328 = vweird.f32 %v8322
        %vm8329 = vmor %vm8327, %vm8328
        %v8330 = vsel %vm8329, %v8322, %v8326
        %v8331 = vand.u32 2147483647, %v8276
        %vm8332 = vcmp.eq.f32.partialorder %v8331, 8.507059e+37
        %v8333 = vand.u32 %v8276, 2147483648
        %v8334 = vor.u32 1.1754944e-38, %v8333
        %v8335 = vsel %vm8332, %v8334, %v8330
        %v8336 = vmul.f32 1.0, %v8335
        %v8337 = vmul.f32 %v8211, %v8018
        %v8338 = vmul.f32 %v8226, %v8070
        %v8339 = vmul.f32 %v8241, %v8122
        %v8340 = vmul.f32 %v8256, %v8174
        %v8341 = vadd.f32 %v7426, %v8337
        %v8342 = vadd.f32 %v7465, %v8338
        %v8343 = vadd.f32 %v7504, %v8339
        %v8344 = vadd.f32 %v7543, %v8340
        %v8345 = vtanh.pop %v8341
        %v8346 = vtanh.pop %v8342
        %v8347 = vtanh.pop %v8343
        %v8348 = vtanh.pop %v8344
        %v8349 = vsub.f32 1.0, %v8291
        %v8350 = vsub.f32 1.0, %v8306
        %v8351 = vsub.f32 1.0, %v8321
        %v8352 = vsub.f32 1.0, %v8336
        %v8353 = vmul.f32 %v8349, %v8345
        %v8354 = vmul.f32 %v8350, %v8346
        %v8355 = vmul.f32 %v8351, %v8347
        %v8356 = vmul.f32 %v8352, %v8348
        %v8357 = vmul.f32 %v8291, %v6972
        %v8358 = vmul.f32 %v8306, %v6973
        %v8359 = vmul.f32 %v8321, %v6974
        %v8360 = vmul.f32 %v8336, %v6975
        %v8361 = vadd.f32 %v8353, %v8357
        %v8362 = vadd.f32 %v8354, %v8358
        %v8363 = vadd.f32 %v8355, %v8359
        %v8364 = vadd.f32 %v8356, %v8360
        %v8365 = vpack.c.bf16 %v8361, %v8361
        %v8366 = vpack.c.bf16 %v8362, %v8362
        %v8367 = vpack.c.bf16 %v8363, %v8363
        %v8368 = vpack.c.bf16 %v8364, %v8364
        %v8369 = vld [vmem:[#allocation19] sm:$0xf]
        %v8370 = vld [vmem:[#allocation19 + $0x4] sm:$0xf]
        %v8371 = vld [vmem:[#allocation19 + $0x8] sm:$0xf]
        %v8372 = vld [vmem:[#allocation19 + $0xc] sm:$0xf]
        %v8373 = vld [vmem:[#allocation19 + $0x10] sm:$0xf]
        %v8374 = vld [vmem:[#allocation19 + $0x14] sm:$0xf]
        %v8375 = vld [vmem:[#allocation19 + $0x18] sm:$0xf]
        %v8376 = vld [vmem:[#allocation19 + $0x1c] sm:$0xf]
        %v8377 = vld [vmem:[#allocation19 + $0x20] sm:$0xf]
        %v8378 = vld [vmem:[#allocation19 + $0x24] sm:$0xf]
        %v8379 = vld [vmem:[#allocation19 + $0x28] sm:$0xf]
        %v8380 = vld [vmem:[#allocation19 + $0x2c] sm:$0xf]
        %v8381 = vld [vmem:[#allocation19 + $0x30] sm:$0xf]
        %v8382 = vld [vmem:[#allocation19 + $0x34] sm:$0xf]
        %v8383 = vld [vmem:[#allocation19 + $0x38] sm:$0xf]
        %v8384 = vld [vmem:[#allocation19 + $0x3c] sm:$0xf]
        %v8385 = vld [vmem:[#allocation19 + $0x40] sm:$0xf]
        %v8386 = vld [vmem:[#allocation19 + $0x44] sm:$0xf]
        %v8387 = vld [vmem:[#allocation19 + $0x48] sm:$0xf]
        %v8388 = vld [vmem:[#allocation19 + $0x4c] sm:$0xf]
        %v8389 = vld [vmem:[#allocation19 + $0x50] sm:$0xf]
        %v8390 = vld [vmem:[#allocation19 + $0x54] sm:$0xf]
        %v8391 = vld [vmem:[#allocation19 + $0x58] sm:$0xf]
        %v8392 = vld [vmem:[#allocation19 + $0x5c] sm:$0xf]
        %v8393 = vld [vmem:[#allocation19 + $0x60] sm:$0xf]
        %v8394 = vld [vmem:[#allocation19 + $0x64] sm:$0xf]
        %v8395 = vld [vmem:[#allocation19 + $0x68] sm:$0xf]
        %v8396 = vld [vmem:[#allocation19 + $0x6c] sm:$0xf]
        %v8397 = vld [vmem:[#allocation19 + $0x70] sm:$0xf]
        %v8398 = vld [vmem:[#allocation19 + $0x74] sm:$0xf]
        %v8399 = vld [vmem:[#allocation19 + $0x78] sm:$0xf]
        %v8400 = vld [vmem:[#allocation19 + $0x7c] sm:$0xf]
        %v8401 = vld [vmem:[#allocation19 + $0x80] sm:$0xf]
        %v8402 = vld [vmem:[#allocation19 + $0x84] sm:$0xf]
        %v8403 = vld [vmem:[#allocation19 + $0x88] sm:$0xf]
        %v8404 = vld [vmem:[#allocation19 + $0x8c] sm:$0xf]
        %v8405 = vld [vmem:[#allocation19 + $0x90] sm:$0xf]
        %v8406 = vld [vmem:[#allocation19 + $0x94] sm:$0xf]
        %v8407 = vld [vmem:[#allocation19 + $0x98] sm:$0xf]
        %v8408 = vld [vmem:[#allocation19 + $0x9c] sm:$0xf]
        %v8409 = vld [vmem:[#allocation19 + $0xa0] sm:$0xf]
        %v8410 = vld [vmem:[#allocation19 + $0xa4] sm:$0xf]
        %v8411 = vld [vmem:[#allocation19 + $0xa8] sm:$0xf]
        %v8412 = vld [vmem:[#allocation19 + $0xac] sm:$0xf]
        %v8413 = vld [vmem:[#allocation19 + $0xb0] sm:$0xf]
        %v8414 = vld [vmem:[#allocation19 + $0xb4] sm:$0xf]
        %v8415 = vld [vmem:[#allocation19 + $0xb8] sm:$0xf]
        %v8416 = vld [vmem:[#allocation19 + $0xbc] sm:$0xf]
        %v8417 = vld [vmem:[#allocation19 + $0xc0] sm:$0xf]
        %v8418 = vld [vmem:[#allocation19 + $0xc4] sm:$0xf]
        %v8419 = vld [vmem:[#allocation19 + $0xc8] sm:$0x3]
        %v8420 = vld [vmem:[#allocation20] sm:$0x1]
        %v8472 = vunpack.c.l.b16 %v8369
        %v8473 = vunpack.c.l.b16 %v8370
        %v8474 = vunpack.c.l.b16 %v8371
        %v8475 = vunpack.c.l.b16 %v8372
        %v8476 = vunpack.c.l.b16 %v8373
        %v8477 = vunpack.c.l.b16 %v8374
        %v8478 = vunpack.c.l.b16 %v8375
        %v8479 = vunpack.c.l.b16 %v8376
        %v8480 = vunpack.c.l.b16 %v8377
        %v8481 = vunpack.c.l.b16 %v8378
        %v8482 = vunpack.c.l.b16 %v8379
        %v8483 = vunpack.c.l.b16 %v8380
        %v8484 = vunpack.c.l.b16 %v8381
        %v8485 = vunpack.c.l.b16 %v8382
        %v8486 = vunpack.c.l.b16 %v8383
        %v8487 = vunpack.c.l.b16 %v8384
        %v8488 = vunpack.c.l.b16 %v8385
        %v8489 = vunpack.c.l.b16 %v8386
        %v8490 = vunpack.c.l.b16 %v8387
        %v8491 = vunpack.c.l.b16 %v8388
        %v8492 = vunpack.c.l.b16 %v8389
        %v8493 = vunpack.c.l.b16 %v8390
        %v8494 = vunpack.c.l.b16 %v8391
        %v8495 = vunpack.c.l.b16 %v8392
        %v8496 = vunpack.c.l.b16 %v8393
        %v8497 = vunpack.c.l.b16 %v8394
        %v8498 = vunpack.c.l.b16 %v8395
        %v8499 = vunpack.c.l.b16 %v8396
        %v8500 = vunpack.c.l.b16 %v8397
        %v8501 = vunpack.c.l.b16 %v8398
        %v8502 = vunpack.c.l.b16 %v8399
        %v8503 = vunpack.c.l.b16 %v8400
        %v8504 = vunpack.c.l.b16 %v8401
        %v8505 = vunpack.c.l.b16 %v8402
        %v8506 = vunpack.c.l.b16 %v8403
        %v8507 = vunpack.c.l.b16 %v8404
        %v8508 = vunpack.c.l.b16 %v8405
        %v8509 = vunpack.c.l.b16 %v8406
        %v8510 = vunpack.c.l.b16 %v8407
        %v8511 = vunpack.c.l.b16 %v8408
        %v8512 = vunpack.c.l.b16 %v8409
        %v8513 = vunpack.c.l.b16 %v8410
        %v8514 = vunpack.c.l.b16 %v8411
        %v8515 = vunpack.c.l.b16 %v8412
        %v8516 = vunpack.c.l.b16 %v8413
        %v8517 = vunpack.c.l.b16 %v8414
        %v8518 = vunpack.c.l.b16 %v8415
        %v8519 = vunpack.c.l.b16 %v8416
        %v8520 = vunpack.c.l.b16 %v8417
        %v8521 = vunpack.c.l.b16 %v8418
        %v8522 = vunpack.c.l.b16 %v8419
        %v8523 = vpack.c.b16 %v8473, %v8472
        %v8524 = vpack.c.b16 %v8475, %v8474
        %v8525 = vpack.c.b16 %v8477, %v8476
        %v8526 = vpack.c.b16 %v8479, %v8478
        %v8527 = vpack.c.b16 %v8481, %v8480
        %v8528 = vpack.c.b16 %v8483, %v8482
        %v8529 = vpack.c.b16 %v8485, %v8484
        %v8530 = vpack.c.b16 %v8487, %v8486
        %v8531 = vpack.c.b16 %v8489, %v8488
        %v8532 = vpack.c.b16 %v8491, %v8490
        %v8533 = vpack.c.b16 %v8493, %v8492
        %v8534 = vpack.c.b16 %v8495, %v8494
        %v8535 = vpack.c.b16 %v8497, %v8496
        %v8536 = vpack.c.b16 %v8499, %v8498
        %v8537 = vpack.c.b16 %v8501, %v8500
        %v8538 = vpack.c.b16 %v8503, %v8502
        %v8539 = vpack.c.b16 %v8505, %v8504
        %v8540 = vpack.c.b16 %v8507, %v8506
        %v8541 = vpack.c.b16 %v8509, %v8508
        %v8542 = vpack.c.b16 %v8511, %v8510
        %v8543 = vpack.c.b16 %v8513, %v8512
        %v8544 = vpack.c.b16 %v8515, %v8514
        %v8545 = vpack.c.b16 %v8517, %v8516
        %v8546 = vpack.c.b16 %v8519, %v8518
        %v8547 = vpack.c.b16 %v8521, %v8520
        %v8548 = vpack.c.b16 %v8522, %v8522
        %v8575 = vsel %vm3566, %v8368, 0
        %v8578 = vsel %vm3570, %v8548, 0
        %8580 = vmatpush.bf16.msra.mxu0 %v8530
        %8581 = vmatpush.bf16.msra.mxu0 %v8529
        %8582 = vmatpush.bf16.msra.mxu0 %v8528
        %8583 = vmatpush.bf16.msra.mxu0 %v8527
        %8584 = vmatpush.bf16.msra.mxu0 %v8526
        %8585 = vmatpush.bf16.msra.mxu0 %v8525
        %8586 = vmatpush.bf16.msra.mxu0 %v8524
        %8587 = vmatpush.bf16.msra.mxu0 %v8523
        %8588 = vmatmul.bf16.gmra.mxu0 %v8365
        %v8589 = vpop.f32.mrf.mxu0
        %v8590 = vadd.f32 %v8420, %v8589
        %v8591 = vpop.f32.mrf.mxu0
        %8592 = vdwg.mxu0
        %8593 = vmatpush.bf16.msra.mxu0 %v8538
        %8594 = vmatpush.bf16.msra.mxu0 %v8537
        %8595 = vmatpush.bf16.msra.mxu0 %v8536
        %8596 = vmatpush.bf16.msra.mxu0 %v8535
        %8597 = vmatpush.bf16.msra.mxu0 %v8534
        %8598 = vmatpush.bf16.msra.mxu0 %v8533
        %8599 = vmatpush.bf16.msra.mxu0 %v8532
        %8600 = vmatpush.bf16.msra.mxu0 %v8531
        %8601 = vmatmul.bf16.gmra.mxu0 %v8366
        %v8602 = vpop.f32.mrf.mxu0
        %v8603 = vadd.f32 %v8590, %v8602
        %v8604 = vpop.f32.mrf.mxu0
        %8605 = vdwg.mxu0
        %8606 = vmatpush.bf16.msra.mxu0 %v8546
        %8607 = vmatpush.bf16.msra.mxu0 %v8545
        %8608 = vmatpush.bf16.msra.mxu0 %v8544
        %8609 = vmatpush.bf16.msra.mxu0 %v8543
        %8610 = vmatpush.bf16.msra.mxu0 %v8542
        %8611 = vmatpush.bf16.msra.mxu0 %v8541
        %8612 = vmatpush.bf16.msra.mxu0 %v8540
        %8613 = vmatpush.bf16.msra.mxu0 %v8539
        %8614 = vmatmul.bf16.gmra.mxu0 %v8367
        %v8615 = vpop.f32.mrf.mxu0
        %v8616 = vadd.f32 %v8603, %v8615
        %v8617 = vpop.f32.mrf.mxu0
        %8618 = vdwg.mxu0
        %8619 = vmatpush.bf16.msra.mxu0 0
        %8620 = vmatpush.bf16.msra.mxu0 0
        %8621 = vmatpush.bf16.msra.mxu0 0
        %8622 = vmatpush.bf16.msra.mxu0 0
        %8623 = vmatpush.bf16.msra.mxu0 0
        %8624 = vmatpush.bf16.msra.mxu0 0
        %8625 = vmatpush.bf16.msra.mxu0 %v8578
        %8626 = vmatpush.bf16.msra.mxu0 %v8547
        %8627 = vmatmul.bf16.gmra.mxu0 %v8575
        %v8628 = vpop.f32.mrf.mxu0
        %v8629 = vadd.f32 %v8616, %v8628
        %v8630 = vpop.f32.mrf.mxu0
        %8631 = vdwg.mxu0
        %s8632 = scalar_lea.vmem %s564, 80 [#allocation8]
        %v8633 = vld [vmem:[%s8632] sm:$0xff]
        %v8634 = vld [vmem:[%s8632 + $0x8] sm:$0xff]
        %v8635 = vld [vmem:[%s8632 + $0x10] sm:$0xff]
        %v8636 = vld [vmem:[%s8632 + $0x18] sm:$0xff]
        %v8637 = vld [vmem:[%s8632 + $0x20] sm:$0xff]
        %v8638 = vpack.c.bf16 %v8633, %v8633
        %v8639 = vpack.c.bf16 %v8634, %v8634
        %v8640 = vpack.c.bf16 %v8635, %v8635
        %v8641 = vpack.c.bf16 %v8636, %v8636
        %v8642 = vpack.c.bf16 %v8637, %v8637
        %v8644 = vsel %vm3566, %v8642, 0
        %8646 = vmatpush.bf16.msra.mxu0 %v4575
        %8647 = vmatpush.bf16.msra.mxu0 %v4574
        %8648 = vmatpush.bf16.msra.mxu0 %v4573
        %8649 = vmatpush.bf16.msra.mxu0 %v4572
        %8650 = vmatpush.bf16.msra.mxu0 %v4571
        %8651 = vmatpush.bf16.msra.mxu0 %v4570
        %8652 = vmatpush.bf16.msra.mxu0 %v4569
        %8653 = vmatpush.bf16.msra.mxu0 %v4568
        %8654 = vmatmul.bf16.gmra.mxu0 %v8638
        %v8655 = vpop.f32.mrf.mxu0
        %v8656 = vadd.f32 %v4432, %v8655
        %v8657 = vpop.f32.mrf.mxu0
        %8658 = vdwg.mxu0
        %8659 = vmatpush.bf16.msra.mxu0 %v4583
        %8660 = vmatpush.bf16.msra.mxu0 %v4582
        %8661 = vmatpush.bf16.msra.mxu0 %v4581
        %8662 = vmatpush.bf16.msra.mxu0 %v4580
        %8663 = vmatpush.bf16.msra.mxu0 %v4579
        %8664 = vmatpush.bf16.msra.mxu0 %v4578
        %8665 = vmatpush.bf16.msra.mxu0 %v4577
        %8666 = vmatpush.bf16.msra.mxu0 %v4576
        %8667 = vmatmul.bf16.gmra.mxu0 %v8639
        %v8668 = vpop.f32.mrf.mxu0
        %v8669 = vadd.f32 %v8656, %v8668
        %v8670 = vpop.f32.mrf.mxu0
        %8671 = vdwg.mxu0
        %8672 = vmatpush.bf16.msra.mxu0 %v4591
        %8673 = vmatpush.bf16.msra.mxu0 %v4590
        %8674 = vmatpush.bf16.msra.mxu0 %v4589
        %8675 = vmatpush.bf16.msra.mxu0 %v4588
        %8676 = vmatpush.bf16.msra.mxu0 %v4587
        %8677 = vmatpush.bf16.msra.mxu0 %v4586
        %8678 = vmatpush.bf16.msra.mxu0 %v4585
        %8679 = vmatpush.bf16.msra.mxu0 %v4584
        %8680 = vmatmul.bf16.gmra.mxu0 %v8640
        %v8681 = vpop.f32.mrf.mxu0
        %v8682 = vadd.f32 %v8669, %v8681
        %v8683 = vpop.f32.mrf.mxu0
        %8684 = vdwg.mxu0
        %8685 = vmatpush.bf16.msra.mxu0 %v4599
        %8686 = vmatpush.bf16.msra.mxu0 %v4598
        %8687 = vmatpush.bf16.msra.mxu0 %v4597
        %8688 = vmatpush.bf16.msra.mxu0 %v4596
        %8689 = vmatpush.bf16.msra.mxu0 %v4595
        %8690 = vmatpush.bf16.msra.mxu0 %v4594
        %8691 = vmatpush.bf16.msra.mxu0 %v4593
        %8692 = vmatpush.bf16.msra.mxu0 %v4592
        %8693 = vmatmul.bf16.gmra.mxu0 %v8641
        %v8694 = vpop.f32.mrf.mxu0
        %v8695 = vadd.f32 %v8682, %v8694
        %v8696 = vpop.f32.mrf.mxu0
        %8697 = vdwg.mxu0
        %8698 = vmatpush.bf16.msra.mxu0 0
        %8699 = vmatpush.bf16.msra.mxu0 0
        %8700 = vmatpush.bf16.msra.mxu0 0
        %8701 = vmatpush.bf16.msra.mxu0 0
        %8702 = vmatpush.bf16.msra.mxu0 0
        %8703 = vmatpush.bf16.msra.mxu0 0
        %8704 = vmatpush.bf16.msra.mxu0 %v4639
        %8705 = vmatpush.bf16.msra.mxu0 %v4600
        %8706 = vmatmul.bf16.gmra.mxu0 %v8644
        %v8707 = vpop.f32.mrf.mxu0
        %v8708 = vadd.f32 %v8695, %v8707
        %v8709 = vpop.f32.mrf.mxu0
        %8710 = vdwg.mxu0
        %v8711 = vrot.slane %v8708, 4
        %v8712 = vmax.f32 %v8708, %v8711
        %v8713 = vrot.slane %v8712, 2
        %v8714 = vmax.f32 %v8712, %v8713
        %v8715 = vrot.slane %v8714, 1
        %v8716 = vmax.f32 %v8714, %v8715
        %v8717 = vld [vmem:[#allocation22] sm:$0x1]
        %v8718 = vmul.f32 %v8629, %v8717
        %v8719 = vld [vmem:[#allocation22 + $0x1] sm:$0x1]
        %v8720 = vmul.f32 %v8716, %v8719
        %v8721 = vadd.f32 %v8718, %v8720
        %vm8722 = vcmask 1040384
        %v8723 = vsel %vm8722, %v8721, 0.0
        %8724 = vadd.xlane.f32.xlu0 %v8723
        %v8725 = vpop.xlane.xlu0 %8724
        %v8726 = vld [vmem:[#allocation4] sm:$0x1]
        %v8727 = vadd.f32 %v8725, %v8726
        %8728 = vmatpush.xpose.msra.mxu0 0.0
        %8729 = vmatpush.xpose.msra.mxu0 0.0
        %8730 = vmatpush.xpose.msra.mxu0 0.0
        %8731 = vmatpush.xpose.msra.mxu0 0.0
        %8732 = vmatpush.xpose.msra.mxu0 0.0
        %8733 = vmatpush.xpose.msra.mxu0 0.0
        %8734 = vmatpush.xpose.msra.mxu0 0.0
        %8735 = vmatpush.xpose.msra.mxu0 0.0
        %8736 = vmatpush.xpose.msra.mxu0 0.0
        %8737 = vmatpush.xpose.msra.mxu0 0.0
        %8738 = vmatpush.xpose.msra.mxu0 0.0
        %8739 = vmatpush.xpose.msra.mxu0 0.0
        %8740 = vmatpush.xpose.msra.mxu0 0.0
        %8741 = vmatpush.xpose.msra.mxu0 0.0
        %8742 = vmatpush.xpose.msra.mxu0 0.0
        %8743 = vmatpush.xpose.msra.mxu0 %v8708
        %8744 = vmatmul.f32.gmra.mxu0 %v8629
        %v8745 = vpop.f32.mrf.mxu0
        %v8746 = vadd.f32 0.0, %v8745
        %8747 = vdwg.mxu0
        %8749 = vrot.lane.b32.xlu0 %v8746, 1
        %v8750 = vpop.permute.xlu0 %8749
        %vm8752 = vcmask 7168
        %v8753 = vsel %vm8752, %v8727, %v8750
        %vm8754 = vcmask 65536
        %v8755 = vsel %vm8754, %v8753, -inf
        %8756 = vmax.xlane.f32.xlu0 %v8755
        %v8757 = vpop.xlane.xlu0 %8756
        %v8758 = vsub.f32 %v8753, %v8757
        %v8759 = vmul.f32 %v8758, 1.442695
        %v8760 = vpow.pop %v8759
        %v8761 = vsel %vm8754, %v8760, 0.0
        %8762 = vadd.xlane.f32.xlu0 %v8761
        %v8763 = vpop.xlane.xlu0 %8762
        %v8764 = vrcp.pop %v8763
        %v8765 = vmul.f32 %v8763, %v8764
        %v8766 = vsub.f32 1.0, %v8765
        %v8767 = vmul.f32 %v8764, %v8766
        %v8768 = vadd.f32 %v8764, %v8767
        %vm8769 = vweird.f32 %v8763
        %vm8770 = vweird.f32 %v8764
        %vm8771 = vmor %vm8769, %vm8770
        %v8772 = vsel %vm8771, %v8764, %v8768
        %v8773 = vand.u32 2147483647, %v8763
        %vm8774 = vcmp.eq.f32.partialorder %v8773, 8.507059e+37
        %v8775 = vand.u32 %v8763, 2147483648
        %v8776 = vor.u32 1.1754944e-38, %v8775
        %v8777 = vsel %vm8774, %v8776, %v8772
        %v8778 = vmul.f32 %v8760, %v8777
        %8779 = vst [vmem:[%s660] sm:$0x1] 0.0
        %8780 = vst.msk [vmem:[%s660] sm:$0x1] %vm8754, %v8778
        %s8781 = sand.u32 %s344, 1
        %s8782 = scalar_lea.sflag [#allocation7], %s8781
        %s8783 = sand.u32 %s344, 1
        %s8784 = scalar_lea.vmem [#allocation23], %s8783
        // Predicated region
        $region117: #{tpu_custom_call.1} parent=71 // pred_check
          %p8785 = pneg %p354
        $region118: #{tpu_custom_call.1} parent=71 // pred_check_branch
          %8787 = sbr.rel (%p8785) target = $region120
        $region119: #{tpu_custom_call.1} parent=71 // pred_region
          %8789 = vsyncadd %s8782, 0
          %s8790 = scalar_lea.hbm %s14, %s48
          %s8792 = sshll.u32 %s8784, 4
          %s8793 = int_to_ptr.vmem [resolvable:$true] %s8792
          %s8794 = sshll.u32 %s8790, 4
          %s8795 = int_to_ptr.hbm [resolvable:$true] %s8794
          %8797 = dma.vmem_to_hbm [thread:$0]  %s8793, 16, %s8795, %s8782
        $region120: #{tpu_custom_call.1} parent=71 // pred_fallthru
          _
      $region72: #{tpu_custom_call.1} parent=5 // pred_fallthru
        _
      %p8798 = scmp.le.s32.totalorder 2, %s43
      // Predicated region
      $region121: #{tpu_custom_call.1} parent=5 // pred_check
        %p8799 = pneg %p8798
      $region122: #{tpu_custom_call.1} parent=5 // pred_check_branch
        %8801 = sbr.rel (%p8799) target = $region124
      $region123: #{tpu_custom_call.1} parent=5 // pred_region
        %s8802 = ssub.s32 %s43, 2
        // Predicated region
        $region125: #{tpu_custom_call.1} parent=123 // pred_check
          %p8803 = pneg %p360
        $region126: #{tpu_custom_call.1} parent=123 // pred_check_branch
          %8805 = sbr.rel (%p8803) target = $region128
        $region127: #{tpu_custom_call.1} parent=123 // pred_region
          %s8806 = sand.u32 %s345, 1
          %s8807 = scalar_lea.sflag [#allocation7], %s8806
          %s8808 = sand.u32 %s345, 1
          %s8809 = scalar_lea.vmem [#allocation23], %s8808
          %8811 = dma.done %s8807, 16
        $region128: #{tpu_custom_call.1} parent=123 // pred_fallthru
          _
      $region124: #{tpu_custom_call.1} parent=5 // pred_fallthru
        _
    $region6: #{tpu_custom_call.1} parent=1 // loop_footer
      %s47 = sadd.s32 1, %s43
    $region7: #{tpu_custom_call.1} parent=1 // loop_footer_branch
      %42 = sbr.rel target = $region3
    $region8: #{tpu_custom_call.1} parent=1 // loop_exit
      _
    %8812 = vsyncpa [#allocation6], 1
    %s8813 = scalar_lea.sflag [#allocation6], 1
    %8814 = vsyncpa %s8813, 1
    %8815 = vsyncpa [#allocation9], 1
    %s8816 = scalar_lea.sflag [#allocation9], 1
    %8817 = vsyncpa %s8816, 1
    %8818 = vsyncpa [#allocation12], 1
    %8819 = vsyncpa [#allocation15], 1
    %8820 = vsyncpa [#allocation18], 1
    %8821 = vsyncpa [#allocation21], 1
    %8822 = vsyncpa [#allocation7], 1
    %s8823 = scalar_lea.sflag [#allocation7], 1
    %8824 = vsyncpa %s8823, 1

</llo_original>
